<compile_context>
chip_gen: v5e
topology: v5e:2x2
jax: 0.10.0
libtpu: 0.0.40
codegen_flags: <defaults>
</compile_context>

<pallas_src>
import math
import functools

import numpy as np
import jax
import jax.numpy as jnp
from jax.experimental import pallas as pl
from jax.experimental.pallas import tpu as pltpu


# ---------------------------------------------------------------------------
# Clifford algebra Cl(3,0): 8 blades ordered by (grade, index).
# cayley[i, j, k] = coefficient of blade j in (blade_i * blade_k).
# ---------------------------------------------------------------------------
def build_cayley(n_gen=3):
    masks = sorted(range(1 << n_gen), key=lambda m: (bin(m).count("1"), m))
    idx_of = {m: i for i, m in enumerate(masks)}
    D = 1 << n_gen
    cayley = np.zeros((D, D, D), dtype=np.float32)

    def reorder_sign(a, b):
        total = 0
        a >>= 1
        while a:
            total += bin(a & b).count("1")
            a >>= 1
        return -1.0 if (total & 1) else 1.0

    for i, am in enumerate(masks):
        for k, bm in enumerate(masks):
            j = idx_of[am ^ bm]
            cayley[i, j, k] = reorder_sign(am, bm)  # Euclidean metric: e_i^2 = +1
    return cayley


def positional_encoding(d_model, max_len=64):
    position = np.arange(max_len, dtype=np.float32)[:, None]
    div_term = np.exp(np.arange(0, d_model, 2, dtype=np.float32)
                      * (-math.log(10000.0) / d_model))
    pe = np.zeros((max_len, d_model), np.float32)
    pe[:, 0::2] = np.sin(position * div_term)
    pe[:, 1::2] = np.cos(position * div_term[: pe[:, 1::2].shape[1]])
    return jnp.asarray(pe)


# ---------------------------------------------------------------------------
# Packed-constant layout for one SelfAttentionGA module
# ---------------------------------------------------------------------------
def _misc_offsets(D, H, E):
    # lane offsets inside the f32 `misc` block (rows D:2D also hold vw in lanes 0:E)
    gamma = E
    beta = gamma + D
    b1 = beta + D
    w2 = b1 + H
    b2 = w2 + H
    vb = b2 + 1
    bqmat = ((vb + E + 7) // 8) * 8
    bkmat = bqmat + D
    assert bkmat + D <= 128, "hidden_dim too large for the packed misc block"
    return dict(row=D, gamma=gamma, beta=beta, b1=b1, w2=w2, b2=b2, vb=vb,
                bqmat=bqmat, bkmat=bkmat)


def pack_attention_params(raw):
    """Pre-pack one SelfAttentionGA module's parameters into 3 resident blocks."""
    (wq, bq, wk, bk, gamma, beta, cayley, w1, b1, w2, b2, vw, vb) = [
        np.asarray(a, np.float32) for a in raw]
    S, _, D = wq.shape
    H = w1.shape[1]
    E = vw.shape[1]
    DD = D * D
    assert D == 8 and S == D and E == D, "packing assumes Cl(3,0): S == E == 2**3 == 8"

    rep = np.kron(np.eye(D, dtype=np.float32), np.ones((1, D), np.float32))   # (D, DD)
    til = np.kron(np.ones((1, D), np.float32), np.eye(D, dtype=np.float32))   # (D, DD)
    c2 = np.transpose(cayley, (0, 2, 1)).reshape(DD, D)     # [(i,kk), j]
    w1c = c2 @ w1                                           # Cayley folded into FFN W1

    # bf16 score-path constants (one-hot expansions are exact in bf16)
    wsc = np.zeros((D + DD, 128), np.float32)
    wsc[0:D, 0:DD] = rep
    wsc[0:D, 64:64 + DD] = til
    wsc[D:D + DD, 0:H] = w1c

    # f32 small constants + output-path expansions
    off = _misc_offsets(D, H, E)
    misc = np.zeros((16, 128), np.float32)
    misc[0:D, 0:DD] = rep
    misc[0:D, 64:64 + DD] = til
    misc[D:2 * D, 0:E] = vw
    misc[D:2 * D, off["bqmat"]] = bq[:, 0]     # scalar-blade bias pattern (S, D), col 0 only
    misc[D:2 * D, off["bkmat"]] = bk[:, 0]
    r = off["row"]
    misc[r, off["gamma"]:off["gamma"] + D] = gamma[0]
    misc[r, off["beta"]:off["beta"] + D] = beta[0]
    misc[r, off["b1"]:off["b1"] + H] = b1[0]
    misc[r, off["w2"]:off["w2"] + H] = w2[:, 0]
    misc[r, off["b2"]] = b2[0, 0]
    misc[r, off["vb"]:off["vb"] + E] = vb[0]

    wqk = np.stack([wq, wk], axis=0)                        # (2, S, S, D)
    return (jnp.asarray(wqk), jnp.asarray(wsc, jnp.bfloat16), jnp.asarray(misc), int(H))


# ---------------------------------------------------------------------------
# Pallas kernel: SelfAttentionGA over a tile of `bt` batch elements
# ---------------------------------------------------------------------------
def _attention_kernel(xv_ref, xg_ref, wqk_ref, wsc_ref, misc_ref, out_ref, *,
                      bt, S, D, H, E):
    f32 = jnp.float32
    bf16 = jnp.bfloat16
    DD = D * D
    N = bt * S            # folded (batch, seq) rows in this tile
    R = N * S             # folded (batch, q, k) pair rows in this tile
    off = _misc_offsets(D, H, E)
    r = off["row"]

    xg = xg_ref[...]                                          # (bt, S, D) f32
    xv = xv_ref[...]

    # ---- resident parameters (static slices of the packed blocks) ----
    rep_f = misc_ref[0:D, 0:DD]                               # (D, DD) f32 one-hot expansion
    til_f = misc_ref[0:D, 64:64 + DD]
    vw_m = misc_ref[D:2 * D, 0:E]                             # (D, E)  v_proj weight
    bq_m = misc_ref[D:2 * D, off["bqmat"]:off["bqmat"] + D]   # (S, D)  scalar-blade bias
    bk_m = misc_ref[D:2 * D, off["bkmat"]:off["bkmat"] + D]
    gamma3 = misc_ref[r:r + 1, off["gamma"]:off["gamma"] + D][None]   # (1, 1, D)
    beta3 = misc_ref[r:r + 1, off["beta"]:off["beta"] + D][None]
    b1_row = misc_ref[r:r + 1, off["b1"]:off["b1"] + H]       # (1, H)
    w2_row = misc_ref[r:r + 1, off["w2"]:off["w2"] + H]
    b2_val = misc_ref[r:r + 1, off["b2"]:off["b2"] + 1]       # (1, 1)
    vb_row = misc_ref[r:r + 1, off["vb"]:off["vb"] + E]       # (1, E)
    rep_b = wsc_ref[0:D, 0:DD]                                # bf16 copies for the score path
    til_b = wsc_ref[0:D, 64:64 + DD]
    w1c_b = wsc_ref[D:D + DD, 0:H]                            # (DD, H) Cayley folded into W1
    wq_w = wqk_ref[0]                                         # (S, S, D) f32
    wk_w = wqk_ref[1]

    # ---- v_proj + column sum (the ONLY path that reaches the output value; keep f32) ----
    xsum = jnp.sum(xv, axis=1)                                # (bt, D)
    col_v = (jnp.dot(xsum, vw_m, preferred_element_type=f32)
             + jnp.float32(S) * vb_row)                       # (bt, E) == sum_s v[b, s, :]

    # ---- MVLinear q/k over the seq axis (per-blade weights, scalar-blade bias) ----
    # TODO(synk): review item 3 (block-diagonal (64,64) MXU projection on a flat (bt,64)
    # input, items 3/9) is deferred: it needs a (bt,64)->(bt*S,8) minor-dim-splitting
    # relayout whose Mosaic lowering is not guaranteed at these shapes; the broadcast
    # form below is small and known to lower cleanly.
    xb = xg[:, None, :, :]                                    # (bt, 1, S, D)
    q_pre = jnp.sum(xb * wq_w[None], axis=2) + bq_m[None]     # (bt, S, D)
    k_pre = jnp.sum(xb * wk_w[None], axis=2) + bk_m[None]

    def layer_norm(z):
        mu = jnp.mean(z, axis=-1, keepdims=True)
        zc = z - mu
        var = jnp.mean(zc * zc, axis=-1, keepdims=True)
        return zc * jax.lax.rsqrt(var + 1e-5) * gamma3 + beta3

    qn = layer_norm(q_pre).reshape(N, D)                      # (bt*S, D)
    kn = layer_norm(k_pre).reshape(N, D)

    # ---- blade-pair expansion: bf16 one-hot matmuls (exact), f32 accumulate ----
    qe = jnp.dot(qn.astype(bf16), rep_b, preferred_element_type=f32)   # (N, DD)
    ke = jnp.dot(kn.astype(bf16), til_b, preferred_element_type=f32)

    # ---- pairwise geometric product: pure broadcast (review item 1: no replication matmul) ----
    pair = (qe.reshape(bt, S, 1, DD) * ke.reshape(bt, 1, S, DD)).reshape(R, DD)

    # ---- score FFN with the Cayley table folded into W1 (bf16 MXU ~ torch fp16 autocast) ----
    h = jnp.dot(pair.astype(bf16), w1c_b, preferred_element_type=f32) + b1_row   # (R, H)
    h = jnp.maximum(h, 0.0)
    # score head: VPU multiply + lane reduce (no lane-1 MXU output)
    att_col = jnp.sum(h * w2_row, axis=-1, keepdims=True) + b2_val               # (R, 1)
    # TODO(synk): Dropout(p=0.5) treated as eval-mode identity.

    eye = (jax.lax.broadcasted_iota(jnp.int32, (S, S), 0)
           == jax.lax.broadcasted_iota(jnp.int32, (S, S), 1)).astype(f32)

    def rows_to_lanes(col, groups):
        # (groups*S, 1) -> (groups, S): one-hot "transpose" (sublanes -> lanes)
        return jnp.sum(col.reshape(groups, S, 1) * eye[None], axis=1)

    att = rows_to_lanes(att_col, N)                           # (bt*S, S): q rows, k lanes

    # ---- softmax over k ----
    m = jnp.max(att, axis=-1, keepdims=True)
    ex = jnp.exp(att - m)
    p = ex / jnp.sum(ex, axis=-1, keepdims=True)              # (bt*S, S)

    # ---- faithful to torch.einsum('bqk,bvd->bqd', p, v):
    #      out[b,q,:] = rowsum(p)[b,q] * colsum(v)[b,:]   (rowsum(softmax)==1, the
    #      attention branch is mathematically dead but kept for semantic fidelity)
    row_p = rows_to_lanes(jnp.sum(p, axis=-1, keepdims=True), bt)                # (bt, S)
    out = (jnp.dot(row_p, rep_f, preferred_element_type=f32)
           * jnp.dot(col_v, til_f, preferred_element_type=f32))                  # (bt, S*E)
    # TODO(synk): review item 10 (128-lane-wide store) deferred: it needs a (bt,64)->
    # (bt//2,128) trailing-dim-merging relayout; the 64-lane store equals the full minor
    # dim of the output block and is tiny per step.
    out_ref[...] = out


@functools.lru_cache(maxsize=None)
def _build_attention_call(Bpad, bt, S, D, H, E):
    kernel = functools.partial(_attention_kernel, bt=bt, S=S, D=D, H=H, E=E)
    DD = D * D
    return jax.jit(pl.pallas_call(
        kernel,
        out_shape=jax.ShapeDtypeStruct((Bpad, S * E), jnp.float32),
        grid_spec=pltpu.PrefetchScalarGridSpec(
            num_scalar_prefetch=0,
            grid=(Bpad // bt,),
            in_specs=[
                pl.BlockSpec((bt, S, D), lambda b: (b, 0, 0)),        # x for v_proj
                pl.BlockSpec((bt, S, D), lambda b: (b, 0, 0)),        # x (+ memory) for GA attn
                pl.BlockSpec((2, S, S, D), lambda b: (0, 0, 0, 0)),   # q/k MVLinear weights
                pl.BlockSpec((D + DD, 128), lambda b: (0, 0)),        # bf16 score constants
                pl.BlockSpec((16, 128), lambda b: (0, 0)),            # f32 small constants
            ],
            out_specs=pl.BlockSpec((bt, S * E), lambda b: (b, 0)),
        ),
        # constant blocks keep the same index -> not re-DMA'd; they total < 64 KiB so the
        # default double-buffering headroom is irrelevant even on v7x (review item 11).
        compiler_params=pltpu.CompilerParams(dimension_semantics=("parallel",)),
    ))


def self_attention_ga(x_v, x_ga, packed, *, bt=64):
    """SelfAttentionGA.forward.  x_v feeds v_proj; x_ga (= x [+ memory]) feeds GA attention."""
    wqk, wsc, misc, H = packed
    B, S, D = x_v.shape
    E = D
    assert D == 8 and S == D, "kernel packing assumes Cl(3,0): S == 2**3 == 8"

    # tile sizing: fold bt batches per grid step (bt % 8 == 0 for the lane-dense output
    # tile); no forced extra grid steps -- a padding step is pure waste on 1-TC v5e/v6e.
    bt = max(8, (bt // 8) * 8)
    bt = min(bt, ((B + 7) // 8) * 8)
    G = pl.cdiv(B, bt)
    Bpad = G * bt
    if Bpad != B:
        pad = ((0, Bpad - B), (0, 0), (0, 0))
        x_v = jnp.pad(x_v, pad)
        x_ga = jnp.pad(x_ga, pad)

    call = _build_attention_call(Bpad, bt, S, D, H, E)
    out = call(x_v, x_ga, wqk, wsc, misc)                    # (Bpad, S*E)
    return out[:B].reshape(B, S, E)


# ---------------------------------------------------------------------------
# TransformerDecoderGA glue (plain JAX around the Pallas attention kernel)
# ---------------------------------------------------------------------------
def _layer_norm(x, gb, eps=1e-5):
    g, b = gb
    mu = x.mean(-1, keepdims=True)
    var = ((x - mu) ** 2).mean(-1, keepdims=True)
    return (x - mu) / jnp.sqrt(var + eps) * g + b


def kernel_attention(x_v, x_ga, lp, name):
    return self_attention_ga(x_v, x_ga, lp[name + "_packed"])


def reference_attention(x_v, x_ga, lp, name):
    (wq, bq, wk, bk, gamma, beta, cayley, w1, b1, w2, b2, vw, vb) = lp[name]
    D = x_v.shape[-1]
    onehot0 = (jnp.arange(D) == 0).astype(jnp.float32)
    v = x_v @ vw + vb[0]

    def mvlin(z, w, bias):
        out = jnp.einsum("bmi,nmi->bni", z, w)
        return out + bias[:, 0][None, :, None] * onehot0[None, None, :]

    def ln(z):
        mu = z.mean(-1, keepdims=True)
        var = ((z - mu) ** 2).mean(-1, keepdims=True)
        return (z - mu) / jnp.sqrt(var + 1e-5) * gamma[0] + beta[0]

    q = ln(mvlin(x_ga, wq, bq))
    k = ln(mvlin(x_ga, wk, bk))
    gp = jnp.einsum("bai,ijk,bck->bacj", q, cayley, k)
    h = jnp.maximum(gp @ w1 + b1[0], 0.0)
    att = (h @ w2)[..., 0] + b2[0, 0]
    p = jax.nn.softmax(att, axis=-1)
    return jnp.einsum("bqk,bvd->bqd", p, v)


def decoder_layer_forward(tgt, memory, lp, attn_fn):
    # TransformerDecoderLayerGA.forward (Dropout(p=0.1) == eval-mode identity)
    n1 = _layer_norm(tgt, lp["norm1"])
    tgt = tgt + attn_fn(n1, n1, lp, "self_attn")
    n2 = _layer_norm(tgt, lp["norm2"])
    tgt = tgt + attn_fn(n2, n2 + memory, lp, "cross_attn")       # v from n2, GA from n2+memory
    ff = jnp.maximum(tgt @ lp["fc_in_w"] + lp["fc_in_b"], 0.0) @ lp["fc_out_w"] + lp["fc_out_b"]
    tgt = tgt + ff
    return _layer_norm(tgt, lp["norm3"])


def transformer_decoder_ga(tgt_vec, memory, layers, pe, attn_fn):
    # TransformerDecoderGA.forward: embed_grade(tgt, 1) -> positional encoding -> layers
    B, S, n_gen = tgt_vec.shape
    D = pe.shape[-1]
    tgt = jnp.zeros((B, S, D), jnp.float32).at[..., 1:1 + n_gen].set(tgt_vec)
    tgt = tgt + pe[None, :S, :]
    for lp in layers:
        tgt = decoder_layer_forward(tgt, memory, lp, attn_fn)
    return tgt


# ---------------------------------------------------------------------------
# Parameter construction
# ---------------------------------------------------------------------------
def make_attention_params(key, S, D, H, E, cayley, scale=0.15):
    ks = jax.random.split(key, 12)
    wq = jax.random.normal(ks[0], (S, S, D), jnp.float32) * scale
    bq = jax.random.normal(ks[1], (S, 1), jnp.float32) * scale
    wk = jax.random.normal(ks[2], (S, S, D), jnp.float32) * scale
    bk = jax.random.normal(ks[3], (S, 1), jnp.float32) * scale
    gamma = 1.0 + 0.1 * jax.random.normal(ks[4], (1, D), jnp.float32)
    beta = 0.1 * jax.random.normal(ks[5], (1, D), jnp.float32)
    w1 = jax.random.normal(ks[6], (D, H), jnp.float32) * scale
    b1 = jax.random.normal(ks[7], (1, H), jnp.float32) * scale
    w2 = jax.random.normal(ks[8], (H, 1), jnp.float32) * scale
    b2 = jax.random.normal(ks[9], (1, 1), jnp.float32) * scale
    vw = jax.random.normal(ks[10], (D, E), jnp.float32) * scale
    vb = jax.random.normal(ks[11], (1, E), jnp.float32) * scale
    return (wq, bq, wk, bk, gamma, beta, cayley, w1, b1, w2, b2, vw, vb)


def make_layer_params(key, S, D, H, cayley):
    k_self, k_cross, k_rest = jax.random.split(key, 3)
    ks = jax.random.split(k_rest, 10)

    def ln_pair(ka, kb):
        return (1.0 + 0.1 * jax.random.normal(ka, (D,), jnp.float32),
                0.1 * jax.random.normal(kb, (D,), jnp.float32))

    lp = {
        "self_attn": make_attention_params(k_self, S, D, H, D, cayley),
        "cross_attn": make_attention_params(k_cross, S, D, H, D, cayley),
        "norm1": ln_pair(ks[0], ks[1]),
        "norm2": ln_pair(ks[2], ks[3]),
        "norm3": ln_pair(ks[4], ks[5]),
        "fc_in_w": jax.random.normal(ks[6], (D, H), jnp.float32) * 0.2,
        "fc_in_b": 0.1 * jax.random.normal(ks[7], (H,), jnp.float32),
        "fc_out_w": jax.random.normal(ks[8], (H, D), jnp.float32) * 0.2,
        "fc_out_b": 0.1 * jax.random.normal(ks[9], (D,), jnp.float32),
    }
    lp["self_attn_packed"] = pack_attention_params(lp["self_attn"])
    lp["cross_attn_packed"] = pack_attention_params(lp["cross_attn"])
    return lp


if __name__ == "__main__":
    key = jax.random.PRNGKey(0)
    n_gen = 3
    D = 2 ** n_gen               # multivector size == embed_dim == 8
    B, S, H = 4, 8, 16           # batch, seq_length, hidden_dim
    num_layers = 2

    cayley = jnp.asarray(build_cayley(n_gen))
    pe = positional_encoding(D, max_len=64)

    kl, kt, km = jax.random.split(key, 3)
    layers = [make_layer_params(k, S, D, H, cayley) for k in jax.random.split(kl, num_layers)]

    tgt_vec = jax.random.normal(kt, (B, S, n_gen), jnp.float32)      # grade-1 (vector) input
    memory = 0.5 * jax.random.normal(km, (B, S, D), jnp.float32)     # decoder memory

    out = jax.block_until_ready(
        transformer_decoder_ga(tgt_vec, memory, layers, pe, kernel_attention))
    ref = transformer_decoder_ga(tgt_vec, memory, layers, pe, reference_attention)

    np.testing.assert_allclose(np.asarray(out), np.asarray(ref), rtol=2e-2, atol=2e-2)
    print("KERNEL_OK")
</pallas_src>

<mosaic_0001>
module attributes {stable_mosaic.version = 11 : i64} {
  func.func @_attention_kernel(%arg0: i32, %arg1: memref<8x8x8xf32, #tpu.memory_space<vmem>>, %arg2: memref<8x8x8xf32, #tpu.memory_space<vmem>>, %arg3: memref<2x8x8x8xf32, #tpu.memory_space<vmem>>, %arg4: memref<72x128xbf16, #tpu.memory_space<vmem>>, %arg5: memref<16x128xf32, #tpu.memory_space<vmem>>, %arg6: memref<8x64xf32, #tpu.memory_space<vmem>>) attributes {dimension_semantics = [#tpu.dimension_semantics<parallel>], iteration_bounds = array<i64: 1>, scalar_prefetch = 0 : i64, scratch_operands = 0 : i64, tpu.core_type = #tpu.core_type<tc>, window_params = [{transform_indices = @transform_0, window_bounds = array<i64: 8, 8, 8>}, {transform_indices = @transform_1, window_bounds = array<i64: 8, 8, 8>}, {pipeline_mode = #tpu.pipeline_mode<synchronous>, transform_indices = @transform_2, window_bounds = array<i64: 2, 8, 8, 8>}, {pipeline_mode = #tpu.pipeline_mode<synchronous>, transform_indices = @transform_3, window_bounds = array<i64: 72, 128>}, {pipeline_mode = #tpu.pipeline_mode<synchronous>, transform_indices = @transform_4, window_bounds = array<i64: 16, 128>}, {transform_indices = @transform_5, window_bounds = array<i64: 8, 64>}]} {
    %c0 = arith.constant 0 : index
    %c0_0 = arith.constant 0 : index
    %c0_1 = arith.constant 0 : index
    %0 = vector.load %arg2[%c0, %c0_0, %c0_1] : memref<8x8x8xf32, #tpu.memory_space<vmem>>, vector<8x8x8xf32>
    %c0_2 = arith.constant 0 : index
    %c0_3 = arith.constant 0 : index
    %c0_4 = arith.constant 0 : index
    %1 = vector.load %arg1[%c0_2, %c0_3, %c0_4] : memref<8x8x8xf32, #tpu.memory_space<vmem>>, vector<8x8x8xf32>
    %c0_5 = arith.constant 0 : index
    %c0_6 = arith.constant 0 : index
    %2 = vector.load %arg5[%c0_5, %c0_6] : memref<16x128xf32, #tpu.memory_space<vmem>>, vector<8x64xf32>
    %c0_7 = arith.constant 0 : index
    %c64 = arith.constant 64 : index
    %3 = vector.load %arg5[%c0_7, %c64] : memref<16x128xf32, #tpu.memory_space<vmem>>, vector<8x64xf32>
    %c8 = arith.constant 8 : index
    %c0_8 = arith.constant 0 : index
    %4 = vector.load %arg5[%c8, %c0_8] : memref<16x128xf32, #tpu.memory_space<vmem>>, vector<8x8xf32>
    %c8_9 = arith.constant 8 : index
    %c72 = arith.constant 72 : index
    %5 = vector.load %arg5[%c8_9, %c72] : memref<16x128xf32, #tpu.memory_space<vmem>>, vector<8x8xf32>
    %c8_10 = arith.constant 8 : index
    %c80 = arith.constant 80 : index
    %6 = vector.load %arg5[%c8_10, %c80] : memref<16x128xf32, #tpu.memory_space<vmem>>, vector<8x8xf32>
    %c8_11 = arith.constant 8 : index
    %c8_12 = arith.constant 8 : index
    %7 = vector.load %arg5[%c8_11, %c8_12] : memref<16x128xf32, #tpu.memory_space<vmem>>, vector<1x8xf32>
    %8 = vector.shape_cast %7 : vector<1x8xf32> to vector<1x1x8xf32>
    %c8_13 = arith.constant 8 : index
    %c16 = arith.constant 16 : index
    %9 = vector.load %arg5[%c8_13, %c16] : memref<16x128xf32, #tpu.memory_space<vmem>>, vector<1x8xf32>
    %10 = vector.shape_cast %9 : vector<1x8xf32> to vector<1x1x8xf32>
    %c8_14 = arith.constant 8 : index
    %c24 = arith.constant 24 : index
    %11 = vector.load %arg5[%c8_14, %c24] : memref<16x128xf32, #tpu.memory_space<vmem>>, vector<1x16xf32>
    %c8_15 = arith.constant 8 : index
    %c40 = arith.constant 40 : index
    %12 = vector.load %arg5[%c8_15, %c40] : memref<16x128xf32, #tpu.memory_space<vmem>>, vector<1x16xf32>
    %c8_16 = arith.constant 8 : index
    %c56 = arith.constant 56 : index
    %13 = vector.load %arg5[%c8_16, %c56] : memref<16x128xf32, #tpu.memory_space<vmem>>, vector<1x1xf32>
    %c8_17 = arith.constant 8 : index
    %c57 = arith.constant 57 : index
    %14 = vector.load %arg5[%c8_17, %c57] : memref<16x128xf32, #tpu.memory_space<vmem>>, vector<1x8xf32>
    %c0_18 = arith.constant 0 : index
    %c0_19 = arith.constant 0 : index
    %15 = vector.load %arg4[%c0_18, %c0_19] : memref<72x128xbf16, #tpu.memory_space<vmem>>, vector<8x64xbf16>
    %c0_20 = arith.constant 0 : index
    %c64_21 = arith.constant 64 : index
    %16 = vector.load %arg4[%c0_20, %c64_21] : memref<72x128xbf16, #tpu.memory_space<vmem>>, vector<8x64xbf16>
    %c8_22 = arith.constant 8 : index
    %c0_23 = arith.constant 0 : index
    %17 = vector.load %arg4[%c8_22, %c0_23] : memref<72x128xbf16, #tpu.memory_space<vmem>>, vector<64x16xbf16>
    %c0_24 = arith.constant 0 : index
    %c0_25 = arith.constant 0 : index
    %c0_26 = arith.constant 0 : index
    %c0_27 = arith.constant 0 : index
    %18 = vector.load %arg3[%c0_24, %c0_25, %c0_26, %c0_27] : memref<2x8x8x8xf32, #tpu.memory_space<vmem>>, vector<1x8x8x8xf32>
    %19 = vector.shape_cast %18 : vector<1x8x8x8xf32> to vector<8x8x8xf32>
    %c1 = arith.constant 1 : index
    %c0_28 = arith.constant 0 : index
    %c0_29 = arith.constant 0 : index
    %c0_30 = arith.constant 0 : index
    %20 = vector.load %arg3[%c1, %c0_28, %c0_29, %c0_30] : memref<2x8x8x8xf32, #tpu.memory_space<vmem>>, vector<1x8x8x8xf32>
    %21 = vector.shape_cast %20 : vector<1x8x8x8xf32> to vector<8x8x8xf32>
    %cst = arith.constant dense<0.000000e+00> : vector<8x8xf32>
    %22 = vector.multi_reduction <add>, %1, %cst [1] : vector<8x8x8xf32> to vector<8x8xf32>
    %cst_31 = arith.constant dense<0.000000e+00> : vector<8x8xf32>
    %23 = tpu.matmul %22, %4, %cst_31 {dimension_numbers = #tpu.dot_dimension_numbers<[1], [0], [0], [1], [0, 0, 1, 1], [], []>} : vector<8x8xf32>, vector<8x8xf32>, vector<8x8xf32> -> vector<8x8xf32>
    %cst_32 = arith.constant 8.000000e+00 : f32
    %24 = vector.broadcast %cst_32 : f32 to vector<1x8xf32>
    %25 = arith.mulf %24, %14 : vector<1x8xf32>
    %26 = vector.broadcast %25 : vector<1x8xf32> to vector<8x8xf32>
    %27 = arith.addf %23, %26 : vector<8x8xf32>
    %28 = vector.shape_cast %0 : vector<8x8x8xf32> to vector<8x1x8x8xf32>
    %29 = vector.shape_cast %19 : vector<8x8x8xf32> to vector<1x8x8x8xf32>
    %30 = vector.broadcast %28 : vector<8x1x8x8xf32> to vector<8x8x8x8xf32>
    %31 = vector.broadcast %29 : vector<1x8x8x8xf32> to vector<8x8x8x8xf32>
    %32 = arith.mulf %30, %31 : vector<8x8x8x8xf32>
    %cst_33 = arith.constant dense<0.000000e+00> : vector<8x8x8xf32>
    %33 = vector.multi_reduction <add>, %32, %cst_33 [2] : vector<8x8x8x8xf32> to vector<8x8x8xf32>
    %34 = vector.shape_cast %5 : vector<8x8xf32> to vector<1x8x8xf32>
    %35 = vector.broadcast %34 : vector<1x8x8xf32> to vector<8x8x8xf32>
    %36 = arith.addf %33, %35 : vector<8x8x8xf32>
    %37 = vector.shape_cast %21 : vector<8x8x8xf32> to vector<1x8x8x8xf32>
    %38 = vector.broadcast %28 : vector<8x1x8x8xf32> to vector<8x8x8x8xf32>
    %39 = vector.broadcast %37 : vector<1x8x8x8xf32> to vector<8x8x8x8xf32>
    %40 = arith.mulf %38, %39 : vector<8x8x8x8xf32>
    %cst_34 = arith.constant dense<0.000000e+00> : vector<8x8x8xf32>
    %41 = vector.multi_reduction <add>, %40, %cst_34 [2] : vector<8x8x8x8xf32> to vector<8x8x8xf32>
    %42 = vector.shape_cast %6 : vector<8x8xf32> to vector<1x8x8xf32>
    %43 = vector.broadcast %42 : vector<1x8x8xf32> to vector<8x8x8xf32>
    %44 = arith.addf %41, %43 : vector<8x8x8xf32>
    %cst_35 = arith.constant dense<0.000000e+00> : vector<8x8xf32>
    %45 = vector.multi_reduction <add>, %36, %cst_35 [2] : vector<8x8x8xf32> to vector<8x8xf32>
    %46 = vector.shape_cast %45 : vector<8x8xf32> to vector<8x8x1xf32>
    %cst_36 = arith.constant 8.000000e+00 : f32
    %47 = vector.broadcast %cst_36 : f32 to vector<8x8x1xf32>
    %48 = arith.divf %46, %47 : vector<8x8x1xf32>
    %49 = vector.broadcast %48 : vector<8x8x1xf32> to vector<8x8x8xf32>
    %50 = arith.subf %36, %49 : vector<8x8x8xf32>
    %51 = arith.mulf %50, %50 : vector<8x8x8xf32>
    %cst_37 = arith.constant dense<0.000000e+00> : vector<8x8xf32>
    %52 = vector.multi_reduction <add>, %51, %cst_37 [2] : vector<8x8x8xf32> to vector<8x8xf32>
    %53 = vector.shape_cast %52 : vector<8x8xf32> to vector<8x8x1xf32>
    %cst_38 = arith.constant 8.000000e+00 : f32
    %54 = vector.broadcast %cst_38 : f32 to vector<8x8x1xf32>
    %55 = arith.divf %53, %54 : vector<8x8x1xf32>
    %cst_39 = arith.constant 9.99999974E-6 : f32
    %56 = vector.broadcast %cst_39 : f32 to vector<8x8x1xf32>
    %57 = arith.addf %55, %56 : vector<8x8x1xf32>
    %58 = math.rsqrt %57 : vector<8x8x1xf32>
    %59 = vector.broadcast %58 : vector<8x8x1xf32> to vector<8x8x8xf32>
    %60 = arith.mulf %50, %59 : vector<8x8x8xf32>
    %61 = vector.broadcast %8 : vector<1x1x8xf32> to vector<8x8x8xf32>
    %62 = arith.mulf %60, %61 : vector<8x8x8xf32>
    %63 = vector.broadcast %10 : vector<1x1x8xf32> to vector<8x8x8xf32>
    %64 = arith.addf %62, %63 : vector<8x8x8xf32>
    %65 = vector.shape_cast %64 : vector<8x8x8xf32> to vector<64x8xf32>
    %cst_40 = arith.constant dense<0.000000e+00> : vector<8x8xf32>
    %66 = vector.multi_reduction <add>, %44, %cst_40 [2] : vector<8x8x8xf32> to vector<8x8xf32>
    %67 = vector.shape_cast %66 : vector<8x8xf32> to vector<8x8x1xf32>
    %cst_41 = arith.constant 8.000000e+00 : f32
    %68 = vector.broadcast %cst_41 : f32 to vector<8x8x1xf32>
    %69 = arith.divf %67, %68 : vector<8x8x1xf32>
    %70 = vector.broadcast %69 : vector<8x8x1xf32> to vector<8x8x8xf32>
    %71 = arith.subf %44, %70 : vector<8x8x8xf32>
    %72 = arith.mulf %71, %71 : vector<8x8x8xf32>
    %cst_42 = arith.constant dense<0.000000e+00> : vector<8x8xf32>
    %73 = vector.multi_reduction <add>, %72, %cst_42 [2] : vector<8x8x8xf32> to vector<8x8xf32>
    %74 = vector.shape_cast %73 : vector<8x8xf32> to vector<8x8x1xf32>
    %cst_43 = arith.constant 8.000000e+00 : f32
    %75 = vector.broadcast %cst_43 : f32 to vector<8x8x1xf32>
    %76 = arith.divf %74, %75 : vector<8x8x1xf32>
    %cst_44 = arith.constant 9.99999974E-6 : f32
    %77 = vector.broadcast %cst_44 : f32 to vector<8x8x1xf32>
    %78 = arith.addf %76, %77 : vector<8x8x1xf32>
    %79 = math.rsqrt %78 : vector<8x8x1xf32>
    %80 = vector.broadcast %79 : vector<8x8x1xf32> to vector<8x8x8xf32>
    %81 = arith.mulf %71, %80 : vector<8x8x8xf32>
    %82 = vector.broadcast %8 : vector<1x1x8xf32> to vector<8x8x8xf32>
    %83 = arith.mulf %81, %82 : vector<8x8x8xf32>
    %84 = vector.broadcast %10 : vector<1x1x8xf32> to vector<8x8x8xf32>
    %85 = arith.addf %83, %84 : vector<8x8x8xf32>
    %86 = vector.shape_cast %85 : vector<8x8x8xf32> to vector<64x8xf32>
    %87 = arith.truncf %65 : vector<64x8xf32> to vector<64x8xbf16>
    %cst_45 = arith.constant dense<0.000000e+00> : vector<64x64xf32>
    %88 = tpu.matmul %87, %15, %cst_45 {dimension_numbers = #tpu.dot_dimension_numbers<[1], [0], [0], [1], [0, 0, 1, 1], [], []>} : vector<64x8xbf16>, vector<8x64xbf16>, vector<64x64xf32> -> vector<64x64xf32>
    %89 = arith.truncf %86 : vector<64x8xf32> to vector<64x8xbf16>
    %cst_46 = arith.constant dense<0.000000e+00> : vector<64x64xf32>
    %90 = tpu.matmul %89, %16, %cst_46 {dimension_numbers = #tpu.dot_dimension_numbers<[1], [0], [0], [1], [0, 0, 1, 1], [], []>} : vector<64x8xbf16>, vector<8x64xbf16>, vector<64x64xf32> -> vector<64x64xf32>
    %91 = vector.shape_cast %88 : vector<64x64xf32> to vector<8x8x1x64xf32>
    %92 = vector.shape_cast %90 : vector<64x64xf32> to vector<8x1x8x64xf32>
    %93 = vector.broadcast %91 : vector<8x8x1x64xf32> to vector<8x8x8x64xf32>
    %94 = vector.broadcast %92 : vector<8x1x8x64xf32> to vector<8x8x8x64xf32>
    %95 = arith.mulf %93, %94 : vector<8x8x8x64xf32>
    %96 = vector.shape_cast %95 : vector<8x8x8x64xf32> to vector<512x64xf32>
    %97 = arith.truncf %96 : vector<512x64xf32> to vector<512x64xbf16>
    %cst_47 = arith.constant dense<0.000000e+00> : vector<512x16xf32>
    %98 = tpu.matmul %97, %17, %cst_47 {dimension_numbers = #tpu.dot_dimension_numbers<[1], [0], [0], [1], [0, 0, 1, 1], [], []>} : vector<512x64xbf16>, vector<64x16xbf16>, vector<512x16xf32> -> vector<512x16xf32>
    %99 = vector.broadcast %11 : vector<1x16xf32> to vector<512x16xf32>
    %100 = arith.addf %98, %99 : vector<512x16xf32>
    %cst_48 = arith.constant 0.000000e+00 : f32
    %101 = vector.broadcast %cst_48 : f32 to vector<512x16xf32>
    %102 = arith.maximumf %100, %101 : vector<512x16xf32>
    %103 = vector.broadcast %12 : vector<1x16xf32> to vector<512x16xf32>
    %104 = arith.mulf %102, %103 : vector<512x16xf32>
    %cst_49 = arith.constant dense<0.000000e+00> : vector<512xf32>
    %105 = vector.multi_reduction <add>, %104, %cst_49 [1] : vector<512x16xf32> to vector<512xf32>
    %106 = vector.shape_cast %105 : vector<512xf32> to vector<512x1xf32>
    %107 = vector.broadcast %13 : vector<1x1xf32> to vector<512x1xf32>
    %108 = arith.addf %106, %107 : vector<512x1xf32>
    %109 = tpu.iota {dimensions = array<i32: 0>} : vector<8x8xi32>
    %110 = tpu.iota {dimensions = array<i32: 1>} : vector<8x8xi32>
    %111 = arith.cmpi eq, %109, %110 : vector<8x8xi32>
    %112 = arith.extui %111 : vector<8x8xi1> to vector<8x8xi32>
    %113 = arith.sitofp %112 : vector<8x8xi32> to vector<8x8xf32>
    %114 = vector.shape_cast %108 : vector<512x1xf32> to vector<64x8x1xf32>
    %115 = vector.shape_cast %113 : vector<8x8xf32> to vector<1x8x8xf32>
    %116 = vector.broadcast %114 : vector<64x8x1xf32> to vector<64x8x8xf32>
    %117 = vector.broadcast %115 : vector<1x8x8xf32> to vector<64x8x8xf32>
    %118 = arith.mulf %116, %117 : vector<64x8x8xf32>
    %cst_50 = arith.constant dense<0.000000e+00> : vector<64x8xf32>
    %119 = vector.multi_reduction <add>, %118, %cst_50 [1] : vector<64x8x8xf32> to vector<64x8xf32>
    %cst_51 = arith.constant dense<0xFF800000> : vector<64xf32>
    %120 = vector.multi_reduction <maximumf>, %119, %cst_51 [1] : vector<64x8xf32> to vector<64xf32>
    %121 = vector.shape_cast %120 : vector<64xf32> to vector<64x1xf32>
    %122 = vector.broadcast %121 : vector<64x1xf32> to vector<64x8xf32>
    %123 = arith.subf %119, %122 : vector<64x8xf32>
    %124 = math.exp %123 : vector<64x8xf32>
    %cst_52 = arith.constant dense<0.000000e+00> : vector<64xf32>
    %125 = vector.multi_reduction <add>, %124, %cst_52 [1] : vector<64x8xf32> to vector<64xf32>
    %126 = vector.shape_cast %125 : vector<64xf32> to vector<64x1xf32>
    %127 = vector.broadcast %126 : vector<64x1xf32> to vector<64x8xf32>
    %128 = arith.divf %124, %127 : vector<64x8xf32>
    %cst_53 = arith.constant dense<0.000000e+00> : vector<64xf32>
    %129 = vector.multi_reduction <add>, %128, %cst_53 [1] : vector<64x8xf32> to vector<64xf32>
    %130 = vector.shape_cast %129 : vector<64xf32> to vector<64x1xf32>
    %131 = vector.shape_cast %130 : vector<64x1xf32> to vector<8x8x1xf32>
    %132 = vector.shape_cast %113 : vector<8x8xf32> to vector<1x8x8xf32>
    %133 = vector.broadcast %131 : vector<8x8x1xf32> to vector<8x8x8xf32>
    %134 = vector.broadcast %132 : vector<1x8x8xf32> to vector<8x8x8xf32>
    %135 = arith.mulf %133, %134 : vector<8x8x8xf32>
    %cst_54 = arith.constant dense<0.000000e+00> : vector<8x8xf32>
    %136 = vector.multi_reduction <add>, %135, %cst_54 [1] : vector<8x8x8xf32> to vector<8x8xf32>
    %cst_55 = arith.constant dense<0.000000e+00> : vector<8x64xf32>
    %137 = tpu.matmul %136, %2, %cst_55 {dimension_numbers = #tpu.dot_dimension_numbers<[1], [0], [0], [1], [0, 0, 1, 1], [], []>} : vector<8x8xf32>, vector<8x64xf32>, vector<8x64xf32> -> vector<8x64xf32>
    %cst_56 = arith.constant dense<0.000000e+00> : vector<8x64xf32>
    %138 = tpu.matmul %27, %3, %cst_56 {dimension_numbers = #tpu.dot_dimension_numbers<[1], [0], [0], [1], [0, 0, 1, 1], [], []>} : vector<8x8xf32>, vector<8x64xf32>, vector<8x64xf32> -> vector<8x64xf32>
    %139 = arith.mulf %137, %138 : vector<8x64xf32>
    %c0_57 = arith.constant 0 : index
    %c0_58 = arith.constant 0 : index
    %140 = vector.load %arg6[%c0_57, %c0_58] : memref<8x64xf32, #tpu.memory_space<vmem>>, vector<8x64xf32>
    tpu.vector_store %arg6[%c0_57, %c0_58], %139 {strides = array<i32>} : memref<8x64xf32, #tpu.memory_space<vmem>>, vector<8x64xf32>,
    return
  }
  func.func @transform_0(%arg0: i32) -> (i32, i32, i32) {
    %c0_i32 = arith.constant 0 : i32
    %c0_i32_0 = arith.constant 0 : i32
    %c0_i32_1 = arith.constant 0 : i32
    return %arg0, %c0_i32, %c0_i32_0 : i32, i32, i32
  }
  func.func @transform_1(%arg0: i32) -> (i32, i32, i32) {
    %c0_i32 = arith.constant 0 : i32
    %c0_i32_0 = arith.constant 0 : i32
    %c0_i32_1 = arith.constant 0 : i32
    return %arg0, %c0_i32, %c0_i32_0 : i32, i32, i32
  }
  func.func @transform_2(%arg0: i32) -> (i32, i32, i32, i32) {
    %c0_i32 = arith.constant 0 : i32
    %c0_i32_0 = arith.constant 0 : i32
    %c0_i32_1 = arith.constant 0 : i32
    %c0_i32_2 = arith.constant 0 : i32
    %c0_i32_3 = arith.constant 0 : i32
    return %c0_i32, %c0_i32_0, %c0_i32_1, %c0_i32_2 : i32, i32, i32, i32
  }
  func.func @transform_3(%arg0: i32) -> (i32, i32) {
    %c0_i32 = arith.constant 0 : i32
    %c0_i32_0 = arith.constant 0 : i32
    %c0_i32_1 = arith.constant 0 : i32
    return %c0_i32, %c0_i32_0 : i32, i32
  }
  func.func @transform_4(%arg0: i32) -> (i32, i32) {
    %c0_i32 = arith.constant 0 : i32
    %c0_i32_0 = arith.constant 0 : i32
    %c0_i32_1 = arith.constant 0 : i32
    return %c0_i32, %c0_i32_0 : i32, i32
  }
  func.func @transform_5(%arg0: i32) -> (i32, i32) {
    %c0_i32 = arith.constant 0 : i32
    %c0_i32_0 = arith.constant 0 : i32
    return %arg0, %c0_i32 : i32, i32
  }
}

</mosaic_0001>

<llo_original>
// kernel: tpu_custom_call.1
$region0: #{tpu_custom_call.1}
  #allocation0 [shape = 'u32[]', space=smem, size = 0x4, offset = 0x4, fixed_abs, tag = 'smem constant byte address 0x4 - core index']
  #allocation1 [shape = 'u32[72,128]{1,0:T(1,128)}', space=vmem, size = 0x9000, scoped, tag = 'internal scratch']
  %s0 = inlined_call_operand.hbm [shape: f32[8,8,8], index: 0, kind: input, shape index: {}]
  %s1 = inlined_call_operand.hbm [shape: f32[8,8,8], index: 1, kind: input, shape index: {}]
  %s2 = inlined_call_operand.hbm [shape: f32[2,8,8,8], index: 2, kind: input, shape index: {}]
  %s3 = inlined_call_operand.hbm [shape: bf16[72,128], index: 3, kind: input, shape index: {}]
  %s4 = inlined_call_operand.hbm [shape: f32[16,128], index: 4, kind: input, shape index: {}]
  %s5 = inlined_call_operand.hbm [shape: f32[8,64], index: 5, kind: output, shape index: {}]
  %s6 = sld [smem:[#allocation0]]
  $region50: #{tpu_custom_call.1} parent=0
    _
  %s8 = ssub.s32 1, %s6
  %s9 = scalar_select 0, %s8, %s6
  $region1: #{tpu_custom_call.1} parent=0
    #allocation2 [shape = 'u8[32768]{0}', space=vmem, size = 0x8000, scoped, tag = 'input window, operand 0, single buffered']
    #allocation3 [shape = 's32[1]{0}', space=sflag, size = 0x4, scoped, tag = 'scoped memory for tpu_custom_call.1']
    #allocation4 [shape = 's32[1]{0}', space=sflag, size = 0x4, scoped, tag = 'scoped memory for tpu_custom_call.1']
    #allocation5 [shape = 'u8[32768]{0}', space=vmem, size = 0x8000, scoped, tag = 'input window, operand 1, single buffered']
    #allocation6 [shape = 's32[1]{0}', space=sflag, size = 0x4, scoped, tag = 'scoped memory for tpu_custom_call.1']
    #allocation7 [shape = 'u8[65536]{0}', space=vmem, size = 0x10000, scoped, tag = 'input window, operand 2, single buffered']
    #allocation8 [shape = 'u8[18432]{0}', space=vmem, size = 0x4800, scoped, tag = 'input window, operand 3, single buffered']
    #allocation9 [shape = 's32[1]{0}', space=sflag, size = 0x4, scoped, tag = 'scoped memory for tpu_custom_call.1']
    #allocation10 [shape = 'u8[8192]{0}', space=vmem, size = 0x2000, scoped, tag = 'input window, operand 4, single buffered']
    #allocation11 [shape = 'u8[4096]{0}', space=vmem, size = 0x1000, scoped, tag = 'output window, operand 0, single buffered']
    %10 = vsyncpa [#allocation3], 0
    %11 = vsyncpa [#allocation6], 0
    %12 = vsyncpa [#allocation9], 0
    %13 = vsyncpa [#allocation4], 0
    // Predicated region
    $region2: #{tpu_custom_call.1} parent=1 // pred_check
      _
    $region3: #{tpu_custom_call.1} parent=1 // pred_check_branch
      %15 = sbr.rel (0) target = $region5
    $region4: #{tpu_custom_call.1} parent=1 // pred_region
      %17 = vsyncadd [#allocation3], 0
      %s18 = sshll.u32 %s0, 4
      %s19 = int_to_ptr.hbm [resolvable:$true] %s18
      %s20 = sshll.u32 [#allocation2], 4
      %s21 = int_to_ptr.vmem [resolvable:$true] %s20
      %26 = dma.hbm_to_vmem [thread:$0]  %s19, 1024, %s21, [#allocation3], 128, 128, 8
    $region5: #{tpu_custom_call.1} parent=1 // pred_fallthru
      _
    // Predicated region
    $region6: #{tpu_custom_call.1} parent=1 // pred_check
      _
    $region7: #{tpu_custom_call.1} parent=1 // pred_check_branch
      %28 = sbr.rel (0) target = $region9
    $region8: #{tpu_custom_call.1} parent=1 // pred_region
      %30 = vsyncadd [#allocation6], 0
      %s31 = sshll.u32 %s1, 4
      %s32 = int_to_ptr.hbm [resolvable:$true] %s31
      %s33 = sshll.u32 [#allocation5], 4
      %s34 = int_to_ptr.vmem [resolvable:$true] %s33
      %39 = dma.hbm_to_vmem [thread:$0]  %s32, 1024, %s34, [#allocation6], 128, 128, 8
    $region9: #{tpu_custom_call.1} parent=1 // pred_fallthru
      _
    // Predicated region
    $region10: #{tpu_custom_call.1} parent=1 // pred_check
      _
    $region11: #{tpu_custom_call.1} parent=1 // pred_check_branch
      %41 = sbr.rel (0) target = $region13
    $region12: #{tpu_custom_call.1} parent=1 // pred_region
      %43 = vsyncadd [#allocation6], 0
      %s44 = sshll.u32 %s2, 4
      %s45 = int_to_ptr.hbm [resolvable:$true] %s44
      %s46 = sshll.u32 [#allocation7], 4
      %s47 = int_to_ptr.vmem [resolvable:$true] %s46
      %52 = dma.hbm_to_vmem [thread:$0]  %s45, 2048, %s47, [#allocation6], 128, 128, 8
    $region13: #{tpu_custom_call.1} parent=1 // pred_fallthru
      _
    // Predicated region
    $region14: #{tpu_custom_call.1} parent=1 // pred_check
      _
    $region15: #{tpu_custom_call.1} parent=1 // pred_check_branch
      %54 = sbr.rel (0) target = $region17
    $region16: #{tpu_custom_call.1} parent=1 // pred_region
      %56 = vsyncadd [#allocation9], 0
      %s57 = sshll.u32 %s3, 4
      %s58 = int_to_ptr.hbm [resolvable:$true] %s57
      %s59 = sshll.u32 [#allocation8], 4
      %s60 = int_to_ptr.vmem [resolvable:$true] %s59
      %65 = dma.hbm_to_vmem [thread:$0]  %s58, 576, %s60, [#allocation9], 64, 64, 4
    $region17: #{tpu_custom_call.1} parent=1 // pred_fallthru
      _
    // Predicated region
    $region18: #{tpu_custom_call.1} parent=1 // pred_check
      _
    $region19: #{tpu_custom_call.1} parent=1 // pred_check_branch
      %67 = sbr.rel (0) target = $region21
    $region20: #{tpu_custom_call.1} parent=1 // pred_region
      %69 = vsyncadd [#allocation9], 0
      %s70 = sshll.u32 %s4, 4
      %s71 = int_to_ptr.hbm [resolvable:$true] %s70
      %s72 = sshll.u32 [#allocation10], 4
      %s73 = int_to_ptr.vmem [resolvable:$true] %s72
      %78 = dma.hbm_to_vmem [thread:$0]  %s71, 256, %s73, [#allocation9], 128, 128, 8
    $region21: #{tpu_custom_call.1} parent=1 // pred_fallthru
      _
    // Predicated region
    $region22: #{tpu_custom_call.1} parent=1 // pred_check
      _
    $region23: #{tpu_custom_call.1} parent=1 // pred_check_branch
      %80 = sbr.rel (0) target = $region25
    $region24: #{tpu_custom_call.1} parent=1 // pred_region
      %82 = dma.done [#allocation3], 1024
    $region25: #{tpu_custom_call.1} parent=1 // pred_fallthru
      _
    // Predicated region
    $region26: #{tpu_custom_call.1} parent=1 // pred_check
      _
    $region27: #{tpu_custom_call.1} parent=1 // pred_check_branch
      %84 = sbr.rel (0) target = $region29
    $region28: #{tpu_custom_call.1} parent=1 // pred_region
      %86 = dma.done [#allocation6], 1024
    $region29: #{tpu_custom_call.1} parent=1 // pred_fallthru
      _
    // Predicated region
    $region30: #{tpu_custom_call.1} parent=1 // pred_check
      _
    $region31: #{tpu_custom_call.1} parent=1 // pred_check_branch
      %88 = sbr.rel (0) target = $region33
    $region32: #{tpu_custom_call.1} parent=1 // pred_region
      %90 = dma.done [#allocation6], 2048
    $region33: #{tpu_custom_call.1} parent=1 // pred_fallthru
      _
    // Predicated region
    $region34: #{tpu_custom_call.1} parent=1 // pred_check
      _
    $region35: #{tpu_custom_call.1} parent=1 // pred_check_branch
      %92 = sbr.rel (0) target = $region37
    $region36: #{tpu_custom_call.1} parent=1 // pred_region
      %94 = dma.done [#allocation9], 576
    $region37: #{tpu_custom_call.1} parent=1 // pred_fallthru
      _
    // Predicated region
    $region38: #{tpu_custom_call.1} parent=1 // pred_check
      _
    $region39: #{tpu_custom_call.1} parent=1 // pred_check_branch
      %96 = sbr.rel (0) target = $region41
    $region40: #{tpu_custom_call.1} parent=1 // pred_region
      %98 = dma.done [#allocation9], 256
    $region41: #{tpu_custom_call.1} parent=1 // pred_fallthru
      _
    %v100 = vld [vmem:[#allocation5] sm:$0xff]
    %v101 = vld [vmem:[#allocation5 + $0x8] sm:$0xff]
    %v102 = vld [vmem:[#allocation5 + $0x10] sm:$0xff]
    %v103 = vld [vmem:[#allocation5 + $0x18] sm:$0xff]
    %v104 = vld [vmem:[#allocation5 + $0x20] sm:$0xff]
    %v105 = vld [vmem:[#allocation5 + $0x28] sm:$0xff]
    %v106 = vld [vmem:[#allocation5 + $0x30] sm:$0xff]
    %v107 = vld [vmem:[#allocation5 + $0x38] sm:$0xff]
    %v108 = vld [vmem:[#allocation2] sm:$0xff]
    %v109 = vld [vmem:[#allocation2 + $0x8] sm:$0xff]
    %v110 = vld [vmem:[#allocation2 + $0x10] sm:$0xff]
    %v111 = vld [vmem:[#allocation2 + $0x18] sm:$0xff]
    %v112 = vld [vmem:[#allocation2 + $0x20] sm:$0xff]
    %v113 = vld [vmem:[#allocation2 + $0x28] sm:$0xff]
    %v114 = vld [vmem:[#allocation2 + $0x30] sm:$0xff]
    %v115 = vld [vmem:[#allocation2 + $0x38] sm:$0xff]
    %v116 = vld [vmem:[#allocation10] sm:$0xff]
    %v117 = vld [vmem:[#allocation10 + $0x8] sm:$0xff]
    %v118 = vld [vmem:[#allocation10 + $0x8] sm:$0x1]
    %v119 = vld [vmem:[#allocation8] sm:$0xf]
    %v120 = vld [vmem:[#allocation8 + $0x4] sm:$0xf]
    %v121 = vld [vmem:[#allocation8 + $0x8] sm:$0xf]
    %v122 = vld [vmem:[#allocation8 + $0xc] sm:$0xf]
    %v123 = vld [vmem:[#allocation8 + $0x10] sm:$0xf]
    %v124 = vld [vmem:[#allocation8 + $0x14] sm:$0xf]
    %v125 = vld [vmem:[#allocation8 + $0x18] sm:$0xf]
    %v126 = vld [vmem:[#allocation8 + $0x1c] sm:$0xf]
    %v127 = vld [vmem:[#allocation8 + $0x20] sm:$0xf]
    %v128 = vld [vmem:[#allocation7] sm:$0xff]
    %v129 = vld [vmem:[#allocation7 + $0x8] sm:$0xff]
    %v130 = vld [vmem:[#allocation7 + $0x10] sm:$0xff]
    %v131 = vld [vmem:[#allocation7 + $0x18] sm:$0xff]
    %v132 = vld [vmem:[#allocation7 + $0x20] sm:$0xff]
    %v133 = vld [vmem:[#allocation7 + $0x28] sm:$0xff]
    %v134 = vld [vmem:[#allocation7 + $0x30] sm:$0xff]
    %v135 = vld [vmem:[#allocation7 + $0x38] sm:$0xff]
    %s136 = scalar_lea.vmem [#allocation7], 64
    %v137 = vld [vmem:[%s136] sm:$0xff]
    %v138 = vld [vmem:[%s136 + $0x8] sm:$0xff]
    %v139 = vld [vmem:[%s136 + $0x10] sm:$0xff]
    %v140 = vld [vmem:[%s136 + $0x18] sm:$0xff]
    %v141 = vld [vmem:[%s136 + $0x20] sm:$0xff]
    %v142 = vld [vmem:[%s136 + $0x28] sm:$0xff]
    %v143 = vld [vmem:[%s136 + $0x30] sm:$0xff]
    %v144 = vld [vmem:[%s136 + $0x38] sm:$0xff]
    %vm145 = vcmask 64512
    %v146 = vsel %vm145, %v108, 0.0
    %v147 = vrot.slane %v146, 4
    %v148 = vadd.f32 %v146, %v147
    %v149 = vrot.slane %v148, 2
    %v150 = vadd.f32 %v148, %v149
    %v151 = vrot.slane %v150, 1
    %v152 = vadd.f32 %v150, %v151
    %v153 = vsel %vm145, %v109, 0.0
    %v154 = vrot.slane %v153, 4
    %v155 = vadd.f32 %v153, %v154
    %v156 = vrot.slane %v155, 2
    %v157 = vadd.f32 %v155, %v156
    %v158 = vrot.slane %v157, 1
    %v159 = vadd.f32 %v157, %v158
    %v160 = vsel %vm145, %v110, 0.0
    %v161 = vrot.slane %v160, 4
    %v162 = vadd.f32 %v160, %v161
    %v163 = vrot.slane %v162, 2
    %v164 = vadd.f32 %v162, %v163
    %v165 = vrot.slane %v164, 1
    %v166 = vadd.f32 %v164, %v165
    %v167 = vsel %vm145, %v111, 0.0
    %v168 = vrot.slane %v167, 4
    %v169 = vadd.f32 %v167, %v168
    %v170 = vrot.slane %v169, 2
    %v171 = vadd.f32 %v169, %v170
    %v172 = vrot.slane %v171, 1
    %v173 = vadd.f32 %v171, %v172
    %v174 = vsel %vm145, %v112, 0.0
    %v175 = vrot.slane %v174, 4
    %v176 = vadd.f32 %v174, %v175
    %v177 = vrot.slane %v176, 2
    %v178 = vadd.f32 %v176, %v177
    %v179 = vrot.slane %v178, 1
    %v180 = vadd.f32 %v178, %v179
    %v181 = vsel %vm145, %v113, 0.0
    %v182 = vrot.slane %v181, 4
    %v183 = vadd.f32 %v181, %v182
    %v184 = vrot.slane %v183, 2
    %v185 = vadd.f32 %v183, %v184
    %v186 = vrot.slane %v185, 1
    %v187 = vadd.f32 %v185, %v186
    %v188 = vsel %vm145, %v114, 0.0
    %v189 = vrot.slane %v188, 4
    %v190 = vadd.f32 %v188, %v189
    %v191 = vrot.slane %v190, 2
    %v192 = vadd.f32 %v190, %v191
    %v193 = vrot.slane %v192, 1
    %v194 = vadd.f32 %v192, %v193
    %v195 = vsel %vm145, %v115, 0.0
    %v196 = vrot.slane %v195, 4
    %v197 = vadd.f32 %v195, %v196
    %v198 = vrot.slane %v197, 2
    %v199 = vadd.f32 %v197, %v198
    %v200 = vrot.slane %v199, 1
    %v201 = vadd.f32 %v199, %v200
    %v202 = vmul.f32 %v118, 8.0
    %v203 = vperm.slane %v202, 0
    %vm212 = vcmask 1041409
    %v213 = vsel %vm212, %v159, %v152
    %vm214 = vcmask 1042434
    %v215 = vsel %vm214, %v166, %v213
    %vm216 = vcmask 1043459
    %v217 = vsel %vm216, %v173, %v215
    %vm218 = vcmask 1044484
    %v219 = vsel %vm218, %v180, %v217
    %vm220 = vcmask 1045509
    %v221 = vsel %vm220, %v187, %v219
    %vm222 = vcmask 1046534
    %v223 = vsel %vm222, %v194, %v221
    %vm224 = vcmask 1047559
    %v225 = vsel %vm224, %v201, %v223
    %227 = vrot.lane.b32.xlu0 %v203, 71
    %v228 = vpop.permute.xlu0 %227
    %v230 = vsel %vm145, %v225, 0
    %232 = vmatpush.msra.mxu0 0.0
    %233 = vmatpush.msra.mxu0 0.0
    %234 = vmatpush.msra.mxu0 0.0
    %235 = vmatpush.msra.mxu0 0.0
    %236 = vmatpush.msra.mxu0 0.0
    %237 = vmatpush.msra.mxu0 0.0
    %238 = vmatpush.msra.mxu0 0.0
    %239 = vmatpush.msra.mxu0 0.0
    %240 = vmatpush.msra.mxu0 0.0
    %241 = vmatpush.msra.mxu0 0.0
    %242 = vmatpush.msra.mxu0 0.0
    %243 = vmatpush.msra.mxu0 0.0
    %244 = vmatpush.msra.mxu0 0.0
    %245 = vmatpush.msra.mxu0 0.0
    %246 = vmatpush.msra.mxu0 0.0
    %247 = vmatpush.msra.mxu0 %v117
    %248 = vmatmul.f32.gmra.mxu0 %v230
    %v249 = vpop.f32.mrf.mxu0
    %v250 = vadd.f32 %v228, %v249
    %251 = vdwg.mxu0
    %v252 = vmul.f32 %v100, %v128
    %v253 = vmul.f32 %v100, %v129
    %v254 = vmul.f32 %v100, %v130
    %v255 = vmul.f32 %v100, %v131
    %v256 = vmul.f32 %v100, %v132
    %v257 = vmul.f32 %v100, %v133
    %v258 = vmul.f32 %v100, %v134
    %v259 = vmul.f32 %v100, %v135
    %v260 = vmul.f32 %v101, %v128
    %v261 = vmul.f32 %v101, %v129
    %v262 = vmul.f32 %v101, %v130
    %v263 = vmul.f32 %v101, %v131
    %v264 = vmul.f32 %v101, %v132
    %v265 = vmul.f32 %v101, %v133
    %v266 = vmul.f32 %v101, %v134
    %v267 = vmul.f32 %v101, %v135
    %v268 = vmul.f32 %v102, %v128
    %v269 = vmul.f32 %v102, %v129
    %v270 = vmul.f32 %v102, %v130
    %v271 = vmul.f32 %v102, %v131
    %v272 = vmul.f32 %v102, %v132
    %v273 = vmul.f32 %v102, %v133
    %v274 = vmul.f32 %v102, %v134
    %v275 = vmul.f32 %v102, %v135
    %v276 = vmul.f32 %v103, %v128
    %v277 = vmul.f32 %v103, %v129
    %v278 = vmul.f32 %v103, %v130
    %v279 = vmul.f32 %v103, %v131
    %v280 = vmul.f32 %v103, %v132
    %v281 = vmul.f32 %v103, %v133
    %v282 = vmul.f32 %v103, %v134
    %v283 = vmul.f32 %v103, %v135
    %v284 = vmul.f32 %v104, %v128
    %v285 = vmul.f32 %v104, %v129
    %v286 = vmul.f32 %v104, %v130
    %v287 = vmul.f32 %v104, %v131
    %v288 = vmul.f32 %v104, %v132
    %v289 = vmul.f32 %v104, %v133
    %v290 = vmul.f32 %v104, %v134
    %v291 = vmul.f32 %v104, %v135
    %v292 = vmul.f32 %v105, %v128
    %v293 = vmul.f32 %v105, %v129
    %v294 = vmul.f32 %v105, %v130
    %v295 = vmul.f32 %v105, %v131
    %v296 = vmul.f32 %v105, %v132
    %v297 = vmul.f32 %v105, %v133
    %v298 = vmul.f32 %v105, %v134
    %v299 = vmul.f32 %v105, %v135
    %v300 = vmul.f32 %v106, %v128
    %v301 = vmul.f32 %v106, %v129
    %v302 = vmul.f32 %v106, %v130
    %v303 = vmul.f32 %v106, %v131
    %v304 = vmul.f32 %v106, %v132
    %v305 = vmul.f32 %v106, %v133
    %v306 = vmul.f32 %v106, %v134
    %v307 = vmul.f32 %v106, %v135
    %v308 = vmul.f32 %v107, %v128
    %v309 = vmul.f32 %v107, %v129
    %v310 = vmul.f32 %v107, %v130
    %v311 = vmul.f32 %v107, %v131
    %v312 = vmul.f32 %v107, %v132
    %v313 = vmul.f32 %v107, %v133
    %v314 = vmul.f32 %v107, %v134
    %v315 = vmul.f32 %v107, %v135
    %v316 = vsel %vm145, %v252, 0.0
    %v317 = vrot.slane %v316, 4
    %v318 = vadd.f32 %v316, %v317
    %v319 = vrot.slane %v318, 2
    %v320 = vadd.f32 %v318, %v319
    %v321 = vrot.slane %v320, 1
    %v322 = vadd.f32 %v320, %v321
    %v323 = vsel %vm145, %v253, 0.0
    %v324 = vrot.slane %v323, 4
    %v325 = vadd.f32 %v323, %v324
    %v326 = vrot.slane %v325, 2
    %v327 = vadd.f32 %v325, %v326
    %v328 = vrot.slane %v327, 1
    %v329 = vadd.f32 %v327, %v328
    %v330 = vsel %vm145, %v254, 0.0
    %v331 = vrot.slane %v330, 4
    %v332 = vadd.f32 %v330, %v331
    %v333 = vrot.slane %v332, 2
    %v334 = vadd.f32 %v332, %v333
    %v335 = vrot.slane %v334, 1
    %v336 = vadd.f32 %v334, %v335
    %v337 = vsel %vm145, %v255, 0.0
    %v338 = vrot.slane %v337, 4
    %v339 = vadd.f32 %v337, %v338
    %v340 = vrot.slane %v339, 2
    %v341 = vadd.f32 %v339, %v340
    %v342 = vrot.slane %v341, 1
    %v343 = vadd.f32 %v341, %v342
    %v344 = vsel %vm145, %v256, 0.0
    %v345 = vrot.slane %v344, 4
    %v346 = vadd.f32 %v344, %v345
    %v347 = vrot.slane %v346, 2
    %v348 = vadd.f32 %v346, %v347
    %v349 = vrot.slane %v348, 1
    %v350 = vadd.f32 %v348, %v349
    %v351 = vsel %vm145, %v257, 0.0
    %v352 = vrot.slane %v351, 4
    %v353 = vadd.f32 %v351, %v352
    %v354 = vrot.slane %v353, 2
    %v355 = vadd.f32 %v353, %v354
    %v356 = vrot.slane %v355, 1
    %v357 = vadd.f32 %v355, %v356
    %v358 = vsel %vm145, %v258, 0.0
    %v359 = vrot.slane %v358, 4
    %v360 = vadd.f32 %v358, %v359
    %v361 = vrot.slane %v360, 2
    %v362 = vadd.f32 %v360, %v361
    %v363 = vrot.slane %v362, 1
    %v364 = vadd.f32 %v362, %v363
    %v365 = vsel %vm145, %v259, 0.0
    %v366 = vrot.slane %v365, 4
    %v367 = vadd.f32 %v365, %v366
    %v368 = vrot.slane %v367, 2
    %v369 = vadd.f32 %v367, %v368
    %v370 = vrot.slane %v369, 1
    %v371 = vadd.f32 %v369, %v370
    %v372 = vsel %vm145, %v260, 0.0
    %v373 = vrot.slane %v372, 4
    %v374 = vadd.f32 %v372, %v373
    %v375 = vrot.slane %v374, 2
    %v376 = vadd.f32 %v374, %v375
    %v377 = vrot.slane %v376, 1
    %v378 = vadd.f32 %v376, %v377
    %v379 = vsel %vm145, %v261, 0.0
    %v380 = vrot.slane %v379, 4
    %v381 = vadd.f32 %v379, %v380
    %v382 = vrot.slane %v381, 2
    %v383 = vadd.f32 %v381, %v382
    %v384 = vrot.slane %v383, 1
    %v385 = vadd.f32 %v383, %v384
    %v386 = vsel %vm145, %v262, 0.0
    %v387 = vrot.slane %v386, 4
    %v388 = vadd.f32 %v386, %v387
    %v389 = vrot.slane %v388, 2
    %v390 = vadd.f32 %v388, %v389
    %v391 = vrot.slane %v390, 1
    %v392 = vadd.f32 %v390, %v391
    %v393 = vsel %vm145, %v263, 0.0
    %v394 = vrot.slane %v393, 4
    %v395 = vadd.f32 %v393, %v394
    %v396 = vrot.slane %v395, 2
    %v397 = vadd.f32 %v395, %v396
    %v398 = vrot.slane %v397, 1
    %v399 = vadd.f32 %v397, %v398
    %v400 = vsel %vm145, %v264, 0.0
    %v401 = vrot.slane %v400, 4
    %v402 = vadd.f32 %v400, %v401
    %v403 = vrot.slane %v402, 2
    %v404 = vadd.f32 %v402, %v403
    %v405 = vrot.slane %v404, 1
    %v406 = vadd.f32 %v404, %v405
    %v407 = vsel %vm145, %v265, 0.0
    %v408 = vrot.slane %v407, 4
    %v409 = vadd.f32 %v407, %v408
    %v410 = vrot.slane %v409, 2
    %v411 = vadd.f32 %v409, %v410
    %v412 = vrot.slane %v411, 1
    %v413 = vadd.f32 %v411, %v412
    %v414 = vsel %vm145, %v266, 0.0
    %v415 = vrot.slane %v414, 4
    %v416 = vadd.f32 %v414, %v415
    %v417 = vrot.slane %v416, 2
    %v418 = vadd.f32 %v416, %v417
    %v419 = vrot.slane %v418, 1
    %v420 = vadd.f32 %v418, %v419
    %v421 = vsel %vm145, %v267, 0.0
    %v422 = vrot.slane %v421, 4
    %v423 = vadd.f32 %v421, %v422
    %v424 = vrot.slane %v423, 2
    %v425 = vadd.f32 %v423, %v424
    %v426 = vrot.slane %v425, 1
    %v427 = vadd.f32 %v425, %v426
    %v428 = vsel %vm145, %v268, 0.0
    %v429 = vrot.slane %v428, 4
    %v430 = vadd.f32 %v428, %v429
    %v431 = vrot.slane %v430, 2
    %v432 = vadd.f32 %v430, %v431
    %v433 = vrot.slane %v432, 1
    %v434 = vadd.f32 %v432, %v433
    %v435 = vsel %vm145, %v269, 0.0
    %v436 = vrot.slane %v435, 4
    %v437 = vadd.f32 %v435, %v436
    %v438 = vrot.slane %v437, 2
    %v439 = vadd.f32 %v437, %v438
    %v440 = vrot.slane %v439, 1
    %v441 = vadd.f32 %v439, %v440
    %v442 = vsel %vm145, %v270, 0.0
    %v443 = vrot.slane %v442, 4
    %v444 = vadd.f32 %v442, %v443
    %v445 = vrot.slane %v444, 2
    %v446 = vadd.f32 %v444, %v445
    %v447 = vrot.slane %v446, 1
    %v448 = vadd.f32 %v446, %v447
    %v449 = vsel %vm145, %v271, 0.0
    %v450 = vrot.slane %v449, 4
    %v451 = vadd.f32 %v449, %v450
    %v452 = vrot.slane %v451, 2
    %v453 = vadd.f32 %v451, %v452
    %v454 = vrot.slane %v453, 1
    %v455 = vadd.f32 %v453, %v454
    %v456 = vsel %vm145, %v272, 0.0
    %v457 = vrot.slane %v456, 4
    %v458 = vadd.f32 %v456, %v457
    %v459 = vrot.slane %v458, 2
    %v460 = vadd.f32 %v458, %v459
    %v461 = vrot.slane %v460, 1
    %v462 = vadd.f32 %v460, %v461
    %v463 = vsel %vm145, %v273, 0.0
    %v464 = vrot.slane %v463, 4
    %v465 = vadd.f32 %v463, %v464
    %v466 = vrot.slane %v465, 2
    %v467 = vadd.f32 %v465, %v466
    %v468 = vrot.slane %v467, 1
    %v469 = vadd.f32 %v467, %v468
    %v470 = vsel %vm145, %v274, 0.0
    %v471 = vrot.slane %v470, 4
    %v472 = vadd.f32 %v470, %v471
    %v473 = vrot.slane %v472, 2
    %v474 = vadd.f32 %v472, %v473
    %v475 = vrot.slane %v474, 1
    %v476 = vadd.f32 %v474, %v475
    %v477 = vsel %vm145, %v275, 0.0
    %v478 = vrot.slane %v477, 4
    %v479 = vadd.f32 %v477, %v478
    %v480 = vrot.slane %v479, 2
    %v481 = vadd.f32 %v479, %v480
    %v482 = vrot.slane %v481, 1
    %v483 = vadd.f32 %v481, %v482
    %v484 = vsel %vm145, %v276, 0.0
    %v485 = vrot.slane %v484, 4
    %v486 = vadd.f32 %v484, %v485
    %v487 = vrot.slane %v486, 2
    %v488 = vadd.f32 %v486, %v487
    %v489 = vrot.slane %v488, 1
    %v490 = vadd.f32 %v488, %v489
    %v491 = vsel %vm145, %v277, 0.0
    %v492 = vrot.slane %v491, 4
    %v493 = vadd.f32 %v491, %v492
    %v494 = vrot.slane %v493, 2
    %v495 = vadd.f32 %v493, %v494
    %v496 = vrot.slane %v495, 1
    %v497 = vadd.f32 %v495, %v496
    %v498 = vsel %vm145, %v278, 0.0
    %v499 = vrot.slane %v498, 4
    %v500 = vadd.f32 %v498, %v499
    %v501 = vrot.slane %v500, 2
    %v502 = vadd.f32 %v500, %v501
    %v503 = vrot.slane %v502, 1
    %v504 = vadd.f32 %v502, %v503
    %v505 = vsel %vm145, %v279, 0.0
    %v506 = vrot.slane %v505, 4
    %v507 = vadd.f32 %v505, %v506
    %v508 = vrot.slane %v507, 2
    %v509 = vadd.f32 %v507, %v508
    %v510 = vrot.slane %v509, 1
    %v511 = vadd.f32 %v509, %v510
    %v512 = vsel %vm145, %v280, 0.0
    %v513 = vrot.slane %v512, 4
    %v514 = vadd.f32 %v512, %v513
    %v515 = vrot.slane %v514, 2
    %v516 = vadd.f32 %v514, %v515
    %v517 = vrot.slane %v516, 1
    %v518 = vadd.f32 %v516, %v517
    %v519 = vsel %vm145, %v281, 0.0
    %v520 = vrot.slane %v519, 4
    %v521 = vadd.f32 %v519, %v520
    %v522 = vrot.slane %v521, 2
    %v523 = vadd.f32 %v521, %v522
    %v524 = vrot.slane %v523, 1
    %v525 = vadd.f32 %v523, %v524
    %v526 = vsel %vm145, %v282, 0.0
    %v527 = vrot.slane %v526, 4
    %v528 = vadd.f32 %v526, %v527
    %v529 = vrot.slane %v528, 2
    %v530 = vadd.f32 %v528, %v529
    %v531 = vrot.slane %v530, 1
    %v532 = vadd.f32 %v530, %v531
    %v533 = vsel %vm145, %v283, 0.0
    %v534 = vrot.slane %v533, 4
    %v535 = vadd.f32 %v533, %v534
    %v536 = vrot.slane %v535, 2
    %v537 = vadd.f32 %v535, %v536
    %v538 = vrot.slane %v537, 1
    %v539 = vadd.f32 %v537, %v538
    %v540 = vsel %vm145, %v284, 0.0
    %v541 = vrot.slane %v540, 4
    %v542 = vadd.f32 %v540, %v541
    %v543 = vrot.slane %v542, 2
    %v544 = vadd.f32 %v542, %v543
    %v545 = vrot.slane %v544, 1
    %v546 = vadd.f32 %v544, %v545
    %v547 = vsel %vm145, %v285, 0.0
    %v548 = vrot.slane %v547, 4
    %v549 = vadd.f32 %v547, %v548
    %v550 = vrot.slane %v549, 2
    %v551 = vadd.f32 %v549, %v550
    %v552 = vrot.slane %v551, 1
    %v553 = vadd.f32 %v551, %v552
    %v554 = vsel %vm145, %v286, 0.0
    %v555 = vrot.slane %v554, 4
    %v556 = vadd.f32 %v554, %v555
    %v557 = vrot.slane %v556, 2
    %v558 = vadd.f32 %v556, %v557
    %v559 = vrot.slane %v558, 1
    %v560 = vadd.f32 %v558, %v559
    %v561 = vsel %vm145, %v287, 0.0
    %v562 = vrot.slane %v561, 4
    %v563 = vadd.f32 %v561, %v562
    %v564 = vrot.slane %v563, 2
    %v565 = vadd.f32 %v563, %v564
    %v566 = vrot.slane %v565, 1
    %v567 = vadd.f32 %v565, %v566
    %v568 = vsel %vm145, %v288, 0.0
    %v569 = vrot.slane %v568, 4
    %v570 = vadd.f32 %v568, %v569
    %v571 = vrot.slane %v570, 2
    %v572 = vadd.f32 %v570, %v571
    %v573 = vrot.slane %v572, 1
    %v574 = vadd.f32 %v572, %v573
    %v575 = vsel %vm145, %v289, 0.0
    %v576 = vrot.slane %v575, 4
    %v577 = vadd.f32 %v575, %v576
    %v578 = vrot.slane %v577, 2
    %v579 = vadd.f32 %v577, %v578
    %v580 = vrot.slane %v579, 1
    %v581 = vadd.f32 %v579, %v580
    %v582 = vsel %vm145, %v290, 0.0
    %v583 = vrot.slane %v582, 4
    %v584 = vadd.f32 %v582, %v583
    %v585 = vrot.slane %v584, 2
    %v586 = vadd.f32 %v584, %v585
    %v587 = vrot.slane %v586, 1
    %v588 = vadd.f32 %v586, %v587
    %v589 = vsel %vm145, %v291, 0.0
    %v590 = vrot.slane %v589, 4
    %v591 = vadd.f32 %v589, %v590
    %v592 = vrot.slane %v591, 2
    %v593 = vadd.f32 %v591, %v592
    %v594 = vrot.slane %v593, 1
    %v595 = vadd.f32 %v593, %v594
    %v596 = vsel %vm145, %v292, 0.0
    %v597 = vrot.slane %v596, 4
    %v598 = vadd.f32 %v596, %v597
    %v599 = vrot.slane %v598, 2
    %v600 = vadd.f32 %v598, %v599
    %v601 = vrot.slane %v600, 1
    %v602 = vadd.f32 %v600, %v601
    %v603 = vsel %vm145, %v293, 0.0
    %v604 = vrot.slane %v603, 4
    %v605 = vadd.f32 %v603, %v604
    %v606 = vrot.slane %v605, 2
    %v607 = vadd.f32 %v605, %v606
    %v608 = vrot.slane %v607, 1
    %v609 = vadd.f32 %v607, %v608
    %v610 = vsel %vm145, %v294, 0.0
    %v611 = vrot.slane %v610, 4
    %v612 = vadd.f32 %v610, %v611
    %v613 = vrot.slane %v612, 2
    %v614 = vadd.f32 %v612, %v613
    %v615 = vrot.slane %v614, 1
    %v616 = vadd.f32 %v614, %v615
    %v617 = vsel %vm145, %v295, 0.0
    %v618 = vrot.slane %v617, 4
    %v619 = vadd.f32 %v617, %v618
    %v620 = vrot.slane %v619, 2
    %v621 = vadd.f32 %v619, %v620
    %v622 = vrot.slane %v621, 1
    %v623 = vadd.f32 %v621, %v622
    %v624 = vsel %vm145, %v296, 0.0
    %v625 = vrot.slane %v624, 4
    %v626 = vadd.f32 %v624, %v625
    %v627 = vrot.slane %v626, 2
    %v628 = vadd.f32 %v626, %v627
    %v629 = vrot.slane %v628, 1
    %v630 = vadd.f32 %v628, %v629
    %v631 = vsel %vm145, %v297, 0.0
    %v632 = vrot.slane %v631, 4
    %v633 = vadd.f32 %v631, %v632
    %v634 = vrot.slane %v633, 2
    %v635 = vadd.f32 %v633, %v634
    %v636 = vrot.slane %v635, 1
    %v637 = vadd.f32 %v635, %v636
    %v638 = vsel %vm145, %v298, 0.0
    %v639 = vrot.slane %v638, 4
    %v640 = vadd.f32 %v638, %v639
    %v641 = vrot.slane %v640, 2
    %v642 = vadd.f32 %v640, %v641
    %v643 = vrot.slane %v642, 1
    %v644 = vadd.f32 %v642, %v643
    %v645 = vsel %vm145, %v299, 0.0
    %v646 = vrot.slane %v645, 4
    %v647 = vadd.f32 %v645, %v646
    %v648 = vrot.slane %v647, 2
    %v649 = vadd.f32 %v647, %v648
    %v650 = vrot.slane %v649, 1
    %v651 = vadd.f32 %v649, %v650
    %v652 = vsel %vm145, %v300, 0.0
    %v653 = vrot.slane %v652, 4
    %v654 = vadd.f32 %v652, %v653
    %v655 = vrot.slane %v654, 2
    %v656 = vadd.f32 %v654, %v655
    %v657 = vrot.slane %v656, 1
    %v658 = vadd.f32 %v656, %v657
    %v659 = vsel %vm145, %v301, 0.0
    %v660 = vrot.slane %v659, 4
    %v661 = vadd.f32 %v659, %v660
    %v662 = vrot.slane %v661, 2
    %v663 = vadd.f32 %v661, %v662
    %v664 = vrot.slane %v663, 1
    %v665 = vadd.f32 %v663, %v664
    %v666 = vsel %vm145, %v302, 0.0
    %v667 = vrot.slane %v666, 4
    %v668 = vadd.f32 %v666, %v667
    %v669 = vrot.slane %v668, 2
    %v670 = vadd.f32 %v668, %v669
    %v671 = vrot.slane %v670, 1
    %v672 = vadd.f32 %v670, %v671
    %v673 = vsel %vm145, %v303, 0.0
    %v674 = vrot.slane %v673, 4
    %v675 = vadd.f32 %v673, %v674
    %v676 = vrot.slane %v675, 2
    %v677 = vadd.f32 %v675, %v676
    %v678 = vrot.slane %v677, 1
    %v679 = vadd.f32 %v677, %v678
    %v680 = vsel %vm145, %v304, 0.0
    %v681 = vrot.slane %v680, 4
    %v682 = vadd.f32 %v680, %v681
    %v683 = vrot.slane %v682, 2
    %v684 = vadd.f32 %v682, %v683
    %v685 = vrot.slane %v684, 1
    %v686 = vadd.f32 %v684, %v685
    %v687 = vsel %vm145, %v305, 0.0
    %v688 = vrot.slane %v687, 4
    %v689 = vadd.f32 %v687, %v688
    %v690 = vrot.slane %v689, 2
    %v691 = vadd.f32 %v689, %v690
    %v692 = vrot.slane %v691, 1
    %v693 = vadd.f32 %v691, %v692
    %v694 = vsel %vm145, %v306, 0.0
    %v695 = vrot.slane %v694, 4
    %v696 = vadd.f32 %v694, %v695
    %v697 = vrot.slane %v696, 2
    %v698 = vadd.f32 %v696, %v697
    %v699 = vrot.slane %v698, 1
    %v700 = vadd.f32 %v698, %v699
    %v701 = vsel %vm145, %v307, 0.0
    %v702 = vrot.slane %v701, 4
    %v703 = vadd.f32 %v701, %v702
    %v704 = vrot.slane %v703, 2
    %v705 = vadd.f32 %v703, %v704
    %v706 = vrot.slane %v705, 1
    %v707 = vadd.f32 %v705, %v706
    %v708 = vsel %vm145, %v308, 0.0
    %v709 = vrot.slane %v708, 4
    %v710 = vadd.f32 %v708, %v709
    %v711 = vrot.slane %v710, 2
    %v712 = vadd.f32 %v710, %v711
    %v713 = vrot.slane %v712, 1
    %v714 = vadd.f32 %v712, %v713
    %v715 = vsel %vm145, %v309, 0.0
    %v716 = vrot.slane %v715, 4
    %v717 = vadd.f32 %v715, %v716
    %v718 = vrot.slane %v717, 2
    %v719 = vadd.f32 %v717, %v718
    %v720 = vrot.slane %v719, 1
    %v721 = vadd.f32 %v719, %v720
    %v722 = vsel %vm145, %v310, 0.0
    %v723 = vrot.slane %v722, 4
    %v724 = vadd.f32 %v722, %v723
    %v725 = vrot.slane %v724, 2
    %v726 = vadd.f32 %v724, %v725
    %v727 = vrot.slane %v726, 1
    %v728 = vadd.f32 %v726, %v727
    %v729 = vsel %vm145, %v311, 0.0
    %v730 = vrot.slane %v729, 4
    %v731 = vadd.f32 %v729, %v730
    %v732 = vrot.slane %v731, 2
    %v733 = vadd.f32 %v731, %v732
    %v734 = vrot.slane %v733, 1
    %v735 = vadd.f32 %v733, %v734
    %v736 = vsel %vm145, %v312, 0.0
    %v737 = vrot.slane %v736, 4
    %v738 = vadd.f32 %v736, %v737
    %v739 = vrot.slane %v738, 2
    %v740 = vadd.f32 %v738, %v739
    %v741 = vrot.slane %v740, 1
    %v742 = vadd.f32 %v740, %v741
    %v743 = vsel %vm145, %v313, 0.0
    %v744 = vrot.slane %v743, 4
    %v745 = vadd.f32 %v743, %v744
    %v746 = vrot.slane %v745, 2
    %v747 = vadd.f32 %v745, %v746
    %v748 = vrot.slane %v747, 1
    %v749 = vadd.f32 %v747, %v748
    %v750 = vsel %vm145, %v314, 0.0
    %v751 = vrot.slane %v750, 4
    %v752 = vadd.f32 %v750, %v751
    %v753 = vrot.slane %v752, 2
    %v754 = vadd.f32 %v752, %v753
    %v755 = vrot.slane %v754, 1
    %v756 = vadd.f32 %v754, %v755
    %v757 = vsel %vm145, %v315, 0.0
    %v758 = vrot.slane %v757, 4
    %v759 = vadd.f32 %v757, %v758
    %v760 = vrot.slane %v759, 2
    %v761 = vadd.f32 %v759, %v760
    %v762 = vrot.slane %v761, 1
    %v763 = vadd.f32 %v761, %v762
    %v765 = vrot.slane %v117, 1
    %v766 = vrot.slane %v117, 2
    %v767 = vrot.slane %v117, 3
    %v768 = vrot.slane %v117, 4
    %v769 = vrot.slane %v117, 5
    %v770 = vrot.slane %v117, 6
    %v771 = vrot.slane %v117, 7
    %772 = vrot.lane.b32.xlu0 %v117, 56
    %v773 = vpop.permute.xlu0 %772
    %774 = vrot.lane.b32.xlu0 %v765, 56
    %v775 = vpop.permute.xlu0 %774
    %776 = vrot.lane.b32.xlu0 %v766, 56
    %v777 = vpop.permute.xlu0 %776
    %778 = vrot.lane.b32.xlu0 %v767, 56
    %v779 = vpop.permute.xlu0 %778
    %780 = vrot.lane.b32.xlu0 %v768, 56
    %v781 = vpop.permute.xlu0 %780
    %782 = vrot.lane.b32.xlu0 %v769, 56
    %v783 = vpop.permute.xlu0 %782
    %784 = vrot.lane.b32.xlu0 %v770, 56
    %v785 = vpop.permute.xlu0 %784
    %786 = vrot.lane.b32.xlu0 %v771, 56
    %v787 = vpop.permute.xlu0 %786
    %v796 = vadd.f32 %v322, %v773
    %v797 = vadd.f32 %v329, %v775
    %v798 = vadd.f32 %v336, %v777
    %v799 = vadd.f32 %v343, %v779
    %v800 = vadd.f32 %v350, %v781
    %v801 = vadd.f32 %v357, %v783
    %v802 = vadd.f32 %v364, %v785
    %v803 = vadd.f32 %v371, %v787
    %v804 = vadd.f32 %v378, %v773
    %v805 = vadd.f32 %v385, %v775
    %v806 = vadd.f32 %v392, %v777
    %v807 = vadd.f32 %v399, %v779
    %v808 = vadd.f32 %v406, %v781
    %v809 = vadd.f32 %v413, %v783
    %v810 = vadd.f32 %v420, %v785
    %v811 = vadd.f32 %v427, %v787
    %v812 = vadd.f32 %v434, %v773
    %v813 = vadd.f32 %v441, %v775
    %v814 = vadd.f32 %v448, %v777
    %v815 = vadd.f32 %v455, %v779
    %v816 = vadd.f32 %v462, %v781
    %v817 = vadd.f32 %v469, %v783
    %v818 = vadd.f32 %v476, %v785
    %v819 = vadd.f32 %v483, %v787
    %v820 = vadd.f32 %v490, %v773
    %v821 = vadd.f32 %v497, %v775
    %v822 = vadd.f32 %v504, %v777
    %v823 = vadd.f32 %v511, %v779
    %v824 = vadd.f32 %v518, %v781
    %v825 = vadd.f32 %v525, %v783
    %v826 = vadd.f32 %v532, %v785
    %v827 = vadd.f32 %v539, %v787
    %v828 = vadd.f32 %v546, %v773
    %v829 = vadd.f32 %v553, %v775
    %v830 = vadd.f32 %v560, %v777
    %v831 = vadd.f32 %v567, %v779
    %v832 = vadd.f32 %v574, %v781
    %v833 = vadd.f32 %v581, %v783
    %v834 = vadd.f32 %v588, %v785
    %v835 = vadd.f32 %v595, %v787
    %v836 = vadd.f32 %v602, %v773
    %v837 = vadd.f32 %v609, %v775
    %v838 = vadd.f32 %v616, %v777
    %v839 = vadd.f32 %v623, %v779
    %v840 = vadd.f32 %v630, %v781
    %v841 = vadd.f32 %v637, %v783
    %v842 = vadd.f32 %v644, %v785
    %v843 = vadd.f32 %v651, %v787
    %v844 = vadd.f32 %v658, %v773
    %v845 = vadd.f32 %v665, %v775
    %v846 = vadd.f32 %v672, %v777
    %v847 = vadd.f32 %v679, %v779
    %v848 = vadd.f32 %v686, %v781
    %v849 = vadd.f32 %v693, %v783
    %v850 = vadd.f32 %v700, %v785
    %v851 = vadd.f32 %v707, %v787
    %v852 = vadd.f32 %v714, %v773
    %v853 = vadd.f32 %v721, %v775
    %v854 = vadd.f32 %v728, %v777
    %v855 = vadd.f32 %v735, %v779
    %v856 = vadd.f32 %v742, %v781
    %v857 = vadd.f32 %v749, %v783
    %v858 = vadd.f32 %v756, %v785
    %v859 = vadd.f32 %v763, %v787
    %v860 = vmul.f32 %v100, %v137
    %v861 = vmul.f32 %v100, %v138
    %v862 = vmul.f32 %v100, %v139
    %v863 = vmul.f32 %v100, %v140
    %v864 = vmul.f32 %v100, %v141
    %v865 = vmul.f32 %v100, %v142
    %v866 = vmul.f32 %v100, %v143
    %v867 = vmul.f32 %v100, %v144
    %v868 = vmul.f32 %v101, %v137
    %v869 = vmul.f32 %v101, %v138
    %v870 = vmul.f32 %v101, %v139
    %v871 = vmul.f32 %v101, %v140
    %v872 = vmul.f32 %v101, %v141
    %v873 = vmul.f32 %v101, %v142
    %v874 = vmul.f32 %v101, %v143
    %v875 = vmul.f32 %v101, %v144
    %v876 = vmul.f32 %v102, %v137
    %v877 = vmul.f32 %v102, %v138
    %v878 = vmul.f32 %v102, %v139
    %v879 = vmul.f32 %v102, %v140
    %v880 = vmul.f32 %v102, %v141
    %v881 = vmul.f32 %v102, %v142
    %v882 = vmul.f32 %v102, %v143
    %v883 = vmul.f32 %v102, %v144
    %v884 = vmul.f32 %v103, %v137
    %v885 = vmul.f32 %v103, %v138
    %v886 = vmul.f32 %v103, %v139
    %v887 = vmul.f32 %v103, %v140
    %v888 = vmul.f32 %v103, %v141
    %v889 = vmul.f32 %v103, %v142
    %v890 = vmul.f32 %v103, %v143
    %v891 = vmul.f32 %v103, %v144
    %v892 = vmul.f32 %v104, %v137
    %v893 = vmul.f32 %v104, %v138
    %v894 = vmul.f32 %v104, %v139
    %v895 = vmul.f32 %v104, %v140
    %v896 = vmul.f32 %v104, %v141
    %v897 = vmul.f32 %v104, %v142
    %v898 = vmul.f32 %v104, %v143
    %v899 = vmul.f32 %v104, %v144
    %v900 = vmul.f32 %v105, %v137
    %v901 = vmul.f32 %v105, %v138
    %v902 = vmul.f32 %v105, %v139
    %v903 = vmul.f32 %v105, %v140
    %v904 = vmul.f32 %v105, %v141
    %v905 = vmul.f32 %v105, %v142
    %v906 = vmul.f32 %v105, %v143
    %v907 = vmul.f32 %v105, %v144
    %v908 = vmul.f32 %v106, %v137
    %v909 = vmul.f32 %v106, %v138
    %v910 = vmul.f32 %v106, %v139
    %v911 = vmul.f32 %v106, %v140
    %v912 = vmul.f32 %v106, %v141
    %v913 = vmul.f32 %v106, %v142
    %v914 = vmul.f32 %v106, %v143
    %v915 = vmul.f32 %v106, %v144
    %v916 = vmul.f32 %v107, %v137
    %v917 = vmul.f32 %v107, %v138
    %v918 = vmul.f32 %v107, %v139
    %v919 = vmul.f32 %v107, %v140
    %v920 = vmul.f32 %v107, %v141
    %v921 = vmul.f32 %v107, %v142
    %v922 = vmul.f32 %v107, %v143
    %v923 = vmul.f32 %v107, %v144
    %v924 = vsel %vm145, %v860, 0.0
    %v925 = vrot.slane %v924, 4
    %v926 = vadd.f32 %v924, %v925
    %v927 = vrot.slane %v926, 2
    %v928 = vadd.f32 %v926, %v927
    %v929 = vrot.slane %v928, 1
    %v930 = vadd.f32 %v928, %v929
    %v931 = vsel %vm145, %v861, 0.0
    %v932 = vrot.slane %v931, 4
    %v933 = vadd.f32 %v931, %v932
    %v934 = vrot.slane %v933, 2
    %v935 = vadd.f32 %v933, %v934
    %v936 = vrot.slane %v935, 1
    %v937 = vadd.f32 %v935, %v936
    %v938 = vsel %vm145, %v862, 0.0
    %v939 = vrot.slane %v938, 4
    %v940 = vadd.f32 %v938, %v939
    %v941 = vrot.slane %v940, 2
    %v942 = vadd.f32 %v940, %v941
    %v943 = vrot.slane %v942, 1
    %v944 = vadd.f32 %v942, %v943
    %v945 = vsel %vm145, %v863, 0.0
    %v946 = vrot.slane %v945, 4
    %v947 = vadd.f32 %v945, %v946
    %v948 = vrot.slane %v947, 2
    %v949 = vadd.f32 %v947, %v948
    %v950 = vrot.slane %v949, 1
    %v951 = vadd.f32 %v949, %v950
    %v952 = vsel %vm145, %v864, 0.0
    %v953 = vrot.slane %v952, 4
    %v954 = vadd.f32 %v952, %v953
    %v955 = vrot.slane %v954, 2
    %v956 = vadd.f32 %v954, %v955
    %v957 = vrot.slane %v956, 1
    %v958 = vadd.f32 %v956, %v957
    %v959 = vsel %vm145, %v865, 0.0
    %v960 = vrot.slane %v959, 4
    %v961 = vadd.f32 %v959, %v960
    %v962 = vrot.slane %v961, 2
    %v963 = vadd.f32 %v961, %v962
    %v964 = vrot.slane %v963, 1
    %v965 = vadd.f32 %v963, %v964
    %v966 = vsel %vm145, %v866, 0.0
    %v967 = vrot.slane %v966, 4
    %v968 = vadd.f32 %v966, %v967
    %v969 = vrot.slane %v968, 2
    %v970 = vadd.f32 %v968, %v969
    %v971 = vrot.slane %v970, 1
    %v972 = vadd.f32 %v970, %v971
    %v973 = vsel %vm145, %v867, 0.0
    %v974 = vrot.slane %v973, 4
    %v975 = vadd.f32 %v973, %v974
    %v976 = vrot.slane %v975, 2
    %v977 = vadd.f32 %v975, %v976
    %v978 = vrot.slane %v977, 1
    %v979 = vadd.f32 %v977, %v978
    %v980 = vsel %vm145, %v868, 0.0
    %v981 = vrot.slane %v980, 4
    %v982 = vadd.f32 %v980, %v981
    %v983 = vrot.slane %v982, 2
    %v984 = vadd.f32 %v982, %v983
    %v985 = vrot.slane %v984, 1
    %v986 = vadd.f32 %v984, %v985
    %v987 = vsel %vm145, %v869, 0.0
    %v988 = vrot.slane %v987, 4
    %v989 = vadd.f32 %v987, %v988
    %v990 = vrot.slane %v989, 2
    %v991 = vadd.f32 %v989, %v990
    %v992 = vrot.slane %v991, 1
    %v993 = vadd.f32 %v991, %v992
    %v994 = vsel %vm145, %v870, 0.0
    %v995 = vrot.slane %v994, 4
    %v996 = vadd.f32 %v994, %v995
    %v997 = vrot.slane %v996, 2
    %v998 = vadd.f32 %v996, %v997
    %v999 = vrot.slane %v998, 1
    %v1000 = vadd.f32 %v998, %v999
    %v1001 = vsel %vm145, %v871, 0.0
    %v1002 = vrot.slane %v1001, 4
    %v1003 = vadd.f32 %v1001, %v1002
    %v1004 = vrot.slane %v1003, 2
    %v1005 = vadd.f32 %v1003, %v1004
    %v1006 = vrot.slane %v1005, 1
    %v1007 = vadd.f32 %v1005, %v1006
    %v1008 = vsel %vm145, %v872, 0.0
    %v1009 = vrot.slane %v1008, 4
    %v1010 = vadd.f32 %v1008, %v1009
    %v1011 = vrot.slane %v1010, 2
    %v1012 = vadd.f32 %v1010, %v1011
    %v1013 = vrot.slane %v1012, 1
    %v1014 = vadd.f32 %v1012, %v1013
    %v1015 = vsel %vm145, %v873, 0.0
    %v1016 = vrot.slane %v1015, 4
    %v1017 = vadd.f32 %v1015, %v1016
    %v1018 = vrot.slane %v1017, 2
    %v1019 = vadd.f32 %v1017, %v1018
    %v1020 = vrot.slane %v1019, 1
    %v1021 = vadd.f32 %v1019, %v1020
    %v1022 = vsel %vm145, %v874, 0.0
    %v1023 = vrot.slane %v1022, 4
    %v1024 = vadd.f32 %v1022, %v1023
    %v1025 = vrot.slane %v1024, 2
    %v1026 = vadd.f32 %v1024, %v1025
    %v1027 = vrot.slane %v1026, 1
    %v1028 = vadd.f32 %v1026, %v1027
    %v1029 = vsel %vm145, %v875, 0.0
    %v1030 = vrot.slane %v1029, 4
    %v1031 = vadd.f32 %v1029, %v1030
    %v1032 = vrot.slane %v1031, 2
    %v1033 = vadd.f32 %v1031, %v1032
    %v1034 = vrot.slane %v1033, 1
    %v1035 = vadd.f32 %v1033, %v1034
    %v1036 = vsel %vm145, %v876, 0.0
    %v1037 = vrot.slane %v1036, 4
    %v1038 = vadd.f32 %v1036, %v1037
    %v1039 = vrot.slane %v1038, 2
    %v1040 = vadd.f32 %v1038, %v1039
    %v1041 = vrot.slane %v1040, 1
    %v1042 = vadd.f32 %v1040, %v1041
    %v1043 = vsel %vm145, %v877, 0.0
    %v1044 = vrot.slane %v1043, 4
    %v1045 = vadd.f32 %v1043, %v1044
    %v1046 = vrot.slane %v1045, 2
    %v1047 = vadd.f32 %v1045, %v1046
    %v1048 = vrot.slane %v1047, 1
    %v1049 = vadd.f32 %v1047, %v1048
    %v1050 = vsel %vm145, %v878, 0.0
    %v1051 = vrot.slane %v1050, 4
    %v1052 = vadd.f32 %v1050, %v1051
    %v1053 = vrot.slane %v1052, 2
    %v1054 = vadd.f32 %v1052, %v1053
    %v1055 = vrot.slane %v1054, 1
    %v1056 = vadd.f32 %v1054, %v1055
    %v1057 = vsel %vm145, %v879, 0.0
    %v1058 = vrot.slane %v1057, 4
    %v1059 = vadd.f32 %v1057, %v1058
    %v1060 = vrot.slane %v1059, 2
    %v1061 = vadd.f32 %v1059, %v1060
    %v1062 = vrot.slane %v1061, 1
    %v1063 = vadd.f32 %v1061, %v1062
    %v1064 = vsel %vm145, %v880, 0.0
    %v1065 = vrot.slane %v1064, 4
    %v1066 = vadd.f32 %v1064, %v1065
    %v1067 = vrot.slane %v1066, 2
    %v1068 = vadd.f32 %v1066, %v1067
    %v1069 = vrot.slane %v1068, 1
    %v1070 = vadd.f32 %v1068, %v1069
    %v1071 = vsel %vm145, %v881, 0.0
    %v1072 = vrot.slane %v1071, 4
    %v1073 = vadd.f32 %v1071, %v1072
    %v1074 = vrot.slane %v1073, 2
    %v1075 = vadd.f32 %v1073, %v1074
    %v1076 = vrot.slane %v1075, 1
    %v1077 = vadd.f32 %v1075, %v1076
    %v1078 = vsel %vm145, %v882, 0.0
    %v1079 = vrot.slane %v1078, 4
    %v1080 = vadd.f32 %v1078, %v1079
    %v1081 = vrot.slane %v1080, 2
    %v1082 = vadd.f32 %v1080, %v1081
    %v1083 = vrot.slane %v1082, 1
    %v1084 = vadd.f32 %v1082, %v1083
    %v1085 = vsel %vm145, %v883, 0.0
    %v1086 = vrot.slane %v1085, 4
    %v1087 = vadd.f32 %v1085, %v1086
    %v1088 = vrot.slane %v1087, 2
    %v1089 = vadd.f32 %v1087, %v1088
    %v1090 = vrot.slane %v1089, 1
    %v1091 = vadd.f32 %v1089, %v1090
    %v1092 = vsel %vm145, %v884, 0.0
    %v1093 = vrot.slane %v1092, 4
    %v1094 = vadd.f32 %v1092, %v1093
    %v1095 = vrot.slane %v1094, 2
    %v1096 = vadd.f32 %v1094, %v1095
    %v1097 = vrot.slane %v1096, 1
    %v1098 = vadd.f32 %v1096, %v1097
    %v1099 = vsel %vm145, %v885, 0.0
    %v1100 = vrot.slane %v1099, 4
    %v1101 = vadd.f32 %v1099, %v1100
    %v1102 = vrot.slane %v1101, 2
    %v1103 = vadd.f32 %v1101, %v1102
    %v1104 = vrot.slane %v1103, 1
    %v1105 = vadd.f32 %v1103, %v1104
    %v1106 = vsel %vm145, %v886, 0.0
    %v1107 = vrot.slane %v1106, 4
    %v1108 = vadd.f32 %v1106, %v1107
    %v1109 = vrot.slane %v1108, 2
    %v1110 = vadd.f32 %v1108, %v1109
    %v1111 = vrot.slane %v1110, 1
    %v1112 = vadd.f32 %v1110, %v1111
    %v1113 = vsel %vm145, %v887, 0.0
    %v1114 = vrot.slane %v1113, 4
    %v1115 = vadd.f32 %v1113, %v1114
    %v1116 = vrot.slane %v1115, 2
    %v1117 = vadd.f32 %v1115, %v1116
    %v1118 = vrot.slane %v1117, 1
    %v1119 = vadd.f32 %v1117, %v1118
    %v1120 = vsel %vm145, %v888, 0.0
    %v1121 = vrot.slane %v1120, 4
    %v1122 = vadd.f32 %v1120, %v1121
    %v1123 = vrot.slane %v1122, 2
    %v1124 = vadd.f32 %v1122, %v1123
    %v1125 = vrot.slane %v1124, 1
    %v1126 = vadd.f32 %v1124, %v1125
    %v1127 = vsel %vm145, %v889, 0.0
    %v1128 = vrot.slane %v1127, 4
    %v1129 = vadd.f32 %v1127, %v1128
    %v1130 = vrot.slane %v1129, 2
    %v1131 = vadd.f32 %v1129, %v1130
    %v1132 = vrot.slane %v1131, 1
    %v1133 = vadd.f32 %v1131, %v1132
    %v1134 = vsel %vm145, %v890, 0.0
    %v1135 = vrot.slane %v1134, 4
    %v1136 = vadd.f32 %v1134, %v1135
    %v1137 = vrot.slane %v1136, 2
    %v1138 = vadd.f32 %v1136, %v1137
    %v1139 = vrot.slane %v1138, 1
    %v1140 = vadd.f32 %v1138, %v1139
    %v1141 = vsel %vm145, %v891, 0.0
    %v1142 = vrot.slane %v1141, 4
    %v1143 = vadd.f32 %v1141, %v1142
    %v1144 = vrot.slane %v1143, 2
    %v1145 = vadd.f32 %v1143, %v1144
    %v1146 = vrot.slane %v1145, 1
    %v1147 = vadd.f32 %v1145, %v1146
    %v1148 = vsel %vm145, %v892, 0.0
    %v1149 = vrot.slane %v1148, 4
    %v1150 = vadd.f32 %v1148, %v1149
    %v1151 = vrot.slane %v1150, 2
    %v1152 = vadd.f32 %v1150, %v1151
    %v1153 = vrot.slane %v1152, 1
    %v1154 = vadd.f32 %v1152, %v1153
    %v1155 = vsel %vm145, %v893, 0.0
    %v1156 = vrot.slane %v1155, 4
    %v1157 = vadd.f32 %v1155, %v1156
    %v1158 = vrot.slane %v1157, 2
    %v1159 = vadd.f32 %v1157, %v1158
    %v1160 = vrot.slane %v1159, 1
    %v1161 = vadd.f32 %v1159, %v1160
    %v1162 = vsel %vm145, %v894, 0.0
    %v1163 = vrot.slane %v1162, 4
    %v1164 = vadd.f32 %v1162, %v1163
    %v1165 = vrot.slane %v1164, 2
    %v1166 = vadd.f32 %v1164, %v1165
    %v1167 = vrot.slane %v1166, 1
    %v1168 = vadd.f32 %v1166, %v1167
    %v1169 = vsel %vm145, %v895, 0.0
    %v1170 = vrot.slane %v1169, 4
    %v1171 = vadd.f32 %v1169, %v1170
    %v1172 = vrot.slane %v1171, 2
    %v1173 = vadd.f32 %v1171, %v1172
    %v1174 = vrot.slane %v1173, 1
    %v1175 = vadd.f32 %v1173, %v1174
    %v1176 = vsel %vm145, %v896, 0.0
    %v1177 = vrot.slane %v1176, 4
    %v1178 = vadd.f32 %v1176, %v1177
    %v1179 = vrot.slane %v1178, 2
    %v1180 = vadd.f32 %v1178, %v1179
    %v1181 = vrot.slane %v1180, 1
    %v1182 = vadd.f32 %v1180, %v1181
    %v1183 = vsel %vm145, %v897, 0.0
    %v1184 = vrot.slane %v1183, 4
    %v1185 = vadd.f32 %v1183, %v1184
    %v1186 = vrot.slane %v1185, 2
    %v1187 = vadd.f32 %v1185, %v1186
    %v1188 = vrot.slane %v1187, 1
    %v1189 = vadd.f32 %v1187, %v1188
    %v1190 = vsel %vm145, %v898, 0.0
    %v1191 = vrot.slane %v1190, 4
    %v1192 = vadd.f32 %v1190, %v1191
    %v1193 = vrot.slane %v1192, 2
    %v1194 = vadd.f32 %v1192, %v1193
    %v1195 = vrot.slane %v1194, 1
    %v1196 = vadd.f32 %v1194, %v1195
    %v1197 = vsel %vm145, %v899, 0.0
    %v1198 = vrot.slane %v1197, 4
    %v1199 = vadd.f32 %v1197, %v1198
    %v1200 = vrot.slane %v1199, 2
    %v1201 = vadd.f32 %v1199, %v1200
    %v1202 = vrot.slane %v1201, 1
    %v1203 = vadd.f32 %v1201, %v1202
    %v1204 = vsel %vm145, %v900, 0.0
    %v1205 = vrot.slane %v1204, 4
    %v1206 = vadd.f32 %v1204, %v1205
    %v1207 = vrot.slane %v1206, 2
    %v1208 = vadd.f32 %v1206, %v1207
    %v1209 = vrot.slane %v1208, 1
    %v1210 = vadd.f32 %v1208, %v1209
    %v1211 = vsel %vm145, %v901, 0.0
    %v1212 = vrot.slane %v1211, 4
    %v1213 = vadd.f32 %v1211, %v1212
    %v1214 = vrot.slane %v1213, 2
    %v1215 = vadd.f32 %v1213, %v1214
    %v1216 = vrot.slane %v1215, 1
    %v1217 = vadd.f32 %v1215, %v1216
    %v1218 = vsel %vm145, %v902, 0.0
    %v1219 = vrot.slane %v1218, 4
    %v1220 = vadd.f32 %v1218, %v1219
    %v1221 = vrot.slane %v1220, 2
    %v1222 = vadd.f32 %v1220, %v1221
    %v1223 = vrot.slane %v1222, 1
    %v1224 = vadd.f32 %v1222, %v1223
    %v1225 = vsel %vm145, %v903, 0.0
    %v1226 = vrot.slane %v1225, 4
    %v1227 = vadd.f32 %v1225, %v1226
    %v1228 = vrot.slane %v1227, 2
    %v1229 = vadd.f32 %v1227, %v1228
    %v1230 = vrot.slane %v1229, 1
    %v1231 = vadd.f32 %v1229, %v1230
    %v1232 = vsel %vm145, %v904, 0.0
    %v1233 = vrot.slane %v1232, 4
    %v1234 = vadd.f32 %v1232, %v1233
    %v1235 = vrot.slane %v1234, 2
    %v1236 = vadd.f32 %v1234, %v1235
    %v1237 = vrot.slane %v1236, 1
    %v1238 = vadd.f32 %v1236, %v1237
    %v1239 = vsel %vm145, %v905, 0.0
    %v1240 = vrot.slane %v1239, 4
    %v1241 = vadd.f32 %v1239, %v1240
    %v1242 = vrot.slane %v1241, 2
    %v1243 = vadd.f32 %v1241, %v1242
    %v1244 = vrot.slane %v1243, 1
    %v1245 = vadd.f32 %v1243, %v1244
    %v1246 = vsel %vm145, %v906, 0.0
    %v1247 = vrot.slane %v1246, 4
    %v1248 = vadd.f32 %v1246, %v1247
    %v1249 = vrot.slane %v1248, 2
    %v1250 = vadd.f32 %v1248, %v1249
    %v1251 = vrot.slane %v1250, 1
    %v1252 = vadd.f32 %v1250, %v1251
    %v1253 = vsel %vm145, %v907, 0.0
    %v1254 = vrot.slane %v1253, 4
    %v1255 = vadd.f32 %v1253, %v1254
    %v1256 = vrot.slane %v1255, 2
    %v1257 = vadd.f32 %v1255, %v1256
    %v1258 = vrot.slane %v1257, 1
    %v1259 = vadd.f32 %v1257, %v1258
    %v1260 = vsel %vm145, %v908, 0.0
    %v1261 = vrot.slane %v1260, 4
    %v1262 = vadd.f32 %v1260, %v1261
    %v1263 = vrot.slane %v1262, 2
    %v1264 = vadd.f32 %v1262, %v1263
    %v1265 = vrot.slane %v1264, 1
    %v1266 = vadd.f32 %v1264, %v1265
    %v1267 = vsel %vm145, %v909, 0.0
    %v1268 = vrot.slane %v1267, 4
    %v1269 = vadd.f32 %v1267, %v1268
    %v1270 = vrot.slane %v1269, 2
    %v1271 = vadd.f32 %v1269, %v1270
    %v1272 = vrot.slane %v1271, 1
    %v1273 = vadd.f32 %v1271, %v1272
    %v1274 = vsel %vm145, %v910, 0.0
    %v1275 = vrot.slane %v1274, 4
    %v1276 = vadd.f32 %v1274, %v1275
    %v1277 = vrot.slane %v1276, 2
    %v1278 = vadd.f32 %v1276, %v1277
    %v1279 = vrot.slane %v1278, 1
    %v1280 = vadd.f32 %v1278, %v1279
    %v1281 = vsel %vm145, %v911, 0.0
    %v1282 = vrot.slane %v1281, 4
    %v1283 = vadd.f32 %v1281, %v1282
    %v1284 = vrot.slane %v1283, 2
    %v1285 = vadd.f32 %v1283, %v1284
    %v1286 = vrot.slane %v1285, 1
    %v1287 = vadd.f32 %v1285, %v1286
    %v1288 = vsel %vm145, %v912, 0.0
    %v1289 = vrot.slane %v1288, 4
    %v1290 = vadd.f32 %v1288, %v1289
    %v1291 = vrot.slane %v1290, 2
    %v1292 = vadd.f32 %v1290, %v1291
    %v1293 = vrot.slane %v1292, 1
    %v1294 = vadd.f32 %v1292, %v1293
    %v1295 = vsel %vm145, %v913, 0.0
    %v1296 = vrot.slane %v1295, 4
    %v1297 = vadd.f32 %v1295, %v1296
    %v1298 = vrot.slane %v1297, 2
    %v1299 = vadd.f32 %v1297, %v1298
    %v1300 = vrot.slane %v1299, 1
    %v1301 = vadd.f32 %v1299, %v1300
    %v1302 = vsel %vm145, %v914, 0.0
    %v1303 = vrot.slane %v1302, 4
    %v1304 = vadd.f32 %v1302, %v1303
    %v1305 = vrot.slane %v1304, 2
    %v1306 = vadd.f32 %v1304, %v1305
    %v1307 = vrot.slane %v1306, 1
    %v1308 = vadd.f32 %v1306, %v1307
    %v1309 = vsel %vm145, %v915, 0.0
    %v1310 = vrot.slane %v1309, 4
    %v1311 = vadd.f32 %v1309, %v1310
    %v1312 = vrot.slane %v1311, 2
    %v1313 = vadd.f32 %v1311, %v1312
    %v1314 = vrot.slane %v1313, 1
    %v1315 = vadd.f32 %v1313, %v1314
    %v1316 = vsel %vm145, %v916, 0.0
    %v1317 = vrot.slane %v1316, 4
    %v1318 = vadd.f32 %v1316, %v1317
    %v1319 = vrot.slane %v1318, 2
    %v1320 = vadd.f32 %v1318, %v1319
    %v1321 = vrot.slane %v1320, 1
    %v1322 = vadd.f32 %v1320, %v1321
    %v1323 = vsel %vm145, %v917, 0.0
    %v1324 = vrot.slane %v1323, 4
    %v1325 = vadd.f32 %v1323, %v1324
    %v1326 = vrot.slane %v1325, 2
    %v1327 = vadd.f32 %v1325, %v1326
    %v1328 = vrot.slane %v1327, 1
    %v1329 = vadd.f32 %v1327, %v1328
    %v1330 = vsel %vm145, %v918, 0.0
    %v1331 = vrot.slane %v1330, 4
    %v1332 = vadd.f32 %v1330, %v1331
    %v1333 = vrot.slane %v1332, 2
    %v1334 = vadd.f32 %v1332, %v1333
    %v1335 = vrot.slane %v1334, 1
    %v1336 = vadd.f32 %v1334, %v1335
    %v1337 = vsel %vm145, %v919, 0.0
    %v1338 = vrot.slane %v1337, 4
    %v1339 = vadd.f32 %v1337, %v1338
    %v1340 = vrot.slane %v1339, 2
    %v1341 = vadd.f32 %v1339, %v1340
    %v1342 = vrot.slane %v1341, 1
    %v1343 = vadd.f32 %v1341, %v1342
    %v1344 = vsel %vm145, %v920, 0.0
    %v1345 = vrot.slane %v1344, 4
    %v1346 = vadd.f32 %v1344, %v1345
    %v1347 = vrot.slane %v1346, 2
    %v1348 = vadd.f32 %v1346, %v1347
    %v1349 = vrot.slane %v1348, 1
    %v1350 = vadd.f32 %v1348, %v1349
    %v1351 = vsel %vm145, %v921, 0.0
    %v1352 = vrot.slane %v1351, 4
    %v1353 = vadd.f32 %v1351, %v1352
    %v1354 = vrot.slane %v1353, 2
    %v1355 = vadd.f32 %v1353, %v1354
    %v1356 = vrot.slane %v1355, 1
    %v1357 = vadd.f32 %v1355, %v1356
    %v1358 = vsel %vm145, %v922, 0.0
    %v1359 = vrot.slane %v1358, 4
    %v1360 = vadd.f32 %v1358, %v1359
    %v1361 = vrot.slane %v1360, 2
    %v1362 = vadd.f32 %v1360, %v1361
    %v1363 = vrot.slane %v1362, 1
    %v1364 = vadd.f32 %v1362, %v1363
    %v1365 = vsel %vm145, %v923, 0.0
    %v1366 = vrot.slane %v1365, 4
    %v1367 = vadd.f32 %v1365, %v1366
    %v1368 = vrot.slane %v1367, 2
    %v1369 = vadd.f32 %v1367, %v1368
    %v1370 = vrot.slane %v1369, 1
    %v1371 = vadd.f32 %v1369, %v1370
    %1372 = vrot.lane.b32.xlu0 %v117, 48
    %v1373 = vpop.permute.xlu0 %1372
    %1374 = vrot.lane.b32.xlu0 %v765, 48
    %v1375 = vpop.permute.xlu0 %1374
    %1376 = vrot.lane.b32.xlu0 %v766, 48
    %v1377 = vpop.permute.xlu0 %1376
    %1378 = vrot.lane.b32.xlu0 %v767, 48
    %v1379 = vpop.permute.xlu0 %1378
    %1380 = vrot.lane.b32.xlu0 %v768, 48
    %v1381 = vpop.permute.xlu0 %1380
    %1382 = vrot.lane.b32.xlu0 %v769, 48
    %v1383 = vpop.permute.xlu0 %1382
    %1384 = vrot.lane.b32.xlu0 %v770, 48
    %v1385 = vpop.permute.xlu0 %1384
    %1386 = vrot.lane.b32.xlu0 %v771, 48
    %v1387 = vpop.permute.xlu0 %1386
    %v1396 = vadd.f32 %v930, %v1373
    %v1397 = vadd.f32 %v937, %v1375
    %v1398 = vadd.f32 %v944, %v1377
    %v1399 = vadd.f32 %v951, %v1379
    %v1400 = vadd.f32 %v958, %v1381
    %v1401 = vadd.f32 %v965, %v1383
    %v1402 = vadd.f32 %v972, %v1385
    %v1403 = vadd.f32 %v979, %v1387
    %v1404 = vadd.f32 %v986, %v1373
    %v1405 = vadd.f32 %v993, %v1375
    %v1406 = vadd.f32 %v1000, %v1377
    %v1407 = vadd.f32 %v1007, %v1379
    %v1408 = vadd.f32 %v1014, %v1381
    %v1409 = vadd.f32 %v1021, %v1383
    %v1410 = vadd.f32 %v1028, %v1385
    %v1411 = vadd.f32 %v1035, %v1387
    %v1412 = vadd.f32 %v1042, %v1373
    %v1413 = vadd.f32 %v1049, %v1375
    %v1414 = vadd.f32 %v1056, %v1377
    %v1415 = vadd.f32 %v1063, %v1379
    %v1416 = vadd.f32 %v1070, %v1381
    %v1417 = vadd.f32 %v1077, %v1383
    %v1418 = vadd.f32 %v1084, %v1385
    %v1419 = vadd.f32 %v1091, %v1387
    %v1420 = vadd.f32 %v1098, %v1373
    %v1421 = vadd.f32 %v1105, %v1375
    %v1422 = vadd.f32 %v1112, %v1377
    %v1423 = vadd.f32 %v1119, %v1379
    %v1424 = vadd.f32 %v1126, %v1381
    %v1425 = vadd.f32 %v1133, %v1383
    %v1426 = vadd.f32 %v1140, %v1385
    %v1427 = vadd.f32 %v1147, %v1387
    %v1428 = vadd.f32 %v1154, %v1373
    %v1429 = vadd.f32 %v1161, %v1375
    %v1430 = vadd.f32 %v1168, %v1377
    %v1431 = vadd.f32 %v1175, %v1379
    %v1432 = vadd.f32 %v1182, %v1381
    %v1433 = vadd.f32 %v1189, %v1383
    %v1434 = vadd.f32 %v1196, %v1385
    %v1435 = vadd.f32 %v1203, %v1387
    %v1436 = vadd.f32 %v1210, %v1373
    %v1437 = vadd.f32 %v1217, %v1375
    %v1438 = vadd.f32 %v1224, %v1377
    %v1439 = vadd.f32 %v1231, %v1379
    %v1440 = vadd.f32 %v1238, %v1381
    %v1441 = vadd.f32 %v1245, %v1383
    %v1442 = vadd.f32 %v1252, %v1385
    %v1443 = vadd.f32 %v1259, %v1387
    %v1444 = vadd.f32 %v1266, %v1373
    %v1445 = vadd.f32 %v1273, %v1375
    %v1446 = vadd.f32 %v1280, %v1377
    %v1447 = vadd.f32 %v1287, %v1379
    %v1448 = vadd.f32 %v1294, %v1381
    %v1449 = vadd.f32 %v1301, %v1383
    %v1450 = vadd.f32 %v1308, %v1385
    %v1451 = vadd.f32 %v1315, %v1387
    %v1452 = vadd.f32 %v1322, %v1373
    %v1453 = vadd.f32 %v1329, %v1375
    %v1454 = vadd.f32 %v1336, %v1377
    %v1455 = vadd.f32 %v1343, %v1379
    %v1456 = vadd.f32 %v1350, %v1381
    %v1457 = vadd.f32 %v1357, %v1383
    %v1458 = vadd.f32 %v1364, %v1385
    %v1459 = vadd.f32 %v1371, %v1387
    %v1524 = vrot.slane %v797, 7
    %v1525 = vsel %vm212, %v1524, %v796
    %v1526 = vrot.slane %v798, 6
    %v1527 = vsel %vm214, %v1526, %v1525
    %v1528 = vrot.slane %v799, 5
    %v1529 = vsel %vm216, %v1528, %v1527
    %v1530 = vrot.slane %v800, 4
    %v1531 = vsel %vm218, %v1530, %v1529
    %v1532 = vrot.slane %v801, 3
    %v1533 = vsel %vm220, %v1532, %v1531
    %v1534 = vrot.slane %v802, 2
    %v1535 = vsel %vm222, %v1534, %v1533
    %v1536 = vrot.slane %v803, 1
    %v1537 = vsel %vm224, %v1536, %v1535
    %v1538 = vrot.slane %v805, 7
    %v1539 = vsel %vm212, %v1538, %v804
    %v1540 = vrot.slane %v806, 6
    %v1541 = vsel %vm214, %v1540, %v1539
    %v1542 = vrot.slane %v807, 5
    %v1543 = vsel %vm216, %v1542, %v1541
    %v1544 = vrot.slane %v808, 4
    %v1545 = vsel %vm218, %v1544, %v1543
    %v1546 = vrot.slane %v809, 3
    %v1547 = vsel %vm220, %v1546, %v1545
    %v1548 = vrot.slane %v810, 2
    %v1549 = vsel %vm222, %v1548, %v1547
    %v1550 = vrot.slane %v811, 1
    %v1551 = vsel %vm224, %v1550, %v1549
    %v1552 = vrot.slane %v813, 7
    %v1553 = vsel %vm212, %v1552, %v812
    %v1554 = vrot.slane %v814, 6
    %v1555 = vsel %vm214, %v1554, %v1553
    %v1556 = vrot.slane %v815, 5
    %v1557 = vsel %vm216, %v1556, %v1555
    %v1558 = vrot.slane %v816, 4
    %v1559 = vsel %vm218, %v1558, %v1557
    %v1560 = vrot.slane %v817, 3
    %v1561 = vsel %vm220, %v1560, %v1559
    %v1562 = vrot.slane %v818, 2
    %v1563 = vsel %vm222, %v1562, %v1561
    %v1564 = vrot.slane %v819, 1
    %v1565 = vsel %vm224, %v1564, %v1563
    %v1566 = vrot.slane %v821, 7
    %v1567 = vsel %vm212, %v1566, %v820
    %v1568 = vrot.slane %v822, 6
    %v1569 = vsel %vm214, %v1568, %v1567
    %v1570 = vrot.slane %v823, 5
    %v1571 = vsel %vm216, %v1570, %v1569
    %v1572 = vrot.slane %v824, 4
    %v1573 = vsel %vm218, %v1572, %v1571
    %v1574 = vrot.slane %v825, 3
    %v1575 = vsel %vm220, %v1574, %v1573
    %v1576 = vrot.slane %v826, 2
    %v1577 = vsel %vm222, %v1576, %v1575
    %v1578 = vrot.slane %v827, 1
    %v1579 = vsel %vm224, %v1578, %v1577
    %v1580 = vrot.slane %v829, 7
    %v1581 = vsel %vm212, %v1580, %v828
    %v1582 = vrot.slane %v830, 6
    %v1583 = vsel %vm214, %v1582, %v1581
    %v1584 = vrot.slane %v831, 5
    %v1585 = vsel %vm216, %v1584, %v1583
    %v1586 = vrot.slane %v832, 4
    %v1587 = vsel %vm218, %v1586, %v1585
    %v1588 = vrot.slane %v833, 3
    %v1589 = vsel %vm220, %v1588, %v1587
    %v1590 = vrot.slane %v834, 2
    %v1591 = vsel %vm222, %v1590, %v1589
    %v1592 = vrot.slane %v835, 1
    %v1593 = vsel %vm224, %v1592, %v1591
    %v1594 = vrot.slane %v837, 7
    %v1595 = vsel %vm212, %v1594, %v836
    %v1596 = vrot.slane %v838, 6
    %v1597 = vsel %vm214, %v1596, %v1595
    %v1598 = vrot.slane %v839, 5
    %v1599 = vsel %vm216, %v1598, %v1597
    %v1600 = vrot.slane %v840, 4
    %v1601 = vsel %vm218, %v1600, %v1599
    %v1602 = vrot.slane %v841, 3
    %v1603 = vsel %vm220, %v1602, %v1601
    %v1604 = vrot.slane %v842, 2
    %v1605 = vsel %vm222, %v1604, %v1603
    %v1606 = vrot.slane %v843, 1
    %v1607 = vsel %vm224, %v1606, %v1605
    %v1608 = vrot.slane %v845, 7
    %v1609 = vsel %vm212, %v1608, %v844
    %v1610 = vrot.slane %v846, 6
    %v1611 = vsel %vm214, %v1610, %v1609
    %v1612 = vrot.slane %v847, 5
    %v1613 = vsel %vm216, %v1612, %v1611
    %v1614 = vrot.slane %v848, 4
    %v1615 = vsel %vm218, %v1614, %v1613
    %v1616 = vrot.slane %v849, 3
    %v1617 = vsel %vm220, %v1616, %v1615
    %v1618 = vrot.slane %v850, 2
    %v1619 = vsel %vm222, %v1618, %v1617
    %v1620 = vrot.slane %v851, 1
    %v1621 = vsel %vm224, %v1620, %v1619
    %v1622 = vrot.slane %v853, 7
    %v1623 = vsel %vm212, %v1622, %v852
    %v1624 = vrot.slane %v854, 6
    %v1625 = vsel %vm214, %v1624, %v1623
    %v1626 = vrot.slane %v855, 5
    %v1627 = vsel %vm216, %v1626, %v1625
    %v1628 = vrot.slane %v856, 4
    %v1629 = vsel %vm218, %v1628, %v1627
    %v1630 = vrot.slane %v857, 3
    %v1631 = vsel %vm220, %v1630, %v1629
    %v1632 = vrot.slane %v858, 2
    %v1633 = vsel %vm222, %v1632, %v1631
    %v1634 = vrot.slane %v859, 1
    %v1635 = vsel %vm224, %v1634, %v1633
    %v1644 = vsel %vm145, %v1537, 0.0
    %1645 = vadd.xlane.f32.xlu0 %v1644
    %v1646 = vpop.xlane.xlu0 %1645
    %v1647 = vsel %vm145, %v1551, 0.0
    %1648 = vadd.xlane.f32.xlu0 %v1647
    %v1649 = vpop.xlane.xlu0 %1648
    %v1650 = vsel %vm145, %v1565, 0.0
    %1651 = vadd.xlane.f32.xlu0 %v1650
    %v1652 = vpop.xlane.xlu0 %1651
    %v1653 = vsel %vm145, %v1579, 0.0
    %1654 = vadd.xlane.f32.xlu0 %v1653
    %v1655 = vpop.xlane.xlu0 %1654
    %v1656 = vsel %vm145, %v1593, 0.0
    %1657 = vadd.xlane.f32.xlu0 %v1656
    %v1658 = vpop.xlane.xlu0 %1657
    %v1659 = vsel %vm145, %v1607, 0.0
    %1660 = vadd.xlane.f32.xlu0 %v1659
    %v1661 = vpop.xlane.xlu0 %1660
    %v1662 = vsel %vm145, %v1621, 0.0
    %1663 = vadd.xlane.f32.xlu0 %v1662
    %v1664 = vpop.xlane.xlu0 %1663
    %v1665 = vsel %vm145, %v1635, 0.0
    %1666 = vadd.xlane.f32.xlu0 %v1665
    %v1667 = vpop.xlane.xlu0 %1666
    %v1668 = vrcp.pop 8.0
    %v1669 = vmul.f32 8.0, %v1668
    %v1670 = vsub.f32 1.0, %v1669
    %v1671 = vmul.f32 %v1668, %v1670
    %v1672 = vadd.f32 %v1668, %v1671
    %vm1673 = vweird.f32 %v1668
    %v1674 = vsel %vm1673, %v1668, %v1672
    %v1675 = vmul.f32 %v1646, %v1674
    %v1676 = vmul.f32 %v1649, %v1674
    %v1677 = vmul.f32 %v1652, %v1674
    %v1678 = vmul.f32 %v1655, %v1674
    %v1679 = vmul.f32 %v1658, %v1674
    %v1680 = vmul.f32 %v1661, %v1674
    %v1681 = vmul.f32 %v1664, %v1674
    %v1682 = vmul.f32 %v1667, %v1674
    %v1691 = vrot.slane %v1675, 1
    %v1692 = vrot.slane %v1675, 2
    %v1693 = vrot.slane %v1675, 3
    %v1694 = vrot.slane %v1675, 4
    %v1695 = vrot.slane %v1675, 5
    %v1696 = vrot.slane %v1675, 6
    %v1697 = vrot.slane %v1675, 7
    %v1698 = vrot.slane %v1676, 1
    %v1699 = vrot.slane %v1676, 2
    %v1700 = vrot.slane %v1676, 3
    %v1701 = vrot.slane %v1676, 4
    %v1702 = vrot.slane %v1676, 5
    %v1703 = vrot.slane %v1676, 6
    %v1704 = vrot.slane %v1676, 7
    %v1705 = vrot.slane %v1677, 1
    %v1706 = vrot.slane %v1677, 2
    %v1707 = vrot.slane %v1677, 3
    %v1708 = vrot.slane %v1677, 4
    %v1709 = vrot.slane %v1677, 5
    %v1710 = vrot.slane %v1677, 6
    %v1711 = vrot.slane %v1677, 7
    %v1712 = vrot.slane %v1678, 1
    %v1713 = vrot.slane %v1678, 2
    %v1714 = vrot.slane %v1678, 3
    %v1715 = vrot.slane %v1678, 4
    %v1716 = vrot.slane %v1678, 5
    %v1717 = vrot.slane %v1678, 6
    %v1718 = vrot.slane %v1678, 7
    %v1719 = vrot.slane %v1679, 1
    %v1720 = vrot.slane %v1679, 2
    %v1721 = vrot.slane %v1679, 3
    %v1722 = vrot.slane %v1679, 4
    %v1723 = vrot.slane %v1679, 5
    %v1724 = vrot.slane %v1679, 6
    %v1725 = vrot.slane %v1679, 7
    %v1726 = vrot.slane %v1680, 1
    %v1727 = vrot.slane %v1680, 2
    %v1728 = vrot.slane %v1680, 3
    %v1729 = vrot.slane %v1680, 4
    %v1730 = vrot.slane %v1680, 5
    %v1731 = vrot.slane %v1680, 6
    %v1732 = vrot.slane %v1680, 7
    %v1733 = vrot.slane %v1681, 1
    %v1734 = vrot.slane %v1681, 2
    %v1735 = vrot.slane %v1681, 3
    %v1736 = vrot.slane %v1681, 4
    %v1737 = vrot.slane %v1681, 5
    %v1738 = vrot.slane %v1681, 6
    %v1739 = vrot.slane %v1681, 7
    %v1740 = vrot.slane %v1682, 1
    %v1741 = vrot.slane %v1682, 2
    %v1742 = vrot.slane %v1682, 3
    %v1743 = vrot.slane %v1682, 4
    %v1744 = vrot.slane %v1682, 5
    %v1745 = vrot.slane %v1682, 6
    %v1746 = vrot.slane %v1682, 7
    %v1811 = vsub.f32 %v796, %v1675
    %v1812 = vsub.f32 %v797, %v1691
    %v1813 = vsub.f32 %v798, %v1692
    %v1814 = vsub.f32 %v799, %v1693
    %v1815 = vsub.f32 %v800, %v1694
    %v1816 = vsub.f32 %v801, %v1695
    %v1817 = vsub.f32 %v802, %v1696
    %v1818 = vsub.f32 %v803, %v1697
    %v1819 = vsub.f32 %v804, %v1676
    %v1820 = vsub.f32 %v805, %v1698
    %v1821 = vsub.f32 %v806, %v1699
    %v1822 = vsub.f32 %v807, %v1700
    %v1823 = vsub.f32 %v808, %v1701
    %v1824 = vsub.f32 %v809, %v1702
    %v1825 = vsub.f32 %v810, %v1703
    %v1826 = vsub.f32 %v811, %v1704
    %v1827 = vsub.f32 %v812, %v1677
    %v1828 = vsub.f32 %v813, %v1705
    %v1829 = vsub.f32 %v814, %v1706
    %v1830 = vsub.f32 %v815, %v1707
    %v1831 = vsub.f32 %v816, %v1708
    %v1832 = vsub.f32 %v817, %v1709
    %v1833 = vsub.f32 %v818, %v1710
    %v1834 = vsub.f32 %v819, %v1711
    %v1835 = vsub.f32 %v820, %v1678
    %v1836 = vsub.f32 %v821, %v1712
    %v1837 = vsub.f32 %v822, %v1713
    %v1838 = vsub.f32 %v823, %v1714
    %v1839 = vsub.f32 %v824, %v1715
    %v1840 = vsub.f32 %v825, %v1716
    %v1841 = vsub.f32 %v826, %v1717
    %v1842 = vsub.f32 %v827, %v1718
    %v1843 = vsub.f32 %v828, %v1679
    %v1844 = vsub.f32 %v829, %v1719
    %v1845 = vsub.f32 %v830, %v1720
    %v1846 = vsub.f32 %v831, %v1721
    %v1847 = vsub.f32 %v832, %v1722
    %v1848 = vsub.f32 %v833, %v1723
    %v1849 = vsub.f32 %v834, %v1724
    %v1850 = vsub.f32 %v835, %v1725
    %v1851 = vsub.f32 %v836, %v1680
    %v1852 = vsub.f32 %v837, %v1726
    %v1853 = vsub.f32 %v838, %v1727
    %v1854 = vsub.f32 %v839, %v1728
    %v1855 = vsub.f32 %v840, %v1729
    %v1856 = vsub.f32 %v841, %v1730
    %v1857 = vsub.f32 %v842, %v1731
    %v1858 = vsub.f32 %v843, %v1732
    %v1859 = vsub.f32 %v844, %v1681
    %v1860 = vsub.f32 %v845, %v1733
    %v1861 = vsub.f32 %v846, %v1734
    %v1862 = vsub.f32 %v847, %v1735
    %v1863 = vsub.f32 %v848, %v1736
    %v1864 = vsub.f32 %v849, %v1737
    %v1865 = vsub.f32 %v850, %v1738
    %v1866 = vsub.f32 %v851, %v1739
    %v1867 = vsub.f32 %v852, %v1682
    %v1868 = vsub.f32 %v853, %v1740
    %v1869 = vsub.f32 %v854, %v1741
    %v1870 = vsub.f32 %v855, %v1742
    %v1871 = vsub.f32 %v856, %v1743
    %v1872 = vsub.f32 %v857, %v1744
    %v1873 = vsub.f32 %v858, %v1745
    %v1874 = vsub.f32 %v859, %v1746
    %v1875 = vmul.f32 %v1811, %v1811
    %v1876 = vmul.f32 %v1812, %v1812
    %v1877 = vmul.f32 %v1813, %v1813
    %v1878 = vmul.f32 %v1814, %v1814
    %v1879 = vmul.f32 %v1815, %v1815
    %v1880 = vmul.f32 %v1816, %v1816
    %v1881 = vmul.f32 %v1817, %v1817
    %v1882 = vmul.f32 %v1818, %v1818
    %v1883 = vmul.f32 %v1819, %v1819
    %v1884 = vmul.f32 %v1820, %v1820
    %v1885 = vmul.f32 %v1821, %v1821
    %v1886 = vmul.f32 %v1822, %v1822
    %v1887 = vmul.f32 %v1823, %v1823
    %v1888 = vmul.f32 %v1824, %v1824
    %v1889 = vmul.f32 %v1825, %v1825
    %v1890 = vmul.f32 %v1826, %v1826
    %v1891 = vmul.f32 %v1827, %v1827
    %v1892 = vmul.f32 %v1828, %v1828
    %v1893 = vmul.f32 %v1829, %v1829
    %v1894 = vmul.f32 %v1830, %v1830
    %v1895 = vmul.f32 %v1831, %v1831
    %v1896 = vmul.f32 %v1832, %v1832
    %v1897 = vmul.f32 %v1833, %v1833
    %v1898 = vmul.f32 %v1834, %v1834
    %v1899 = vmul.f32 %v1835, %v1835
    %v1900 = vmul.f32 %v1836, %v1836
    %v1901 = vmul.f32 %v1837, %v1837
    %v1902 = vmul.f32 %v1838, %v1838
    %v1903 = vmul.f32 %v1839, %v1839
    %v1904 = vmul.f32 %v1840, %v1840
    %v1905 = vmul.f32 %v1841, %v1841
    %v1906 = vmul.f32 %v1842, %v1842
    %v1907 = vmul.f32 %v1843, %v1843
    %v1908 = vmul.f32 %v1844, %v1844
    %v1909 = vmul.f32 %v1845, %v1845
    %v1910 = vmul.f32 %v1846, %v1846
    %v1911 = vmul.f32 %v1847, %v1847
    %v1912 = vmul.f32 %v1848, %v1848
    %v1913 = vmul.f32 %v1849, %v1849
    %v1914 = vmul.f32 %v1850, %v1850
    %v1915 = vmul.f32 %v1851, %v1851
    %v1916 = vmul.f32 %v1852, %v1852
    %v1917 = vmul.f32 %v1853, %v1853
    %v1918 = vmul.f32 %v1854, %v1854
    %v1919 = vmul.f32 %v1855, %v1855
    %v1920 = vmul.f32 %v1856, %v1856
    %v1921 = vmul.f32 %v1857, %v1857
    %v1922 = vmul.f32 %v1858, %v1858
    %v1923 = vmul.f32 %v1859, %v1859
    %v1924 = vmul.f32 %v1860, %v1860
    %v1925 = vmul.f32 %v1861, %v1861
    %v1926 = vmul.f32 %v1862, %v1862
    %v1927 = vmul.f32 %v1863, %v1863
    %v1928 = vmul.f32 %v1864, %v1864
    %v1929 = vmul.f32 %v1865, %v1865
    %v1930 = vmul.f32 %v1866, %v1866
    %v1931 = vmul.f32 %v1867, %v1867
    %v1932 = vmul.f32 %v1868, %v1868
    %v1933 = vmul.f32 %v1869, %v1869
    %v1934 = vmul.f32 %v1870, %v1870
    %v1935 = vmul.f32 %v1871, %v1871
    %v1936 = vmul.f32 %v1872, %v1872
    %v1937 = vmul.f32 %v1873, %v1873
    %v1938 = vmul.f32 %v1874, %v1874
    %v2003 = vrot.slane %v1876, 7
    %v2004 = vsel %vm212, %v2003, %v1875
    %v2005 = vrot.slane %v1877, 6
    %v2006 = vsel %vm214, %v2005, %v2004
    %v2007 = vrot.slane %v1878, 5
    %v2008 = vsel %vm216, %v2007, %v2006
    %v2009 = vrot.slane %v1879, 4
    %v2010 = vsel %vm218, %v2009, %v2008
    %v2011 = vrot.slane %v1880, 3
    %v2012 = vsel %vm220, %v2011, %v2010
    %v2013 = vrot.slane %v1881, 2
    %v2014 = vsel %vm222, %v2013, %v2012
    %v2015 = vrot.slane %v1882, 1
    %v2016 = vsel %vm224, %v2015, %v2014
    %v2017 = vrot.slane %v1884, 7
    %v2018 = vsel %vm212, %v2017, %v1883
    %v2019 = vrot.slane %v1885, 6
    %v2020 = vsel %vm214, %v2019, %v2018
    %v2021 = vrot.slane %v1886, 5
    %v2022 = vsel %vm216, %v2021, %v2020
    %v2023 = vrot.slane %v1887, 4
    %v2024 = vsel %vm218, %v2023, %v2022
    %v2025 = vrot.slane %v1888, 3
    %v2026 = vsel %vm220, %v2025, %v2024
    %v2027 = vrot.slane %v1889, 2
    %v2028 = vsel %vm222, %v2027, %v2026
    %v2029 = vrot.slane %v1890, 1
    %v2030 = vsel %vm224, %v2029, %v2028
    %v2031 = vrot.slane %v1892, 7
    %v2032 = vsel %vm212, %v2031, %v1891
    %v2033 = vrot.slane %v1893, 6
    %v2034 = vsel %vm214, %v2033, %v2032
    %v2035 = vrot.slane %v1894, 5
    %v2036 = vsel %vm216, %v2035, %v2034
    %v2037 = vrot.slane %v1895, 4
    %v2038 = vsel %vm218, %v2037, %v2036
    %v2039 = vrot.slane %v1896, 3
    %v2040 = vsel %vm220, %v2039, %v2038
    %v2041 = vrot.slane %v1897, 2
    %v2042 = vsel %vm222, %v2041, %v2040
    %v2043 = vrot.slane %v1898, 1
    %v2044 = vsel %vm224, %v2043, %v2042
    %v2045 = vrot.slane %v1900, 7
    %v2046 = vsel %vm212, %v2045, %v1899
    %v2047 = vrot.slane %v1901, 6
    %v2048 = vsel %vm214, %v2047, %v2046
    %v2049 = vrot.slane %v1902, 5
    %v2050 = vsel %vm216, %v2049, %v2048
    %v2051 = vrot.slane %v1903, 4
    %v2052 = vsel %vm218, %v2051, %v2050
    %v2053 = vrot.slane %v1904, 3
    %v2054 = vsel %vm220, %v2053, %v2052
    %v2055 = vrot.slane %v1905, 2
    %v2056 = vsel %vm222, %v2055, %v2054
    %v2057 = vrot.slane %v1906, 1
    %v2058 = vsel %vm224, %v2057, %v2056
    %v2059 = vrot.slane %v1908, 7
    %v2060 = vsel %vm212, %v2059, %v1907
    %v2061 = vrot.slane %v1909, 6
    %v2062 = vsel %vm214, %v2061, %v2060
    %v2063 = vrot.slane %v1910, 5
    %v2064 = vsel %vm216, %v2063, %v2062
    %v2065 = vrot.slane %v1911, 4
    %v2066 = vsel %vm218, %v2065, %v2064
    %v2067 = vrot.slane %v1912, 3
    %v2068 = vsel %vm220, %v2067, %v2066
    %v2069 = vrot.slane %v1913, 2
    %v2070 = vsel %vm222, %v2069, %v2068
    %v2071 = vrot.slane %v1914, 1
    %v2072 = vsel %vm224, %v2071, %v2070
    %v2073 = vrot.slane %v1916, 7
    %v2074 = vsel %vm212, %v2073, %v1915
    %v2075 = vrot.slane %v1917, 6
    %v2076 = vsel %vm214, %v2075, %v2074
    %v2077 = vrot.slane %v1918, 5
    %v2078 = vsel %vm216, %v2077, %v2076
    %v2079 = vrot.slane %v1919, 4
    %v2080 = vsel %vm218, %v2079, %v2078
    %v2081 = vrot.slane %v1920, 3
    %v2082 = vsel %vm220, %v2081, %v2080
    %v2083 = vrot.slane %v1921, 2
    %v2084 = vsel %vm222, %v2083, %v2082
    %v2085 = vrot.slane %v1922, 1
    %v2086 = vsel %vm224, %v2085, %v2084
    %v2087 = vrot.slane %v1924, 7
    %v2088 = vsel %vm212, %v2087, %v1923
    %v2089 = vrot.slane %v1925, 6
    %v2090 = vsel %vm214, %v2089, %v2088
    %v2091 = vrot.slane %v1926, 5
    %v2092 = vsel %vm216, %v2091, %v2090
    %v2093 = vrot.slane %v1927, 4
    %v2094 = vsel %vm218, %v2093, %v2092
    %v2095 = vrot.slane %v1928, 3
    %v2096 = vsel %vm220, %v2095, %v2094
    %v2097 = vrot.slane %v1929, 2
    %v2098 = vsel %vm222, %v2097, %v2096
    %v2099 = vrot.slane %v1930, 1
    %v2100 = vsel %vm224, %v2099, %v2098
    %v2101 = vrot.slane %v1932, 7
    %v2102 = vsel %vm212, %v2101, %v1931
    %v2103 = vrot.slane %v1933, 6
    %v2104 = vsel %vm214, %v2103, %v2102
    %v2105 = vrot.slane %v1934, 5
    %v2106 = vsel %vm216, %v2105, %v2104
    %v2107 = vrot.slane %v1935, 4
    %v2108 = vsel %vm218, %v2107, %v2106
    %v2109 = vrot.slane %v1936, 3
    %v2110 = vsel %vm220, %v2109, %v2108
    %v2111 = vrot.slane %v1937, 2
    %v2112 = vsel %vm222, %v2111, %v2110
    %v2113 = vrot.slane %v1938, 1
    %v2114 = vsel %vm224, %v2113, %v2112
    %v2123 = vsel %vm145, %v2016, 0.0
    %2124 = vadd.xlane.f32.xlu0 %v2123
    %v2125 = vpop.xlane.xlu0 %2124
    %v2126 = vsel %vm145, %v2030, 0.0
    %2127 = vadd.xlane.f32.xlu0 %v2126
    %v2128 = vpop.xlane.xlu0 %2127
    %v2129 = vsel %vm145, %v2044, 0.0
    %2130 = vadd.xlane.f32.xlu0 %v2129
    %v2131 = vpop.xlane.xlu0 %2130
    %v2132 = vsel %vm145, %v2058, 0.0
    %2133 = vadd.xlane.f32.xlu0 %v2132
    %v2134 = vpop.xlane.xlu0 %2133
    %v2135 = vsel %vm145, %v2072, 0.0
    %2136 = vadd.xlane.f32.xlu0 %v2135
    %v2137 = vpop.xlane.xlu0 %2136
    %v2138 = vsel %vm145, %v2086, 0.0
    %2139 = vadd.xlane.f32.xlu0 %v2138
    %v2140 = vpop.xlane.xlu0 %2139
    %v2141 = vsel %vm145, %v2100, 0.0
    %2142 = vadd.xlane.f32.xlu0 %v2141
    %v2143 = vpop.xlane.xlu0 %2142
    %v2144 = vsel %vm145, %v2114, 0.0
    %2145 = vadd.xlane.f32.xlu0 %v2144
    %v2146 = vpop.xlane.xlu0 %2145
    %v2147 = vmul.f32 %v2125, %v1674
    %v2148 = vmul.f32 %v2128, %v1674
    %v2149 = vmul.f32 %v2131, %v1674
    %v2150 = vmul.f32 %v2134, %v1674
    %v2151 = vmul.f32 %v2137, %v1674
    %v2152 = vmul.f32 %v2140, %v1674
    %v2153 = vmul.f32 %v2143, %v1674
    %v2154 = vmul.f32 %v2146, %v1674
    %v2155 = vadd.f32 %v2147, 1e-05
    %v2156 = vadd.f32 %v2148, 1e-05
    %v2157 = vadd.f32 %v2149, 1e-05
    %v2158 = vadd.f32 %v2150, 1e-05
    %v2159 = vadd.f32 %v2151, 1e-05
    %v2160 = vadd.f32 %v2152, 1e-05
    %v2161 = vadd.f32 %v2153, 1e-05
    %v2162 = vadd.f32 %v2154, 1e-05
    %v2163 = vrsqrt.pop %v2155
    %v2164 = vmul.f32 %v2163, %v2155
    %v2165 = vmul.f32 %v2164, %v2163
    %v2166 = vmul.f32 0.5, %v2165
    %v2167 = vsub.f32 1.5, %v2166
    %v2168 = vmul.f32 %v2163, %v2167
    %vm2169 = vweird.f32 %v2155
    %vm2170 = vweird.f32 %v2163
    %vm2171 = vmor %vm2169, %vm2170
    %v2172 = vsel %vm2171, %v2163, %v2168
    %v2173 = vrsqrt.pop %v2156
    %v2174 = vmul.f32 %v2173, %v2156
    %v2175 = vmul.f32 %v2174, %v2173
    %v2176 = vmul.f32 0.5, %v2175
    %v2177 = vsub.f32 1.5, %v2176
    %v2178 = vmul.f32 %v2173, %v2177
    %vm2179 = vweird.f32 %v2156
    %vm2180 = vweird.f32 %v2173
    %vm2181 = vmor %vm2179, %vm2180
    %v2182 = vsel %vm2181, %v2173, %v2178
    %v2183 = vrsqrt.pop %v2157
    %v2184 = vmul.f32 %v2183, %v2157
    %v2185 = vmul.f32 %v2184, %v2183
    %v2186 = vmul.f32 0.5, %v2185
    %v2187 = vsub.f32 1.5, %v2186
    %v2188 = vmul.f32 %v2183, %v2187
    %vm2189 = vweird.f32 %v2157
    %vm2190 = vweird.f32 %v2183
    %vm2191 = vmor %vm2189, %vm2190
    %v2192 = vsel %vm2191, %v2183, %v2188
    %v2193 = vrsqrt.pop %v2158
    %v2194 = vmul.f32 %v2193, %v2158
    %v2195 = vmul.f32 %v2194, %v2193
    %v2196 = vmul.f32 0.5, %v2195
    %v2197 = vsub.f32 1.5, %v2196
    %v2198 = vmul.f32 %v2193, %v2197
    %vm2199 = vweird.f32 %v2158
    %vm2200 = vweird.f32 %v2193
    %vm2201 = vmor %vm2199, %vm2200
    %v2202 = vsel %vm2201, %v2193, %v2198
    %v2203 = vrsqrt.pop %v2159
    %v2204 = vmul.f32 %v2203, %v2159
    %v2205 = vmul.f32 %v2204, %v2203
    %v2206 = vmul.f32 0.5, %v2205
    %v2207 = vsub.f32 1.5, %v2206
    %v2208 = vmul.f32 %v2203, %v2207
    %vm2209 = vweird.f32 %v2159
    %vm2210 = vweird.f32 %v2203
    %vm2211 = vmor %vm2209, %vm2210
    %v2212 = vsel %vm2211, %v2203, %v2208
    %v2213 = vrsqrt.pop %v2160
    %v2214 = vmul.f32 %v2213, %v2160
    %v2215 = vmul.f32 %v2214, %v2213
    %v2216 = vmul.f32 0.5, %v2215
    %v2217 = vsub.f32 1.5, %v2216
    %v2218 = vmul.f32 %v2213, %v2217
    %vm2219 = vweird.f32 %v2160
    %vm2220 = vweird.f32 %v2213
    %vm2221 = vmor %vm2219, %vm2220
    %v2222 = vsel %vm2221, %v2213, %v2218
    %v2223 = vrsqrt.pop %v2161
    %v2224 = vmul.f32 %v2223, %v2161
    %v2225 = vmul.f32 %v2224, %v2223
    %v2226 = vmul.f32 0.5, %v2225
    %v2227 = vsub.f32 1.5, %v2226
    %v2228 = vmul.f32 %v2223, %v2227
    %vm2229 = vweird.f32 %v2161
    %vm2230 = vweird.f32 %v2223
    %vm2231 = vmor %vm2229, %vm2230
    %v2232 = vsel %vm2231, %v2223, %v2228
    %v2233 = vrsqrt.pop %v2162
    %v2234 = vmul.f32 %v2233, %v2162
    %v2235 = vmul.f32 %v2234, %v2233
    %v2236 = vmul.f32 0.5, %v2235
    %v2237 = vsub.f32 1.5, %v2236
    %v2238 = vmul.f32 %v2233, %v2237
    %vm2239 = vweird.f32 %v2162
    %vm2240 = vweird.f32 %v2233
    %vm2241 = vmor %vm2239, %vm2240
    %v2242 = vsel %vm2241, %v2233, %v2238
    %v2251 = vrot.slane %v2172, 1
    %v2252 = vrot.slane %v2172, 2
    %v2253 = vrot.slane %v2172, 3
    %v2254 = vrot.slane %v2172, 4
    %v2255 = vrot.slane %v2172, 5
    %v2256 = vrot.slane %v2172, 6
    %v2257 = vrot.slane %v2172, 7
    %v2258 = vrot.slane %v2182, 1
    %v2259 = vrot.slane %v2182, 2
    %v2260 = vrot.slane %v2182, 3
    %v2261 = vrot.slane %v2182, 4
    %v2262 = vrot.slane %v2182, 5
    %v2263 = vrot.slane %v2182, 6
    %v2264 = vrot.slane %v2182, 7
    %v2265 = vrot.slane %v2192, 1
    %v2266 = vrot.slane %v2192, 2
    %v2267 = vrot.slane %v2192, 3
    %v2268 = vrot.slane %v2192, 4
    %v2269 = vrot.slane %v2192, 5
    %v2270 = vrot.slane %v2192, 6
    %v2271 = vrot.slane %v2192, 7
    %v2272 = vrot.slane %v2202, 1
    %v2273 = vrot.slane %v2202, 2
    %v2274 = vrot.slane %v2202, 3
    %v2275 = vrot.slane %v2202, 4
    %v2276 = vrot.slane %v2202, 5
    %v2277 = vrot.slane %v2202, 6
    %v2278 = vrot.slane %v2202, 7
    %v2279 = vrot.slane %v2212, 1
    %v2280 = vrot.slane %v2212, 2
    %v2281 = vrot.slane %v2212, 3
    %v2282 = vrot.slane %v2212, 4
    %v2283 = vrot.slane %v2212, 5
    %v2284 = vrot.slane %v2212, 6
    %v2285 = vrot.slane %v2212, 7
    %v2286 = vrot.slane %v2222, 1
    %v2287 = vrot.slane %v2222, 2
    %v2288 = vrot.slane %v2222, 3
    %v2289 = vrot.slane %v2222, 4
    %v2290 = vrot.slane %v2222, 5
    %v2291 = vrot.slane %v2222, 6
    %v2292 = vrot.slane %v2222, 7
    %v2293 = vrot.slane %v2232, 1
    %v2294 = vrot.slane %v2232, 2
    %v2295 = vrot.slane %v2232, 3
    %v2296 = vrot.slane %v2232, 4
    %v2297 = vrot.slane %v2232, 5
    %v2298 = vrot.slane %v2232, 6
    %v2299 = vrot.slane %v2232, 7
    %v2300 = vrot.slane %v2242, 1
    %v2301 = vrot.slane %v2242, 2
    %v2302 = vrot.slane %v2242, 3
    %v2303 = vrot.slane %v2242, 4
    %v2304 = vrot.slane %v2242, 5
    %v2305 = vrot.slane %v2242, 6
    %v2306 = vrot.slane %v2242, 7
    %v2371 = vmul.f32 %v1811, %v2172
    %v2372 = vmul.f32 %v1812, %v2251
    %v2373 = vmul.f32 %v1813, %v2252
    %v2374 = vmul.f32 %v1814, %v2253
    %v2375 = vmul.f32 %v1815, %v2254
    %v2376 = vmul.f32 %v1816, %v2255
    %v2377 = vmul.f32 %v1817, %v2256
    %v2378 = vmul.f32 %v1818, %v2257
    %v2379 = vmul.f32 %v1819, %v2182
    %v2380 = vmul.f32 %v1820, %v2258
    %v2381 = vmul.f32 %v1821, %v2259
    %v2382 = vmul.f32 %v1822, %v2260
    %v2383 = vmul.f32 %v1823, %v2261
    %v2384 = vmul.f32 %v1824, %v2262
    %v2385 = vmul.f32 %v1825, %v2263
    %v2386 = vmul.f32 %v1826, %v2264
    %v2387 = vmul.f32 %v1827, %v2192
    %v2388 = vmul.f32 %v1828, %v2265
    %v2389 = vmul.f32 %v1829, %v2266
    %v2390 = vmul.f32 %v1830, %v2267
    %v2391 = vmul.f32 %v1831, %v2268
    %v2392 = vmul.f32 %v1832, %v2269
    %v2393 = vmul.f32 %v1833, %v2270
    %v2394 = vmul.f32 %v1834, %v2271
    %v2395 = vmul.f32 %v1835, %v2202
    %v2396 = vmul.f32 %v1836, %v2272
    %v2397 = vmul.f32 %v1837, %v2273
    %v2398 = vmul.f32 %v1838, %v2274
    %v2399 = vmul.f32 %v1839, %v2275
    %v2400 = vmul.f32 %v1840, %v2276
    %v2401 = vmul.f32 %v1841, %v2277
    %v2402 = vmul.f32 %v1842, %v2278
    %v2403 = vmul.f32 %v1843, %v2212
    %v2404 = vmul.f32 %v1844, %v2279
    %v2405 = vmul.f32 %v1845, %v2280
    %v2406 = vmul.f32 %v1846, %v2281
    %v2407 = vmul.f32 %v1847, %v2282
    %v2408 = vmul.f32 %v1848, %v2283
    %v2409 = vmul.f32 %v1849, %v2284
    %v2410 = vmul.f32 %v1850, %v2285
    %v2411 = vmul.f32 %v1851, %v2222
    %v2412 = vmul.f32 %v1852, %v2286
    %v2413 = vmul.f32 %v1853, %v2287
    %v2414 = vmul.f32 %v1854, %v2288
    %v2415 = vmul.f32 %v1855, %v2289
    %v2416 = vmul.f32 %v1856, %v2290
    %v2417 = vmul.f32 %v1857, %v2291
    %v2418 = vmul.f32 %v1858, %v2292
    %v2419 = vmul.f32 %v1859, %v2232
    %v2420 = vmul.f32 %v1860, %v2293
    %v2421 = vmul.f32 %v1861, %v2294
    %v2422 = vmul.f32 %v1862, %v2295
    %v2423 = vmul.f32 %v1863, %v2296
    %v2424 = vmul.f32 %v1864, %v2297
    %v2425 = vmul.f32 %v1865, %v2298
    %v2426 = vmul.f32 %v1866, %v2299
    %v2427 = vmul.f32 %v1867, %v2242
    %v2428 = vmul.f32 %v1868, %v2300
    %v2429 = vmul.f32 %v1869, %v2301
    %v2430 = vmul.f32 %v1870, %v2302
    %v2431 = vmul.f32 %v1871, %v2303
    %v2432 = vmul.f32 %v1872, %v2304
    %v2433 = vmul.f32 %v1873, %v2305
    %v2434 = vmul.f32 %v1874, %v2306
    %v2435 = vperm.slane %v118, 0
    %2437 = vrot.lane.b32.xlu0 %v2435, 120
    %v2438 = vpop.permute.xlu0 %2437
    %v2440 = vmul.f32 %v2371, %v2438
    %v2441 = vmul.f32 %v2372, %v2438
    %v2442 = vmul.f32 %v2373, %v2438
    %v2443 = vmul.f32 %v2374, %v2438
    %v2444 = vmul.f32 %v2375, %v2438
    %v2445 = vmul.f32 %v2376, %v2438
    %v2446 = vmul.f32 %v2377, %v2438
    %v2447 = vmul.f32 %v2378, %v2438
    %v2448 = vmul.f32 %v2379, %v2438
    %v2449 = vmul.f32 %v2380, %v2438
    %v2450 = vmul.f32 %v2381, %v2438
    %v2451 = vmul.f32 %v2382, %v2438
    %v2452 = vmul.f32 %v2383, %v2438
    %v2453 = vmul.f32 %v2384, %v2438
    %v2454 = vmul.f32 %v2385, %v2438
    %v2455 = vmul.f32 %v2386, %v2438
    %v2456 = vmul.f32 %v2387, %v2438
    %v2457 = vmul.f32 %v2388, %v2438
    %v2458 = vmul.f32 %v2389, %v2438
    %v2459 = vmul.f32 %v2390, %v2438
    %v2460 = vmul.f32 %v2391, %v2438
    %v2461 = vmul.f32 %v2392, %v2438
    %v2462 = vmul.f32 %v2393, %v2438
    %v2463 = vmul.f32 %v2394, %v2438
    %v2464 = vmul.f32 %v2395, %v2438
    %v2465 = vmul.f32 %v2396, %v2438
    %v2466 = vmul.f32 %v2397, %v2438
    %v2467 = vmul.f32 %v2398, %v2438
    %v2468 = vmul.f32 %v2399, %v2438
    %v2469 = vmul.f32 %v2400, %v2438
    %v2470 = vmul.f32 %v2401, %v2438
    %v2471 = vmul.f32 %v2402, %v2438
    %v2472 = vmul.f32 %v2403, %v2438
    %v2473 = vmul.f32 %v2404, %v2438
    %v2474 = vmul.f32 %v2405, %v2438
    %v2475 = vmul.f32 %v2406, %v2438
    %v2476 = vmul.f32 %v2407, %v2438
    %v2477 = vmul.f32 %v2408, %v2438
    %v2478 = vmul.f32 %v2409, %v2438
    %v2479 = vmul.f32 %v2410, %v2438
    %v2480 = vmul.f32 %v2411, %v2438
    %v2481 = vmul.f32 %v2412, %v2438
    %v2482 = vmul.f32 %v2413, %v2438
    %v2483 = vmul.f32 %v2414, %v2438
    %v2484 = vmul.f32 %v2415, %v2438
    %v2485 = vmul.f32 %v2416, %v2438
    %v2486 = vmul.f32 %v2417, %v2438
    %v2487 = vmul.f32 %v2418, %v2438
    %v2488 = vmul.f32 %v2419, %v2438
    %v2489 = vmul.f32 %v2420, %v2438
    %v2490 = vmul.f32 %v2421, %v2438
    %v2491 = vmul.f32 %v2422, %v2438
    %v2492 = vmul.f32 %v2423, %v2438
    %v2493 = vmul.f32 %v2424, %v2438
    %v2494 = vmul.f32 %v2425, %v2438
    %v2495 = vmul.f32 %v2426, %v2438
    %v2496 = vmul.f32 %v2427, %v2438
    %v2497 = vmul.f32 %v2428, %v2438
    %v2498 = vmul.f32 %v2429, %v2438
    %v2499 = vmul.f32 %v2430, %v2438
    %v2500 = vmul.f32 %v2431, %v2438
    %v2501 = vmul.f32 %v2432, %v2438
    %v2502 = vmul.f32 %v2433, %v2438
    %v2503 = vmul.f32 %v2434, %v2438
    %2504 = vrot.lane.b32.xlu0 %v2435, 112
    %v2505 = vpop.permute.xlu0 %2504
    %v2507 = vadd.f32 %v2440, %v2505
    %v2508 = vadd.f32 %v2441, %v2505
    %v2509 = vadd.f32 %v2442, %v2505
    %v2510 = vadd.f32 %v2443, %v2505
    %v2511 = vadd.f32 %v2444, %v2505
    %v2512 = vadd.f32 %v2445, %v2505
    %v2513 = vadd.f32 %v2446, %v2505
    %v2514 = vadd.f32 %v2447, %v2505
    %v2515 = vadd.f32 %v2448, %v2505
    %v2516 = vadd.f32 %v2449, %v2505
    %v2517 = vadd.f32 %v2450, %v2505
    %v2518 = vadd.f32 %v2451, %v2505
    %v2519 = vadd.f32 %v2452, %v2505
    %v2520 = vadd.f32 %v2453, %v2505
    %v2521 = vadd.f32 %v2454, %v2505
    %v2522 = vadd.f32 %v2455, %v2505
    %v2523 = vadd.f32 %v2456, %v2505
    %v2524 = vadd.f32 %v2457, %v2505
    %v2525 = vadd.f32 %v2458, %v2505
    %v2526 = vadd.f32 %v2459, %v2505
    %v2527 = vadd.f32 %v2460, %v2505
    %v2528 = vadd.f32 %v2461, %v2505
    %v2529 = vadd.f32 %v2462, %v2505
    %v2530 = vadd.f32 %v2463, %v2505
    %v2531 = vadd.f32 %v2464, %v2505
    %v2532 = vadd.f32 %v2465, %v2505
    %v2533 = vadd.f32 %v2466, %v2505
    %v2534 = vadd.f32 %v2467, %v2505
    %v2535 = vadd.f32 %v2468, %v2505
    %v2536 = vadd.f32 %v2469, %v2505
    %v2537 = vadd.f32 %v2470, %v2505
    %v2538 = vadd.f32 %v2471, %v2505
    %v2539 = vadd.f32 %v2472, %v2505
    %v2540 = vadd.f32 %v2473, %v2505
    %v2541 = vadd.f32 %v2474, %v2505
    %v2542 = vadd.f32 %v2475, %v2505
    %v2543 = vadd.f32 %v2476, %v2505
    %v2544 = vadd.f32 %v2477, %v2505
    %v2545 = vadd.f32 %v2478, %v2505
    %v2546 = vadd.f32 %v2479, %v2505
    %v2547 = vadd.f32 %v2480, %v2505
    %v2548 = vadd.f32 %v2481, %v2505
    %v2549 = vadd.f32 %v2482, %v2505
    %v2550 = vadd.f32 %v2483, %v2505
    %v2551 = vadd.f32 %v2484, %v2505
    %v2552 = vadd.f32 %v2485, %v2505
    %v2553 = vadd.f32 %v2486, %v2505
    %v2554 = vadd.f32 %v2487, %v2505
    %v2555 = vadd.f32 %v2488, %v2505
    %v2556 = vadd.f32 %v2489, %v2505
    %v2557 = vadd.f32 %v2490, %v2505
    %v2558 = vadd.f32 %v2491, %v2505
    %v2559 = vadd.f32 %v2492, %v2505
    %v2560 = vadd.f32 %v2493, %v2505
    %v2561 = vadd.f32 %v2494, %v2505
    %v2562 = vadd.f32 %v2495, %v2505
    %v2563 = vadd.f32 %v2496, %v2505
    %v2564 = vadd.f32 %v2497, %v2505
    %v2565 = vadd.f32 %v2498, %v2505
    %v2566 = vadd.f32 %v2499, %v2505
    %v2567 = vadd.f32 %v2500, %v2505
    %v2568 = vadd.f32 %v2501, %v2505
    %v2569 = vadd.f32 %v2502, %v2505
    %v2570 = vadd.f32 %v2503, %v2505
    %v2635 = vrot.slane %v1397, 7
    %v2636 = vsel %vm212, %v2635, %v1396
    %v2637 = vrot.slane %v1398, 6
    %v2638 = vsel %vm214, %v2637, %v2636
    %v2639 = vrot.slane %v1399, 5
    %v2640 = vsel %vm216, %v2639, %v2638
    %v2641 = vrot.slane %v1400, 4
    %v2642 = vsel %vm218, %v2641, %v2640
    %v2643 = vrot.slane %v1401, 3
    %v2644 = vsel %vm220, %v2643, %v2642
    %v2645 = vrot.slane %v1402, 2
    %v2646 = vsel %vm222, %v2645, %v2644
    %v2647 = vrot.slane %v1403, 1
    %v2648 = vsel %vm224, %v2647, %v2646
    %v2649 = vrot.slane %v1405, 7
    %v2650 = vsel %vm212, %v2649, %v1404
    %v2651 = vrot.slane %v1406, 6
    %v2652 = vsel %vm214, %v2651, %v2650
    %v2653 = vrot.slane %v1407, 5
    %v2654 = vsel %vm216, %v2653, %v2652
    %v2655 = vrot.slane %v1408, 4
    %v2656 = vsel %vm218, %v2655, %v2654
    %v2657 = vrot.slane %v1409, 3
    %v2658 = vsel %vm220, %v2657, %v2656
    %v2659 = vrot.slane %v1410, 2
    %v2660 = vsel %vm222, %v2659, %v2658
    %v2661 = vrot.slane %v1411, 1
    %v2662 = vsel %vm224, %v2661, %v2660
    %v2663 = vrot.slane %v1413, 7
    %v2664 = vsel %vm212, %v2663, %v1412
    %v2665 = vrot.slane %v1414, 6
    %v2666 = vsel %vm214, %v2665, %v2664
    %v2667 = vrot.slane %v1415, 5
    %v2668 = vsel %vm216, %v2667, %v2666
    %v2669 = vrot.slane %v1416, 4
    %v2670 = vsel %vm218, %v2669, %v2668
    %v2671 = vrot.slane %v1417, 3
    %v2672 = vsel %vm220, %v2671, %v2670
    %v2673 = vrot.slane %v1418, 2
    %v2674 = vsel %vm222, %v2673, %v2672
    %v2675 = vrot.slane %v1419, 1
    %v2676 = vsel %vm224, %v2675, %v2674
    %v2677 = vrot.slane %v1421, 7
    %v2678 = vsel %vm212, %v2677, %v1420
    %v2679 = vrot.slane %v1422, 6
    %v2680 = vsel %vm214, %v2679, %v2678
    %v2681 = vrot.slane %v1423, 5
    %v2682 = vsel %vm216, %v2681, %v2680
    %v2683 = vrot.slane %v1424, 4
    %v2684 = vsel %vm218, %v2683, %v2682
    %v2685 = vrot.slane %v1425, 3
    %v2686 = vsel %vm220, %v2685, %v2684
    %v2687 = vrot.slane %v1426, 2
    %v2688 = vsel %vm222, %v2687, %v2686
    %v2689 = vrot.slane %v1427, 1
    %v2690 = vsel %vm224, %v2689, %v2688
    %v2691 = vrot.slane %v1429, 7
    %v2692 = vsel %vm212, %v2691, %v1428
    %v2693 = vrot.slane %v1430, 6
    %v2694 = vsel %vm214, %v2693, %v2692
    %v2695 = vrot.slane %v1431, 5
    %v2696 = vsel %vm216, %v2695, %v2694
    %v2697 = vrot.slane %v1432, 4
    %v2698 = vsel %vm218, %v2697, %v2696
    %v2699 = vrot.slane %v1433, 3
    %v2700 = vsel %vm220, %v2699, %v2698
    %v2701 = vrot.slane %v1434, 2
    %v2702 = vsel %vm222, %v2701, %v2700
    %v2703 = vrot.slane %v1435, 1
    %v2704 = vsel %vm224, %v2703, %v2702
    %v2705 = vrot.slane %v1437, 7
    %v2706 = vsel %vm212, %v2705, %v1436
    %v2707 = vrot.slane %v1438, 6
    %v2708 = vsel %vm214, %v2707, %v2706
    %v2709 = vrot.slane %v1439, 5
    %v2710 = vsel %vm216, %v2709, %v2708
    %v2711 = vrot.slane %v1440, 4
    %v2712 = vsel %vm218, %v2711, %v2710
    %v2713 = vrot.slane %v1441, 3
    %v2714 = vsel %vm220, %v2713, %v2712
    %v2715 = vrot.slane %v1442, 2
    %v2716 = vsel %vm222, %v2715, %v2714
    %v2717 = vrot.slane %v1443, 1
    %v2718 = vsel %vm224, %v2717, %v2716
    %v2719 = vrot.slane %v1445, 7
    %v2720 = vsel %vm212, %v2719, %v1444
    %v2721 = vrot.slane %v1446, 6
    %v2722 = vsel %vm214, %v2721, %v2720
    %v2723 = vrot.slane %v1447, 5
    %v2724 = vsel %vm216, %v2723, %v2722
    %v2725 = vrot.slane %v1448, 4
    %v2726 = vsel %vm218, %v2725, %v2724
    %v2727 = vrot.slane %v1449, 3
    %v2728 = vsel %vm220, %v2727, %v2726
    %v2729 = vrot.slane %v1450, 2
    %v2730 = vsel %vm222, %v2729, %v2728
    %v2731 = vrot.slane %v1451, 1
    %v2732 = vsel %vm224, %v2731, %v2730
    %v2733 = vrot.slane %v1453, 7
    %v2734 = vsel %vm212, %v2733, %v1452
    %v2735 = vrot.slane %v1454, 6
    %v2736 = vsel %vm214, %v2735, %v2734
    %v2737 = vrot.slane %v1455, 5
    %v2738 = vsel %vm216, %v2737, %v2736
    %v2739 = vrot.slane %v1456, 4
    %v2740 = vsel %vm218, %v2739, %v2738
    %v2741 = vrot.slane %v1457, 3
    %v2742 = vsel %vm220, %v2741, %v2740
    %v2743 = vrot.slane %v1458, 2
    %v2744 = vsel %vm222, %v2743, %v2742
    %v2745 = vrot.slane %v1459, 1
    %v2746 = vsel %vm224, %v2745, %v2744
    %v2755 = vsel %vm145, %v2648, 0.0
    %2756 = vadd.xlane.f32.xlu0 %v2755
    %v2757 = vpop.xlane.xlu0 %2756
    %v2758 = vsel %vm145, %v2662, 0.0
    %2759 = vadd.xlane.f32.xlu0 %v2758
    %v2760 = vpop.xlane.xlu0 %2759
    %v2761 = vsel %vm145, %v2676, 0.0
    %2762 = vadd.xlane.f32.xlu0 %v2761
    %v2763 = vpop.xlane.xlu0 %2762
    %v2764 = vsel %vm145, %v2690, 0.0
    %2765 = vadd.xlane.f32.xlu0 %v2764
    %v2766 = vpop.xlane.xlu0 %2765
    %v2767 = vsel %vm145, %v2704, 0.0
    %2768 = vadd.xlane.f32.xlu0 %v2767
    %v2769 = vpop.xlane.xlu0 %2768
    %v2770 = vsel %vm145, %v2718, 0.0
    %2771 = vadd.xlane.f32.xlu0 %v2770
    %v2772 = vpop.xlane.xlu0 %2771
    %v2773 = vsel %vm145, %v2732, 0.0
    %2774 = vadd.xlane.f32.xlu0 %v2773
    %v2775 = vpop.xlane.xlu0 %2774
    %v2776 = vsel %vm145, %v2746, 0.0
    %2777 = vadd.xlane.f32.xlu0 %v2776
    %v2778 = vpop.xlane.xlu0 %2777
    %v2779 = vmul.f32 %v2757, %v1674
    %v2780 = vmul.f32 %v2760, %v1674
    %v2781 = vmul.f32 %v2763, %v1674
    %v2782 = vmul.f32 %v2766, %v1674
    %v2783 = vmul.f32 %v2769, %v1674
    %v2784 = vmul.f32 %v2772, %v1674
    %v2785 = vmul.f32 %v2775, %v1674
    %v2786 = vmul.f32 %v2778, %v1674
    %v2795 = vrot.slane %v2779, 1
    %v2796 = vrot.slane %v2779, 2
    %v2797 = vrot.slane %v2779, 3
    %v2798 = vrot.slane %v2779, 4
    %v2799 = vrot.slane %v2779, 5
    %v2800 = vrot.slane %v2779, 6
    %v2801 = vrot.slane %v2779, 7
    %v2802 = vrot.slane %v2780, 1
    %v2803 = vrot.slane %v2780, 2
    %v2804 = vrot.slane %v2780, 3
    %v2805 = vrot.slane %v2780, 4
    %v2806 = vrot.slane %v2780, 5
    %v2807 = vrot.slane %v2780, 6
    %v2808 = vrot.slane %v2780, 7
    %v2809 = vrot.slane %v2781, 1
    %v2810 = vrot.slane %v2781, 2
    %v2811 = vrot.slane %v2781, 3
    %v2812 = vrot.slane %v2781, 4
    %v2813 = vrot.slane %v2781, 5
    %v2814 = vrot.slane %v2781, 6
    %v2815 = vrot.slane %v2781, 7
    %v2816 = vrot.slane %v2782, 1
    %v2817 = vrot.slane %v2782, 2
    %v2818 = vrot.slane %v2782, 3
    %v2819 = vrot.slane %v2782, 4
    %v2820 = vrot.slane %v2782, 5
    %v2821 = vrot.slane %v2782, 6
    %v2822 = vrot.slane %v2782, 7
    %v2823 = vrot.slane %v2783, 1
    %v2824 = vrot.slane %v2783, 2
    %v2825 = vrot.slane %v2783, 3
    %v2826 = vrot.slane %v2783, 4
    %v2827 = vrot.slane %v2783, 5
    %v2828 = vrot.slane %v2783, 6
    %v2829 = vrot.slane %v2783, 7
    %v2830 = vrot.slane %v2784, 1
    %v2831 = vrot.slane %v2784, 2
    %v2832 = vrot.slane %v2784, 3
    %v2833 = vrot.slane %v2784, 4
    %v2834 = vrot.slane %v2784, 5
    %v2835 = vrot.slane %v2784, 6
    %v2836 = vrot.slane %v2784, 7
    %v2837 = vrot.slane %v2785, 1
    %v2838 = vrot.slane %v2785, 2
    %v2839 = vrot.slane %v2785, 3
    %v2840 = vrot.slane %v2785, 4
    %v2841 = vrot.slane %v2785, 5
    %v2842 = vrot.slane %v2785, 6
    %v2843 = vrot.slane %v2785, 7
    %v2844 = vrot.slane %v2786, 1
    %v2845 = vrot.slane %v2786, 2
    %v2846 = vrot.slane %v2786, 3
    %v2847 = vrot.slane %v2786, 4
    %v2848 = vrot.slane %v2786, 5
    %v2849 = vrot.slane %v2786, 6
    %v2850 = vrot.slane %v2786, 7
    %v2915 = vsub.f32 %v1396, %v2779
    %v2916 = vsub.f32 %v1397, %v2795
    %v2917 = vsub.f32 %v1398, %v2796
    %v2918 = vsub.f32 %v1399, %v2797
    %v2919 = vsub.f32 %v1400, %v2798
    %v2920 = vsub.f32 %v1401, %v2799
    %v2921 = vsub.f32 %v1402, %v2800
    %v2922 = vsub.f32 %v1403, %v2801
    %v2923 = vsub.f32 %v1404, %v2780
    %v2924 = vsub.f32 %v1405, %v2802
    %v2925 = vsub.f32 %v1406, %v2803
    %v2926 = vsub.f32 %v1407, %v2804
    %v2927 = vsub.f32 %v1408, %v2805
    %v2928 = vsub.f32 %v1409, %v2806
    %v2929 = vsub.f32 %v1410, %v2807
    %v2930 = vsub.f32 %v1411, %v2808
    %v2931 = vsub.f32 %v1412, %v2781
    %v2932 = vsub.f32 %v1413, %v2809
    %v2933 = vsub.f32 %v1414, %v2810
    %v2934 = vsub.f32 %v1415, %v2811
    %v2935 = vsub.f32 %v1416, %v2812
    %v2936 = vsub.f32 %v1417, %v2813
    %v2937 = vsub.f32 %v1418, %v2814
    %v2938 = vsub.f32 %v1419, %v2815
    %v2939 = vsub.f32 %v1420, %v2782
    %v2940 = vsub.f32 %v1421, %v2816
    %v2941 = vsub.f32 %v1422, %v2817
    %v2942 = vsub.f32 %v1423, %v2818
    %v2943 = vsub.f32 %v1424, %v2819
    %v2944 = vsub.f32 %v1425, %v2820
    %v2945 = vsub.f32 %v1426, %v2821
    %v2946 = vsub.f32 %v1427, %v2822
    %v2947 = vsub.f32 %v1428, %v2783
    %v2948 = vsub.f32 %v1429, %v2823
    %v2949 = vsub.f32 %v1430, %v2824
    %v2950 = vsub.f32 %v1431, %v2825
    %v2951 = vsub.f32 %v1432, %v2826
    %v2952 = vsub.f32 %v1433, %v2827
    %v2953 = vsub.f32 %v1434, %v2828
    %v2954 = vsub.f32 %v1435, %v2829
    %v2955 = vsub.f32 %v1436, %v2784
    %v2956 = vsub.f32 %v1437, %v2830
    %v2957 = vsub.f32 %v1438, %v2831
    %v2958 = vsub.f32 %v1439, %v2832
    %v2959 = vsub.f32 %v1440, %v2833
    %v2960 = vsub.f32 %v1441, %v2834
    %v2961 = vsub.f32 %v1442, %v2835
    %v2962 = vsub.f32 %v1443, %v2836
    %v2963 = vsub.f32 %v1444, %v2785
    %v2964 = vsub.f32 %v1445, %v2837
    %v2965 = vsub.f32 %v1446, %v2838
    %v2966 = vsub.f32 %v1447, %v2839
    %v2967 = vsub.f32 %v1448, %v2840
    %v2968 = vsub.f32 %v1449, %v2841
    %v2969 = vsub.f32 %v1450, %v2842
    %v2970 = vsub.f32 %v1451, %v2843
    %v2971 = vsub.f32 %v1452, %v2786
    %v2972 = vsub.f32 %v1453, %v2844
    %v2973 = vsub.f32 %v1454, %v2845
    %v2974 = vsub.f32 %v1455, %v2846
    %v2975 = vsub.f32 %v1456, %v2847
    %v2976 = vsub.f32 %v1457, %v2848
    %v2977 = vsub.f32 %v1458, %v2849
    %v2978 = vsub.f32 %v1459, %v2850
    %v2979 = vmul.f32 %v2915, %v2915
    %v2980 = vmul.f32 %v2916, %v2916
    %v2981 = vmul.f32 %v2917, %v2917
    %v2982 = vmul.f32 %v2918, %v2918
    %v2983 = vmul.f32 %v2919, %v2919
    %v2984 = vmul.f32 %v2920, %v2920
    %v2985 = vmul.f32 %v2921, %v2921
    %v2986 = vmul.f32 %v2922, %v2922
    %v2987 = vmul.f32 %v2923, %v2923
    %v2988 = vmul.f32 %v2924, %v2924
    %v2989 = vmul.f32 %v2925, %v2925
    %v2990 = vmul.f32 %v2926, %v2926
    %v2991 = vmul.f32 %v2927, %v2927
    %v2992 = vmul.f32 %v2928, %v2928
    %v2993 = vmul.f32 %v2929, %v2929
    %v2994 = vmul.f32 %v2930, %v2930
    %v2995 = vmul.f32 %v2931, %v2931
    %v2996 = vmul.f32 %v2932, %v2932
    %v2997 = vmul.f32 %v2933, %v2933
    %v2998 = vmul.f32 %v2934, %v2934
    %v2999 = vmul.f32 %v2935, %v2935
    %v3000 = vmul.f32 %v2936, %v2936
    %v3001 = vmul.f32 %v2937, %v2937
    %v3002 = vmul.f32 %v2938, %v2938
    %v3003 = vmul.f32 %v2939, %v2939
    %v3004 = vmul.f32 %v2940, %v2940
    %v3005 = vmul.f32 %v2941, %v2941
    %v3006 = vmul.f32 %v2942, %v2942
    %v3007 = vmul.f32 %v2943, %v2943
    %v3008 = vmul.f32 %v2944, %v2944
    %v3009 = vmul.f32 %v2945, %v2945
    %v3010 = vmul.f32 %v2946, %v2946
    %v3011 = vmul.f32 %v2947, %v2947
    %v3012 = vmul.f32 %v2948, %v2948
    %v3013 = vmul.f32 %v2949, %v2949
    %v3014 = vmul.f32 %v2950, %v2950
    %v3015 = vmul.f32 %v2951, %v2951
    %v3016 = vmul.f32 %v2952, %v2952
    %v3017 = vmul.f32 %v2953, %v2953
    %v3018 = vmul.f32 %v2954, %v2954
    %v3019 = vmul.f32 %v2955, %v2955
    %v3020 = vmul.f32 %v2956, %v2956
    %v3021 = vmul.f32 %v2957, %v2957
    %v3022 = vmul.f32 %v2958, %v2958
    %v3023 = vmul.f32 %v2959, %v2959
    %v3024 = vmul.f32 %v2960, %v2960
    %v3025 = vmul.f32 %v2961, %v2961
    %v3026 = vmul.f32 %v2962, %v2962
    %v3027 = vmul.f32 %v2963, %v2963
    %v3028 = vmul.f32 %v2964, %v2964
    %v3029 = vmul.f32 %v2965, %v2965
    %v3030 = vmul.f32 %v2966, %v2966
    %v3031 = vmul.f32 %v2967, %v2967
    %v3032 = vmul.f32 %v2968, %v2968
    %v3033 = vmul.f32 %v2969, %v2969
    %v3034 = vmul.f32 %v2970, %v2970
    %v3035 = vmul.f32 %v2971, %v2971
    %v3036 = vmul.f32 %v2972, %v2972
    %v3037 = vmul.f32 %v2973, %v2973
    %v3038 = vmul.f32 %v2974, %v2974
    %v3039 = vmul.f32 %v2975, %v2975
    %v3040 = vmul.f32 %v2976, %v2976
    %v3041 = vmul.f32 %v2977, %v2977
    %v3042 = vmul.f32 %v2978, %v2978
    %v3107 = vrot.slane %v2980, 7
    %v3108 = vsel %vm212, %v3107, %v2979
    %v3109 = vrot.slane %v2981, 6
    %v3110 = vsel %vm214, %v3109, %v3108
    %v3111 = vrot.slane %v2982, 5
    %v3112 = vsel %vm216, %v3111, %v3110
    %v3113 = vrot.slane %v2983, 4
    %v3114 = vsel %vm218, %v3113, %v3112
    %v3115 = vrot.slane %v2984, 3
    %v3116 = vsel %vm220, %v3115, %v3114
    %v3117 = vrot.slane %v2985, 2
    %v3118 = vsel %vm222, %v3117, %v3116
    %v3119 = vrot.slane %v2986, 1
    %v3120 = vsel %vm224, %v3119, %v3118
    %v3121 = vrot.slane %v2988, 7
    %v3122 = vsel %vm212, %v3121, %v2987
    %v3123 = vrot.slane %v2989, 6
    %v3124 = vsel %vm214, %v3123, %v3122
    %v3125 = vrot.slane %v2990, 5
    %v3126 = vsel %vm216, %v3125, %v3124
    %v3127 = vrot.slane %v2991, 4
    %v3128 = vsel %vm218, %v3127, %v3126
    %v3129 = vrot.slane %v2992, 3
    %v3130 = vsel %vm220, %v3129, %v3128
    %v3131 = vrot.slane %v2993, 2
    %v3132 = vsel %vm222, %v3131, %v3130
    %v3133 = vrot.slane %v2994, 1
    %v3134 = vsel %vm224, %v3133, %v3132
    %v3135 = vrot.slane %v2996, 7
    %v3136 = vsel %vm212, %v3135, %v2995
    %v3137 = vrot.slane %v2997, 6
    %v3138 = vsel %vm214, %v3137, %v3136
    %v3139 = vrot.slane %v2998, 5
    %v3140 = vsel %vm216, %v3139, %v3138
    %v3141 = vrot.slane %v2999, 4
    %v3142 = vsel %vm218, %v3141, %v3140
    %v3143 = vrot.slane %v3000, 3
    %v3144 = vsel %vm220, %v3143, %v3142
    %v3145 = vrot.slane %v3001, 2
    %v3146 = vsel %vm222, %v3145, %v3144
    %v3147 = vrot.slane %v3002, 1
    %v3148 = vsel %vm224, %v3147, %v3146
    %v3149 = vrot.slane %v3004, 7
    %v3150 = vsel %vm212, %v3149, %v3003
    %v3151 = vrot.slane %v3005, 6
    %v3152 = vsel %vm214, %v3151, %v3150
    %v3153 = vrot.slane %v3006, 5
    %v3154 = vsel %vm216, %v3153, %v3152
    %v3155 = vrot.slane %v3007, 4
    %v3156 = vsel %vm218, %v3155, %v3154
    %v3157 = vrot.slane %v3008, 3
    %v3158 = vsel %vm220, %v3157, %v3156
    %v3159 = vrot.slane %v3009, 2
    %v3160 = vsel %vm222, %v3159, %v3158
    %v3161 = vrot.slane %v3010, 1
    %v3162 = vsel %vm224, %v3161, %v3160
    %v3163 = vrot.slane %v3012, 7
    %v3164 = vsel %vm212, %v3163, %v3011
    %v3165 = vrot.slane %v3013, 6
    %v3166 = vsel %vm214, %v3165, %v3164
    %v3167 = vrot.slane %v3014, 5
    %v3168 = vsel %vm216, %v3167, %v3166
    %v3169 = vrot.slane %v3015, 4
    %v3170 = vsel %vm218, %v3169, %v3168
    %v3171 = vrot.slane %v3016, 3
    %v3172 = vsel %vm220, %v3171, %v3170
    %v3173 = vrot.slane %v3017, 2
    %v3174 = vsel %vm222, %v3173, %v3172
    %v3175 = vrot.slane %v3018, 1
    %v3176 = vsel %vm224, %v3175, %v3174
    %v3177 = vrot.slane %v3020, 7
    %v3178 = vsel %vm212, %v3177, %v3019
    %v3179 = vrot.slane %v3021, 6
    %v3180 = vsel %vm214, %v3179, %v3178
    %v3181 = vrot.slane %v3022, 5
    %v3182 = vsel %vm216, %v3181, %v3180
    %v3183 = vrot.slane %v3023, 4
    %v3184 = vsel %vm218, %v3183, %v3182
    %v3185 = vrot.slane %v3024, 3
    %v3186 = vsel %vm220, %v3185, %v3184
    %v3187 = vrot.slane %v3025, 2
    %v3188 = vsel %vm222, %v3187, %v3186
    %v3189 = vrot.slane %v3026, 1
    %v3190 = vsel %vm224, %v3189, %v3188
    %v3191 = vrot.slane %v3028, 7
    %v3192 = vsel %vm212, %v3191, %v3027
    %v3193 = vrot.slane %v3029, 6
    %v3194 = vsel %vm214, %v3193, %v3192
    %v3195 = vrot.slane %v3030, 5
    %v3196 = vsel %vm216, %v3195, %v3194
    %v3197 = vrot.slane %v3031, 4
    %v3198 = vsel %vm218, %v3197, %v3196
    %v3199 = vrot.slane %v3032, 3
    %v3200 = vsel %vm220, %v3199, %v3198
    %v3201 = vrot.slane %v3033, 2
    %v3202 = vsel %vm222, %v3201, %v3200
    %v3203 = vrot.slane %v3034, 1
    %v3204 = vsel %vm224, %v3203, %v3202
    %v3205 = vrot.slane %v3036, 7
    %v3206 = vsel %vm212, %v3205, %v3035
    %v3207 = vrot.slane %v3037, 6
    %v3208 = vsel %vm214, %v3207, %v3206
    %v3209 = vrot.slane %v3038, 5
    %v3210 = vsel %vm216, %v3209, %v3208
    %v3211 = vrot.slane %v3039, 4
    %v3212 = vsel %vm218, %v3211, %v3210
    %v3213 = vrot.slane %v3040, 3
    %v3214 = vsel %vm220, %v3213, %v3212
    %v3215 = vrot.slane %v3041, 2
    %v3216 = vsel %vm222, %v3215, %v3214
    %v3217 = vrot.slane %v3042, 1
    %v3218 = vsel %vm224, %v3217, %v3216
    %v3227 = vsel %vm145, %v3120, 0.0
    %3228 = vadd.xlane.f32.xlu0 %v3227
    %v3229 = vpop.xlane.xlu0 %3228
    %v3230 = vsel %vm145, %v3134, 0.0
    %3231 = vadd.xlane.f32.xlu0 %v3230
    %v3232 = vpop.xlane.xlu0 %3231
    %v3233 = vsel %vm145, %v3148, 0.0
    %3234 = vadd.xlane.f32.xlu0 %v3233
    %v3235 = vpop.xlane.xlu0 %3234
    %v3236 = vsel %vm145, %v3162, 0.0
    %3237 = vadd.xlane.f32.xlu0 %v3236
    %v3238 = vpop.xlane.xlu0 %3237
    %v3239 = vsel %vm145, %v3176, 0.0
    %3240 = vadd.xlane.f32.xlu0 %v3239
    %v3241 = vpop.xlane.xlu0 %3240
    %v3242 = vsel %vm145, %v3190, 0.0
    %3243 = vadd.xlane.f32.xlu0 %v3242
    %v3244 = vpop.xlane.xlu0 %3243
    %v3245 = vsel %vm145, %v3204, 0.0
    %3246 = vadd.xlane.f32.xlu0 %v3245
    %v3247 = vpop.xlane.xlu0 %3246
    %v3248 = vsel %vm145, %v3218, 0.0
    %3249 = vadd.xlane.f32.xlu0 %v3248
    %v3250 = vpop.xlane.xlu0 %3249
    %v3251 = vmul.f32 %v3229, %v1674
    %v3252 = vmul.f32 %v3232, %v1674
    %v3253 = vmul.f32 %v3235, %v1674
    %v3254 = vmul.f32 %v3238, %v1674
    %v3255 = vmul.f32 %v3241, %v1674
    %v3256 = vmul.f32 %v3244, %v1674
    %v3257 = vmul.f32 %v3247, %v1674
    %v3258 = vmul.f32 %v3250, %v1674
    %v3259 = vadd.f32 %v3251, 1e-05
    %v3260 = vadd.f32 %v3252, 1e-05
    %v3261 = vadd.f32 %v3253, 1e-05
    %v3262 = vadd.f32 %v3254, 1e-05
    %v3263 = vadd.f32 %v3255, 1e-05
    %v3264 = vadd.f32 %v3256, 1e-05
    %v3265 = vadd.f32 %v3257, 1e-05
    %v3266 = vadd.f32 %v3258, 1e-05
    %v3267 = vrsqrt.pop %v3259
    %v3268 = vmul.f32 %v3267, %v3259
    %v3269 = vmul.f32 %v3268, %v3267
    %v3270 = vmul.f32 0.5, %v3269
    %v3271 = vsub.f32 1.5, %v3270
    %v3272 = vmul.f32 %v3267, %v3271
    %vm3273 = vweird.f32 %v3259
    %vm3274 = vweird.f32 %v3267
    %vm3275 = vmor %vm3273, %vm3274
    %v3276 = vsel %vm3275, %v3267, %v3272
    %v3277 = vrsqrt.pop %v3260
    %v3278 = vmul.f32 %v3277, %v3260
    %v3279 = vmul.f32 %v3278, %v3277
    %v3280 = vmul.f32 0.5, %v3279
    %v3281 = vsub.f32 1.5, %v3280
    %v3282 = vmul.f32 %v3277, %v3281
    %vm3283 = vweird.f32 %v3260
    %vm3284 = vweird.f32 %v3277
    %vm3285 = vmor %vm3283, %vm3284
    %v3286 = vsel %vm3285, %v3277, %v3282
    %v3287 = vrsqrt.pop %v3261
    %v3288 = vmul.f32 %v3287, %v3261
    %v3289 = vmul.f32 %v3288, %v3287
    %v3290 = vmul.f32 0.5, %v3289
    %v3291 = vsub.f32 1.5, %v3290
    %v3292 = vmul.f32 %v3287, %v3291
    %vm3293 = vweird.f32 %v3261
    %vm3294 = vweird.f32 %v3287
    %vm3295 = vmor %vm3293, %vm3294
    %v3296 = vsel %vm3295, %v3287, %v3292
    %v3297 = vrsqrt.pop %v3262
    %v3298 = vmul.f32 %v3297, %v3262
    %v3299 = vmul.f32 %v3298, %v3297
    %v3300 = vmul.f32 0.5, %v3299
    %v3301 = vsub.f32 1.5, %v3300
    %v3302 = vmul.f32 %v3297, %v3301
    %vm3303 = vweird.f32 %v3262
    %vm3304 = vweird.f32 %v3297
    %vm3305 = vmor %vm3303, %vm3304
    %v3306 = vsel %vm3305, %v3297, %v3302
    %v3307 = vrsqrt.pop %v3263
    %v3308 = vmul.f32 %v3307, %v3263
    %v3309 = vmul.f32 %v3308, %v3307
    %v3310 = vmul.f32 0.5, %v3309
    %v3311 = vsub.f32 1.5, %v3310
    %v3312 = vmul.f32 %v3307, %v3311
    %vm3313 = vweird.f32 %v3263
    %vm3314 = vweird.f32 %v3307
    %vm3315 = vmor %vm3313, %vm3314
    %v3316 = vsel %vm3315, %v3307, %v3312
    %v3317 = vrsqrt.pop %v3264
    %v3318 = vmul.f32 %v3317, %v3264
    %v3319 = vmul.f32 %v3318, %v3317
    %v3320 = vmul.f32 0.5, %v3319
    %v3321 = vsub.f32 1.5, %v3320
    %v3322 = vmul.f32 %v3317, %v3321
    %vm3323 = vweird.f32 %v3264
    %vm3324 = vweird.f32 %v3317
    %vm3325 = vmor %vm3323, %vm3324
    %v3326 = vsel %vm3325, %v3317, %v3322
    %v3327 = vrsqrt.pop %v3265
    %v3328 = vmul.f32 %v3327, %v3265
    %v3329 = vmul.f32 %v3328, %v3327
    %v3330 = vmul.f32 0.5, %v3329
    %v3331 = vsub.f32 1.5, %v3330
    %v3332 = vmul.f32 %v3327, %v3331
    %vm3333 = vweird.f32 %v3265
    %vm3334 = vweird.f32 %v3327
    %vm3335 = vmor %vm3333, %vm3334
    %v3336 = vsel %vm3335, %v3327, %v3332
    %v3337 = vrsqrt.pop %v3266
    %v3338 = vmul.f32 %v3337, %v3266
    %v3339 = vmul.f32 %v3338, %v3337
    %v3340 = vmul.f32 0.5, %v3339
    %v3341 = vsub.f32 1.5, %v3340
    %v3342 = vmul.f32 %v3337, %v3341
    %vm3343 = vweird.f32 %v3266
    %vm3344 = vweird.f32 %v3337
    %vm3345 = vmor %vm3343, %vm3344
    %v3346 = vsel %vm3345, %v3337, %v3342
    %v3355 = vrot.slane %v3276, 1
    %v3356 = vrot.slane %v3276, 2
    %v3357 = vrot.slane %v3276, 3
    %v3358 = vrot.slane %v3276, 4
    %v3359 = vrot.slane %v3276, 5
    %v3360 = vrot.slane %v3276, 6
    %v3361 = vrot.slane %v3276, 7
    %v3362 = vrot.slane %v3286, 1
    %v3363 = vrot.slane %v3286, 2
    %v3364 = vrot.slane %v3286, 3
    %v3365 = vrot.slane %v3286, 4
    %v3366 = vrot.slane %v3286, 5
    %v3367 = vrot.slane %v3286, 6
    %v3368 = vrot.slane %v3286, 7
    %v3369 = vrot.slane %v3296, 1
    %v3370 = vrot.slane %v3296, 2
    %v3371 = vrot.slane %v3296, 3
    %v3372 = vrot.slane %v3296, 4
    %v3373 = vrot.slane %v3296, 5
    %v3374 = vrot.slane %v3296, 6
    %v3375 = vrot.slane %v3296, 7
    %v3376 = vrot.slane %v3306, 1
    %v3377 = vrot.slane %v3306, 2
    %v3378 = vrot.slane %v3306, 3
    %v3379 = vrot.slane %v3306, 4
    %v3380 = vrot.slane %v3306, 5
    %v3381 = vrot.slane %v3306, 6
    %v3382 = vrot.slane %v3306, 7
    %v3383 = vrot.slane %v3316, 1
    %v3384 = vrot.slane %v3316, 2
    %v3385 = vrot.slane %v3316, 3
    %v3386 = vrot.slane %v3316, 4
    %v3387 = vrot.slane %v3316, 5
    %v3388 = vrot.slane %v3316, 6
    %v3389 = vrot.slane %v3316, 7
    %v3390 = vrot.slane %v3326, 1
    %v3391 = vrot.slane %v3326, 2
    %v3392 = vrot.slane %v3326, 3
    %v3393 = vrot.slane %v3326, 4
    %v3394 = vrot.slane %v3326, 5
    %v3395 = vrot.slane %v3326, 6
    %v3396 = vrot.slane %v3326, 7
    %v3397 = vrot.slane %v3336, 1
    %v3398 = vrot.slane %v3336, 2
    %v3399 = vrot.slane %v3336, 3
    %v3400 = vrot.slane %v3336, 4
    %v3401 = vrot.slane %v3336, 5
    %v3402 = vrot.slane %v3336, 6
    %v3403 = vrot.slane %v3336, 7
    %v3404 = vrot.slane %v3346, 1
    %v3405 = vrot.slane %v3346, 2
    %v3406 = vrot.slane %v3346, 3
    %v3407 = vrot.slane %v3346, 4
    %v3408 = vrot.slane %v3346, 5
    %v3409 = vrot.slane %v3346, 6
    %v3410 = vrot.slane %v3346, 7
    %v3475 = vmul.f32 %v2915, %v3276
    %v3476 = vmul.f32 %v2916, %v3355
    %v3477 = vmul.f32 %v2917, %v3356
    %v3478 = vmul.f32 %v2918, %v3357
    %v3479 = vmul.f32 %v2919, %v3358
    %v3480 = vmul.f32 %v2920, %v3359
    %v3481 = vmul.f32 %v2921, %v3360
    %v3482 = vmul.f32 %v2922, %v3361
    %v3483 = vmul.f32 %v2923, %v3286
    %v3484 = vmul.f32 %v2924, %v3362
    %v3485 = vmul.f32 %v2925, %v3363
    %v3486 = vmul.f32 %v2926, %v3364
    %v3487 = vmul.f32 %v2927, %v3365
    %v3488 = vmul.f32 %v2928, %v3366
    %v3489 = vmul.f32 %v2929, %v3367
    %v3490 = vmul.f32 %v2930, %v3368
    %v3491 = vmul.f32 %v2931, %v3296
    %v3492 = vmul.f32 %v2932, %v3369
    %v3493 = vmul.f32 %v2933, %v3370
    %v3494 = vmul.f32 %v2934, %v3371
    %v3495 = vmul.f32 %v2935, %v3372
    %v3496 = vmul.f32 %v2936, %v3373
    %v3497 = vmul.f32 %v2937, %v3374
    %v3498 = vmul.f32 %v2938, %v3375
    %v3499 = vmul.f32 %v2939, %v3306
    %v3500 = vmul.f32 %v2940, %v3376
    %v3501 = vmul.f32 %v2941, %v3377
    %v3502 = vmul.f32 %v2942, %v3378
    %v3503 = vmul.f32 %v2943, %v3379
    %v3504 = vmul.f32 %v2944, %v3380
    %v3505 = vmul.f32 %v2945, %v3381
    %v3506 = vmul.f32 %v2946, %v3382
    %v3507 = vmul.f32 %v2947, %v3316
    %v3508 = vmul.f32 %v2948, %v3383
    %v3509 = vmul.f32 %v2949, %v3384
    %v3510 = vmul.f32 %v2950, %v3385
    %v3511 = vmul.f32 %v2951, %v3386
    %v3512 = vmul.f32 %v2952, %v3387
    %v3513 = vmul.f32 %v2953, %v3388
    %v3514 = vmul.f32 %v2954, %v3389
    %v3515 = vmul.f32 %v2955, %v3326
    %v3516 = vmul.f32 %v2956, %v3390
    %v3517 = vmul.f32 %v2957, %v3391
    %v3518 = vmul.f32 %v2958, %v3392
    %v3519 = vmul.f32 %v2959, %v3393
    %v3520 = vmul.f32 %v2960, %v3394
    %v3521 = vmul.f32 %v2961, %v3395
    %v3522 = vmul.f32 %v2962, %v3396
    %v3523 = vmul.f32 %v2963, %v3336
    %v3524 = vmul.f32 %v2964, %v3397
    %v3525 = vmul.f32 %v2965, %v3398
    %v3526 = vmul.f32 %v2966, %v3399
    %v3527 = vmul.f32 %v2967, %v3400
    %v3528 = vmul.f32 %v2968, %v3401
    %v3529 = vmul.f32 %v2969, %v3402
    %v3530 = vmul.f32 %v2970, %v3403
    %v3531 = vmul.f32 %v2971, %v3346
    %v3532 = vmul.f32 %v2972, %v3404
    %v3533 = vmul.f32 %v2973, %v3405
    %v3534 = vmul.f32 %v2974, %v3406
    %v3535 = vmul.f32 %v2975, %v3407
    %v3536 = vmul.f32 %v2976, %v3408
    %v3537 = vmul.f32 %v2977, %v3409
    %v3538 = vmul.f32 %v2978, %v3410
    %v3539 = vmul.f32 %v3475, %v2438
    %v3540 = vmul.f32 %v3476, %v2438
    %v3541 = vmul.f32 %v3477, %v2438
    %v3542 = vmul.f32 %v3478, %v2438
    %v3543 = vmul.f32 %v3479, %v2438
    %v3544 = vmul.f32 %v3480, %v2438
    %v3545 = vmul.f32 %v3481, %v2438
    %v3546 = vmul.f32 %v3482, %v2438
    %v3547 = vmul.f32 %v3483, %v2438
    %v3548 = vmul.f32 %v3484, %v2438
    %v3549 = vmul.f32 %v3485, %v2438
    %v3550 = vmul.f32 %v3486, %v2438
    %v3551 = vmul.f32 %v3487, %v2438
    %v3552 = vmul.f32 %v3488, %v2438
    %v3553 = vmul.f32 %v3489, %v2438
    %v3554 = vmul.f32 %v3490, %v2438
    %v3555 = vmul.f32 %v3491, %v2438
    %v3556 = vmul.f32 %v3492, %v2438
    %v3557 = vmul.f32 %v3493, %v2438
    %v3558 = vmul.f32 %v3494, %v2438
    %v3559 = vmul.f32 %v3495, %v2438
    %v3560 = vmul.f32 %v3496, %v2438
    %v3561 = vmul.f32 %v3497, %v2438
    %v3562 = vmul.f32 %v3498, %v2438
    %v3563 = vmul.f32 %v3499, %v2438
    %v3564 = vmul.f32 %v3500, %v2438
    %v3565 = vmul.f32 %v3501, %v2438
    %v3566 = vmul.f32 %v3502, %v2438
    %v3567 = vmul.f32 %v3503, %v2438
    %v3568 = vmul.f32 %v3504, %v2438
    %v3569 = vmul.f32 %v3505, %v2438
    %v3570 = vmul.f32 %v3506, %v2438
    %v3571 = vmul.f32 %v3507, %v2438
    %v3572 = vmul.f32 %v3508, %v2438
    %v3573 = vmul.f32 %v3509, %v2438
    %v3574 = vmul.f32 %v3510, %v2438
    %v3575 = vmul.f32 %v3511, %v2438
    %v3576 = vmul.f32 %v3512, %v2438
    %v3577 = vmul.f32 %v3513, %v2438
    %v3578 = vmul.f32 %v3514, %v2438
    %v3579 = vmul.f32 %v3515, %v2438
    %v3580 = vmul.f32 %v3516, %v2438
    %v3581 = vmul.f32 %v3517, %v2438
    %v3582 = vmul.f32 %v3518, %v2438
    %v3583 = vmul.f32 %v3519, %v2438
    %v3584 = vmul.f32 %v3520, %v2438
    %v3585 = vmul.f32 %v3521, %v2438
    %v3586 = vmul.f32 %v3522, %v2438
    %v3587 = vmul.f32 %v3523, %v2438
    %v3588 = vmul.f32 %v3524, %v2438
    %v3589 = vmul.f32 %v3525, %v2438
    %v3590 = vmul.f32 %v3526, %v2438
    %v3591 = vmul.f32 %v3527, %v2438
    %v3592 = vmul.f32 %v3528, %v2438
    %v3593 = vmul.f32 %v3529, %v2438
    %v3594 = vmul.f32 %v3530, %v2438
    %v3595 = vmul.f32 %v3531, %v2438
    %v3596 = vmul.f32 %v3532, %v2438
    %v3597 = vmul.f32 %v3533, %v2438
    %v3598 = vmul.f32 %v3534, %v2438
    %v3599 = vmul.f32 %v3535, %v2438
    %v3600 = vmul.f32 %v3536, %v2438
    %v3601 = vmul.f32 %v3537, %v2438
    %v3602 = vmul.f32 %v3538, %v2438
    %v3603 = vadd.f32 %v3539, %v2505
    %v3604 = vadd.f32 %v3540, %v2505
    %v3605 = vadd.f32 %v3541, %v2505
    %v3606 = vadd.f32 %v3542, %v2505
    %v3607 = vadd.f32 %v3543, %v2505
    %v3608 = vadd.f32 %v3544, %v2505
    %v3609 = vadd.f32 %v3545, %v2505
    %v3610 = vadd.f32 %v3546, %v2505
    %v3611 = vadd.f32 %v3547, %v2505
    %v3612 = vadd.f32 %v3548, %v2505
    %v3613 = vadd.f32 %v3549, %v2505
    %v3614 = vadd.f32 %v3550, %v2505
    %v3615 = vadd.f32 %v3551, %v2505
    %v3616 = vadd.f32 %v3552, %v2505
    %v3617 = vadd.f32 %v3553, %v2505
    %v3618 = vadd.f32 %v3554, %v2505
    %v3619 = vadd.f32 %v3555, %v2505
    %v3620 = vadd.f32 %v3556, %v2505
    %v3621 = vadd.f32 %v3557, %v2505
    %v3622 = vadd.f32 %v3558, %v2505
    %v3623 = vadd.f32 %v3559, %v2505
    %v3624 = vadd.f32 %v3560, %v2505
    %v3625 = vadd.f32 %v3561, %v2505
    %v3626 = vadd.f32 %v3562, %v2505
    %v3627 = vadd.f32 %v3563, %v2505
    %v3628 = vadd.f32 %v3564, %v2505
    %v3629 = vadd.f32 %v3565, %v2505
    %v3630 = vadd.f32 %v3566, %v2505
    %v3631 = vadd.f32 %v3567, %v2505
    %v3632 = vadd.f32 %v3568, %v2505
    %v3633 = vadd.f32 %v3569, %v2505
    %v3634 = vadd.f32 %v3570, %v2505
    %v3635 = vadd.f32 %v3571, %v2505
    %v3636 = vadd.f32 %v3572, %v2505
    %v3637 = vadd.f32 %v3573, %v2505
    %v3638 = vadd.f32 %v3574, %v2505
    %v3639 = vadd.f32 %v3575, %v2505
    %v3640 = vadd.f32 %v3576, %v2505
    %v3641 = vadd.f32 %v3577, %v2505
    %v3642 = vadd.f32 %v3578, %v2505
    %v3643 = vadd.f32 %v3579, %v2505
    %v3644 = vadd.f32 %v3580, %v2505
    %v3645 = vadd.f32 %v3581, %v2505
    %v3646 = vadd.f32 %v3582, %v2505
    %v3647 = vadd.f32 %v3583, %v2505
    %v3648 = vadd.f32 %v3584, %v2505
    %v3649 = vadd.f32 %v3585, %v2505
    %v3650 = vadd.f32 %v3586, %v2505
    %v3651 = vadd.f32 %v3587, %v2505
    %v3652 = vadd.f32 %v3588, %v2505
    %v3653 = vadd.f32 %v3589, %v2505
    %v3654 = vadd.f32 %v3590, %v2505
    %v3655 = vadd.f32 %v3591, %v2505
    %v3656 = vadd.f32 %v3592, %v2505
    %v3657 = vadd.f32 %v3593, %v2505
    %v3658 = vadd.f32 %v3594, %v2505
    %v3659 = vadd.f32 %v3595, %v2505
    %v3660 = vadd.f32 %v3596, %v2505
    %v3661 = vadd.f32 %v3597, %v2505
    %v3662 = vadd.f32 %v3598, %v2505
    %v3663 = vadd.f32 %v3599, %v2505
    %v3664 = vadd.f32 %v3600, %v2505
    %v3665 = vadd.f32 %v3601, %v2505
    %v3666 = vadd.f32 %v3602, %v2505
    %v3667 = vpack.c.bf16 %v2507, %v2507
    %v3668 = vpack.c.bf16 %v2508, %v2508
    %v3669 = vpack.c.bf16 %v2509, %v2509
    %v3670 = vpack.c.bf16 %v2510, %v2510
    %v3671 = vpack.c.bf16 %v2511, %v2511
    %v3672 = vpack.c.bf16 %v2512, %v2512
    %v3673 = vpack.c.bf16 %v2513, %v2513
    %v3674 = vpack.c.bf16 %v2514, %v2514
    %v3675 = vpack.c.bf16 %v2515, %v2515
    %v3676 = vpack.c.bf16 %v2516, %v2516
    %v3677 = vpack.c.bf16 %v2517, %v2517
    %v3678 = vpack.c.bf16 %v2518, %v2518
    %v3679 = vpack.c.bf16 %v2519, %v2519
    %v3680 = vpack.c.bf16 %v2520, %v2520
    %v3681 = vpack.c.bf16 %v2521, %v2521
    %v3682 = vpack.c.bf16 %v2522, %v2522
    %v3683 = vpack.c.bf16 %v2523, %v2523
    %v3684 = vpack.c.bf16 %v2524, %v2524
    %v3685 = vpack.c.bf16 %v2525, %v2525
    %v3686 = vpack.c.bf16 %v2526, %v2526
    %v3687 = vpack.c.bf16 %v2527, %v2527
    %v3688 = vpack.c.bf16 %v2528, %v2528
    %v3689 = vpack.c.bf16 %v2529, %v2529
    %v3690 = vpack.c.bf16 %v2530, %v2530
    %v3691 = vpack.c.bf16 %v2531, %v2531
    %v3692 = vpack.c.bf16 %v2532, %v2532
    %v3693 = vpack.c.bf16 %v2533, %v2533
    %v3694 = vpack.c.bf16 %v2534, %v2534
    %v3695 = vpack.c.bf16 %v2535, %v2535
    %v3696 = vpack.c.bf16 %v2536, %v2536
    %v3697 = vpack.c.bf16 %v2537, %v2537
    %v3698 = vpack.c.bf16 %v2538, %v2538
    %v3699 = vpack.c.bf16 %v2539, %v2539
    %v3700 = vpack.c.bf16 %v2540, %v2540
    %v3701 = vpack.c.bf16 %v2541, %v2541
    %v3702 = vpack.c.bf16 %v2542, %v2542
    %v3703 = vpack.c.bf16 %v2543, %v2543
    %v3704 = vpack.c.bf16 %v2544, %v2544
    %v3705 = vpack.c.bf16 %v2545, %v2545
    %v3706 = vpack.c.bf16 %v2546, %v2546
    %v3707 = vpack.c.bf16 %v2547, %v2547
    %v3708 = vpack.c.bf16 %v2548, %v2548
    %v3709 = vpack.c.bf16 %v2549, %v2549
    %v3710 = vpack.c.bf16 %v2550, %v2550
    %v3711 = vpack.c.bf16 %v2551, %v2551
    %v3712 = vpack.c.bf16 %v2552, %v2552
    %v3713 = vpack.c.bf16 %v2553, %v2553
    %v3714 = vpack.c.bf16 %v2554, %v2554
    %v3715 = vpack.c.bf16 %v2555, %v2555
    %v3716 = vpack.c.bf16 %v2556, %v2556
    %v3717 = vpack.c.bf16 %v2557, %v2557
    %v3718 = vpack.c.bf16 %v2558, %v2558
    %v3719 = vpack.c.bf16 %v2559, %v2559
    %v3720 = vpack.c.bf16 %v2560, %v2560
    %v3721 = vpack.c.bf16 %v2561, %v2561
    %v3722 = vpack.c.bf16 %v2562, %v2562
    %v3723 = vpack.c.bf16 %v2563, %v2563
    %v3724 = vpack.c.bf16 %v2564, %v2564
    %v3725 = vpack.c.bf16 %v2565, %v2565
    %v3726 = vpack.c.bf16 %v2566, %v2566
    %v3727 = vpack.c.bf16 %v2567, %v2567
    %v3728 = vpack.c.bf16 %v2568, %v2568
    %v3729 = vpack.c.bf16 %v2569, %v2569
    %v3730 = vpack.c.bf16 %v2570, %v2570
    %v3795 = vunpack.c.l.b16 %v3667
    %v3796 = vunpack.c.l.b16 %v3668
    %v3797 = vunpack.c.l.b16 %v3669
    %v3798 = vunpack.c.l.b16 %v3670
    %v3799 = vunpack.c.l.b16 %v3671
    %v3800 = vunpack.c.l.b16 %v3672
    %v3801 = vunpack.c.l.b16 %v3673
    %v3802 = vunpack.c.l.b16 %v3674
    %v3803 = vunpack.c.l.b16 %v3675
    %v3804 = vunpack.c.l.b16 %v3676
    %v3805 = vunpack.c.l.b16 %v3677
    %v3806 = vunpack.c.l.b16 %v3678
    %v3807 = vunpack.c.l.b16 %v3679
    %v3808 = vunpack.c.l.b16 %v3680
    %v3809 = vunpack.c.l.b16 %v3681
    %v3810 = vunpack.c.l.b16 %v3682
    %v3811 = vunpack.c.l.b16 %v3683
    %v3812 = vunpack.c.l.b16 %v3684
    %v3813 = vunpack.c.l.b16 %v3685
    %v3814 = vunpack.c.l.b16 %v3686
    %v3815 = vunpack.c.l.b16 %v3687
    %v3816 = vunpack.c.l.b16 %v3688
    %v3817 = vunpack.c.l.b16 %v3689
    %v3818 = vunpack.c.l.b16 %v3690
    %v3819 = vunpack.c.l.b16 %v3691
    %v3820 = vunpack.c.l.b16 %v3692
    %v3821 = vunpack.c.l.b16 %v3693
    %v3822 = vunpack.c.l.b16 %v3694
    %v3823 = vunpack.c.l.b16 %v3695
    %v3824 = vunpack.c.l.b16 %v3696
    %v3825 = vunpack.c.l.b16 %v3697
    %v3826 = vunpack.c.l.b16 %v3698
    %v3827 = vunpack.c.l.b16 %v3699
    %v3828 = vunpack.c.l.b16 %v3700
    %v3829 = vunpack.c.l.b16 %v3701
    %v3830 = vunpack.c.l.b16 %v3702
    %v3831 = vunpack.c.l.b16 %v3703
    %v3832 = vunpack.c.l.b16 %v3704
    %v3833 = vunpack.c.l.b16 %v3705
    %v3834 = vunpack.c.l.b16 %v3706
    %v3835 = vunpack.c.l.b16 %v3707
    %v3836 = vunpack.c.l.b16 %v3708
    %v3837 = vunpack.c.l.b16 %v3709
    %v3838 = vunpack.c.l.b16 %v3710
    %v3839 = vunpack.c.l.b16 %v3711
    %v3840 = vunpack.c.l.b16 %v3712
    %v3841 = vunpack.c.l.b16 %v3713
    %v3842 = vunpack.c.l.b16 %v3714
    %v3843 = vunpack.c.l.b16 %v3715
    %v3844 = vunpack.c.l.b16 %v3716
    %v3845 = vunpack.c.l.b16 %v3717
    %v3846 = vunpack.c.l.b16 %v3718
    %v3847 = vunpack.c.l.b16 %v3719
    %v3848 = vunpack.c.l.b16 %v3720
    %v3849 = vunpack.c.l.b16 %v3721
    %v3850 = vunpack.c.l.b16 %v3722
    %v3851 = vunpack.c.l.b16 %v3723
    %v3852 = vunpack.c.l.b16 %v3724
    %v3853 = vunpack.c.l.b16 %v3725
    %v3854 = vunpack.c.l.b16 %v3726
    %v3855 = vunpack.c.l.b16 %v3727
    %v3856 = vunpack.c.l.b16 %v3728
    %v3857 = vunpack.c.l.b16 %v3729
    %v3858 = vunpack.c.l.b16 %v3730
    %v3859 = vrot.slane %v3796, 7
    %v3860 = vsel %vm212, %v3859, %v3795
    %v3861 = vrot.slane %v3797, 6
    %v3862 = vsel %vm214, %v3861, %v3860
    %v3863 = vrot.slane %v3798, 5
    %v3864 = vsel %vm216, %v3863, %v3862
    %v3865 = vrot.slane %v3799, 4
    %v3866 = vsel %vm218, %v3865, %v3864
    %v3867 = vrot.slane %v3800, 3
    %v3868 = vsel %vm220, %v3867, %v3866
    %v3869 = vrot.slane %v3801, 2
    %v3870 = vsel %vm222, %v3869, %v3868
    %v3871 = vrot.slane %v3802, 1
    %v3872 = vsel %vm224, %v3871, %v3870
    %v3873 = vrot.slane %v3804, 7
    %v3874 = vsel %vm212, %v3873, %v3803
    %v3875 = vrot.slane %v3805, 6
    %v3876 = vsel %vm214, %v3875, %v3874
    %v3877 = vrot.slane %v3806, 5
    %v3878 = vsel %vm216, %v3877, %v3876
    %v3879 = vrot.slane %v3807, 4
    %v3880 = vsel %vm218, %v3879, %v3878
    %v3881 = vrot.slane %v3808, 3
    %v3882 = vsel %vm220, %v3881, %v3880
    %v3883 = vrot.slane %v3809, 2
    %v3884 = vsel %vm222, %v3883, %v3882
    %v3885 = vrot.slane %v3810, 1
    %v3886 = vsel %vm224, %v3885, %v3884
    %v3887 = vrot.slane %v3812, 7
    %v3888 = vsel %vm212, %v3887, %v3811
    %v3889 = vrot.slane %v3813, 6
    %v3890 = vsel %vm214, %v3889, %v3888
    %v3891 = vrot.slane %v3814, 5
    %v3892 = vsel %vm216, %v3891, %v3890
    %v3893 = vrot.slane %v3815, 4
    %v3894 = vsel %vm218, %v3893, %v3892
    %v3895 = vrot.slane %v3816, 3
    %v3896 = vsel %vm220, %v3895, %v3894
    %v3897 = vrot.slane %v3817, 2
    %v3898 = vsel %vm222, %v3897, %v3896
    %v3899 = vrot.slane %v3818, 1
    %v3900 = vsel %vm224, %v3899, %v3898
    %v3901 = vrot.slane %v3820, 7
    %v3902 = vsel %vm212, %v3901, %v3819
    %v3903 = vrot.slane %v3821, 6
    %v3904 = vsel %vm214, %v3903, %v3902
    %v3905 = vrot.slane %v3822, 5
    %v3906 = vsel %vm216, %v3905, %v3904
    %v3907 = vrot.slane %v3823, 4
    %v3908 = vsel %vm218, %v3907, %v3906
    %v3909 = vrot.slane %v3824, 3
    %v3910 = vsel %vm220, %v3909, %v3908
    %v3911 = vrot.slane %v3825, 2
    %v3912 = vsel %vm222, %v3911, %v3910
    %v3913 = vrot.slane %v3826, 1
    %v3914 = vsel %vm224, %v3913, %v3912
    %v3915 = vrot.slane %v3828, 7
    %v3916 = vsel %vm212, %v3915, %v3827
    %v3917 = vrot.slane %v3829, 6
    %v3918 = vsel %vm214, %v3917, %v3916
    %v3919 = vrot.slane %v3830, 5
    %v3920 = vsel %vm216, %v3919, %v3918
    %v3921 = vrot.slane %v3831, 4
    %v3922 = vsel %vm218, %v3921, %v3920
    %v3923 = vrot.slane %v3832, 3
    %v3924 = vsel %vm220, %v3923, %v3922
    %v3925 = vrot.slane %v3833, 2
    %v3926 = vsel %vm222, %v3925, %v3924
    %v3927 = vrot.slane %v3834, 1
    %v3928 = vsel %vm224, %v3927, %v3926
    %v3929 = vrot.slane %v3836, 7
    %v3930 = vsel %vm212, %v3929, %v3835
    %v3931 = vrot.slane %v3837, 6
    %v3932 = vsel %vm214, %v3931, %v3930
    %v3933 = vrot.slane %v3838, 5
    %v3934 = vsel %vm216, %v3933, %v3932
    %v3935 = vrot.slane %v3839, 4
    %v3936 = vsel %vm218, %v3935, %v3934
    %v3937 = vrot.slane %v3840, 3
    %v3938 = vsel %vm220, %v3937, %v3936
    %v3939 = vrot.slane %v3841, 2
    %v3940 = vsel %vm222, %v3939, %v3938
    %v3941 = vrot.slane %v3842, 1
    %v3942 = vsel %vm224, %v3941, %v3940
    %v3943 = vrot.slane %v3844, 7
    %v3944 = vsel %vm212, %v3943, %v3843
    %v3945 = vrot.slane %v3845, 6
    %v3946 = vsel %vm214, %v3945, %v3944
    %v3947 = vrot.slane %v3846, 5
    %v3948 = vsel %vm216, %v3947, %v3946
    %v3949 = vrot.slane %v3847, 4
    %v3950 = vsel %vm218, %v3949, %v3948
    %v3951 = vrot.slane %v3848, 3
    %v3952 = vsel %vm220, %v3951, %v3950
    %v3953 = vrot.slane %v3849, 2
    %v3954 = vsel %vm222, %v3953, %v3952
    %v3955 = vrot.slane %v3850, 1
    %v3956 = vsel %vm224, %v3955, %v3954
    %v3957 = vrot.slane %v3852, 7
    %v3958 = vsel %vm212, %v3957, %v3851
    %v3959 = vrot.slane %v3853, 6
    %v3960 = vsel %vm214, %v3959, %v3958
    %v3961 = vrot.slane %v3854, 5
    %v3962 = vsel %vm216, %v3961, %v3960
    %v3963 = vrot.slane %v3855, 4
    %v3964 = vsel %vm218, %v3963, %v3962
    %v3965 = vrot.slane %v3856, 3
    %v3966 = vsel %vm220, %v3965, %v3964
    %v3967 = vrot.slane %v3857, 2
    %v3968 = vsel %vm222, %v3967, %v3966
    %v3969 = vrot.slane %v3858, 1
    %v3970 = vsel %vm224, %v3969, %v3968
    %v3971 = vpack.c.b16 %v3886, %v3872
    %v3972 = vpack.c.b16 %v3914, %v3900
    %v3973 = vpack.c.b16 %v3942, %v3928
    %v3974 = vpack.c.b16 %v3970, %v3956
    %v3976 = vsel %vm145, %v3971, 0
    %v3979 = vsel %vm145, %v3972, 0
    %v3982 = vsel %vm145, %v3973, 0
    %v3985 = vsel %vm145, %v3974, 0
    %vm3987 = vcmask 1043456
    %v3989 = vsel %vm3987, %v119, 0
    %3991 = vmatpush.bf16.msra.mxu0 0
    %3992 = vmatpush.bf16.msra.mxu0 0
    %3993 = vmatpush.bf16.msra.mxu0 0
    %3994 = vmatpush.bf16.msra.mxu0 0
    %3995 = vmatpush.bf16.msra.mxu0 0
    %3996 = vmatpush.bf16.msra.mxu0 0
    %3997 = vmatpush.bf16.msra.mxu0 0
    %3998 = vmatpush.bf16.msra.mxu0 %v3989
    %3999 = vmatmul.bf16.gmra.mxu0 %v3976
    %v4000 = vpop.f32.mrf.mxu0
    %v4001 = vadd.f32 0.0, %v4000
    %v4002 = vpop.f32.mrf.mxu0
    %v4003 = vadd.f32 0.0, %v4002
    %4004 = vmatmul.bf16.gmra.mxu0 %v3979
    %v4005 = vpop.f32.mrf.mxu0
    %v4006 = vadd.f32 0.0, %v4005
    %v4007 = vpop.f32.mrf.mxu0
    %v4008 = vadd.f32 0.0, %v4007
    %4009 = vmatmul.bf16.gmra.mxu0 %v3982
    %v4010 = vpop.f32.mrf.mxu0
    %v4011 = vadd.f32 0.0, %v4010
    %v4012 = vpop.f32.mrf.mxu0
    %v4013 = vadd.f32 0.0, %v4012
    %4014 = vmatmul.bf16.gmra.mxu0 %v3985
    %v4015 = vpop.f32.mrf.mxu0
    %v4016 = vadd.f32 0.0, %v4015
    %v4017 = vpop.f32.mrf.mxu0
    %v4018 = vadd.f32 0.0, %v4017
    %4019 = vdwg.mxu0
    %v4020 = vpack.c.bf16 %v3603, %v3603
    %v4021 = vpack.c.bf16 %v3604, %v3604
    %v4022 = vpack.c.bf16 %v3605, %v3605
    %v4023 = vpack.c.bf16 %v3606, %v3606
    %v4024 = vpack.c.bf16 %v3607, %v3607
    %v4025 = vpack.c.bf16 %v3608, %v3608
    %v4026 = vpack.c.bf16 %v3609, %v3609
    %v4027 = vpack.c.bf16 %v3610, %v3610
    %v4028 = vpack.c.bf16 %v3611, %v3611
    %v4029 = vpack.c.bf16 %v3612, %v3612
    %v4030 = vpack.c.bf16 %v3613, %v3613
    %v4031 = vpack.c.bf16 %v3614, %v3614
    %v4032 = vpack.c.bf16 %v3615, %v3615
    %v4033 = vpack.c.bf16 %v3616, %v3616
    %v4034 = vpack.c.bf16 %v3617, %v3617
    %v4035 = vpack.c.bf16 %v3618, %v3618
    %v4036 = vpack.c.bf16 %v3619, %v3619
    %v4037 = vpack.c.bf16 %v3620, %v3620
    %v4038 = vpack.c.bf16 %v3621, %v3621
    %v4039 = vpack.c.bf16 %v3622, %v3622
    %v4040 = vpack.c.bf16 %v3623, %v3623
    %v4041 = vpack.c.bf16 %v3624, %v3624
    %v4042 = vpack.c.bf16 %v3625, %v3625
    %v4043 = vpack.c.bf16 %v3626, %v3626
    %v4044 = vpack.c.bf16 %v3627, %v3627
    %v4045 = vpack.c.bf16 %v3628, %v3628
    %v4046 = vpack.c.bf16 %v3629, %v3629
    %v4047 = vpack.c.bf16 %v3630, %v3630
    %v4048 = vpack.c.bf16 %v3631, %v3631
    %v4049 = vpack.c.bf16 %v3632, %v3632
    %v4050 = vpack.c.bf16 %v3633, %v3633
    %v4051 = vpack.c.bf16 %v3634, %v3634
    %v4052 = vpack.c.bf16 %v3635, %v3635
    %v4053 = vpack.c.bf16 %v3636, %v3636
    %v4054 = vpack.c.bf16 %v3637, %v3637
    %v4055 = vpack.c.bf16 %v3638, %v3638
    %v4056 = vpack.c.bf16 %v3639, %v3639
    %v4057 = vpack.c.bf16 %v3640, %v3640
    %v4058 = vpack.c.bf16 %v3641, %v3641
    %v4059 = vpack.c.bf16 %v3642, %v3642
    %v4060 = vpack.c.bf16 %v3643, %v3643
    %v4061 = vpack.c.bf16 %v3644, %v3644
    %v4062 = vpack.c.bf16 %v3645, %v3645
    %v4063 = vpack.c.bf16 %v3646, %v3646
    %v4064 = vpack.c.bf16 %v3647, %v3647
    %v4065 = vpack.c.bf16 %v3648, %v3648
    %v4066 = vpack.c.bf16 %v3649, %v3649
    %v4067 = vpack.c.bf16 %v3650, %v3650
    %v4068 = vpack.c.bf16 %v3651, %v3651
    %v4069 = vpack.c.bf16 %v3652, %v3652
    %v4070 = vpack.c.bf16 %v3653, %v3653
    %v4071 = vpack.c.bf16 %v3654, %v3654
    %v4072 = vpack.c.bf16 %v3655, %v3655
    %v4073 = vpack.c.bf16 %v3656, %v3656
    %v4074 = vpack.c.bf16 %v3657, %v3657
    %v4075 = vpack.c.bf16 %v3658, %v3658
    %v4076 = vpack.c.bf16 %v3659, %v3659
    %v4077 = vpack.c.bf16 %v3660, %v3660
    %v4078 = vpack.c.bf16 %v3661, %v3661
    %v4079 = vpack.c.bf16 %v3662, %v3662
    %v4080 = vpack.c.bf16 %v3663, %v3663
    %v4081 = vpack.c.bf16 %v3664, %v3664
    %v4082 = vpack.c.bf16 %v3665, %v3665
    %v4083 = vpack.c.bf16 %v3666, %v3666
    %v4148 = vunpack.c.l.b16 %v4020
    %v4149 = vunpack.c.l.b16 %v4021
    %v4150 = vunpack.c.l.b16 %v4022
    %v4151 = vunpack.c.l.b16 %v4023
    %v4152 = vunpack.c.l.b16 %v4024
    %v4153 = vunpack.c.l.b16 %v4025
    %v4154 = vunpack.c.l.b16 %v4026
    %v4155 = vunpack.c.l.b16 %v4027
    %v4156 = vunpack.c.l.b16 %v4028
    %v4157 = vunpack.c.l.b16 %v4029
    %v4158 = vunpack.c.l.b16 %v4030
    %v4159 = vunpack.c.l.b16 %v4031
    %v4160 = vunpack.c.l.b16 %v4032
    %v4161 = vunpack.c.l.b16 %v4033
    %v4162 = vunpack.c.l.b16 %v4034
    %v4163 = vunpack.c.l.b16 %v4035
    %v4164 = vunpack.c.l.b16 %v4036
    %v4165 = vunpack.c.l.b16 %v4037
    %v4166 = vunpack.c.l.b16 %v4038
    %v4167 = vunpack.c.l.b16 %v4039
    %v4168 = vunpack.c.l.b16 %v4040
    %v4169 = vunpack.c.l.b16 %v4041
    %v4170 = vunpack.c.l.b16 %v4042
    %v4171 = vunpack.c.l.b16 %v4043
    %v4172 = vunpack.c.l.b16 %v4044
    %v4173 = vunpack.c.l.b16 %v4045
    %v4174 = vunpack.c.l.b16 %v4046
    %v4175 = vunpack.c.l.b16 %v4047
    %v4176 = vunpack.c.l.b16 %v4048
    %v4177 = vunpack.c.l.b16 %v4049
    %v4178 = vunpack.c.l.b16 %v4050
    %v4179 = vunpack.c.l.b16 %v4051
    %v4180 = vunpack.c.l.b16 %v4052
    %v4181 = vunpack.c.l.b16 %v4053
    %v4182 = vunpack.c.l.b16 %v4054
    %v4183 = vunpack.c.l.b16 %v4055
    %v4184 = vunpack.c.l.b16 %v4056
    %v4185 = vunpack.c.l.b16 %v4057
    %v4186 = vunpack.c.l.b16 %v4058
    %v4187 = vunpack.c.l.b16 %v4059
    %v4188 = vunpack.c.l.b16 %v4060
    %v4189 = vunpack.c.l.b16 %v4061
    %v4190 = vunpack.c.l.b16 %v4062
    %v4191 = vunpack.c.l.b16 %v4063
    %v4192 = vunpack.c.l.b16 %v4064
    %v4193 = vunpack.c.l.b16 %v4065
    %v4194 = vunpack.c.l.b16 %v4066
    %v4195 = vunpack.c.l.b16 %v4067
    %v4196 = vunpack.c.l.b16 %v4068
    %v4197 = vunpack.c.l.b16 %v4069
    %v4198 = vunpack.c.l.b16 %v4070
    %v4199 = vunpack.c.l.b16 %v4071
    %v4200 = vunpack.c.l.b16 %v4072
    %v4201 = vunpack.c.l.b16 %v4073
    %v4202 = vunpack.c.l.b16 %v4074
    %v4203 = vunpack.c.l.b16 %v4075
    %v4204 = vunpack.c.l.b16 %v4076
    %v4205 = vunpack.c.l.b16 %v4077
    %v4206 = vunpack.c.l.b16 %v4078
    %v4207 = vunpack.c.l.b16 %v4079
    %v4208 = vunpack.c.l.b16 %v4080
    %v4209 = vunpack.c.l.b16 %v4081
    %v4210 = vunpack.c.l.b16 %v4082
    %v4211 = vunpack.c.l.b16 %v4083
    %v4212 = vrot.slane %v4149, 7
    %v4213 = vsel %vm212, %v4212, %v4148
    %v4214 = vrot.slane %v4150, 6
    %v4215 = vsel %vm214, %v4214, %v4213
    %v4216 = vrot.slane %v4151, 5
    %v4217 = vsel %vm216, %v4216, %v4215
    %v4218 = vrot.slane %v4152, 4
    %v4219 = vsel %vm218, %v4218, %v4217
    %v4220 = vrot.slane %v4153, 3
    %v4221 = vsel %vm220, %v4220, %v4219
    %v4222 = vrot.slane %v4154, 2
    %v4223 = vsel %vm222, %v4222, %v4221
    %v4224 = vrot.slane %v4155, 1
    %v4225 = vsel %vm224, %v4224, %v4223
    %v4226 = vrot.slane %v4157, 7
    %v4227 = vsel %vm212, %v4226, %v4156
    %v4228 = vrot.slane %v4158, 6
    %v4229 = vsel %vm214, %v4228, %v4227
    %v4230 = vrot.slane %v4159, 5
    %v4231 = vsel %vm216, %v4230, %v4229
    %v4232 = vrot.slane %v4160, 4
    %v4233 = vsel %vm218, %v4232, %v4231
    %v4234 = vrot.slane %v4161, 3
    %v4235 = vsel %vm220, %v4234, %v4233
    %v4236 = vrot.slane %v4162, 2
    %v4237 = vsel %vm222, %v4236, %v4235
    %v4238 = vrot.slane %v4163, 1
    %v4239 = vsel %vm224, %v4238, %v4237
    %v4240 = vrot.slane %v4165, 7
    %v4241 = vsel %vm212, %v4240, %v4164
    %v4242 = vrot.slane %v4166, 6
    %v4243 = vsel %vm214, %v4242, %v4241
    %v4244 = vrot.slane %v4167, 5
    %v4245 = vsel %vm216, %v4244, %v4243
    %v4246 = vrot.slane %v4168, 4
    %v4247 = vsel %vm218, %v4246, %v4245
    %v4248 = vrot.slane %v4169, 3
    %v4249 = vsel %vm220, %v4248, %v4247
    %v4250 = vrot.slane %v4170, 2
    %v4251 = vsel %vm222, %v4250, %v4249
    %v4252 = vrot.slane %v4171, 1
    %v4253 = vsel %vm224, %v4252, %v4251
    %v4254 = vrot.slane %v4173, 7
    %v4255 = vsel %vm212, %v4254, %v4172
    %v4256 = vrot.slane %v4174, 6
    %v4257 = vsel %vm214, %v4256, %v4255
    %v4258 = vrot.slane %v4175, 5
    %v4259 = vsel %vm216, %v4258, %v4257
    %v4260 = vrot.slane %v4176, 4
    %v4261 = vsel %vm218, %v4260, %v4259
    %v4262 = vrot.slane %v4177, 3
    %v4263 = vsel %vm220, %v4262, %v4261
    %v4264 = vrot.slane %v4178, 2
    %v4265 = vsel %vm222, %v4264, %v4263
    %v4266 = vrot.slane %v4179, 1
    %v4267 = vsel %vm224, %v4266, %v4265
    %v4268 = vrot.slane %v4181, 7
    %v4269 = vsel %vm212, %v4268, %v4180
    %v4270 = vrot.slane %v4182, 6
    %v4271 = vsel %vm214, %v4270, %v4269
    %v4272 = vrot.slane %v4183, 5
    %v4273 = vsel %vm216, %v4272, %v4271
    %v4274 = vrot.slane %v4184, 4
    %v4275 = vsel %vm218, %v4274, %v4273
    %v4276 = vrot.slane %v4185, 3
    %v4277 = vsel %vm220, %v4276, %v4275
    %v4278 = vrot.slane %v4186, 2
    %v4279 = vsel %vm222, %v4278, %v4277
    %v4280 = vrot.slane %v4187, 1
    %v4281 = vsel %vm224, %v4280, %v4279
    %v4282 = vrot.slane %v4189, 7
    %v4283 = vsel %vm212, %v4282, %v4188
    %v4284 = vrot.slane %v4190, 6
    %v4285 = vsel %vm214, %v4284, %v4283
    %v4286 = vrot.slane %v4191, 5
    %v4287 = vsel %vm216, %v4286, %v4285
    %v4288 = vrot.slane %v4192, 4
    %v4289 = vsel %vm218, %v4288, %v4287
    %v4290 = vrot.slane %v4193, 3
    %v4291 = vsel %vm220, %v4290, %v4289
    %v4292 = vrot.slane %v4194, 2
    %v4293 = vsel %vm222, %v4292, %v4291
    %v4294 = vrot.slane %v4195, 1
    %v4295 = vsel %vm224, %v4294, %v4293
    %v4296 = vrot.slane %v4197, 7
    %v4297 = vsel %vm212, %v4296, %v4196
    %v4298 = vrot.slane %v4198, 6
    %v4299 = vsel %vm214, %v4298, %v4297
    %v4300 = vrot.slane %v4199, 5
    %v4301 = vsel %vm216, %v4300, %v4299
    %v4302 = vrot.slane %v4200, 4
    %v4303 = vsel %vm218, %v4302, %v4301
    %v4304 = vrot.slane %v4201, 3
    %v4305 = vsel %vm220, %v4304, %v4303
    %v4306 = vrot.slane %v4202, 2
    %v4307 = vsel %vm222, %v4306, %v4305
    %v4308 = vrot.slane %v4203, 1
    %v4309 = vsel %vm224, %v4308, %v4307
    %v4310 = vrot.slane %v4205, 7
    %v4311 = vsel %vm212, %v4310, %v4204
    %v4312 = vrot.slane %v4206, 6
    %v4313 = vsel %vm214, %v4312, %v4311
    %v4314 = vrot.slane %v4207, 5
    %v4315 = vsel %vm216, %v4314, %v4313
    %v4316 = vrot.slane %v4208, 4
    %v4317 = vsel %vm218, %v4316, %v4315
    %v4318 = vrot.slane %v4209, 3
    %v4319 = vsel %vm220, %v4318, %v4317
    %v4320 = vrot.slane %v4210, 2
    %v4321 = vsel %vm222, %v4320, %v4319
    %v4322 = vrot.slane %v4211, 1
    %v4323 = vsel %vm224, %v4322, %v4321
    %v4324 = vpack.c.b16 %v4239, %v4225
    %v4325 = vpack.c.b16 %v4267, %v4253
    %v4326 = vpack.c.b16 %v4295, %v4281
    %v4327 = vpack.c.b16 %v4323, %v4309
    %v4329 = vunpack.c.l.b16 %v119
    %v4330 = vpack.c.b16 %v4329, %v4329
    %4331 = vrot.lane.b32.xlu0 %v4330, 64
    %v4332 = vpop.permute.xlu0 %4331
    %v4334 = vsel %vm145, %v4324, 0
    %v4337 = vsel %vm145, %v4325, 0
    %v4340 = vsel %vm145, %v4326, 0
    %v4343 = vsel %vm145, %v4327, 0
    %v4346 = vsel %vm3987, %v4332, 0
    %4348 = vmatpush.bf16.msra.mxu0 0
    %4349 = vmatpush.bf16.msra.mxu0 0
    %4350 = vmatpush.bf16.msra.mxu0 0
    %4351 = vmatpush.bf16.msra.mxu0 0
    %4352 = vmatpush.bf16.msra.mxu0 0
    %4353 = vmatpush.bf16.msra.mxu0 0
    %4354 = vmatpush.bf16.msra.mxu0 0
    %4355 = vmatpush.bf16.msra.mxu0 %v4346
    %4356 = vmatmul.bf16.gmra.mxu0 %v4334
    %v4357 = vpop.f32.mrf.mxu0
    %v4358 = vadd.f32 0.0, %v4357
    %v4359 = vpop.f32.mrf.mxu0
    %v4360 = vadd.f32 0.0, %v4359
    %4361 = vmatmul.bf16.gmra.mxu0 %v4337
    %v4362 = vpop.f32.mrf.mxu0
    %v4363 = vadd.f32 0.0, %v4362
    %v4364 = vpop.f32.mrf.mxu0
    %v4365 = vadd.f32 0.0, %v4364
    %4366 = vmatmul.bf16.gmra.mxu0 %v4340
    %v4367 = vpop.f32.mrf.mxu0
    %v4368 = vadd.f32 0.0, %v4367
    %v4369 = vpop.f32.mrf.mxu0
    %v4370 = vadd.f32 0.0, %v4369
    %4371 = vmatmul.bf16.gmra.mxu0 %v4343
    %v4372 = vpop.f32.mrf.mxu0
    %v4373 = vadd.f32 0.0, %v4372
    %v4374 = vpop.f32.mrf.mxu0
    %v4375 = vadd.f32 0.0, %v4374
    %4376 = vdwg.mxu0
    %v4385 = vrot.slane %v4001, 1
    %v4386 = vrot.slane %v4001, 2
    %v4387 = vrot.slane %v4001, 3
    %v4388 = vrot.slane %v4001, 4
    %v4389 = vrot.slane %v4001, 5
    %v4390 = vrot.slane %v4001, 6
    %v4391 = vrot.slane %v4001, 7
    %v4392 = vrot.slane %v4003, 1
    %v4393 = vrot.slane %v4003, 2
    %v4394 = vrot.slane %v4003, 3
    %v4395 = vrot.slane %v4003, 4
    %v4396 = vrot.slane %v4003, 5
    %v4397 = vrot.slane %v4003, 6
    %v4398 = vrot.slane %v4003, 7
    %v4399 = vrot.slane %v4006, 1
    %v4400 = vrot.slane %v4006, 2
    %v4401 = vrot.slane %v4006, 3
    %v4402 = vrot.slane %v4006, 4
    %v4403 = vrot.slane %v4006, 5
    %v4404 = vrot.slane %v4006, 6
    %v4405 = vrot.slane %v4006, 7
    %v4406 = vrot.slane %v4008, 1
    %v4407 = vrot.slane %v4008, 2
    %v4408 = vrot.slane %v4008, 3
    %v4409 = vrot.slane %v4008, 4
    %v4410 = vrot.slane %v4008, 5
    %v4411 = vrot.slane %v4008, 6
    %v4412 = vrot.slane %v4008, 7
    %v4413 = vrot.slane %v4011, 1
    %v4414 = vrot.slane %v4011, 2
    %v4415 = vrot.slane %v4011, 3
    %v4416 = vrot.slane %v4011, 4
    %v4417 = vrot.slane %v4011, 5
    %v4418 = vrot.slane %v4011, 6
    %v4419 = vrot.slane %v4011, 7
    %v4420 = vrot.slane %v4013, 1
    %v4421 = vrot.slane %v4013, 2
    %v4422 = vrot.slane %v4013, 3
    %v4423 = vrot.slane %v4013, 4
    %v4424 = vrot.slane %v4013, 5
    %v4425 = vrot.slane %v4013, 6
    %v4426 = vrot.slane %v4013, 7
    %v4427 = vrot.slane %v4016, 1
    %v4428 = vrot.slane %v4016, 2
    %v4429 = vrot.slane %v4016, 3
    %v4430 = vrot.slane %v4016, 4
    %v4431 = vrot.slane %v4016, 5
    %v4432 = vrot.slane %v4016, 6
    %v4433 = vrot.slane %v4016, 7
    %v4434 = vrot.slane %v4018, 1
    %v4435 = vrot.slane %v4018, 2
    %v4436 = vrot.slane %v4018, 3
    %v4437 = vrot.slane %v4018, 4
    %v4438 = vrot.slane %v4018, 5
    %v4439 = vrot.slane %v4018, 6
    %v4440 = vrot.slane %v4018, 7
    %v4441 = vperm.slane %v4001, 0
    %v4442 = vperm.slane %v4385, 0
    %v4443 = vperm.slane %v4386, 0
    %v4444 = vperm.slane %v4387, 0
    %v4445 = vperm.slane %v4388, 0
    %v4446 = vperm.slane %v4389, 0
    %v4447 = vperm.slane %v4390, 0
    %v4448 = vperm.slane %v4391, 0
    %v4449 = vperm.slane %v4003, 0
    %v4450 = vperm.slane %v4392, 0
    %v4451 = vperm.slane %v4393, 0
    %v4452 = vperm.slane %v4394, 0
    %v4453 = vperm.slane %v4395, 0
    %v4454 = vperm.slane %v4396, 0
    %v4455 = vperm.slane %v4397, 0
    %v4456 = vperm.slane %v4398, 0
    %v4457 = vperm.slane %v4006, 0
    %v4458 = vperm.slane %v4399, 0
    %v4459 = vperm.slane %v4400, 0
    %v4460 = vperm.slane %v4401, 0
    %v4461 = vperm.slane %v4402, 0
    %v4462 = vperm.slane %v4403, 0
    %v4463 = vperm.slane %v4404, 0
    %v4464 = vperm.slane %v4405, 0
    %v4465 = vperm.slane %v4008, 0
    %v4466 = vperm.slane %v4406, 0
    %v4467 = vperm.slane %v4407, 0
    %v4468 = vperm.slane %v4408, 0
    %v4469 = vperm.slane %v4409, 0
    %v4470 = vperm.slane %v4410, 0
    %v4471 = vperm.slane %v4411, 0
    %v4472 = vperm.slane %v4412, 0
    %v4473 = vperm.slane %v4011, 0
    %v4474 = vperm.slane %v4413, 0
    %v4475 = vperm.slane %v4414, 0
    %v4476 = vperm.slane %v4415, 0
    %v4477 = vperm.slane %v4416, 0
    %v4478 = vperm.slane %v4417, 0
    %v4479 = vperm.slane %v4418, 0
    %v4480 = vperm.slane %v4419, 0
    %v4481 = vperm.slane %v4013, 0
    %v4482 = vperm.slane %v4420, 0
    %v4483 = vperm.slane %v4421, 0
    %v4484 = vperm.slane %v4422, 0
    %v4485 = vperm.slane %v4423, 0
    %v4486 = vperm.slane %v4424, 0
    %v4487 = vperm.slane %v4425, 0
    %v4488 = vperm.slane %v4426, 0
    %v4489 = vperm.slane %v4016, 0
    %v4490 = vperm.slane %v4427, 0
    %v4491 = vperm.slane %v4428, 0
    %v4492 = vperm.slane %v4429, 0
    %v4493 = vperm.slane %v4430, 0
    %v4494 = vperm.slane %v4431, 0
    %v4495 = vperm.slane %v4432, 0
    %v4496 = vperm.slane %v4433, 0
    %v4497 = vperm.slane %v4018, 0
    %v4498 = vperm.slane %v4434, 0
    %v4499 = vperm.slane %v4435, 0
    %v4500 = vperm.slane %v4436, 0
    %v4501 = vperm.slane %v4437, 0
    %v4502 = vperm.slane %v4438, 0
    %v4503 = vperm.slane %v4439, 0
    %v4504 = vperm.slane %v4440, 0
    %v4569 = vmul.f32 %v4441, %v4358
    %v4570 = vmul.f32 %v4442, %v4358
    %v4571 = vmul.f32 %v4443, %v4358
    %v4572 = vmul.f32 %v4444, %v4358
    %v4573 = vmul.f32 %v4445, %v4358
    %v4574 = vmul.f32 %v4446, %v4358
    %v4575 = vmul.f32 %v4447, %v4358
    %v4576 = vmul.f32 %v4448, %v4358
    %v4577 = vmul.f32 %v4449, %v4360
    %v4578 = vmul.f32 %v4450, %v4360
    %v4579 = vmul.f32 %v4451, %v4360
    %v4580 = vmul.f32 %v4452, %v4360
    %v4581 = vmul.f32 %v4453, %v4360
    %v4582 = vmul.f32 %v4454, %v4360
    %v4583 = vmul.f32 %v4455, %v4360
    %v4584 = vmul.f32 %v4456, %v4360
    %v4585 = vmul.f32 %v4457, %v4363
    %v4586 = vmul.f32 %v4458, %v4363
    %v4587 = vmul.f32 %v4459, %v4363
    %v4588 = vmul.f32 %v4460, %v4363
    %v4589 = vmul.f32 %v4461, %v4363
    %v4590 = vmul.f32 %v4462, %v4363
    %v4591 = vmul.f32 %v4463, %v4363
    %v4592 = vmul.f32 %v4464, %v4363
    %v4593 = vmul.f32 %v4465, %v4365
    %v4594 = vmul.f32 %v4466, %v4365
    %v4595 = vmul.f32 %v4467, %v4365
    %v4596 = vmul.f32 %v4468, %v4365
    %v4597 = vmul.f32 %v4469, %v4365
    %v4598 = vmul.f32 %v4470, %v4365
    %v4599 = vmul.f32 %v4471, %v4365
    %v4600 = vmul.f32 %v4472, %v4365
    %v4601 = vmul.f32 %v4473, %v4368
    %v4602 = vmul.f32 %v4474, %v4368
    %v4603 = vmul.f32 %v4475, %v4368
    %v4604 = vmul.f32 %v4476, %v4368
    %v4605 = vmul.f32 %v4477, %v4368
    %v4606 = vmul.f32 %v4478, %v4368
    %v4607 = vmul.f32 %v4479, %v4368
    %v4608 = vmul.f32 %v4480, %v4368
    %v4609 = vmul.f32 %v4481, %v4370
    %v4610 = vmul.f32 %v4482, %v4370
    %v4611 = vmul.f32 %v4483, %v4370
    %v4612 = vmul.f32 %v4484, %v4370
    %v4613 = vmul.f32 %v4485, %v4370
    %v4614 = vmul.f32 %v4486, %v4370
    %v4615 = vmul.f32 %v4487, %v4370
    %v4616 = vmul.f32 %v4488, %v4370
    %v4617 = vmul.f32 %v4489, %v4373
    %v4618 = vmul.f32 %v4490, %v4373
    %v4619 = vmul.f32 %v4491, %v4373
    %v4620 = vmul.f32 %v4492, %v4373
    %v4621 = vmul.f32 %v4493, %v4373
    %v4622 = vmul.f32 %v4494, %v4373
    %v4623 = vmul.f32 %v4495, %v4373
    %v4624 = vmul.f32 %v4496, %v4373
    %v4625 = vmul.f32 %v4497, %v4375
    %v4626 = vmul.f32 %v4498, %v4375
    %v4627 = vmul.f32 %v4499, %v4375
    %v4628 = vmul.f32 %v4500, %v4375
    %v4629 = vmul.f32 %v4501, %v4375
    %v4630 = vmul.f32 %v4502, %v4375
    %v4631 = vmul.f32 %v4503, %v4375
    %v4632 = vmul.f32 %v4504, %v4375
    %v4633 = vpack.c.bf16 %v4570, %v4569
    %v4634 = vpack.c.bf16 %v4572, %v4571
    %v4635 = vpack.c.bf16 %v4574, %v4573
    %v4636 = vpack.c.bf16 %v4576, %v4575
    %v4637 = vpack.c.bf16 %v4578, %v4577
    %v4638 = vpack.c.bf16 %v4580, %v4579
    %v4639 = vpack.c.bf16 %v4582, %v4581
    %v4640 = vpack.c.bf16 %v4584, %v4583
    %v4641 = vpack.c.bf16 %v4586, %v4585
    %v4642 = vpack.c.bf16 %v4588, %v4587
    %v4643 = vpack.c.bf16 %v4590, %v4589
    %v4644 = vpack.c.bf16 %v4592, %v4591
    %v4645 = vpack.c.bf16 %v4594, %v4593
    %v4646 = vpack.c.bf16 %v4596, %v4595
    %v4647 = vpack.c.bf16 %v4598, %v4597
    %v4648 = vpack.c.bf16 %v4600, %v4599
    %v4649 = vpack.c.bf16 %v4602, %v4601
    %v4650 = vpack.c.bf16 %v4604, %v4603
    %v4651 = vpack.c.bf16 %v4606, %v4605
    %v4652 = vpack.c.bf16 %v4608, %v4607
    %v4653 = vpack.c.bf16 %v4610, %v4609
    %v4654 = vpack.c.bf16 %v4612, %v4611
    %v4655 = vpack.c.bf16 %v4614, %v4613
    %v4656 = vpack.c.bf16 %v4616, %v4615
    %v4657 = vpack.c.bf16 %v4618, %v4617
    %v4658 = vpack.c.bf16 %v4620, %v4619
    %v4659 = vpack.c.bf16 %v4622, %v4621
    %v4660 = vpack.c.bf16 %v4624, %v4623
    %v4661 = vpack.c.bf16 %v4626, %v4625
    %v4662 = vpack.c.bf16 %v4628, %v4627
    %v4663 = vpack.c.bf16 %v4630, %v4629
    %v4664 = vpack.c.bf16 %v4632, %v4631
    %v4673 = vunpack.c.l.b16 %v120
    %v4674 = vunpack.c.l.b16 %v121
    %v4675 = vunpack.c.l.b16 %v122
    %v4676 = vunpack.c.l.b16 %v123
    %v4677 = vunpack.c.l.b16 %v124
    %v4678 = vunpack.c.l.b16 %v125
    %v4679 = vunpack.c.l.b16 %v126
    %v4680 = vunpack.c.l.b16 %v127
    %v4681 = vpack.c.b16 %v4674, %v4673
    %v4682 = vpack.c.b16 %v4676, %v4675
    %v4683 = vpack.c.b16 %v4678, %v4677
    %v4684 = vpack.c.b16 %v4680, %v4679
    %4689 = vrot.lane.b32.xlu0 %v2435, 104
    %v4690 = vpop.permute.xlu0 %4689
    %vm4692 = vcmask 523264
    %v4694 = vsel %vm4692, %v4633, 0
    %v4697 = vsel %vm4692, %v4634, 0
    %v4700 = vsel %vm4692, %v4635, 0
    %v4703 = vsel %vm4692, %v4636, 0
    %v4706 = vsel %vm4692, %v4637, 0
    %v4709 = vsel %vm4692, %v4638, 0
    %v4712 = vsel %vm4692, %v4639, 0
    %v4715 = vsel %vm4692, %v4640, 0
    %v4718 = vsel %vm4692, %v4641, 0
    %v4721 = vsel %vm4692, %v4642, 0
    %v4724 = vsel %vm4692, %v4643, 0
    %v4727 = vsel %vm4692, %v4644, 0
    %v4730 = vsel %vm4692, %v4645, 0
    %v4733 = vsel %vm4692, %v4646, 0
    %v4736 = vsel %vm4692, %v4647, 0
    %v4739 = vsel %vm4692, %v4648, 0
    %v4742 = vsel %vm4692, %v4649, 0
    %v4745 = vsel %vm4692, %v4650, 0
    %v4748 = vsel %vm4692, %v4651, 0
    %v4751 = vsel %vm4692, %v4652, 0
    %v4754 = vsel %vm4692, %v4653, 0
    %v4757 = vsel %vm4692, %v4654, 0
    %v4760 = vsel %vm4692, %v4655, 0
    %v4763 = vsel %vm4692, %v4656, 0
    %v4766 = vsel %vm4692, %v4657, 0
    %v4769 = vsel %vm4692, %v4658, 0
    %v4772 = vsel %vm4692, %v4659, 0
    %v4775 = vsel %vm4692, %v4660, 0
    %v4778 = vsel %vm4692, %v4661, 0
    %v4781 = vsel %vm4692, %v4662, 0
    %v4784 = vsel %vm4692, %v4663, 0
    %v4787 = vsel %vm4692, %v4664, 0
    %4789 = vmatpush.bf16.msra.mxu0 0
    %4790 = vmatpush.bf16.msra.mxu0 0
    %4791 = vmatpush.bf16.msra.mxu0 0
    %4792 = vmatpush.bf16.msra.mxu0 0
    %4793 = vmatpush.bf16.msra.mxu0 %v4684
    %4794 = vmatpush.bf16.msra.mxu0 %v4683
    %4795 = vmatpush.bf16.msra.mxu0 %v4682
    %4796 = vmatpush.bf16.msra.mxu0 %v4681
    %4797 = vmatmul.bf16.gmra.mxu0 %v4694
    %v4798 = vpop.f32.mrf.mxu0
    %v4799 = vadd.f32 %v4690, %v4798
    %v4800 = vpop.f32.mrf.mxu0
    %v4801 = vadd.f32 %v4690, %v4800
    %4802 = vmatmul.bf16.gmra.mxu0 %v4697
    %v4803 = vpop.f32.mrf.mxu0
    %v4804 = vadd.f32 %v4690, %v4803
    %v4805 = vpop.f32.mrf.mxu0
    %v4806 = vadd.f32 %v4690, %v4805
    %4807 = vmatmul.bf16.gmra.mxu0 %v4700
    %v4808 = vpop.f32.mrf.mxu0
    %v4809 = vadd.f32 %v4690, %v4808
    %v4810 = vpop.f32.mrf.mxu0
    %v4811 = vadd.f32 %v4690, %v4810
    %4812 = vmatmul.bf16.gmra.mxu0 %v4703
    %v4813 = vpop.f32.mrf.mxu0
    %v4814 = vadd.f32 %v4690, %v4813
    %v4815 = vpop.f32.mrf.mxu0
    %v4816 = vadd.f32 %v4690, %v4815
    %4817 = vmatmul.bf16.gmra.mxu0 %v4706
    %v4818 = vpop.f32.mrf.mxu0
    %v4819 = vadd.f32 %v4690, %v4818
    %v4820 = vpop.f32.mrf.mxu0
    %v4821 = vadd.f32 %v4690, %v4820
    %4822 = vmatmul.bf16.gmra.mxu0 %v4709
    %v4823 = vpop.f32.mrf.mxu0
    %v4824 = vadd.f32 %v4690, %v4823
    %v4825 = vpop.f32.mrf.mxu0
    %v4826 = vadd.f32 %v4690, %v4825
    %4827 = vmatmul.bf16.gmra.mxu0 %v4712
    %v4828 = vpop.f32.mrf.mxu0
    %v4829 = vadd.f32 %v4690, %v4828
    %v4830 = vpop.f32.mrf.mxu0
    %v4831 = vadd.f32 %v4690, %v4830
    %4832 = vmatmul.bf16.gmra.mxu0 %v4715
    %v4833 = vpop.f32.mrf.mxu0
    %v4834 = vadd.f32 %v4690, %v4833
    %v4835 = vpop.f32.mrf.mxu0
    %v4836 = vadd.f32 %v4690, %v4835
    %4837 = vmatmul.bf16.gmra.mxu0 %v4718
    %v4838 = vpop.f32.mrf.mxu0
    %v4839 = vadd.f32 %v4690, %v4838
    %v4840 = vpop.f32.mrf.mxu0
    %v4841 = vadd.f32 %v4690, %v4840
    %4842 = vmatmul.bf16.gmra.mxu0 %v4721
    %v4843 = vpop.f32.mrf.mxu0
    %v4844 = vadd.f32 %v4690, %v4843
    %v4845 = vpop.f32.mrf.mxu0
    %v4846 = vadd.f32 %v4690, %v4845
    %4847 = vmatmul.bf16.gmra.mxu0 %v4724
    %v4848 = vpop.f32.mrf.mxu0
    %v4849 = vadd.f32 %v4690, %v4848
    %v4850 = vpop.f32.mrf.mxu0
    %v4851 = vadd.f32 %v4690, %v4850
    %4852 = vmatmul.bf16.gmra.mxu0 %v4727
    %v4853 = vpop.f32.mrf.mxu0
    %v4854 = vadd.f32 %v4690, %v4853
    %v4855 = vpop.f32.mrf.mxu0
    %v4856 = vadd.f32 %v4690, %v4855
    %4857 = vmatmul.bf16.gmra.mxu0 %v4730
    %v4858 = vpop.f32.mrf.mxu0
    %v4859 = vadd.f32 %v4690, %v4858
    %v4860 = vpop.f32.mrf.mxu0
    %v4861 = vadd.f32 %v4690, %v4860
    %4862 = vmatmul.bf16.gmra.mxu0 %v4733
    %v4863 = vpop.f32.mrf.mxu0
    %v4864 = vadd.f32 %v4690, %v4863
    %v4865 = vpop.f32.mrf.mxu0
    %v4866 = vadd.f32 %v4690, %v4865
    %4867 = vmatmul.bf16.gmra.mxu0 %v4736
    %v4868 = vpop.f32.mrf.mxu0
    %v4869 = vadd.f32 %v4690, %v4868
    %v4870 = vpop.f32.mrf.mxu0
    %v4871 = vadd.f32 %v4690, %v4870
    %4872 = vmatmul.bf16.gmra.mxu0 %v4739
    %v4873 = vpop.f32.mrf.mxu0
    %v4874 = vadd.f32 %v4690, %v4873
    %v4875 = vpop.f32.mrf.mxu0
    %v4876 = vadd.f32 %v4690, %v4875
    %4877 = vmatmul.bf16.gmra.mxu0 %v4742
    %v4878 = vpop.f32.mrf.mxu0
    %v4879 = vadd.f32 %v4690, %v4878
    %v4880 = vpop.f32.mrf.mxu0
    %v4881 = vadd.f32 %v4690, %v4880
    %4882 = vmatmul.bf16.gmra.mxu0 %v4745
    %v4883 = vpop.f32.mrf.mxu0
    %v4884 = vadd.f32 %v4690, %v4883
    %v4885 = vpop.f32.mrf.mxu0
    %v4886 = vadd.f32 %v4690, %v4885
    %4887 = vmatmul.bf16.gmra.mxu0 %v4748
    %v4888 = vpop.f32.mrf.mxu0
    %v4889 = vadd.f32 %v4690, %v4888
    %v4890 = vpop.f32.mrf.mxu0
    %v4891 = vadd.f32 %v4690, %v4890
    %4892 = vmatmul.bf16.gmra.mxu0 %v4751
    %v4893 = vpop.f32.mrf.mxu0
    %v4894 = vadd.f32 %v4690, %v4893
    %v4895 = vpop.f32.mrf.mxu0
    %v4896 = vadd.f32 %v4690, %v4895
    %4897 = vmatmul.bf16.gmra.mxu0 %v4754
    %v4898 = vpop.f32.mrf.mxu0
    %v4899 = vadd.f32 %v4690, %v4898
    %v4900 = vpop.f32.mrf.mxu0
    %v4901 = vadd.f32 %v4690, %v4900
    %4902 = vmatmul.bf16.gmra.mxu0 %v4757
    %v4903 = vpop.f32.mrf.mxu0
    %v4904 = vadd.f32 %v4690, %v4903
    %v4905 = vpop.f32.mrf.mxu0
    %v4906 = vadd.f32 %v4690, %v4905
    %4907 = vmatmul.bf16.gmra.mxu0 %v4760
    %v4908 = vpop.f32.mrf.mxu0
    %v4909 = vadd.f32 %v4690, %v4908
    %v4910 = vpop.f32.mrf.mxu0
    %v4911 = vadd.f32 %v4690, %v4910
    %4912 = vmatmul.bf16.gmra.mxu0 %v4763
    %v4913 = vpop.f32.mrf.mxu0
    %v4914 = vadd.f32 %v4690, %v4913
    %v4915 = vpop.f32.mrf.mxu0
    %v4916 = vadd.f32 %v4690, %v4915
    %4917 = vmatmul.bf16.gmra.mxu0 %v4766
    %v4918 = vpop.f32.mrf.mxu0
    %v4919 = vadd.f32 %v4690, %v4918
    %v4920 = vpop.f32.mrf.mxu0
    %v4921 = vadd.f32 %v4690, %v4920
    %4922 = vmatmul.bf16.gmra.mxu0 %v4769
    %v4923 = vpop.f32.mrf.mxu0
    %v4924 = vadd.f32 %v4690, %v4923
    %v4925 = vpop.f32.mrf.mxu0
    %v4926 = vadd.f32 %v4690, %v4925
    %4927 = vmatmul.bf16.gmra.mxu0 %v4772
    %v4928 = vpop.f32.mrf.mxu0
    %v4929 = vadd.f32 %v4690, %v4928
    %v4930 = vpop.f32.mrf.mxu0
    %v4931 = vadd.f32 %v4690, %v4930
    %4932 = vmatmul.bf16.gmra.mxu0 %v4775
    %v4933 = vpop.f32.mrf.mxu0
    %v4934 = vadd.f32 %v4690, %v4933
    %v4935 = vpop.f32.mrf.mxu0
    %v4936 = vadd.f32 %v4690, %v4935
    %4937 = vmatmul.bf16.gmra.mxu0 %v4778
    %v4938 = vpop.f32.mrf.mxu0
    %v4939 = vadd.f32 %v4690, %v4938
    %v4940 = vpop.f32.mrf.mxu0
    %v4941 = vadd.f32 %v4690, %v4940
    %4942 = vmatmul.bf16.gmra.mxu0 %v4781
    %v4943 = vpop.f32.mrf.mxu0
    %v4944 = vadd.f32 %v4690, %v4943
    %v4945 = vpop.f32.mrf.mxu0
    %v4946 = vadd.f32 %v4690, %v4945
    %4947 = vmatmul.bf16.gmra.mxu0 %v4784
    %v4948 = vpop.f32.mrf.mxu0
    %v4949 = vadd.f32 %v4690, %v4948
    %v4950 = vpop.f32.mrf.mxu0
    %v4951 = vadd.f32 %v4690, %v4950
    %4952 = vmatmul.bf16.gmra.mxu0 %v4787
    %v4953 = vpop.f32.mrf.mxu0
    %v4954 = vadd.f32 %v4690, %v4953
    %v4955 = vpop.f32.mrf.mxu0
    %v4956 = vadd.f32 %v4690, %v4955
    %4957 = vdwg.mxu0
    %v4958 = vmax.f32 %v4799, 0.0
    %v4959 = vmax.f32 %v4801, 0.0
    %v4960 = vmax.f32 %v4804, 0.0
    %v4961 = vmax.f32 %v4806, 0.0
    %v4962 = vmax.f32 %v4809, 0.0
    %v4963 = vmax.f32 %v4811, 0.0
    %v4964 = vmax.f32 %v4814, 0.0
    %v4965 = vmax.f32 %v4816, 0.0
    %v4966 = vmax.f32 %v4819, 0.0
    %v4967 = vmax.f32 %v4821, 0.0
    %v4968 = vmax.f32 %v4824, 0.0
    %v4969 = vmax.f32 %v4826, 0.0
    %v4970 = vmax.f32 %v4829, 0.0
    %v4971 = vmax.f32 %v4831, 0.0
    %v4972 = vmax.f32 %v4834, 0.0
    %v4973 = vmax.f32 %v4836, 0.0
    %v4974 = vmax.f32 %v4839, 0.0
    %v4975 = vmax.f32 %v4841, 0.0
    %v4976 = vmax.f32 %v4844, 0.0
    %v4977 = vmax.f32 %v4846, 0.0
    %v4978 = vmax.f32 %v4849, 0.0
    %v4979 = vmax.f32 %v4851, 0.0
    %v4980 = vmax.f32 %v4854, 0.0
    %v4981 = vmax.f32 %v4856, 0.0
    %v4982 = vmax.f32 %v4859, 0.0
    %v4983 = vmax.f32 %v4861, 0.0
    %v4984 = vmax.f32 %v4864, 0.0
    %v4985 = vmax.f32 %v4866, 0.0
    %v4986 = vmax.f32 %v4869, 0.0
    %v4987 = vmax.f32 %v4871, 0.0
    %v4988 = vmax.f32 %v4874, 0.0
    %v4989 = vmax.f32 %v4876, 0.0
    %v4990 = vmax.f32 %v4879, 0.0
    %v4991 = vmax.f32 %v4881, 0.0
    %v4992 = vmax.f32 %v4884, 0.0
    %v4993 = vmax.f32 %v4886, 0.0
    %v4994 = vmax.f32 %v4889, 0.0
    %v4995 = vmax.f32 %v4891, 0.0
    %v4996 = vmax.f32 %v4894, 0.0
    %v4997 = vmax.f32 %v4896, 0.0
    %v4998 = vmax.f32 %v4899, 0.0
    %v4999 = vmax.f32 %v4901, 0.0
    %v5000 = vmax.f32 %v4904, 0.0
    %v5001 = vmax.f32 %v4906, 0.0
    %v5002 = vmax.f32 %v4909, 0.0
    %v5003 = vmax.f32 %v4911, 0.0
    %v5004 = vmax.f32 %v4914, 0.0
    %v5005 = vmax.f32 %v4916, 0.0
    %v5006 = vmax.f32 %v4919, 0.0
    %v5007 = vmax.f32 %v4921, 0.0
    %v5008 = vmax.f32 %v4924, 0.0
    %v5009 = vmax.f32 %v4926, 0.0
    %v5010 = vmax.f32 %v4929, 0.0
    %v5011 = vmax.f32 %v4931, 0.0
    %v5012 = vmax.f32 %v4934, 0.0
    %v5013 = vmax.f32 %v4936, 0.0
    %v5014 = vmax.f32 %v4939, 0.0
    %v5015 = vmax.f32 %v4941, 0.0
    %v5016 = vmax.f32 %v4944, 0.0
    %v5017 = vmax.f32 %v4946, 0.0
    %v5018 = vmax.f32 %v4949, 0.0
    %v5019 = vmax.f32 %v4951, 0.0
    %v5020 = vmax.f32 %v4954, 0.0
    %v5021 = vmax.f32 %v4956, 0.0
    %5022 = vrot.lane.b32.xlu0 %v2435, 88
    %v5023 = vpop.permute.xlu0 %5022
    %v5025 = vmul.f32 %v4958, %v5023
    %v5026 = vmul.f32 %v4959, %v5023
    %v5027 = vmul.f32 %v4960, %v5023
    %v5028 = vmul.f32 %v4961, %v5023
    %v5029 = vmul.f32 %v4962, %v5023
    %v5030 = vmul.f32 %v4963, %v5023
    %v5031 = vmul.f32 %v4964, %v5023
    %v5032 = vmul.f32 %v4965, %v5023
    %v5033 = vmul.f32 %v4966, %v5023
    %v5034 = vmul.f32 %v4967, %v5023
    %v5035 = vmul.f32 %v4968, %v5023
    %v5036 = vmul.f32 %v4969, %v5023
    %v5037 = vmul.f32 %v4970, %v5023
    %v5038 = vmul.f32 %v4971, %v5023
    %v5039 = vmul.f32 %v4972, %v5023
    %v5040 = vmul.f32 %v4973, %v5023
    %v5041 = vmul.f32 %v4974, %v5023
    %v5042 = vmul.f32 %v4975, %v5023
    %v5043 = vmul.f32 %v4976, %v5023
    %v5044 = vmul.f32 %v4977, %v5023
    %v5045 = vmul.f32 %v4978, %v5023
    %v5046 = vmul.f32 %v4979, %v5023
    %v5047 = vmul.f32 %v4980, %v5023
    %v5048 = vmul.f32 %v4981, %v5023
    %v5049 = vmul.f32 %v4982, %v5023
    %v5050 = vmul.f32 %v4983, %v5023
    %v5051 = vmul.f32 %v4984, %v5023
    %v5052 = vmul.f32 %v4985, %v5023
    %v5053 = vmul.f32 %v4986, %v5023
    %v5054 = vmul.f32 %v4987, %v5023
    %v5055 = vmul.f32 %v4988, %v5023
    %v5056 = vmul.f32 %v4989, %v5023
    %v5057 = vmul.f32 %v4990, %v5023
    %v5058 = vmul.f32 %v4991, %v5023
    %v5059 = vmul.f32 %v4992, %v5023
    %v5060 = vmul.f32 %v4993, %v5023
    %v5061 = vmul.f32 %v4994, %v5023
    %v5062 = vmul.f32 %v4995, %v5023
    %v5063 = vmul.f32 %v4996, %v5023
    %v5064 = vmul.f32 %v4997, %v5023
    %v5065 = vmul.f32 %v4998, %v5023
    %v5066 = vmul.f32 %v4999, %v5023
    %v5067 = vmul.f32 %v5000, %v5023
    %v5068 = vmul.f32 %v5001, %v5023
    %v5069 = vmul.f32 %v5002, %v5023
    %v5070 = vmul.f32 %v5003, %v5023
    %v5071 = vmul.f32 %v5004, %v5023
    %v5072 = vmul.f32 %v5005, %v5023
    %v5073 = vmul.f32 %v5006, %v5023
    %v5074 = vmul.f32 %v5007, %v5023
    %v5075 = vmul.f32 %v5008, %v5023
    %v5076 = vmul.f32 %v5009, %v5023
    %v5077 = vmul.f32 %v5010, %v5023
    %v5078 = vmul.f32 %v5011, %v5023
    %v5079 = vmul.f32 %v5012, %v5023
    %v5080 = vmul.f32 %v5013, %v5023
    %v5081 = vmul.f32 %v5014, %v5023
    %v5082 = vmul.f32 %v5015, %v5023
    %v5083 = vmul.f32 %v5016, %v5023
    %v5084 = vmul.f32 %v5017, %v5023
    %v5085 = vmul.f32 %v5018, %v5023
    %v5086 = vmul.f32 %v5019, %v5023
    %v5087 = vmul.f32 %v5020, %v5023
    %v5088 = vmul.f32 %v5021, %v5023
    %vm5089 = vcmask 130048
    %v5090 = vsel %vm5089, %v5025, 0.0
    %5091 = vadd.xlane.f32.xlu0 %v5090
    %v5092 = vpop.xlane.xlu0 %5091
    %v5093 = vsel %vm5089, %v5026, 0.0
    %5094 = vadd.xlane.f32.xlu0 %v5093
    %v5095 = vpop.xlane.xlu0 %5094
    %v5096 = vsel %vm5089, %v5027, 0.0
    %5097 = vadd.xlane.f32.xlu0 %v5096
    %v5098 = vpop.xlane.xlu0 %5097
    %v5099 = vsel %vm5089, %v5028, 0.0
    %5100 = vadd.xlane.f32.xlu0 %v5099
    %v5101 = vpop.xlane.xlu0 %5100
    %v5102 = vsel %vm5089, %v5029, 0.0
    %5103 = vadd.xlane.f32.xlu0 %v5102
    %v5104 = vpop.xlane.xlu0 %5103
    %v5105 = vsel %vm5089, %v5030, 0.0
    %5106 = vadd.xlane.f32.xlu0 %v5105
    %v5107 = vpop.xlane.xlu0 %5106
    %v5108 = vsel %vm5089, %v5031, 0.0
    %5109 = vadd.xlane.f32.xlu0 %v5108
    %v5110 = vpop.xlane.xlu0 %5109
    %v5111 = vsel %vm5089, %v5032, 0.0
    %5112 = vadd.xlane.f32.xlu0 %v5111
    %v5113 = vpop.xlane.xlu0 %5112
    %v5114 = vsel %vm5089, %v5033, 0.0
    %5115 = vadd.xlane.f32.xlu0 %v5114
    %v5116 = vpop.xlane.xlu0 %5115
    %v5117 = vsel %vm5089, %v5034, 0.0
    %5118 = vadd.xlane.f32.xlu0 %v5117
    %v5119 = vpop.xlane.xlu0 %5118
    %v5120 = vsel %vm5089, %v5035, 0.0
    %5121 = vadd.xlane.f32.xlu0 %v5120
    %v5122 = vpop.xlane.xlu0 %5121
    %v5123 = vsel %vm5089, %v5036, 0.0
    %5124 = vadd.xlane.f32.xlu0 %v5123
    %v5125 = vpop.xlane.xlu0 %5124
    %v5126 = vsel %vm5089, %v5037, 0.0
    %5127 = vadd.xlane.f32.xlu0 %v5126
    %v5128 = vpop.xlane.xlu0 %5127
    %v5129 = vsel %vm5089, %v5038, 0.0
    %5130 = vadd.xlane.f32.xlu0 %v5129
    %v5131 = vpop.xlane.xlu0 %5130
    %v5132 = vsel %vm5089, %v5039, 0.0
    %5133 = vadd.xlane.f32.xlu0 %v5132
    %v5134 = vpop.xlane.xlu0 %5133
    %v5135 = vsel %vm5089, %v5040, 0.0
    %5136 = vadd.xlane.f32.xlu0 %v5135
    %v5137 = vpop.xlane.xlu0 %5136
    %v5138 = vsel %vm5089, %v5041, 0.0
    %5139 = vadd.xlane.f32.xlu0 %v5138
    %v5140 = vpop.xlane.xlu0 %5139
    %v5141 = vsel %vm5089, %v5042, 0.0
    %5142 = vadd.xlane.f32.xlu0 %v5141
    %v5143 = vpop.xlane.xlu0 %5142
    %v5144 = vsel %vm5089, %v5043, 0.0
    %5145 = vadd.xlane.f32.xlu0 %v5144
    %v5146 = vpop.xlane.xlu0 %5145
    %v5147 = vsel %vm5089, %v5044, 0.0
    %5148 = vadd.xlane.f32.xlu0 %v5147
    %v5149 = vpop.xlane.xlu0 %5148
    %v5150 = vsel %vm5089, %v5045, 0.0
    %5151 = vadd.xlane.f32.xlu0 %v5150
    %v5152 = vpop.xlane.xlu0 %5151
    %v5153 = vsel %vm5089, %v5046, 0.0
    %5154 = vadd.xlane.f32.xlu0 %v5153
    %v5155 = vpop.xlane.xlu0 %5154
    %v5156 = vsel %vm5089, %v5047, 0.0
    %5157 = vadd.xlane.f32.xlu0 %v5156
    %v5158 = vpop.xlane.xlu0 %5157
    %v5159 = vsel %vm5089, %v5048, 0.0
    %5160 = vadd.xlane.f32.xlu0 %v5159
    %v5161 = vpop.xlane.xlu0 %5160
    %v5162 = vsel %vm5089, %v5049, 0.0
    %5163 = vadd.xlane.f32.xlu0 %v5162
    %v5164 = vpop.xlane.xlu0 %5163
    %v5165 = vsel %vm5089, %v5050, 0.0
    %5166 = vadd.xlane.f32.xlu0 %v5165
    %v5167 = vpop.xlane.xlu0 %5166
    %v5168 = vsel %vm5089, %v5051, 0.0
    %5169 = vadd.xlane.f32.xlu0 %v5168
    %v5170 = vpop.xlane.xlu0 %5169
    %v5171 = vsel %vm5089, %v5052, 0.0
    %5172 = vadd.xlane.f32.xlu0 %v5171
    %v5173 = vpop.xlane.xlu0 %5172
    %v5174 = vsel %vm5089, %v5053, 0.0
    %5175 = vadd.xlane.f32.xlu0 %v5174
    %v5176 = vpop.xlane.xlu0 %5175
    %v5177 = vsel %vm5089, %v5054, 0.0
    %5178 = vadd.xlane.f32.xlu0 %v5177
    %v5179 = vpop.xlane.xlu0 %5178
    %v5180 = vsel %vm5089, %v5055, 0.0
    %5181 = vadd.xlane.f32.xlu0 %v5180
    %v5182 = vpop.xlane.xlu0 %5181
    %v5183 = vsel %vm5089, %v5056, 0.0
    %5184 = vadd.xlane.f32.xlu0 %v5183
    %v5185 = vpop.xlane.xlu0 %5184
    %v5186 = vsel %vm5089, %v5057, 0.0
    %5187 = vadd.xlane.f32.xlu0 %v5186
    %v5188 = vpop.xlane.xlu0 %5187
    %v5189 = vsel %vm5089, %v5058, 0.0
    %5190 = vadd.xlane.f32.xlu0 %v5189
    %v5191 = vpop.xlane.xlu0 %5190
    %v5192 = vsel %vm5089, %v5059, 0.0
    %5193 = vadd.xlane.f32.xlu0 %v5192
    %v5194 = vpop.xlane.xlu0 %5193
    %v5195 = vsel %vm5089, %v5060, 0.0
    %5196 = vadd.xlane.f32.xlu0 %v5195
    %v5197 = vpop.xlane.xlu0 %5196
    %v5198 = vsel %vm5089, %v5061, 0.0
    %5199 = vadd.xlane.f32.xlu0 %v5198
    %v5200 = vpop.xlane.xlu0 %5199
    %v5201 = vsel %vm5089, %v5062, 0.0
    %5202 = vadd.xlane.f32.xlu0 %v5201
    %v5203 = vpop.xlane.xlu0 %5202
    %v5204 = vsel %vm5089, %v5063, 0.0
    %5205 = vadd.xlane.f32.xlu0 %v5204
    %v5206 = vpop.xlane.xlu0 %5205
    %v5207 = vsel %vm5089, %v5064, 0.0
    %5208 = vadd.xlane.f32.xlu0 %v5207
    %v5209 = vpop.xlane.xlu0 %5208
    %v5210 = vsel %vm5089, %v5065, 0.0
    %5211 = vadd.xlane.f32.xlu0 %v5210
    %v5212 = vpop.xlane.xlu0 %5211
    %v5213 = vsel %vm5089, %v5066, 0.0
    %5214 = vadd.xlane.f32.xlu0 %v5213
    %v5215 = vpop.xlane.xlu0 %5214
    %v5216 = vsel %vm5089, %v5067, 0.0
    %5217 = vadd.xlane.f32.xlu0 %v5216
    %v5218 = vpop.xlane.xlu0 %5217
    %v5219 = vsel %vm5089, %v5068, 0.0
    %5220 = vadd.xlane.f32.xlu0 %v5219
    %v5221 = vpop.xlane.xlu0 %5220
    %v5222 = vsel %vm5089, %v5069, 0.0
    %5223 = vadd.xlane.f32.xlu0 %v5222
    %v5224 = vpop.xlane.xlu0 %5223
    %v5225 = vsel %vm5089, %v5070, 0.0
    %5226 = vadd.xlane.f32.xlu0 %v5225
    %v5227 = vpop.xlane.xlu0 %5226
    %v5228 = vsel %vm5089, %v5071, 0.0
    %5229 = vadd.xlane.f32.xlu0 %v5228
    %v5230 = vpop.xlane.xlu0 %5229
    %v5231 = vsel %vm5089, %v5072, 0.0
    %5232 = vadd.xlane.f32.xlu0 %v5231
    %v5233 = vpop.xlane.xlu0 %5232
    %v5234 = vsel %vm5089, %v5073, 0.0
    %5235 = vadd.xlane.f32.xlu0 %v5234
    %v5236 = vpop.xlane.xlu0 %5235
    %v5237 = vsel %vm5089, %v5074, 0.0
    %5238 = vadd.xlane.f32.xlu0 %v5237
    %v5239 = vpop.xlane.xlu0 %5238
    %v5240 = vsel %vm5089, %v5075, 0.0
    %5241 = vadd.xlane.f32.xlu0 %v5240
    %v5242 = vpop.xlane.xlu0 %5241
    %v5243 = vsel %vm5089, %v5076, 0.0
    %5244 = vadd.xlane.f32.xlu0 %v5243
    %v5245 = vpop.xlane.xlu0 %5244
    %v5246 = vsel %vm5089, %v5077, 0.0
    %5247 = vadd.xlane.f32.xlu0 %v5246
    %v5248 = vpop.xlane.xlu0 %5247
    %v5249 = vsel %vm5089, %v5078, 0.0
    %5250 = vadd.xlane.f32.xlu0 %v5249
    %v5251 = vpop.xlane.xlu0 %5250
    %v5252 = vsel %vm5089, %v5079, 0.0
    %5253 = vadd.xlane.f32.xlu0 %v5252
    %v5254 = vpop.xlane.xlu0 %5253
    %v5255 = vsel %vm5089, %v5080, 0.0
    %5256 = vadd.xlane.f32.xlu0 %v5255
    %v5257 = vpop.xlane.xlu0 %5256
    %v5258 = vsel %vm5089, %v5081, 0.0
    %5259 = vadd.xlane.f32.xlu0 %v5258
    %v5260 = vpop.xlane.xlu0 %5259
    %v5261 = vsel %vm5089, %v5082, 0.0
    %5262 = vadd.xlane.f32.xlu0 %v5261
    %v5263 = vpop.xlane.xlu0 %5262
    %v5264 = vsel %vm5089, %v5083, 0.0
    %5265 = vadd.xlane.f32.xlu0 %v5264
    %v5266 = vpop.xlane.xlu0 %5265
    %v5267 = vsel %vm5089, %v5084, 0.0
    %5268 = vadd.xlane.f32.xlu0 %v5267
    %v5269 = vpop.xlane.xlu0 %5268
    %v5270 = vsel %vm5089, %v5085, 0.0
    %5271 = vadd.xlane.f32.xlu0 %v5270
    %v5272 = vpop.xlane.xlu0 %5271
    %v5273 = vsel %vm5089, %v5086, 0.0
    %5274 = vadd.xlane.f32.xlu0 %v5273
    %v5275 = vpop.xlane.xlu0 %5274
    %v5276 = vsel %vm5089, %v5087, 0.0
    %5277 = vadd.xlane.f32.xlu0 %v5276
    %v5278 = vpop.xlane.xlu0 %5277
    %v5279 = vsel %vm5089, %v5088, 0.0
    %5280 = vadd.xlane.f32.xlu0 %v5279
    %v5281 = vpop.xlane.xlu0 %5280
    %v5282 = vadd.f32 %v5092, %v2435
    %v5283 = vadd.f32 %v5095, %v2435
    %v5284 = vadd.f32 %v5098, %v2435
    %v5285 = vadd.f32 %v5101, %v2435
    %v5286 = vadd.f32 %v5104, %v2435
    %v5287 = vadd.f32 %v5107, %v2435
    %v5288 = vadd.f32 %v5110, %v2435
    %v5289 = vadd.f32 %v5113, %v2435
    %v5290 = vadd.f32 %v5116, %v2435
    %v5291 = vadd.f32 %v5119, %v2435
    %v5292 = vadd.f32 %v5122, %v2435
    %v5293 = vadd.f32 %v5125, %v2435
    %v5294 = vadd.f32 %v5128, %v2435
    %v5295 = vadd.f32 %v5131, %v2435
    %v5296 = vadd.f32 %v5134, %v2435
    %v5297 = vadd.f32 %v5137, %v2435
    %v5298 = vadd.f32 %v5140, %v2435
    %v5299 = vadd.f32 %v5143, %v2435
    %v5300 = vadd.f32 %v5146, %v2435
    %v5301 = vadd.f32 %v5149, %v2435
    %v5302 = vadd.f32 %v5152, %v2435
    %v5303 = vadd.f32 %v5155, %v2435
    %v5304 = vadd.f32 %v5158, %v2435
    %v5305 = vadd.f32 %v5161, %v2435
    %v5306 = vadd.f32 %v5164, %v2435
    %v5307 = vadd.f32 %v5167, %v2435
    %v5308 = vadd.f32 %v5170, %v2435
    %v5309 = vadd.f32 %v5173, %v2435
    %v5310 = vadd.f32 %v5176, %v2435
    %v5311 = vadd.f32 %v5179, %v2435
    %v5312 = vadd.f32 %v5182, %v2435
    %v5313 = vadd.f32 %v5185, %v2435
    %v5314 = vadd.f32 %v5188, %v2435
    %v5315 = vadd.f32 %v5191, %v2435
    %v5316 = vadd.f32 %v5194, %v2435
    %v5317 = vadd.f32 %v5197, %v2435
    %v5318 = vadd.f32 %v5200, %v2435
    %v5319 = vadd.f32 %v5203, %v2435
    %v5320 = vadd.f32 %v5206, %v2435
    %v5321 = vadd.f32 %v5209, %v2435
    %v5322 = vadd.f32 %v5212, %v2435
    %v5323 = vadd.f32 %v5215, %v2435
    %v5324 = vadd.f32 %v5218, %v2435
    %v5325 = vadd.f32 %v5221, %v2435
    %v5326 = vadd.f32 %v5224, %v2435
    %v5327 = vadd.f32 %v5227, %v2435
    %v5328 = vadd.f32 %v5230, %v2435
    %v5329 = vadd.f32 %v5233, %v2435
    %v5330 = vadd.f32 %v5236, %v2435
    %v5331 = vadd.f32 %v5239, %v2435
    %v5332 = vadd.f32 %v5242, %v2435
    %v5333 = vadd.f32 %v5245, %v2435
    %v5334 = vadd.f32 %v5248, %v2435
    %v5335 = vadd.f32 %v5251, %v2435
    %v5336 = vadd.f32 %v5254, %v2435
    %v5337 = vadd.f32 %v5257, %v2435
    %v5338 = vadd.f32 %v5260, %v2435
    %v5339 = vadd.f32 %v5263, %v2435
    %v5340 = vadd.f32 %v5266, %v2435
    %v5341 = vadd.f32 %v5269, %v2435
    %v5342 = vadd.f32 %v5272, %v2435
    %v5343 = vadd.f32 %v5275, %v2435
    %v5344 = vadd.f32 %v5278, %v2435
    %v5345 = vadd.f32 %v5281, %v2435
    %v5346 = vlaneseq
    %v5347 = vshrl.u32 %v5346, 7
    %v5348 = vlaneseq
    %v5349 = vand.u32 %v5348, 127
    %vm5350 = vcmp.eq.s32.totalorder %v5347, %v5349
    %v5351 = vsel %vm5350, 1, 0
    %v5352 = vcvt.s32.f32 %v5351
    %5354 = vset.pattern.permute.xlu0 56
    %5355 = vperm.xlu0 %5354, %v5282
    %v5356 = vpop.permute.xlu0 %5355
    %5359 = vset.pattern.permute.xlu0 56
    %5360 = vperm.xlu0 %5359, %v5283
    %v5361 = vpop.permute.xlu0 %5360
    %5364 = vset.pattern.permute.xlu0 56
    %5365 = vperm.xlu0 %5364, %v5284
    %v5366 = vpop.permute.xlu0 %5365
    %5369 = vset.pattern.permute.xlu0 56
    %5370 = vperm.xlu0 %5369, %v5285
    %v5371 = vpop.permute.xlu0 %5370
    %5374 = vset.pattern.permute.xlu0 56
    %5375 = vperm.xlu0 %5374, %v5286
    %v5376 = vpop.permute.xlu0 %5375
    %5379 = vset.pattern.permute.xlu0 56
    %5380 = vperm.xlu0 %5379, %v5287
    %v5381 = vpop.permute.xlu0 %5380
    %5384 = vset.pattern.permute.xlu0 56
    %5385 = vperm.xlu0 %5384, %v5288
    %v5386 = vpop.permute.xlu0 %5385
    %5389 = vset.pattern.permute.xlu0 56
    %5390 = vperm.xlu0 %5389, %v5289
    %v5391 = vpop.permute.xlu0 %5390
    %5394 = vset.pattern.permute.xlu0 56
    %5395 = vperm.xlu0 %5394, %v5290
    %v5396 = vpop.permute.xlu0 %5395
    %5399 = vset.pattern.permute.xlu0 56
    %5400 = vperm.xlu0 %5399, %v5291
    %v5401 = vpop.permute.xlu0 %5400
    %5404 = vset.pattern.permute.xlu0 56
    %5405 = vperm.xlu0 %5404, %v5292
    %v5406 = vpop.permute.xlu0 %5405
    %5409 = vset.pattern.permute.xlu0 56
    %5410 = vperm.xlu0 %5409, %v5293
    %v5411 = vpop.permute.xlu0 %5410
    %5414 = vset.pattern.permute.xlu0 56
    %5415 = vperm.xlu0 %5414, %v5294
    %v5416 = vpop.permute.xlu0 %5415
    %5419 = vset.pattern.permute.xlu0 56
    %5420 = vperm.xlu0 %5419, %v5295
    %v5421 = vpop.permute.xlu0 %5420
    %5424 = vset.pattern.permute.xlu0 56
    %5425 = vperm.xlu0 %5424, %v5296
    %v5426 = vpop.permute.xlu0 %5425
    %5429 = vset.pattern.permute.xlu0 56
    %5430 = vperm.xlu0 %5429, %v5297
    %v5431 = vpop.permute.xlu0 %5430
    %5434 = vset.pattern.permute.xlu0 56
    %5435 = vperm.xlu0 %5434, %v5298
    %v5436 = vpop.permute.xlu0 %5435
    %5439 = vset.pattern.permute.xlu0 56
    %5440 = vperm.xlu0 %5439, %v5299
    %v5441 = vpop.permute.xlu0 %5440
    %5444 = vset.pattern.permute.xlu0 56
    %5445 = vperm.xlu0 %5444, %v5300
    %v5446 = vpop.permute.xlu0 %5445
    %5449 = vset.pattern.permute.xlu0 56
    %5450 = vperm.xlu0 %5449, %v5301
    %v5451 = vpop.permute.xlu0 %5450
    %5454 = vset.pattern.permute.xlu0 56
    %5455 = vperm.xlu0 %5454, %v5302
    %v5456 = vpop.permute.xlu0 %5455
    %5459 = vset.pattern.permute.xlu0 56
    %5460 = vperm.xlu0 %5459, %v5303
    %v5461 = vpop.permute.xlu0 %5460
    %5464 = vset.pattern.permute.xlu0 56
    %5465 = vperm.xlu0 %5464, %v5304
    %v5466 = vpop.permute.xlu0 %5465
    %5469 = vset.pattern.permute.xlu0 56
    %5470 = vperm.xlu0 %5469, %v5305
    %v5471 = vpop.permute.xlu0 %5470
    %5474 = vset.pattern.permute.xlu0 56
    %5475 = vperm.xlu0 %5474, %v5306
    %v5476 = vpop.permute.xlu0 %5475
    %5479 = vset.pattern.permute.xlu0 56
    %5480 = vperm.xlu0 %5479, %v5307
    %v5481 = vpop.permute.xlu0 %5480
    %5484 = vset.pattern.permute.xlu0 56
    %5485 = vperm.xlu0 %5484, %v5308
    %v5486 = vpop.permute.xlu0 %5485
    %5489 = vset.pattern.permute.xlu0 56
    %5490 = vperm.xlu0 %5489, %v5309
    %v5491 = vpop.permute.xlu0 %5490
    %5494 = vset.pattern.permute.xlu0 56
    %5495 = vperm.xlu0 %5494, %v5310
    %v5496 = vpop.permute.xlu0 %5495
    %5499 = vset.pattern.permute.xlu0 56
    %5500 = vperm.xlu0 %5499, %v5311
    %v5501 = vpop.permute.xlu0 %5500
    %5504 = vset.pattern.permute.xlu0 56
    %5505 = vperm.xlu0 %5504, %v5312
    %v5506 = vpop.permute.xlu0 %5505
    %5509 = vset.pattern.permute.xlu0 56
    %5510 = vperm.xlu0 %5509, %v5313
    %v5511 = vpop.permute.xlu0 %5510
    %5514 = vset.pattern.permute.xlu0 56
    %5515 = vperm.xlu0 %5514, %v5314
    %v5516 = vpop.permute.xlu0 %5515
    %5519 = vset.pattern.permute.xlu0 56
    %5520 = vperm.xlu0 %5519, %v5315
    %v5521 = vpop.permute.xlu0 %5520
    %5524 = vset.pattern.permute.xlu0 56
    %5525 = vperm.xlu0 %5524, %v5316
    %v5526 = vpop.permute.xlu0 %5525
    %5529 = vset.pattern.permute.xlu0 56
    %5530 = vperm.xlu0 %5529, %v5317
    %v5531 = vpop.permute.xlu0 %5530
    %5534 = vset.pattern.permute.xlu0 56
    %5535 = vperm.xlu0 %5534, %v5318
    %v5536 = vpop.permute.xlu0 %5535
    %5539 = vset.pattern.permute.xlu0 56
    %5540 = vperm.xlu0 %5539, %v5319
    %v5541 = vpop.permute.xlu0 %5540
    %5544 = vset.pattern.permute.xlu0 56
    %5545 = vperm.xlu0 %5544, %v5320
    %v5546 = vpop.permute.xlu0 %5545
    %5549 = vset.pattern.permute.xlu0 56
    %5550 = vperm.xlu0 %5549, %v5321
    %v5551 = vpop.permute.xlu0 %5550
    %5554 = vset.pattern.permute.xlu0 56
    %5555 = vperm.xlu0 %5554, %v5322
    %v5556 = vpop.permute.xlu0 %5555
    %5559 = vset.pattern.permute.xlu0 56
    %5560 = vperm.xlu0 %5559, %v5323
    %v5561 = vpop.permute.xlu0 %5560
    %5564 = vset.pattern.permute.xlu0 56
    %5565 = vperm.xlu0 %5564, %v5324
    %v5566 = vpop.permute.xlu0 %5565
    %5569 = vset.pattern.permute.xlu0 56
    %5570 = vperm.xlu0 %5569, %v5325
    %v5571 = vpop.permute.xlu0 %5570
    %5574 = vset.pattern.permute.xlu0 56
    %5575 = vperm.xlu0 %5574, %v5326
    %v5576 = vpop.permute.xlu0 %5575
    %5579 = vset.pattern.permute.xlu0 56
    %5580 = vperm.xlu0 %5579, %v5327
    %v5581 = vpop.permute.xlu0 %5580
    %5584 = vset.pattern.permute.xlu0 56
    %5585 = vperm.xlu0 %5584, %v5328
    %v5586 = vpop.permute.xlu0 %5585
    %5589 = vset.pattern.permute.xlu0 56
    %5590 = vperm.xlu0 %5589, %v5329
    %v5591 = vpop.permute.xlu0 %5590
    %5594 = vset.pattern.permute.xlu0 56
    %5595 = vperm.xlu0 %5594, %v5330
    %v5596 = vpop.permute.xlu0 %5595
    %5599 = vset.pattern.permute.xlu0 56
    %5600 = vperm.xlu0 %5599, %v5331
    %v5601 = vpop.permute.xlu0 %5600
    %5604 = vset.pattern.permute.xlu0 56
    %5605 = vperm.xlu0 %5604, %v5332
    %v5606 = vpop.permute.xlu0 %5605
    %5609 = vset.pattern.permute.xlu0 56
    %5610 = vperm.xlu0 %5609, %v5333
    %v5611 = vpop.permute.xlu0 %5610
    %5614 = vset.pattern.permute.xlu0 56
    %5615 = vperm.xlu0 %5614, %v5334
    %v5616 = vpop.permute.xlu0 %5615
    %5619 = vset.pattern.permute.xlu0 56
    %5620 = vperm.xlu0 %5619, %v5335
    %v5621 = vpop.permute.xlu0 %5620
    %5624 = vset.pattern.permute.xlu0 56
    %5625 = vperm.xlu0 %5624, %v5336
    %v5626 = vpop.permute.xlu0 %5625
    %5629 = vset.pattern.permute.xlu0 56
    %5630 = vperm.xlu0 %5629, %v5337
    %v5631 = vpop.permute.xlu0 %5630
    %5634 = vset.pattern.permute.xlu0 56
    %5635 = vperm.xlu0 %5634, %v5338
    %v5636 = vpop.permute.xlu0 %5635
    %5639 = vset.pattern.permute.xlu0 56
    %5640 = vperm.xlu0 %5639, %v5339
    %v5641 = vpop.permute.xlu0 %5640
    %5644 = vset.pattern.permute.xlu0 56
    %5645 = vperm.xlu0 %5644, %v5340
    %v5646 = vpop.permute.xlu0 %5645
    %5649 = vset.pattern.permute.xlu0 56
    %5650 = vperm.xlu0 %5649, %v5341
    %v5651 = vpop.permute.xlu0 %5650
    %5654 = vset.pattern.permute.xlu0 56
    %5655 = vperm.xlu0 %5654, %v5342
    %v5656 = vpop.permute.xlu0 %5655
    %5659 = vset.pattern.permute.xlu0 56
    %5660 = vperm.xlu0 %5659, %v5343
    %v5661 = vpop.permute.xlu0 %5660
    %5664 = vset.pattern.permute.xlu0 56
    %5665 = vperm.xlu0 %5664, %v5344
    %v5666 = vpop.permute.xlu0 %5665
    %5669 = vset.pattern.permute.xlu0 56
    %5670 = vperm.xlu0 %5669, %v5345
    %v5671 = vpop.permute.xlu0 %5670
    %v5673 = vmul.f32 %v5356, %v5352
    %v5674 = vmul.f32 %v5361, %v5352
    %v5675 = vmul.f32 %v5366, %v5352
    %v5676 = vmul.f32 %v5371, %v5352
    %v5677 = vmul.f32 %v5376, %v5352
    %v5678 = vmul.f32 %v5381, %v5352
    %v5679 = vmul.f32 %v5386, %v5352
    %v5680 = vmul.f32 %v5391, %v5352
    %v5681 = vmul.f32 %v5396, %v5352
    %v5682 = vmul.f32 %v5401, %v5352
    %v5683 = vmul.f32 %v5406, %v5352
    %v5684 = vmul.f32 %v5411, %v5352
    %v5685 = vmul.f32 %v5416, %v5352
    %v5686 = vmul.f32 %v5421, %v5352
    %v5687 = vmul.f32 %v5426, %v5352
    %v5688 = vmul.f32 %v5431, %v5352
    %v5689 = vmul.f32 %v5436, %v5352
    %v5690 = vmul.f32 %v5441, %v5352
    %v5691 = vmul.f32 %v5446, %v5352
    %v5692 = vmul.f32 %v5451, %v5352
    %v5693 = vmul.f32 %v5456, %v5352
    %v5694 = vmul.f32 %v5461, %v5352
    %v5695 = vmul.f32 %v5466, %v5352
    %v5696 = vmul.f32 %v5471, %v5352
    %v5697 = vmul.f32 %v5476, %v5352
    %v5698 = vmul.f32 %v5481, %v5352
    %v5699 = vmul.f32 %v5486, %v5352
    %v5700 = vmul.f32 %v5491, %v5352
    %v5701 = vmul.f32 %v5496, %v5352
    %v5702 = vmul.f32 %v5501, %v5352
    %v5703 = vmul.f32 %v5506, %v5352
    %v5704 = vmul.f32 %v5511, %v5352
    %v5705 = vmul.f32 %v5516, %v5352
    %v5706 = vmul.f32 %v5521, %v5352
    %v5707 = vmul.f32 %v5526, %v5352
    %v5708 = vmul.f32 %v5531, %v5352
    %v5709 = vmul.f32 %v5536, %v5352
    %v5710 = vmul.f32 %v5541, %v5352
    %v5711 = vmul.f32 %v5546, %v5352
    %v5712 = vmul.f32 %v5551, %v5352
    %v5713 = vmul.f32 %v5556, %v5352
    %v5714 = vmul.f32 %v5561, %v5352
    %v5715 = vmul.f32 %v5566, %v5352
    %v5716 = vmul.f32 %v5571, %v5352
    %v5717 = vmul.f32 %v5576, %v5352
    %v5718 = vmul.f32 %v5581, %v5352
    %v5719 = vmul.f32 %v5586, %v5352
    %v5720 = vmul.f32 %v5591, %v5352
    %v5721 = vmul.f32 %v5596, %v5352
    %v5722 = vmul.f32 %v5601, %v5352
    %v5723 = vmul.f32 %v5606, %v5352
    %v5724 = vmul.f32 %v5611, %v5352
    %v5725 = vmul.f32 %v5616, %v5352
    %v5726 = vmul.f32 %v5621, %v5352
    %v5727 = vmul.f32 %v5626, %v5352
    %v5728 = vmul.f32 %v5631, %v5352
    %v5729 = vmul.f32 %v5636, %v5352
    %v5730 = vmul.f32 %v5641, %v5352
    %v5731 = vmul.f32 %v5646, %v5352
    %v5732 = vmul.f32 %v5651, %v5352
    %v5733 = vmul.f32 %v5656, %v5352
    %v5734 = vmul.f32 %v5661, %v5352
    %v5735 = vmul.f32 %v5666, %v5352
    %v5736 = vmul.f32 %v5671, %v5352
    %v5737 = vsel %vm145, %v5673, 0.0
    %v5738 = vrot.slane %v5737, 4
    %v5739 = vadd.f32 %v5737, %v5738
    %v5740 = vrot.slane %v5739, 2
    %v5741 = vadd.f32 %v5739, %v5740
    %v5742 = vrot.slane %v5741, 1
    %v5743 = vadd.f32 %v5741, %v5742
    %v5744 = vsel %vm145, %v5674, 0.0
    %v5745 = vrot.slane %v5744, 4
    %v5746 = vadd.f32 %v5744, %v5745
    %v5747 = vrot.slane %v5746, 2
    %v5748 = vadd.f32 %v5746, %v5747
    %v5749 = vrot.slane %v5748, 1
    %v5750 = vadd.f32 %v5748, %v5749
    %v5751 = vsel %vm145, %v5675, 0.0
    %v5752 = vrot.slane %v5751, 4
    %v5753 = vadd.f32 %v5751, %v5752
    %v5754 = vrot.slane %v5753, 2
    %v5755 = vadd.f32 %v5753, %v5754
    %v5756 = vrot.slane %v5755, 1
    %v5757 = vadd.f32 %v5755, %v5756
    %v5758 = vsel %vm145, %v5676, 0.0
    %v5759 = vrot.slane %v5758, 4
    %v5760 = vadd.f32 %v5758, %v5759
    %v5761 = vrot.slane %v5760, 2
    %v5762 = vadd.f32 %v5760, %v5761
    %v5763 = vrot.slane %v5762, 1
    %v5764 = vadd.f32 %v5762, %v5763
    %v5765 = vsel %vm145, %v5677, 0.0
    %v5766 = vrot.slane %v5765, 4
    %v5767 = vadd.f32 %v5765, %v5766
    %v5768 = vrot.slane %v5767, 2
    %v5769 = vadd.f32 %v5767, %v5768
    %v5770 = vrot.slane %v5769, 1
    %v5771 = vadd.f32 %v5769, %v5770
    %v5772 = vsel %vm145, %v5678, 0.0
    %v5773 = vrot.slane %v5772, 4
    %v5774 = vadd.f32 %v5772, %v5773
    %v5775 = vrot.slane %v5774, 2
    %v5776 = vadd.f32 %v5774, %v5775
    %v5777 = vrot.slane %v5776, 1
    %v5778 = vadd.f32 %v5776, %v5777
    %v5779 = vsel %vm145, %v5679, 0.0
    %v5780 = vrot.slane %v5779, 4
    %v5781 = vadd.f32 %v5779, %v5780
    %v5782 = vrot.slane %v5781, 2
    %v5783 = vadd.f32 %v5781, %v5782
    %v5784 = vrot.slane %v5783, 1
    %v5785 = vadd.f32 %v5783, %v5784
    %v5786 = vsel %vm145, %v5680, 0.0
    %v5787 = vrot.slane %v5786, 4
    %v5788 = vadd.f32 %v5786, %v5787
    %v5789 = vrot.slane %v5788, 2
    %v5790 = vadd.f32 %v5788, %v5789
    %v5791 = vrot.slane %v5790, 1
    %v5792 = vadd.f32 %v5790, %v5791
    %v5793 = vsel %vm145, %v5681, 0.0
    %v5794 = vrot.slane %v5793, 4
    %v5795 = vadd.f32 %v5793, %v5794
    %v5796 = vrot.slane %v5795, 2
    %v5797 = vadd.f32 %v5795, %v5796
    %v5798 = vrot.slane %v5797, 1
    %v5799 = vadd.f32 %v5797, %v5798
    %v5800 = vsel %vm145, %v5682, 0.0
    %v5801 = vrot.slane %v5800, 4
    %v5802 = vadd.f32 %v5800, %v5801
    %v5803 = vrot.slane %v5802, 2
    %v5804 = vadd.f32 %v5802, %v5803
    %v5805 = vrot.slane %v5804, 1
    %v5806 = vadd.f32 %v5804, %v5805
    %v5807 = vsel %vm145, %v5683, 0.0
    %v5808 = vrot.slane %v5807, 4
    %v5809 = vadd.f32 %v5807, %v5808
    %v5810 = vrot.slane %v5809, 2
    %v5811 = vadd.f32 %v5809, %v5810
    %v5812 = vrot.slane %v5811, 1
    %v5813 = vadd.f32 %v5811, %v5812
    %v5814 = vsel %vm145, %v5684, 0.0
    %v5815 = vrot.slane %v5814, 4
    %v5816 = vadd.f32 %v5814, %v5815
    %v5817 = vrot.slane %v5816, 2
    %v5818 = vadd.f32 %v5816, %v5817
    %v5819 = vrot.slane %v5818, 1
    %v5820 = vadd.f32 %v5818, %v5819
    %v5821 = vsel %vm145, %v5685, 0.0
    %v5822 = vrot.slane %v5821, 4
    %v5823 = vadd.f32 %v5821, %v5822
    %v5824 = vrot.slane %v5823, 2
    %v5825 = vadd.f32 %v5823, %v5824
    %v5826 = vrot.slane %v5825, 1
    %v5827 = vadd.f32 %v5825, %v5826
    %v5828 = vsel %vm145, %v5686, 0.0
    %v5829 = vrot.slane %v5828, 4
    %v5830 = vadd.f32 %v5828, %v5829
    %v5831 = vrot.slane %v5830, 2
    %v5832 = vadd.f32 %v5830, %v5831
    %v5833 = vrot.slane %v5832, 1
    %v5834 = vadd.f32 %v5832, %v5833
    %v5835 = vsel %vm145, %v5687, 0.0
    %v5836 = vrot.slane %v5835, 4
    %v5837 = vadd.f32 %v5835, %v5836
    %v5838 = vrot.slane %v5837, 2
    %v5839 = vadd.f32 %v5837, %v5838
    %v5840 = vrot.slane %v5839, 1
    %v5841 = vadd.f32 %v5839, %v5840
    %v5842 = vsel %vm145, %v5688, 0.0
    %v5843 = vrot.slane %v5842, 4
    %v5844 = vadd.f32 %v5842, %v5843
    %v5845 = vrot.slane %v5844, 2
    %v5846 = vadd.f32 %v5844, %v5845
    %v5847 = vrot.slane %v5846, 1
    %v5848 = vadd.f32 %v5846, %v5847
    %v5849 = vsel %vm145, %v5689, 0.0
    %v5850 = vrot.slane %v5849, 4
    %v5851 = vadd.f32 %v5849, %v5850
    %v5852 = vrot.slane %v5851, 2
    %v5853 = vadd.f32 %v5851, %v5852
    %v5854 = vrot.slane %v5853, 1
    %v5855 = vadd.f32 %v5853, %v5854
    %v5856 = vsel %vm145, %v5690, 0.0
    %v5857 = vrot.slane %v5856, 4
    %v5858 = vadd.f32 %v5856, %v5857
    %v5859 = vrot.slane %v5858, 2
    %v5860 = vadd.f32 %v5858, %v5859
    %v5861 = vrot.slane %v5860, 1
    %v5862 = vadd.f32 %v5860, %v5861
    %v5863 = vsel %vm145, %v5691, 0.0
    %v5864 = vrot.slane %v5863, 4
    %v5865 = vadd.f32 %v5863, %v5864
    %v5866 = vrot.slane %v5865, 2
    %v5867 = vadd.f32 %v5865, %v5866
    %v5868 = vrot.slane %v5867, 1
    %v5869 = vadd.f32 %v5867, %v5868
    %v5870 = vsel %vm145, %v5692, 0.0
    %v5871 = vrot.slane %v5870, 4
    %v5872 = vadd.f32 %v5870, %v5871
    %v5873 = vrot.slane %v5872, 2
    %v5874 = vadd.f32 %v5872, %v5873
    %v5875 = vrot.slane %v5874, 1
    %v5876 = vadd.f32 %v5874, %v5875
    %v5877 = vsel %vm145, %v5693, 0.0
    %v5878 = vrot.slane %v5877, 4
    %v5879 = vadd.f32 %v5877, %v5878
    %v5880 = vrot.slane %v5879, 2
    %v5881 = vadd.f32 %v5879, %v5880
    %v5882 = vrot.slane %v5881, 1
    %v5883 = vadd.f32 %v5881, %v5882
    %v5884 = vsel %vm145, %v5694, 0.0
    %v5885 = vrot.slane %v5884, 4
    %v5886 = vadd.f32 %v5884, %v5885
    %v5887 = vrot.slane %v5886, 2
    %v5888 = vadd.f32 %v5886, %v5887
    %v5889 = vrot.slane %v5888, 1
    %v5890 = vadd.f32 %v5888, %v5889
    %v5891 = vsel %vm145, %v5695, 0.0
    %v5892 = vrot.slane %v5891, 4
    %v5893 = vadd.f32 %v5891, %v5892
    %v5894 = vrot.slane %v5893, 2
    %v5895 = vadd.f32 %v5893, %v5894
    %v5896 = vrot.slane %v5895, 1
    %v5897 = vadd.f32 %v5895, %v5896
    %v5898 = vsel %vm145, %v5696, 0.0
    %v5899 = vrot.slane %v5898, 4
    %v5900 = vadd.f32 %v5898, %v5899
    %v5901 = vrot.slane %v5900, 2
    %v5902 = vadd.f32 %v5900, %v5901
    %v5903 = vrot.slane %v5902, 1
    %v5904 = vadd.f32 %v5902, %v5903
    %v5905 = vsel %vm145, %v5697, 0.0
    %v5906 = vrot.slane %v5905, 4
    %v5907 = vadd.f32 %v5905, %v5906
    %v5908 = vrot.slane %v5907, 2
    %v5909 = vadd.f32 %v5907, %v5908
    %v5910 = vrot.slane %v5909, 1
    %v5911 = vadd.f32 %v5909, %v5910
    %v5912 = vsel %vm145, %v5698, 0.0
    %v5913 = vrot.slane %v5912, 4
    %v5914 = vadd.f32 %v5912, %v5913
    %v5915 = vrot.slane %v5914, 2
    %v5916 = vadd.f32 %v5914, %v5915
    %v5917 = vrot.slane %v5916, 1
    %v5918 = vadd.f32 %v5916, %v5917
    %v5919 = vsel %vm145, %v5699, 0.0
    %v5920 = vrot.slane %v5919, 4
    %v5921 = vadd.f32 %v5919, %v5920
    %v5922 = vrot.slane %v5921, 2
    %v5923 = vadd.f32 %v5921, %v5922
    %v5924 = vrot.slane %v5923, 1
    %v5925 = vadd.f32 %v5923, %v5924
    %v5926 = vsel %vm145, %v5700, 0.0
    %v5927 = vrot.slane %v5926, 4
    %v5928 = vadd.f32 %v5926, %v5927
    %v5929 = vrot.slane %v5928, 2
    %v5930 = vadd.f32 %v5928, %v5929
    %v5931 = vrot.slane %v5930, 1
    %v5932 = vadd.f32 %v5930, %v5931
    %v5933 = vsel %vm145, %v5701, 0.0
    %v5934 = vrot.slane %v5933, 4
    %v5935 = vadd.f32 %v5933, %v5934
    %v5936 = vrot.slane %v5935, 2
    %v5937 = vadd.f32 %v5935, %v5936
    %v5938 = vrot.slane %v5937, 1
    %v5939 = vadd.f32 %v5937, %v5938
    %v5940 = vsel %vm145, %v5702, 0.0
    %v5941 = vrot.slane %v5940, 4
    %v5942 = vadd.f32 %v5940, %v5941
    %v5943 = vrot.slane %v5942, 2
    %v5944 = vadd.f32 %v5942, %v5943
    %v5945 = vrot.slane %v5944, 1
    %v5946 = vadd.f32 %v5944, %v5945
    %v5947 = vsel %vm145, %v5703, 0.0
    %v5948 = vrot.slane %v5947, 4
    %v5949 = vadd.f32 %v5947, %v5948
    %v5950 = vrot.slane %v5949, 2
    %v5951 = vadd.f32 %v5949, %v5950
    %v5952 = vrot.slane %v5951, 1
    %v5953 = vadd.f32 %v5951, %v5952
    %v5954 = vsel %vm145, %v5704, 0.0
    %v5955 = vrot.slane %v5954, 4
    %v5956 = vadd.f32 %v5954, %v5955
    %v5957 = vrot.slane %v5956, 2
    %v5958 = vadd.f32 %v5956, %v5957
    %v5959 = vrot.slane %v5958, 1
    %v5960 = vadd.f32 %v5958, %v5959
    %v5961 = vsel %vm145, %v5705, 0.0
    %v5962 = vrot.slane %v5961, 4
    %v5963 = vadd.f32 %v5961, %v5962
    %v5964 = vrot.slane %v5963, 2
    %v5965 = vadd.f32 %v5963, %v5964
    %v5966 = vrot.slane %v5965, 1
    %v5967 = vadd.f32 %v5965, %v5966
    %v5968 = vsel %vm145, %v5706, 0.0
    %v5969 = vrot.slane %v5968, 4
    %v5970 = vadd.f32 %v5968, %v5969
    %v5971 = vrot.slane %v5970, 2
    %v5972 = vadd.f32 %v5970, %v5971
    %v5973 = vrot.slane %v5972, 1
    %v5974 = vadd.f32 %v5972, %v5973
    %v5975 = vsel %vm145, %v5707, 0.0
    %v5976 = vrot.slane %v5975, 4
    %v5977 = vadd.f32 %v5975, %v5976
    %v5978 = vrot.slane %v5977, 2
    %v5979 = vadd.f32 %v5977, %v5978
    %v5980 = vrot.slane %v5979, 1
    %v5981 = vadd.f32 %v5979, %v5980
    %v5982 = vsel %vm145, %v5708, 0.0
    %v5983 = vrot.slane %v5982, 4
    %v5984 = vadd.f32 %v5982, %v5983
    %v5985 = vrot.slane %v5984, 2
    %v5986 = vadd.f32 %v5984, %v5985
    %v5987 = vrot.slane %v5986, 1
    %v5988 = vadd.f32 %v5986, %v5987
    %v5989 = vsel %vm145, %v5709, 0.0
    %v5990 = vrot.slane %v5989, 4
    %v5991 = vadd.f32 %v5989, %v5990
    %v5992 = vrot.slane %v5991, 2
    %v5993 = vadd.f32 %v5991, %v5992
    %v5994 = vrot.slane %v5993, 1
    %v5995 = vadd.f32 %v5993, %v5994
    %v5996 = vsel %vm145, %v5710, 0.0
    %v5997 = vrot.slane %v5996, 4
    %v5998 = vadd.f32 %v5996, %v5997
    %v5999 = vrot.slane %v5998, 2
    %v6000 = vadd.f32 %v5998, %v5999
    %v6001 = vrot.slane %v6000, 1
    %v6002 = vadd.f32 %v6000, %v6001
    %v6003 = vsel %vm145, %v5711, 0.0
    %v6004 = vrot.slane %v6003, 4
    %v6005 = vadd.f32 %v6003, %v6004
    %v6006 = vrot.slane %v6005, 2
    %v6007 = vadd.f32 %v6005, %v6006
    %v6008 = vrot.slane %v6007, 1
    %v6009 = vadd.f32 %v6007, %v6008
    %v6010 = vsel %vm145, %v5712, 0.0
    %v6011 = vrot.slane %v6010, 4
    %v6012 = vadd.f32 %v6010, %v6011
    %v6013 = vrot.slane %v6012, 2
    %v6014 = vadd.f32 %v6012, %v6013
    %v6015 = vrot.slane %v6014, 1
    %v6016 = vadd.f32 %v6014, %v6015
    %v6017 = vsel %vm145, %v5713, 0.0
    %v6018 = vrot.slane %v6017, 4
    %v6019 = vadd.f32 %v6017, %v6018
    %v6020 = vrot.slane %v6019, 2
    %v6021 = vadd.f32 %v6019, %v6020
    %v6022 = vrot.slane %v6021, 1
    %v6023 = vadd.f32 %v6021, %v6022
    %v6024 = vsel %vm145, %v5714, 0.0
    %v6025 = vrot.slane %v6024, 4
    %v6026 = vadd.f32 %v6024, %v6025
    %v6027 = vrot.slane %v6026, 2
    %v6028 = vadd.f32 %v6026, %v6027
    %v6029 = vrot.slane %v6028, 1
    %v6030 = vadd.f32 %v6028, %v6029
    %v6031 = vsel %vm145, %v5715, 0.0
    %v6032 = vrot.slane %v6031, 4
    %v6033 = vadd.f32 %v6031, %v6032
    %v6034 = vrot.slane %v6033, 2
    %v6035 = vadd.f32 %v6033, %v6034
    %v6036 = vrot.slane %v6035, 1
    %v6037 = vadd.f32 %v6035, %v6036
    %v6038 = vsel %vm145, %v5716, 0.0
    %v6039 = vrot.slane %v6038, 4
    %v6040 = vadd.f32 %v6038, %v6039
    %v6041 = vrot.slane %v6040, 2
    %v6042 = vadd.f32 %v6040, %v6041
    %v6043 = vrot.slane %v6042, 1
    %v6044 = vadd.f32 %v6042, %v6043
    %v6045 = vsel %vm145, %v5717, 0.0
    %v6046 = vrot.slane %v6045, 4
    %v6047 = vadd.f32 %v6045, %v6046
    %v6048 = vrot.slane %v6047, 2
    %v6049 = vadd.f32 %v6047, %v6048
    %v6050 = vrot.slane %v6049, 1
    %v6051 = vadd.f32 %v6049, %v6050
    %v6052 = vsel %vm145, %v5718, 0.0
    %v6053 = vrot.slane %v6052, 4
    %v6054 = vadd.f32 %v6052, %v6053
    %v6055 = vrot.slane %v6054, 2
    %v6056 = vadd.f32 %v6054, %v6055
    %v6057 = vrot.slane %v6056, 1
    %v6058 = vadd.f32 %v6056, %v6057
    %v6059 = vsel %vm145, %v5719, 0.0
    %v6060 = vrot.slane %v6059, 4
    %v6061 = vadd.f32 %v6059, %v6060
    %v6062 = vrot.slane %v6061, 2
    %v6063 = vadd.f32 %v6061, %v6062
    %v6064 = vrot.slane %v6063, 1
    %v6065 = vadd.f32 %v6063, %v6064
    %v6066 = vsel %vm145, %v5720, 0.0
    %v6067 = vrot.slane %v6066, 4
    %v6068 = vadd.f32 %v6066, %v6067
    %v6069 = vrot.slane %v6068, 2
    %v6070 = vadd.f32 %v6068, %v6069
    %v6071 = vrot.slane %v6070, 1
    %v6072 = vadd.f32 %v6070, %v6071
    %v6073 = vsel %vm145, %v5721, 0.0
    %v6074 = vrot.slane %v6073, 4
    %v6075 = vadd.f32 %v6073, %v6074
    %v6076 = vrot.slane %v6075, 2
    %v6077 = vadd.f32 %v6075, %v6076
    %v6078 = vrot.slane %v6077, 1
    %v6079 = vadd.f32 %v6077, %v6078
    %v6080 = vsel %vm145, %v5722, 0.0
    %v6081 = vrot.slane %v6080, 4
    %v6082 = vadd.f32 %v6080, %v6081
    %v6083 = vrot.slane %v6082, 2
    %v6084 = vadd.f32 %v6082, %v6083
    %v6085 = vrot.slane %v6084, 1
    %v6086 = vadd.f32 %v6084, %v6085
    %v6087 = vsel %vm145, %v5723, 0.0
    %v6088 = vrot.slane %v6087, 4
    %v6089 = vadd.f32 %v6087, %v6088
    %v6090 = vrot.slane %v6089, 2
    %v6091 = vadd.f32 %v6089, %v6090
    %v6092 = vrot.slane %v6091, 1
    %v6093 = vadd.f32 %v6091, %v6092
    %v6094 = vsel %vm145, %v5724, 0.0
    %v6095 = vrot.slane %v6094, 4
    %v6096 = vadd.f32 %v6094, %v6095
    %v6097 = vrot.slane %v6096, 2
    %v6098 = vadd.f32 %v6096, %v6097
    %v6099 = vrot.slane %v6098, 1
    %v6100 = vadd.f32 %v6098, %v6099
    %v6101 = vsel %vm145, %v5725, 0.0
    %v6102 = vrot.slane %v6101, 4
    %v6103 = vadd.f32 %v6101, %v6102
    %v6104 = vrot.slane %v6103, 2
    %v6105 = vadd.f32 %v6103, %v6104
    %v6106 = vrot.slane %v6105, 1
    %v6107 = vadd.f32 %v6105, %v6106
    %v6108 = vsel %vm145, %v5726, 0.0
    %v6109 = vrot.slane %v6108, 4
    %v6110 = vadd.f32 %v6108, %v6109
    %v6111 = vrot.slane %v6110, 2
    %v6112 = vadd.f32 %v6110, %v6111
    %v6113 = vrot.slane %v6112, 1
    %v6114 = vadd.f32 %v6112, %v6113
    %v6115 = vsel %vm145, %v5727, 0.0
    %v6116 = vrot.slane %v6115, 4
    %v6117 = vadd.f32 %v6115, %v6116
    %v6118 = vrot.slane %v6117, 2
    %v6119 = vadd.f32 %v6117, %v6118
    %v6120 = vrot.slane %v6119, 1
    %v6121 = vadd.f32 %v6119, %v6120
    %v6122 = vsel %vm145, %v5728, 0.0
    %v6123 = vrot.slane %v6122, 4
    %v6124 = vadd.f32 %v6122, %v6123
    %v6125 = vrot.slane %v6124, 2
    %v6126 = vadd.f32 %v6124, %v6125
    %v6127 = vrot.slane %v6126, 1
    %v6128 = vadd.f32 %v6126, %v6127
    %v6129 = vsel %vm145, %v5729, 0.0
    %v6130 = vrot.slane %v6129, 4
    %v6131 = vadd.f32 %v6129, %v6130
    %v6132 = vrot.slane %v6131, 2
    %v6133 = vadd.f32 %v6131, %v6132
    %v6134 = vrot.slane %v6133, 1
    %v6135 = vadd.f32 %v6133, %v6134
    %v6136 = vsel %vm145, %v5730, 0.0
    %v6137 = vrot.slane %v6136, 4
    %v6138 = vadd.f32 %v6136, %v6137
    %v6139 = vrot.slane %v6138, 2
    %v6140 = vadd.f32 %v6138, %v6139
    %v6141 = vrot.slane %v6140, 1
    %v6142 = vadd.f32 %v6140, %v6141
    %v6143 = vsel %vm145, %v5731, 0.0
    %v6144 = vrot.slane %v6143, 4
    %v6145 = vadd.f32 %v6143, %v6144
    %v6146 = vrot.slane %v6145, 2
    %v6147 = vadd.f32 %v6145, %v6146
    %v6148 = vrot.slane %v6147, 1
    %v6149 = vadd.f32 %v6147, %v6148
    %v6150 = vsel %vm145, %v5732, 0.0
    %v6151 = vrot.slane %v6150, 4
    %v6152 = vadd.f32 %v6150, %v6151
    %v6153 = vrot.slane %v6152, 2
    %v6154 = vadd.f32 %v6152, %v6153
    %v6155 = vrot.slane %v6154, 1
    %v6156 = vadd.f32 %v6154, %v6155
    %v6157 = vsel %vm145, %v5733, 0.0
    %v6158 = vrot.slane %v6157, 4
    %v6159 = vadd.f32 %v6157, %v6158
    %v6160 = vrot.slane %v6159, 2
    %v6161 = vadd.f32 %v6159, %v6160
    %v6162 = vrot.slane %v6161, 1
    %v6163 = vadd.f32 %v6161, %v6162
    %v6164 = vsel %vm145, %v5734, 0.0
    %v6165 = vrot.slane %v6164, 4
    %v6166 = vadd.f32 %v6164, %v6165
    %v6167 = vrot.slane %v6166, 2
    %v6168 = vadd.f32 %v6166, %v6167
    %v6169 = vrot.slane %v6168, 1
    %v6170 = vadd.f32 %v6168, %v6169
    %v6171 = vsel %vm145, %v5735, 0.0
    %v6172 = vrot.slane %v6171, 4
    %v6173 = vadd.f32 %v6171, %v6172
    %v6174 = vrot.slane %v6173, 2
    %v6175 = vadd.f32 %v6173, %v6174
    %v6176 = vrot.slane %v6175, 1
    %v6177 = vadd.f32 %v6175, %v6176
    %v6178 = vsel %vm145, %v5736, 0.0
    %v6179 = vrot.slane %v6178, 4
    %v6180 = vadd.f32 %v6178, %v6179
    %v6181 = vrot.slane %v6180, 2
    %v6182 = vadd.f32 %v6180, %v6181
    %v6183 = vrot.slane %v6182, 1
    %v6184 = vadd.f32 %v6182, %v6183
    %v6249 = vsel %vm212, %v5750, %v5743
    %v6250 = vsel %vm214, %v5757, %v6249
    %v6251 = vsel %vm216, %v5764, %v6250
    %v6252 = vsel %vm218, %v5771, %v6251
    %v6253 = vsel %vm220, %v5778, %v6252
    %v6254 = vsel %vm222, %v5785, %v6253
    %v6255 = vsel %vm224, %v5792, %v6254
    %v6256 = vsel %vm212, %v5806, %v5799
    %v6257 = vsel %vm214, %v5813, %v6256
    %v6258 = vsel %vm216, %v5820, %v6257
    %v6259 = vsel %vm218, %v5827, %v6258
    %v6260 = vsel %vm220, %v5834, %v6259
    %v6261 = vsel %vm222, %v5841, %v6260
    %v6262 = vsel %vm224, %v5848, %v6261
    %v6263 = vsel %vm212, %v5862, %v5855
    %v6264 = vsel %vm214, %v5869, %v6263
    %v6265 = vsel %vm216, %v5876, %v6264
    %v6266 = vsel %vm218, %v5883, %v6265
    %v6267 = vsel %vm220, %v5890, %v6266
    %v6268 = vsel %vm222, %v5897, %v6267
    %v6269 = vsel %vm224, %v5904, %v6268
    %v6270 = vsel %vm212, %v5918, %v5911
    %v6271 = vsel %vm214, %v5925, %v6270
    %v6272 = vsel %vm216, %v5932, %v6271
    %v6273 = vsel %vm218, %v5939, %v6272
    %v6274 = vsel %vm220, %v5946, %v6273
    %v6275 = vsel %vm222, %v5953, %v6274
    %v6276 = vsel %vm224, %v5960, %v6275
    %v6277 = vsel %vm212, %v5974, %v5967
    %v6278 = vsel %vm214, %v5981, %v6277
    %v6279 = vsel %vm216, %v5988, %v6278
    %v6280 = vsel %vm218, %v5995, %v6279
    %v6281 = vsel %vm220, %v6002, %v6280
    %v6282 = vsel %vm222, %v6009, %v6281
    %v6283 = vsel %vm224, %v6016, %v6282
    %v6284 = vsel %vm212, %v6030, %v6023
    %v6285 = vsel %vm214, %v6037, %v6284
    %v6286 = vsel %vm216, %v6044, %v6285
    %v6287 = vsel %vm218, %v6051, %v6286
    %v6288 = vsel %vm220, %v6058, %v6287
    %v6289 = vsel %vm222, %v6065, %v6288
    %v6290 = vsel %vm224, %v6072, %v6289
    %v6291 = vsel %vm212, %v6086, %v6079
    %v6292 = vsel %vm214, %v6093, %v6291
    %v6293 = vsel %vm216, %v6100, %v6292
    %v6294 = vsel %vm218, %v6107, %v6293
    %v6295 = vsel %vm220, %v6114, %v6294
    %v6296 = vsel %vm222, %v6121, %v6295
    %v6297 = vsel %vm224, %v6128, %v6296
    %v6298 = vsel %vm212, %v6142, %v6135
    %v6299 = vsel %vm214, %v6149, %v6298
    %v6300 = vsel %vm216, %v6156, %v6299
    %v6301 = vsel %vm218, %v6163, %v6300
    %v6302 = vsel %vm220, %v6170, %v6301
    %v6303 = vsel %vm222, %v6177, %v6302
    %v6304 = vsel %vm224, %v6184, %v6303
    %v6313 = vsel %vm145, %v6255, -inf
    %6314 = vmax.xlane.f32.xlu0 %v6313
    %v6315 = vpop.xlane.xlu0 %6314
    %v6316 = vsel %vm145, %v6262, -inf
    %6317 = vmax.xlane.f32.xlu0 %v6316
    %v6318 = vpop.xlane.xlu0 %6317
    %v6319 = vsel %vm145, %v6269, -inf
    %6320 = vmax.xlane.f32.xlu0 %v6319
    %v6321 = vpop.xlane.xlu0 %6320
    %v6322 = vsel %vm145, %v6276, -inf
    %6323 = vmax.xlane.f32.xlu0 %v6322
    %v6324 = vpop.xlane.xlu0 %6323
    %v6325 = vsel %vm145, %v6283, -inf
    %6326 = vmax.xlane.f32.xlu0 %v6325
    %v6327 = vpop.xlane.xlu0 %6326
    %v6328 = vsel %vm145, %v6290, -inf
    %6329 = vmax.xlane.f32.xlu0 %v6328
    %v6330 = vpop.xlane.xlu0 %6329
    %v6331 = vsel %vm145, %v6297, -inf
    %6332 = vmax.xlane.f32.xlu0 %v6331
    %v6333 = vpop.xlane.xlu0 %6332
    %v6334 = vsel %vm145, %v6304, -inf
    %6335 = vmax.xlane.f32.xlu0 %v6334
    %v6336 = vpop.xlane.xlu0 %6335
    %v6345 = vrot.slane %v6315, 1
    %v6346 = vrot.slane %v6315, 2
    %v6347 = vrot.slane %v6315, 3
    %v6348 = vrot.slane %v6315, 4
    %v6349 = vrot.slane %v6315, 5
    %v6350 = vrot.slane %v6315, 6
    %v6351 = vrot.slane %v6315, 7
    %v6352 = vrot.slane %v6318, 1
    %v6353 = vrot.slane %v6318, 2
    %v6354 = vrot.slane %v6318, 3
    %v6355 = vrot.slane %v6318, 4
    %v6356 = vrot.slane %v6318, 5
    %v6357 = vrot.slane %v6318, 6
    %v6358 = vrot.slane %v6318, 7
    %v6359 = vrot.slane %v6321, 1
    %v6360 = vrot.slane %v6321, 2
    %v6361 = vrot.slane %v6321, 3
    %v6362 = vrot.slane %v6321, 4
    %v6363 = vrot.slane %v6321, 5
    %v6364 = vrot.slane %v6321, 6
    %v6365 = vrot.slane %v6321, 7
    %v6366 = vrot.slane %v6324, 1
    %v6367 = vrot.slane %v6324, 2
    %v6368 = vrot.slane %v6324, 3
    %v6369 = vrot.slane %v6324, 4
    %v6370 = vrot.slane %v6324, 5
    %v6371 = vrot.slane %v6324, 6
    %v6372 = vrot.slane %v6324, 7
    %v6373 = vrot.slane %v6327, 1
    %v6374 = vrot.slane %v6327, 2
    %v6375 = vrot.slane %v6327, 3
    %v6376 = vrot.slane %v6327, 4
    %v6377 = vrot.slane %v6327, 5
    %v6378 = vrot.slane %v6327, 6
    %v6379 = vrot.slane %v6327, 7
    %v6380 = vrot.slane %v6330, 1
    %v6381 = vrot.slane %v6330, 2
    %v6382 = vrot.slane %v6330, 3
    %v6383 = vrot.slane %v6330, 4
    %v6384 = vrot.slane %v6330, 5
    %v6385 = vrot.slane %v6330, 6
    %v6386 = vrot.slane %v6330, 7
    %v6387 = vrot.slane %v6333, 1
    %v6388 = vrot.slane %v6333, 2
    %v6389 = vrot.slane %v6333, 3
    %v6390 = vrot.slane %v6333, 4
    %v6391 = vrot.slane %v6333, 5
    %v6392 = vrot.slane %v6333, 6
    %v6393 = vrot.slane %v6333, 7
    %v6394 = vrot.slane %v6336, 1
    %v6395 = vrot.slane %v6336, 2
    %v6396 = vrot.slane %v6336, 3
    %v6397 = vrot.slane %v6336, 4
    %v6398 = vrot.slane %v6336, 5
    %v6399 = vrot.slane %v6336, 6
    %v6400 = vrot.slane %v6336, 7
    %v6465 = vsub.f32 %v5743, %v6315
    %v6466 = vsub.f32 %v5750, %v6345
    %v6467 = vsub.f32 %v5757, %v6346
    %v6468 = vsub.f32 %v5764, %v6347
    %v6469 = vsub.f32 %v5771, %v6348
    %v6470 = vsub.f32 %v5778, %v6349
    %v6471 = vsub.f32 %v5785, %v6350
    %v6472 = vsub.f32 %v5792, %v6351
    %v6473 = vsub.f32 %v5799, %v6318
    %v6474 = vsub.f32 %v5806, %v6352
    %v6475 = vsub.f32 %v5813, %v6353
    %v6476 = vsub.f32 %v5820, %v6354
    %v6477 = vsub.f32 %v5827, %v6355
    %v6478 = vsub.f32 %v5834, %v6356
    %v6479 = vsub.f32 %v5841, %v6357
    %v6480 = vsub.f32 %v5848, %v6358
    %v6481 = vsub.f32 %v5855, %v6321
    %v6482 = vsub.f32 %v5862, %v6359
    %v6483 = vsub.f32 %v5869, %v6360
    %v6484 = vsub.f32 %v5876, %v6361
    %v6485 = vsub.f32 %v5883, %v6362
    %v6486 = vsub.f32 %v5890, %v6363
    %v6487 = vsub.f32 %v5897, %v6364
    %v6488 = vsub.f32 %v5904, %v6365
    %v6489 = vsub.f32 %v5911, %v6324
    %v6490 = vsub.f32 %v5918, %v6366
    %v6491 = vsub.f32 %v5925, %v6367
    %v6492 = vsub.f32 %v5932, %v6368
    %v6493 = vsub.f32 %v5939, %v6369
    %v6494 = vsub.f32 %v5946, %v6370
    %v6495 = vsub.f32 %v5953, %v6371
    %v6496 = vsub.f32 %v5960, %v6372
    %v6497 = vsub.f32 %v5967, %v6327
    %v6498 = vsub.f32 %v5974, %v6373
    %v6499 = vsub.f32 %v5981, %v6374
    %v6500 = vsub.f32 %v5988, %v6375
    %v6501 = vsub.f32 %v5995, %v6376
    %v6502 = vsub.f32 %v6002, %v6377
    %v6503 = vsub.f32 %v6009, %v6378
    %v6504 = vsub.f32 %v6016, %v6379
    %v6505 = vsub.f32 %v6023, %v6330
    %v6506 = vsub.f32 %v6030, %v6380
    %v6507 = vsub.f32 %v6037, %v6381
    %v6508 = vsub.f32 %v6044, %v6382
    %v6509 = vsub.f32 %v6051, %v6383
    %v6510 = vsub.f32 %v6058, %v6384
    %v6511 = vsub.f32 %v6065, %v6385
    %v6512 = vsub.f32 %v6072, %v6386
    %v6513 = vsub.f32 %v6079, %v6333
    %v6514 = vsub.f32 %v6086, %v6387
    %v6515 = vsub.f32 %v6093, %v6388
    %v6516 = vsub.f32 %v6100, %v6389
    %v6517 = vsub.f32 %v6107, %v6390
    %v6518 = vsub.f32 %v6114, %v6391
    %v6519 = vsub.f32 %v6121, %v6392
    %v6520 = vsub.f32 %v6128, %v6393
    %v6521 = vsub.f32 %v6135, %v6336
    %v6522 = vsub.f32 %v6142, %v6394
    %v6523 = vsub.f32 %v6149, %v6395
    %v6524 = vsub.f32 %v6156, %v6396
    %v6525 = vsub.f32 %v6163, %v6397
    %v6526 = vsub.f32 %v6170, %v6398
    %v6527 = vsub.f32 %v6177, %v6399
    %v6528 = vsub.f32 %v6184, %v6400
    %v6529 = vmul.f32 %v6465, 1.442695
    %v6530 = vpow.pop %v6529
    %v6531 = vmul.f32 %v6466, 1.442695
    %v6532 = vpow.pop %v6531
    %v6533 = vmul.f32 %v6467, 1.442695
    %v6534 = vpow.pop %v6533
    %v6535 = vmul.f32 %v6468, 1.442695
    %v6536 = vpow.pop %v6535
    %v6537 = vmul.f32 %v6469, 1.442695
    %v6538 = vpow.pop %v6537
    %v6539 = vmul.f32 %v6470, 1.442695
    %v6540 = vpow.pop %v6539
    %v6541 = vmul.f32 %v6471, 1.442695
    %v6542 = vpow.pop %v6541
    %v6543 = vmul.f32 %v6472, 1.442695
    %v6544 = vpow.pop %v6543
    %v6545 = vmul.f32 %v6473, 1.442695
    %v6546 = vpow.pop %v6545
    %v6547 = vmul.f32 %v6474, 1.442695
    %v6548 = vpow.pop %v6547
    %v6549 = vmul.f32 %v6475, 1.442695
    %v6550 = vpow.pop %v6549
    %v6551 = vmul.f32 %v6476, 1.442695
    %v6552 = vpow.pop %v6551
    %v6553 = vmul.f32 %v6477, 1.442695
    %v6554 = vpow.pop %v6553
    %v6555 = vmul.f32 %v6478, 1.442695
    %v6556 = vpow.pop %v6555
    %v6557 = vmul.f32 %v6479, 1.442695
    %v6558 = vpow.pop %v6557
    %v6559 = vmul.f32 %v6480, 1.442695
    %v6560 = vpow.pop %v6559
    %v6561 = vmul.f32 %v6481, 1.442695
    %v6562 = vpow.pop %v6561
    %v6563 = vmul.f32 %v6482, 1.442695
    %v6564 = vpow.pop %v6563
    %v6565 = vmul.f32 %v6483, 1.442695
    %v6566 = vpow.pop %v6565
    %v6567 = vmul.f32 %v6484, 1.442695
    %v6568 = vpow.pop %v6567
    %v6569 = vmul.f32 %v6485, 1.442695
    %v6570 = vpow.pop %v6569
    %v6571 = vmul.f32 %v6486, 1.442695
    %v6572 = vpow.pop %v6571
    %v6573 = vmul.f32 %v6487, 1.442695
    %v6574 = vpow.pop %v6573
    %v6575 = vmul.f32 %v6488, 1.442695
    %v6576 = vpow.pop %v6575
    %v6577 = vmul.f32 %v6489, 1.442695
    %v6578 = vpow.pop %v6577
    %v6579 = vmul.f32 %v6490, 1.442695
    %v6580 = vpow.pop %v6579
    %v6581 = vmul.f32 %v6491, 1.442695
    %v6582 = vpow.pop %v6581
    %v6583 = vmul.f32 %v6492, 1.442695
    %v6584 = vpow.pop %v6583
    %v6585 = vmul.f32 %v6493, 1.442695
    %v6586 = vpow.pop %v6585
    %v6587 = vmul.f32 %v6494, 1.442695
    %v6588 = vpow.pop %v6587
    %v6589 = vmul.f32 %v6495, 1.442695
    %v6590 = vpow.pop %v6589
    %v6591 = vmul.f32 %v6496, 1.442695
    %v6592 = vpow.pop %v6591
    %v6593 = vmul.f32 %v6497, 1.442695
    %v6594 = vpow.pop %v6593
    %v6595 = vmul.f32 %v6498, 1.442695
    %v6596 = vpow.pop %v6595
    %v6597 = vmul.f32 %v6499, 1.442695
    %v6598 = vpow.pop %v6597
    %v6599 = vmul.f32 %v6500, 1.442695
    %v6600 = vpow.pop %v6599
    %v6601 = vmul.f32 %v6501, 1.442695
    %v6602 = vpow.pop %v6601
    %v6603 = vmul.f32 %v6502, 1.442695
    %v6604 = vpow.pop %v6603
    %v6605 = vmul.f32 %v6503, 1.442695
    %v6606 = vpow.pop %v6605
    %v6607 = vmul.f32 %v6504, 1.442695
    %v6608 = vpow.pop %v6607
    %v6609 = vmul.f32 %v6505, 1.442695
    %v6610 = vpow.pop %v6609
    %v6611 = vmul.f32 %v6506, 1.442695
    %v6612 = vpow.pop %v6611
    %v6613 = vmul.f32 %v6507, 1.442695
    %v6614 = vpow.pop %v6613
    %v6615 = vmul.f32 %v6508, 1.442695
    %v6616 = vpow.pop %v6615
    %v6617 = vmul.f32 %v6509, 1.442695
    %v6618 = vpow.pop %v6617
    %v6619 = vmul.f32 %v6510, 1.442695
    %v6620 = vpow.pop %v6619
    %v6621 = vmul.f32 %v6511, 1.442695
    %v6622 = vpow.pop %v6621
    %v6623 = vmul.f32 %v6512, 1.442695
    %v6624 = vpow.pop %v6623
    %v6625 = vmul.f32 %v6513, 1.442695
    %v6626 = vpow.pop %v6625
    %v6627 = vmul.f32 %v6514, 1.442695
    %v6628 = vpow.pop %v6627
    %v6629 = vmul.f32 %v6515, 1.442695
    %v6630 = vpow.pop %v6629
    %v6631 = vmul.f32 %v6516, 1.442695
    %v6632 = vpow.pop %v6631
    %v6633 = vmul.f32 %v6517, 1.442695
    %v6634 = vpow.pop %v6633
    %v6635 = vmul.f32 %v6518, 1.442695
    %v6636 = vpow.pop %v6635
    %v6637 = vmul.f32 %v6519, 1.442695
    %v6638 = vpow.pop %v6637
    %v6639 = vmul.f32 %v6520, 1.442695
    %v6640 = vpow.pop %v6639
    %v6641 = vmul.f32 %v6521, 1.442695
    %v6642 = vpow.pop %v6641
    %v6643 = vmul.f32 %v6522, 1.442695
    %v6644 = vpow.pop %v6643
    %v6645 = vmul.f32 %v6523, 1.442695
    %v6646 = vpow.pop %v6645
    %v6647 = vmul.f32 %v6524, 1.442695
    %v6648 = vpow.pop %v6647
    %v6649 = vmul.f32 %v6525, 1.442695
    %v6650 = vpow.pop %v6649
    %v6651 = vmul.f32 %v6526, 1.442695
    %v6652 = vpow.pop %v6651
    %v6653 = vmul.f32 %v6527, 1.442695
    %v6654 = vpow.pop %v6653
    %v6655 = vmul.f32 %v6528, 1.442695
    %v6656 = vpow.pop %v6655
    %v6721 = vrot.slane %v6532, 7
    %v6722 = vsel %vm212, %v6721, %v6530
    %v6723 = vrot.slane %v6534, 6
    %v6724 = vsel %vm214, %v6723, %v6722
    %v6725 = vrot.slane %v6536, 5
    %v6726 = vsel %vm216, %v6725, %v6724
    %v6727 = vrot.slane %v6538, 4
    %v6728 = vsel %vm218, %v6727, %v6726
    %v6729 = vrot.slane %v6540, 3
    %v6730 = vsel %vm220, %v6729, %v6728
    %v6731 = vrot.slane %v6542, 2
    %v6732 = vsel %vm222, %v6731, %v6730
    %v6733 = vrot.slane %v6544, 1
    %v6734 = vsel %vm224, %v6733, %v6732
    %v6735 = vrot.slane %v6548, 7
    %v6736 = vsel %vm212, %v6735, %v6546
    %v6737 = vrot.slane %v6550, 6
    %v6738 = vsel %vm214, %v6737, %v6736
    %v6739 = vrot.slane %v6552, 5
    %v6740 = vsel %vm216, %v6739, %v6738
    %v6741 = vrot.slane %v6554, 4
    %v6742 = vsel %vm218, %v6741, %v6740
    %v6743 = vrot.slane %v6556, 3
    %v6744 = vsel %vm220, %v6743, %v6742
    %v6745 = vrot.slane %v6558, 2
    %v6746 = vsel %vm222, %v6745, %v6744
    %v6747 = vrot.slane %v6560, 1
    %v6748 = vsel %vm224, %v6747, %v6746
    %v6749 = vrot.slane %v6564, 7
    %v6750 = vsel %vm212, %v6749, %v6562
    %v6751 = vrot.slane %v6566, 6
    %v6752 = vsel %vm214, %v6751, %v6750
    %v6753 = vrot.slane %v6568, 5
    %v6754 = vsel %vm216, %v6753, %v6752
    %v6755 = vrot.slane %v6570, 4
    %v6756 = vsel %vm218, %v6755, %v6754
    %v6757 = vrot.slane %v6572, 3
    %v6758 = vsel %vm220, %v6757, %v6756
    %v6759 = vrot.slane %v6574, 2
    %v6760 = vsel %vm222, %v6759, %v6758
    %v6761 = vrot.slane %v6576, 1
    %v6762 = vsel %vm224, %v6761, %v6760
    %v6763 = vrot.slane %v6580, 7
    %v6764 = vsel %vm212, %v6763, %v6578
    %v6765 = vrot.slane %v6582, 6
    %v6766 = vsel %vm214, %v6765, %v6764
    %v6767 = vrot.slane %v6584, 5
    %v6768 = vsel %vm216, %v6767, %v6766
    %v6769 = vrot.slane %v6586, 4
    %v6770 = vsel %vm218, %v6769, %v6768
    %v6771 = vrot.slane %v6588, 3
    %v6772 = vsel %vm220, %v6771, %v6770
    %v6773 = vrot.slane %v6590, 2
    %v6774 = vsel %vm222, %v6773, %v6772
    %v6775 = vrot.slane %v6592, 1
    %v6776 = vsel %vm224, %v6775, %v6774
    %v6777 = vrot.slane %v6596, 7
    %v6778 = vsel %vm212, %v6777, %v6594
    %v6779 = vrot.slane %v6598, 6
    %v6780 = vsel %vm214, %v6779, %v6778
    %v6781 = vrot.slane %v6600, 5
    %v6782 = vsel %vm216, %v6781, %v6780
    %v6783 = vrot.slane %v6602, 4
    %v6784 = vsel %vm218, %v6783, %v6782
    %v6785 = vrot.slane %v6604, 3
    %v6786 = vsel %vm220, %v6785, %v6784
    %v6787 = vrot.slane %v6606, 2
    %v6788 = vsel %vm222, %v6787, %v6786
    %v6789 = vrot.slane %v6608, 1
    %v6790 = vsel %vm224, %v6789, %v6788
    %v6791 = vrot.slane %v6612, 7
    %v6792 = vsel %vm212, %v6791, %v6610
    %v6793 = vrot.slane %v6614, 6
    %v6794 = vsel %vm214, %v6793, %v6792
    %v6795 = vrot.slane %v6616, 5
    %v6796 = vsel %vm216, %v6795, %v6794
    %v6797 = vrot.slane %v6618, 4
    %v6798 = vsel %vm218, %v6797, %v6796
    %v6799 = vrot.slane %v6620, 3
    %v6800 = vsel %vm220, %v6799, %v6798
    %v6801 = vrot.slane %v6622, 2
    %v6802 = vsel %vm222, %v6801, %v6800
    %v6803 = vrot.slane %v6624, 1
    %v6804 = vsel %vm224, %v6803, %v6802
    %v6805 = vrot.slane %v6628, 7
    %v6806 = vsel %vm212, %v6805, %v6626
    %v6807 = vrot.slane %v6630, 6
    %v6808 = vsel %vm214, %v6807, %v6806
    %v6809 = vrot.slane %v6632, 5
    %v6810 = vsel %vm216, %v6809, %v6808
    %v6811 = vrot.slane %v6634, 4
    %v6812 = vsel %vm218, %v6811, %v6810
    %v6813 = vrot.slane %v6636, 3
    %v6814 = vsel %vm220, %v6813, %v6812
    %v6815 = vrot.slane %v6638, 2
    %v6816 = vsel %vm222, %v6815, %v6814
    %v6817 = vrot.slane %v6640, 1
    %v6818 = vsel %vm224, %v6817, %v6816
    %v6819 = vrot.slane %v6644, 7
    %v6820 = vsel %vm212, %v6819, %v6642
    %v6821 = vrot.slane %v6646, 6
    %v6822 = vsel %vm214, %v6821, %v6820
    %v6823 = vrot.slane %v6648, 5
    %v6824 = vsel %vm216, %v6823, %v6822
    %v6825 = vrot.slane %v6650, 4
    %v6826 = vsel %vm218, %v6825, %v6824
    %v6827 = vrot.slane %v6652, 3
    %v6828 = vsel %vm220, %v6827, %v6826
    %v6829 = vrot.slane %v6654, 2
    %v6830 = vsel %vm222, %v6829, %v6828
    %v6831 = vrot.slane %v6656, 1
    %v6832 = vsel %vm224, %v6831, %v6830
    %v6841 = vsel %vm145, %v6734, 0.0
    %6842 = vadd.xlane.f32.xlu0 %v6841
    %v6843 = vpop.xlane.xlu0 %6842
    %v6844 = vsel %vm145, %v6748, 0.0
    %6845 = vadd.xlane.f32.xlu0 %v6844
    %v6846 = vpop.xlane.xlu0 %6845
    %v6847 = vsel %vm145, %v6762, 0.0
    %6848 = vadd.xlane.f32.xlu0 %v6847
    %v6849 = vpop.xlane.xlu0 %6848
    %v6850 = vsel %vm145, %v6776, 0.0
    %6851 = vadd.xlane.f32.xlu0 %v6850
    %v6852 = vpop.xlane.xlu0 %6851
    %v6853 = vsel %vm145, %v6790, 0.0
    %6854 = vadd.xlane.f32.xlu0 %v6853
    %v6855 = vpop.xlane.xlu0 %6854
    %v6856 = vsel %vm145, %v6804, 0.0
    %6857 = vadd.xlane.f32.xlu0 %v6856
    %v6858 = vpop.xlane.xlu0 %6857
    %v6859 = vsel %vm145, %v6818, 0.0
    %6860 = vadd.xlane.f32.xlu0 %v6859
    %v6861 = vpop.xlane.xlu0 %6860
    %v6862 = vsel %vm145, %v6832, 0.0
    %6863 = vadd.xlane.f32.xlu0 %v6862
    %v6864 = vpop.xlane.xlu0 %6863
    %v6873 = vrot.slane %v6843, 1
    %v6874 = vrot.slane %v6843, 2
    %v6875 = vrot.slane %v6843, 3
    %v6876 = vrot.slane %v6843, 4
    %v6877 = vrot.slane %v6843, 5
    %v6878 = vrot.slane %v6843, 6
    %v6879 = vrot.slane %v6843, 7
    %v6880 = vrot.slane %v6846, 1
    %v6881 = vrot.slane %v6846, 2
    %v6882 = vrot.slane %v6846, 3
    %v6883 = vrot.slane %v6846, 4
    %v6884 = vrot.slane %v6846, 5
    %v6885 = vrot.slane %v6846, 6
    %v6886 = vrot.slane %v6846, 7
    %v6887 = vrot.slane %v6849, 1
    %v6888 = vrot.slane %v6849, 2
    %v6889 = vrot.slane %v6849, 3
    %v6890 = vrot.slane %v6849, 4
    %v6891 = vrot.slane %v6849, 5
    %v6892 = vrot.slane %v6849, 6
    %v6893 = vrot.slane %v6849, 7
    %v6894 = vrot.slane %v6852, 1
    %v6895 = vrot.slane %v6852, 2
    %v6896 = vrot.slane %v6852, 3
    %v6897 = vrot.slane %v6852, 4
    %v6898 = vrot.slane %v6852, 5
    %v6899 = vrot.slane %v6852, 6
    %v6900 = vrot.slane %v6852, 7
    %v6901 = vrot.slane %v6855, 1
    %v6902 = vrot.slane %v6855, 2
    %v6903 = vrot.slane %v6855, 3
    %v6904 = vrot.slane %v6855, 4
    %v6905 = vrot.slane %v6855, 5
    %v6906 = vrot.slane %v6855, 6
    %v6907 = vrot.slane %v6855, 7
    %v6908 = vrot.slane %v6858, 1
    %v6909 = vrot.slane %v6858, 2
    %v6910 = vrot.slane %v6858, 3
    %v6911 = vrot.slane %v6858, 4
    %v6912 = vrot.slane %v6858, 5
    %v6913 = vrot.slane %v6858, 6
    %v6914 = vrot.slane %v6858, 7
    %v6915 = vrot.slane %v6861, 1
    %v6916 = vrot.slane %v6861, 2
    %v6917 = vrot.slane %v6861, 3
    %v6918 = vrot.slane %v6861, 4
    %v6919 = vrot.slane %v6861, 5
    %v6920 = vrot.slane %v6861, 6
    %v6921 = vrot.slane %v6861, 7
    %v6922 = vrot.slane %v6864, 1
    %v6923 = vrot.slane %v6864, 2
    %v6924 = vrot.slane %v6864, 3
    %v6925 = vrot.slane %v6864, 4
    %v6926 = vrot.slane %v6864, 5
    %v6927 = vrot.slane %v6864, 6
    %v6928 = vrot.slane %v6864, 7
    %v6993 = vrcp.pop %v6843
    %v6994 = vmul.f32 %v6843, %v6993
    %v6995 = vsub.f32 1.0, %v6994
    %v6996 = vmul.f32 %v6993, %v6995
    %v6997 = vadd.f32 %v6993, %v6996
    %vm6998 = vweird.f32 %v6843
    %vm6999 = vweird.f32 %v6993
    %vm7000 = vmor %vm6998, %vm6999
    %v7001 = vsel %vm7000, %v6993, %v6997
    %v7002 = vand.u32 2147483647, %v6843
    %vm7003 = vcmp.eq.f32.partialorder %v7002, 8.507059e+37
    %v7004 = vand.u32 %v6843, 2147483648
    %v7005 = vor.u32 1.1754944e-38, %v7004
    %v7006 = vsel %vm7003, %v7005, %v7001
    %v7007 = vmul.f32 %v6530, %v7006
    %v7008 = vrcp.pop %v6873
    %v7009 = vmul.f32 %v6873, %v7008
    %v7010 = vsub.f32 1.0, %v7009
    %v7011 = vmul.f32 %v7008, %v7010
    %v7012 = vadd.f32 %v7008, %v7011
    %vm7013 = vweird.f32 %v6873
    %vm7014 = vweird.f32 %v7008
    %vm7015 = vmor %vm7013, %vm7014
    %v7016 = vsel %vm7015, %v7008, %v7012
    %v7017 = vand.u32 2147483647, %v6873
    %vm7018 = vcmp.eq.f32.partialorder %v7017, 8.507059e+37
    %v7019 = vand.u32 %v6873, 2147483648
    %v7020 = vor.u32 1.1754944e-38, %v7019
    %v7021 = vsel %vm7018, %v7020, %v7016
    %v7022 = vmul.f32 %v6532, %v7021
    %v7023 = vrcp.pop %v6874
    %v7024 = vmul.f32 %v6874, %v7023
    %v7025 = vsub.f32 1.0, %v7024
    %v7026 = vmul.f32 %v7023, %v7025
    %v7027 = vadd.f32 %v7023, %v7026
    %vm7028 = vweird.f32 %v6874
    %vm7029 = vweird.f32 %v7023
    %vm7030 = vmor %vm7028, %vm7029
    %v7031 = vsel %vm7030, %v7023, %v7027
    %v7032 = vand.u32 2147483647, %v6874
    %vm7033 = vcmp.eq.f32.partialorder %v7032, 8.507059e+37
    %v7034 = vand.u32 %v6874, 2147483648
    %v7035 = vor.u32 1.1754944e-38, %v7034
    %v7036 = vsel %vm7033, %v7035, %v7031
    %v7037 = vmul.f32 %v6534, %v7036
    %v7038 = vrcp.pop %v6875
    %v7039 = vmul.f32 %v6875, %v7038
    %v7040 = vsub.f32 1.0, %v7039
    %v7041 = vmul.f32 %v7038, %v7040
    %v7042 = vadd.f32 %v7038, %v7041
    %vm7043 = vweird.f32 %v6875
    %vm7044 = vweird.f32 %v7038
    %vm7045 = vmor %vm7043, %vm7044
    %v7046 = vsel %vm7045, %v7038, %v7042
    %v7047 = vand.u32 2147483647, %v6875
    %vm7048 = vcmp.eq.f32.partialorder %v7047, 8.507059e+37
    %v7049 = vand.u32 %v6875, 2147483648
    %v7050 = vor.u32 1.1754944e-38, %v7049
    %v7051 = vsel %vm7048, %v7050, %v7046
    %v7052 = vmul.f32 %v6536, %v7051
    %v7053 = vrcp.pop %v6876
    %v7054 = vmul.f32 %v6876, %v7053
    %v7055 = vsub.f32 1.0, %v7054
    %v7056 = vmul.f32 %v7053, %v7055
    %v7057 = vadd.f32 %v7053, %v7056
    %vm7058 = vweird.f32 %v6876
    %vm7059 = vweird.f32 %v7053
    %vm7060 = vmor %vm7058, %vm7059
    %v7061 = vsel %vm7060, %v7053, %v7057
    %v7062 = vand.u32 2147483647, %v6876
    %vm7063 = vcmp.eq.f32.partialorder %v7062, 8.507059e+37
    %v7064 = vand.u32 %v6876, 2147483648
    %v7065 = vor.u32 1.1754944e-38, %v7064
    %v7066 = vsel %vm7063, %v7065, %v7061
    %v7067 = vmul.f32 %v6538, %v7066
    %v7068 = vrcp.pop %v6877
    %v7069 = vmul.f32 %v6877, %v7068
    %v7070 = vsub.f32 1.0, %v7069
    %v7071 = vmul.f32 %v7068, %v7070
    %v7072 = vadd.f32 %v7068, %v7071
    %vm7073 = vweird.f32 %v6877
    %vm7074 = vweird.f32 %v7068
    %vm7075 = vmor %vm7073, %vm7074
    %v7076 = vsel %vm7075, %v7068, %v7072
    %v7077 = vand.u32 2147483647, %v6877
    %vm7078 = vcmp.eq.f32.partialorder %v7077, 8.507059e+37
    %v7079 = vand.u32 %v6877, 2147483648
    %v7080 = vor.u32 1.1754944e-38, %v7079
    %v7081 = vsel %vm7078, %v7080, %v7076
    %v7082 = vmul.f32 %v6540, %v7081
    %v7083 = vrcp.pop %v6878
    %v7084 = vmul.f32 %v6878, %v7083
    %v7085 = vsub.f32 1.0, %v7084
    %v7086 = vmul.f32 %v7083, %v7085
    %v7087 = vadd.f32 %v7083, %v7086
    %vm7088 = vweird.f32 %v6878
    %vm7089 = vweird.f32 %v7083
    %vm7090 = vmor %vm7088, %vm7089
    %v7091 = vsel %vm7090, %v7083, %v7087
    %v7092 = vand.u32 2147483647, %v6878
    %vm7093 = vcmp.eq.f32.partialorder %v7092, 8.507059e+37
    %v7094 = vand.u32 %v6878, 2147483648
    %v7095 = vor.u32 1.1754944e-38, %v7094
    %v7096 = vsel %vm7093, %v7095, %v7091
    %v7097 = vmul.f32 %v6542, %v7096
    %v7098 = vrcp.pop %v6879
    %v7099 = vmul.f32 %v6879, %v7098
    %v7100 = vsub.f32 1.0, %v7099
    %v7101 = vmul.f32 %v7098, %v7100
    %v7102 = vadd.f32 %v7098, %v7101
    %vm7103 = vweird.f32 %v6879
    %vm7104 = vweird.f32 %v7098
    %vm7105 = vmor %vm7103, %vm7104
    %v7106 = vsel %vm7105, %v7098, %v7102
    %v7107 = vand.u32 2147483647, %v6879
    %vm7108 = vcmp.eq.f32.partialorder %v7107, 8.507059e+37
    %v7109 = vand.u32 %v6879, 2147483648
    %v7110 = vor.u32 1.1754944e-38, %v7109
    %v7111 = vsel %vm7108, %v7110, %v7106
    %v7112 = vmul.f32 %v6544, %v7111
    %v7113 = vrcp.pop %v6846
    %v7114 = vmul.f32 %v6846, %v7113
    %v7115 = vsub.f32 1.0, %v7114
    %v7116 = vmul.f32 %v7113, %v7115
    %v7117 = vadd.f32 %v7113, %v7116
    %vm7118 = vweird.f32 %v6846
    %vm7119 = vweird.f32 %v7113
    %vm7120 = vmor %vm7118, %vm7119
    %v7121 = vsel %vm7120, %v7113, %v7117
    %v7122 = vand.u32 2147483647, %v6846
    %vm7123 = vcmp.eq.f32.partialorder %v7122, 8.507059e+37
    %v7124 = vand.u32 %v6846, 2147483648
    %v7125 = vor.u32 1.1754944e-38, %v7124
    %v7126 = vsel %vm7123, %v7125, %v7121
    %v7127 = vmul.f32 %v6546, %v7126
    %v7128 = vrcp.pop %v6880
    %v7129 = vmul.f32 %v6880, %v7128
    %v7130 = vsub.f32 1.0, %v7129
    %v7131 = vmul.f32 %v7128, %v7130
    %v7132 = vadd.f32 %v7128, %v7131
    %vm7133 = vweird.f32 %v6880
    %vm7134 = vweird.f32 %v7128
    %vm7135 = vmor %vm7133, %vm7134
    %v7136 = vsel %vm7135, %v7128, %v7132
    %v7137 = vand.u32 2147483647, %v6880
    %vm7138 = vcmp.eq.f32.partialorder %v7137, 8.507059e+37
    %v7139 = vand.u32 %v6880, 2147483648
    %v7140 = vor.u32 1.1754944e-38, %v7139
    %v7141 = vsel %vm7138, %v7140, %v7136
    %v7142 = vmul.f32 %v6548, %v7141
    %v7143 = vrcp.pop %v6881
    %v7144 = vmul.f32 %v6881, %v7143
    %v7145 = vsub.f32 1.0, %v7144
    %v7146 = vmul.f32 %v7143, %v7145
    %v7147 = vadd.f32 %v7143, %v7146
    %vm7148 = vweird.f32 %v6881
    %vm7149 = vweird.f32 %v7143
    %vm7150 = vmor %vm7148, %vm7149
    %v7151 = vsel %vm7150, %v7143, %v7147
    %v7152 = vand.u32 2147483647, %v6881
    %vm7153 = vcmp.eq.f32.partialorder %v7152, 8.507059e+37
    %v7154 = vand.u32 %v6881, 2147483648
    %v7155 = vor.u32 1.1754944e-38, %v7154
    %v7156 = vsel %vm7153, %v7155, %v7151
    %v7157 = vmul.f32 %v6550, %v7156
    %v7158 = vrcp.pop %v6882
    %v7159 = vmul.f32 %v6882, %v7158
    %v7160 = vsub.f32 1.0, %v7159
    %v7161 = vmul.f32 %v7158, %v7160
    %v7162 = vadd.f32 %v7158, %v7161
    %vm7163 = vweird.f32 %v6882
    %vm7164 = vweird.f32 %v7158
    %vm7165 = vmor %vm7163, %vm7164
    %v7166 = vsel %vm7165, %v7158, %v7162
    %v7167 = vand.u32 2147483647, %v6882
    %vm7168 = vcmp.eq.f32.partialorder %v7167, 8.507059e+37
    %v7169 = vand.u32 %v6882, 2147483648
    %v7170 = vor.u32 1.1754944e-38, %v7169
    %v7171 = vsel %vm7168, %v7170, %v7166
    %v7172 = vmul.f32 %v6552, %v7171
    %v7173 = vrcp.pop %v6883
    %v7174 = vmul.f32 %v6883, %v7173
    %v7175 = vsub.f32 1.0, %v7174
    %v7176 = vmul.f32 %v7173, %v7175
    %v7177 = vadd.f32 %v7173, %v7176
    %vm7178 = vweird.f32 %v6883
    %vm7179 = vweird.f32 %v7173
    %vm7180 = vmor %vm7178, %vm7179
    %v7181 = vsel %vm7180, %v7173, %v7177
    %v7182 = vand.u32 2147483647, %v6883
    %vm7183 = vcmp.eq.f32.partialorder %v7182, 8.507059e+37
    %v7184 = vand.u32 %v6883, 2147483648
    %v7185 = vor.u32 1.1754944e-38, %v7184
    %v7186 = vsel %vm7183, %v7185, %v7181
    %v7187 = vmul.f32 %v6554, %v7186
    %v7188 = vrcp.pop %v6884
    %v7189 = vmul.f32 %v6884, %v7188
    %v7190 = vsub.f32 1.0, %v7189
    %v7191 = vmul.f32 %v7188, %v7190
    %v7192 = vadd.f32 %v7188, %v7191
    %vm7193 = vweird.f32 %v6884
    %vm7194 = vweird.f32 %v7188
    %vm7195 = vmor %vm7193, %vm7194
    %v7196 = vsel %vm7195, %v7188, %v7192
    %v7197 = vand.u32 2147483647, %v6884
    %vm7198 = vcmp.eq.f32.partialorder %v7197, 8.507059e+37
    %v7199 = vand.u32 %v6884, 2147483648
    %v7200 = vor.u32 1.1754944e-38, %v7199
    %v7201 = vsel %vm7198, %v7200, %v7196
    %v7202 = vmul.f32 %v6556, %v7201
    %v7203 = vrcp.pop %v6885
    %v7204 = vmul.f32 %v6885, %v7203
    %v7205 = vsub.f32 1.0, %v7204
    %v7206 = vmul.f32 %v7203, %v7205
    %v7207 = vadd.f32 %v7203, %v7206
    %vm7208 = vweird.f32 %v6885
    %vm7209 = vweird.f32 %v7203
    %vm7210 = vmor %vm7208, %vm7209
    %v7211 = vsel %vm7210, %v7203, %v7207
    %v7212 = vand.u32 2147483647, %v6885
    %vm7213 = vcmp.eq.f32.partialorder %v7212, 8.507059e+37
    %v7214 = vand.u32 %v6885, 2147483648
    %v7215 = vor.u32 1.1754944e-38, %v7214
    %v7216 = vsel %vm7213, %v7215, %v7211
    %v7217 = vmul.f32 %v6558, %v7216
    %v7218 = vrcp.pop %v6886
    %v7219 = vmul.f32 %v6886, %v7218
    %v7220 = vsub.f32 1.0, %v7219
    %v7221 = vmul.f32 %v7218, %v7220
    %v7222 = vadd.f32 %v7218, %v7221
    %vm7223 = vweird.f32 %v6886
    %vm7224 = vweird.f32 %v7218
    %vm7225 = vmor %vm7223, %vm7224
    %v7226 = vsel %vm7225, %v7218, %v7222
    %v7227 = vand.u32 2147483647, %v6886
    %vm7228 = vcmp.eq.f32.partialorder %v7227, 8.507059e+37
    %v7229 = vand.u32 %v6886, 2147483648
    %v7230 = vor.u32 1.1754944e-38, %v7229
    %v7231 = vsel %vm7228, %v7230, %v7226
    %v7232 = vmul.f32 %v6560, %v7231
    %v7233 = vrcp.pop %v6849
    %v7234 = vmul.f32 %v6849, %v7233
    %v7235 = vsub.f32 1.0, %v7234
    %v7236 = vmul.f32 %v7233, %v7235
    %v7237 = vadd.f32 %v7233, %v7236
    %vm7238 = vweird.f32 %v6849
    %vm7239 = vweird.f32 %v7233
    %vm7240 = vmor %vm7238, %vm7239
    %v7241 = vsel %vm7240, %v7233, %v7237
    %v7242 = vand.u32 2147483647, %v6849
    %vm7243 = vcmp.eq.f32.partialorder %v7242, 8.507059e+37
    %v7244 = vand.u32 %v6849, 2147483648
    %v7245 = vor.u32 1.1754944e-38, %v7244
    %v7246 = vsel %vm7243, %v7245, %v7241
    %v7247 = vmul.f32 %v6562, %v7246
    %v7248 = vrcp.pop %v6887
    %v7249 = vmul.f32 %v6887, %v7248
    %v7250 = vsub.f32 1.0, %v7249
    %v7251 = vmul.f32 %v7248, %v7250
    %v7252 = vadd.f32 %v7248, %v7251
    %vm7253 = vweird.f32 %v6887
    %vm7254 = vweird.f32 %v7248
    %vm7255 = vmor %vm7253, %vm7254
    %v7256 = vsel %vm7255, %v7248, %v7252
    %v7257 = vand.u32 2147483647, %v6887
    %vm7258 = vcmp.eq.f32.partialorder %v7257, 8.507059e+37
    %v7259 = vand.u32 %v6887, 2147483648
    %v7260 = vor.u32 1.1754944e-38, %v7259
    %v7261 = vsel %vm7258, %v7260, %v7256
    %v7262 = vmul.f32 %v6564, %v7261
    %v7263 = vrcp.pop %v6888
    %v7264 = vmul.f32 %v6888, %v7263
    %v7265 = vsub.f32 1.0, %v7264
    %v7266 = vmul.f32 %v7263, %v7265
    %v7267 = vadd.f32 %v7263, %v7266
    %vm7268 = vweird.f32 %v6888
    %vm7269 = vweird.f32 %v7263
    %vm7270 = vmor %vm7268, %vm7269
    %v7271 = vsel %vm7270, %v7263, %v7267
    %v7272 = vand.u32 2147483647, %v6888
    %vm7273 = vcmp.eq.f32.partialorder %v7272, 8.507059e+37
    %v7274 = vand.u32 %v6888, 2147483648
    %v7275 = vor.u32 1.1754944e-38, %v7274
    %v7276 = vsel %vm7273, %v7275, %v7271
    %v7277 = vmul.f32 %v6566, %v7276
    %v7278 = vrcp.pop %v6889
    %v7279 = vmul.f32 %v6889, %v7278
    %v7280 = vsub.f32 1.0, %v7279
    %v7281 = vmul.f32 %v7278, %v7280
    %v7282 = vadd.f32 %v7278, %v7281
    %vm7283 = vweird.f32 %v6889
    %vm7284 = vweird.f32 %v7278
    %vm7285 = vmor %vm7283, %vm7284
    %v7286 = vsel %vm7285, %v7278, %v7282
    %v7287 = vand.u32 2147483647, %v6889
    %vm7288 = vcmp.eq.f32.partialorder %v7287, 8.507059e+37
    %v7289 = vand.u32 %v6889, 2147483648
    %v7290 = vor.u32 1.1754944e-38, %v7289
    %v7291 = vsel %vm7288, %v7290, %v7286
    %v7292 = vmul.f32 %v6568, %v7291
    %v7293 = vrcp.pop %v6890
    %v7294 = vmul.f32 %v6890, %v7293
    %v7295 = vsub.f32 1.0, %v7294
    %v7296 = vmul.f32 %v7293, %v7295
    %v7297 = vadd.f32 %v7293, %v7296
    %vm7298 = vweird.f32 %v6890
    %vm7299 = vweird.f32 %v7293
    %vm7300 = vmor %vm7298, %vm7299
    %v7301 = vsel %vm7300, %v7293, %v7297
    %v7302 = vand.u32 2147483647, %v6890
    %vm7303 = vcmp.eq.f32.partialorder %v7302, 8.507059e+37
    %v7304 = vand.u32 %v6890, 2147483648
    %v7305 = vor.u32 1.1754944e-38, %v7304
    %v7306 = vsel %vm7303, %v7305, %v7301
    %v7307 = vmul.f32 %v6570, %v7306
    %v7308 = vrcp.pop %v6891
    %v7309 = vmul.f32 %v6891, %v7308
    %v7310 = vsub.f32 1.0, %v7309
    %v7311 = vmul.f32 %v7308, %v7310
    %v7312 = vadd.f32 %v7308, %v7311
    %vm7313 = vweird.f32 %v6891
    %vm7314 = vweird.f32 %v7308
    %vm7315 = vmor %vm7313, %vm7314
    %v7316 = vsel %vm7315, %v7308, %v7312
    %v7317 = vand.u32 2147483647, %v6891
    %vm7318 = vcmp.eq.f32.partialorder %v7317, 8.507059e+37
    %v7319 = vand.u32 %v6891, 2147483648
    %v7320 = vor.u32 1.1754944e-38, %v7319
    %v7321 = vsel %vm7318, %v7320, %v7316
    %v7322 = vmul.f32 %v6572, %v7321
    %v7323 = vrcp.pop %v6892
    %v7324 = vmul.f32 %v6892, %v7323
    %v7325 = vsub.f32 1.0, %v7324
    %v7326 = vmul.f32 %v7323, %v7325
    %v7327 = vadd.f32 %v7323, %v7326
    %vm7328 = vweird.f32 %v6892
    %vm7329 = vweird.f32 %v7323
    %vm7330 = vmor %vm7328, %vm7329
    %v7331 = vsel %vm7330, %v7323, %v7327
    %v7332 = vand.u32 2147483647, %v6892
    %vm7333 = vcmp.eq.f32.partialorder %v7332, 8.507059e+37
    %v7334 = vand.u32 %v6892, 2147483648
    %v7335 = vor.u32 1.1754944e-38, %v7334
    %v7336 = vsel %vm7333, %v7335, %v7331
    %v7337 = vmul.f32 %v6574, %v7336
    %v7338 = vrcp.pop %v6893
    %v7339 = vmul.f32 %v6893, %v7338
    %v7340 = vsub.f32 1.0, %v7339
    %v7341 = vmul.f32 %v7338, %v7340
    %v7342 = vadd.f32 %v7338, %v7341
    %vm7343 = vweird.f32 %v6893
    %vm7344 = vweird.f32 %v7338
    %vm7345 = vmor %vm7343, %vm7344
    %v7346 = vsel %vm7345, %v7338, %v7342
    %v7347 = vand.u32 2147483647, %v6893
    %vm7348 = vcmp.eq.f32.partialorder %v7347, 8.507059e+37
    %v7349 = vand.u32 %v6893, 2147483648
    %v7350 = vor.u32 1.1754944e-38, %v7349
    %v7351 = vsel %vm7348, %v7350, %v7346
    %v7352 = vmul.f32 %v6576, %v7351
    %v7353 = vrcp.pop %v6852
    %v7354 = vmul.f32 %v6852, %v7353
    %v7355 = vsub.f32 1.0, %v7354
    %v7356 = vmul.f32 %v7353, %v7355
    %v7357 = vadd.f32 %v7353, %v7356
    %vm7358 = vweird.f32 %v6852
    %vm7359 = vweird.f32 %v7353
    %vm7360 = vmor %vm7358, %vm7359
    %v7361 = vsel %vm7360, %v7353, %v7357
    %v7362 = vand.u32 2147483647, %v6852
    %vm7363 = vcmp.eq.f32.partialorder %v7362, 8.507059e+37
    %v7364 = vand.u32 %v6852, 2147483648
    %v7365 = vor.u32 1.1754944e-38, %v7364
    %v7366 = vsel %vm7363, %v7365, %v7361
    %v7367 = vmul.f32 %v6578, %v7366
    %v7368 = vrcp.pop %v6894
    %v7369 = vmul.f32 %v6894, %v7368
    %v7370 = vsub.f32 1.0, %v7369
    %v7371 = vmul.f32 %v7368, %v7370
    %v7372 = vadd.f32 %v7368, %v7371
    %vm7373 = vweird.f32 %v6894
    %vm7374 = vweird.f32 %v7368
    %vm7375 = vmor %vm7373, %vm7374
    %v7376 = vsel %vm7375, %v7368, %v7372
    %v7377 = vand.u32 2147483647, %v6894
    %vm7378 = vcmp.eq.f32.partialorder %v7377, 8.507059e+37
    %v7379 = vand.u32 %v6894, 2147483648
    %v7380 = vor.u32 1.1754944e-38, %v7379
    %v7381 = vsel %vm7378, %v7380, %v7376
    %v7382 = vmul.f32 %v6580, %v7381
    %v7383 = vrcp.pop %v6895
    %v7384 = vmul.f32 %v6895, %v7383
    %v7385 = vsub.f32 1.0, %v7384
    %v7386 = vmul.f32 %v7383, %v7385
    %v7387 = vadd.f32 %v7383, %v7386
    %vm7388 = vweird.f32 %v6895
    %vm7389 = vweird.f32 %v7383
    %vm7390 = vmor %vm7388, %vm7389
    %v7391 = vsel %vm7390, %v7383, %v7387
    %v7392 = vand.u32 2147483647, %v6895
    %vm7393 = vcmp.eq.f32.partialorder %v7392, 8.507059e+37
    %v7394 = vand.u32 %v6895, 2147483648
    %v7395 = vor.u32 1.1754944e-38, %v7394
    %v7396 = vsel %vm7393, %v7395, %v7391
    %v7397 = vmul.f32 %v6582, %v7396
    %v7398 = vrcp.pop %v6896
    %v7399 = vmul.f32 %v6896, %v7398
    %v7400 = vsub.f32 1.0, %v7399
    %v7401 = vmul.f32 %v7398, %v7400
    %v7402 = vadd.f32 %v7398, %v7401
    %vm7403 = vweird.f32 %v6896
    %vm7404 = vweird.f32 %v7398
    %vm7405 = vmor %vm7403, %vm7404
    %v7406 = vsel %vm7405, %v7398, %v7402
    %v7407 = vand.u32 2147483647, %v6896
    %vm7408 = vcmp.eq.f32.partialorder %v7407, 8.507059e+37
    %v7409 = vand.u32 %v6896, 2147483648
    %v7410 = vor.u32 1.1754944e-38, %v7409
    %v7411 = vsel %vm7408, %v7410, %v7406
    %v7412 = vmul.f32 %v6584, %v7411
    %v7413 = vrcp.pop %v6897
    %v7414 = vmul.f32 %v6897, %v7413
    %v7415 = vsub.f32 1.0, %v7414
    %v7416 = vmul.f32 %v7413, %v7415
    %v7417 = vadd.f32 %v7413, %v7416
    %vm7418 = vweird.f32 %v6897
    %vm7419 = vweird.f32 %v7413
    %vm7420 = vmor %vm7418, %vm7419
    %v7421 = vsel %vm7420, %v7413, %v7417
    %v7422 = vand.u32 2147483647, %v6897
    %vm7423 = vcmp.eq.f32.partialorder %v7422, 8.507059e+37
    %v7424 = vand.u32 %v6897, 2147483648
    %v7425 = vor.u32 1.1754944e-38, %v7424
    %v7426 = vsel %vm7423, %v7425, %v7421
    %v7427 = vmul.f32 %v6586, %v7426
    %v7428 = vrcp.pop %v6898
    %v7429 = vmul.f32 %v6898, %v7428
    %v7430 = vsub.f32 1.0, %v7429
    %v7431 = vmul.f32 %v7428, %v7430
    %v7432 = vadd.f32 %v7428, %v7431
    %vm7433 = vweird.f32 %v6898
    %vm7434 = vweird.f32 %v7428
    %vm7435 = vmor %vm7433, %vm7434
    %v7436 = vsel %vm7435, %v7428, %v7432
    %v7437 = vand.u32 2147483647, %v6898
    %vm7438 = vcmp.eq.f32.partialorder %v7437, 8.507059e+37
    %v7439 = vand.u32 %v6898, 2147483648
    %v7440 = vor.u32 1.1754944e-38, %v7439
    %v7441 = vsel %vm7438, %v7440, %v7436
    %v7442 = vmul.f32 %v6588, %v7441
    %v7443 = vrcp.pop %v6899
    %v7444 = vmul.f32 %v6899, %v7443
    %v7445 = vsub.f32 1.0, %v7444
    %v7446 = vmul.f32 %v7443, %v7445
    %v7447 = vadd.f32 %v7443, %v7446
    %vm7448 = vweird.f32 %v6899
    %vm7449 = vweird.f32 %v7443
    %vm7450 = vmor %vm7448, %vm7449
    %v7451 = vsel %vm7450, %v7443, %v7447
    %v7452 = vand.u32 2147483647, %v6899
    %vm7453 = vcmp.eq.f32.partialorder %v7452, 8.507059e+37
    %v7454 = vand.u32 %v6899, 2147483648
    %v7455 = vor.u32 1.1754944e-38, %v7454
    %v7456 = vsel %vm7453, %v7455, %v7451
    %v7457 = vmul.f32 %v6590, %v7456
    %v7458 = vrcp.pop %v6900
    %v7459 = vmul.f32 %v6900, %v7458
    %v7460 = vsub.f32 1.0, %v7459
    %v7461 = vmul.f32 %v7458, %v7460
    %v7462 = vadd.f32 %v7458, %v7461
    %vm7463 = vweird.f32 %v6900
    %vm7464 = vweird.f32 %v7458
    %vm7465 = vmor %vm7463, %vm7464
    %v7466 = vsel %vm7465, %v7458, %v7462
    %v7467 = vand.u32 2147483647, %v6900
    %vm7468 = vcmp.eq.f32.partialorder %v7467, 8.507059e+37
    %v7469 = vand.u32 %v6900, 2147483648
    %v7470 = vor.u32 1.1754944e-38, %v7469
    %v7471 = vsel %vm7468, %v7470, %v7466
    %v7472 = vmul.f32 %v6592, %v7471
    %v7473 = vrcp.pop %v6855
    %v7474 = vmul.f32 %v6855, %v7473
    %v7475 = vsub.f32 1.0, %v7474
    %v7476 = vmul.f32 %v7473, %v7475
    %v7477 = vadd.f32 %v7473, %v7476
    %vm7478 = vweird.f32 %v6855
    %vm7479 = vweird.f32 %v7473
    %vm7480 = vmor %vm7478, %vm7479
    %v7481 = vsel %vm7480, %v7473, %v7477
    %v7482 = vand.u32 2147483647, %v6855
    %vm7483 = vcmp.eq.f32.partialorder %v7482, 8.507059e+37
    %v7484 = vand.u32 %v6855, 2147483648
    %v7485 = vor.u32 1.1754944e-38, %v7484
    %v7486 = vsel %vm7483, %v7485, %v7481
    %v7487 = vmul.f32 %v6594, %v7486
    %v7488 = vrcp.pop %v6901
    %v7489 = vmul.f32 %v6901, %v7488
    %v7490 = vsub.f32 1.0, %v7489
    %v7491 = vmul.f32 %v7488, %v7490
    %v7492 = vadd.f32 %v7488, %v7491
    %vm7493 = vweird.f32 %v6901
    %vm7494 = vweird.f32 %v7488
    %vm7495 = vmor %vm7493, %vm7494
    %v7496 = vsel %vm7495, %v7488, %v7492
    %v7497 = vand.u32 2147483647, %v6901
    %vm7498 = vcmp.eq.f32.partialorder %v7497, 8.507059e+37
    %v7499 = vand.u32 %v6901, 2147483648
    %v7500 = vor.u32 1.1754944e-38, %v7499
    %v7501 = vsel %vm7498, %v7500, %v7496
    %v7502 = vmul.f32 %v6596, %v7501
    %v7503 = vrcp.pop %v6902
    %v7504 = vmul.f32 %v6902, %v7503
    %v7505 = vsub.f32 1.0, %v7504
    %v7506 = vmul.f32 %v7503, %v7505
    %v7507 = vadd.f32 %v7503, %v7506
    %vm7508 = vweird.f32 %v6902
    %vm7509 = vweird.f32 %v7503
    %vm7510 = vmor %vm7508, %vm7509
    %v7511 = vsel %vm7510, %v7503, %v7507
    %v7512 = vand.u32 2147483647, %v6902
    %vm7513 = vcmp.eq.f32.partialorder %v7512, 8.507059e+37
    %v7514 = vand.u32 %v6902, 2147483648
    %v7515 = vor.u32 1.1754944e-38, %v7514
    %v7516 = vsel %vm7513, %v7515, %v7511
    %v7517 = vmul.f32 %v6598, %v7516
    %v7518 = vrcp.pop %v6903
    %v7519 = vmul.f32 %v6903, %v7518
    %v7520 = vsub.f32 1.0, %v7519
    %v7521 = vmul.f32 %v7518, %v7520
    %v7522 = vadd.f32 %v7518, %v7521
    %vm7523 = vweird.f32 %v6903
    %vm7524 = vweird.f32 %v7518
    %vm7525 = vmor %vm7523, %vm7524
    %v7526 = vsel %vm7525, %v7518, %v7522
    %v7527 = vand.u32 2147483647, %v6903
    %vm7528 = vcmp.eq.f32.partialorder %v7527, 8.507059e+37
    %v7529 = vand.u32 %v6903, 2147483648
    %v7530 = vor.u32 1.1754944e-38, %v7529
    %v7531 = vsel %vm7528, %v7530, %v7526
    %v7532 = vmul.f32 %v6600, %v7531
    %v7533 = vrcp.pop %v6904
    %v7534 = vmul.f32 %v6904, %v7533
    %v7535 = vsub.f32 1.0, %v7534
    %v7536 = vmul.f32 %v7533, %v7535
    %v7537 = vadd.f32 %v7533, %v7536
    %vm7538 = vweird.f32 %v6904
    %vm7539 = vweird.f32 %v7533
    %vm7540 = vmor %vm7538, %vm7539
    %v7541 = vsel %vm7540, %v7533, %v7537
    %v7542 = vand.u32 2147483647, %v6904
    %vm7543 = vcmp.eq.f32.partialorder %v7542, 8.507059e+37
    %v7544 = vand.u32 %v6904, 2147483648
    %v7545 = vor.u32 1.1754944e-38, %v7544
    %v7546 = vsel %vm7543, %v7545, %v7541
    %v7547 = vmul.f32 %v6602, %v7546
    %v7548 = vrcp.pop %v6905
    %v7549 = vmul.f32 %v6905, %v7548
    %v7550 = vsub.f32 1.0, %v7549
    %v7551 = vmul.f32 %v7548, %v7550
    %v7552 = vadd.f32 %v7548, %v7551
    %vm7553 = vweird.f32 %v6905
    %vm7554 = vweird.f32 %v7548
    %vm7555 = vmor %vm7553, %vm7554
    %v7556 = vsel %vm7555, %v7548, %v7552
    %v7557 = vand.u32 2147483647, %v6905
    %vm7558 = vcmp.eq.f32.partialorder %v7557, 8.507059e+37
    %v7559 = vand.u32 %v6905, 2147483648
    %v7560 = vor.u32 1.1754944e-38, %v7559
    %v7561 = vsel %vm7558, %v7560, %v7556
    %v7562 = vmul.f32 %v6604, %v7561
    %v7563 = vrcp.pop %v6906
    %v7564 = vmul.f32 %v6906, %v7563
    %v7565 = vsub.f32 1.0, %v7564
    %v7566 = vmul.f32 %v7563, %v7565
    %v7567 = vadd.f32 %v7563, %v7566
    %vm7568 = vweird.f32 %v6906
    %vm7569 = vweird.f32 %v7563
    %vm7570 = vmor %vm7568, %vm7569
    %v7571 = vsel %vm7570, %v7563, %v7567
    %v7572 = vand.u32 2147483647, %v6906
    %vm7573 = vcmp.eq.f32.partialorder %v7572, 8.507059e+37
    %v7574 = vand.u32 %v6906, 2147483648
    %v7575 = vor.u32 1.1754944e-38, %v7574
    %v7576 = vsel %vm7573, %v7575, %v7571
    %v7577 = vmul.f32 %v6606, %v7576
    %v7578 = vrcp.pop %v6907
    %v7579 = vmul.f32 %v6907, %v7578
    %v7580 = vsub.f32 1.0, %v7579
    %v7581 = vmul.f32 %v7578, %v7580
    %v7582 = vadd.f32 %v7578, %v7581
    %vm7583 = vweird.f32 %v6907
    %vm7584 = vweird.f32 %v7578
    %vm7585 = vmor %vm7583, %vm7584
    %v7586 = vsel %vm7585, %v7578, %v7582
    %v7587 = vand.u32 2147483647, %v6907
    %vm7588 = vcmp.eq.f32.partialorder %v7587, 8.507059e+37
    %v7589 = vand.u32 %v6907, 2147483648
    %v7590 = vor.u32 1.1754944e-38, %v7589
    %v7591 = vsel %vm7588, %v7590, %v7586
    %v7592 = vmul.f32 %v6608, %v7591
    %v7593 = vrcp.pop %v6858
    %v7594 = vmul.f32 %v6858, %v7593
    %v7595 = vsub.f32 1.0, %v7594
    %v7596 = vmul.f32 %v7593, %v7595
    %v7597 = vadd.f32 %v7593, %v7596
    %vm7598 = vweird.f32 %v6858
    %vm7599 = vweird.f32 %v7593
    %vm7600 = vmor %vm7598, %vm7599
    %v7601 = vsel %vm7600, %v7593, %v7597
    %v7602 = vand.u32 2147483647, %v6858
    %vm7603 = vcmp.eq.f32.partialorder %v7602, 8.507059e+37
    %v7604 = vand.u32 %v6858, 2147483648
    %v7605 = vor.u32 1.1754944e-38, %v7604
    %v7606 = vsel %vm7603, %v7605, %v7601
    %v7607 = vmul.f32 %v6610, %v7606
    %v7608 = vrcp.pop %v6908
    %v7609 = vmul.f32 %v6908, %v7608
    %v7610 = vsub.f32 1.0, %v7609
    %v7611 = vmul.f32 %v7608, %v7610
    %v7612 = vadd.f32 %v7608, %v7611
    %vm7613 = vweird.f32 %v6908
    %vm7614 = vweird.f32 %v7608
    %vm7615 = vmor %vm7613, %vm7614
    %v7616 = vsel %vm7615, %v7608, %v7612
    %v7617 = vand.u32 2147483647, %v6908
    %vm7618 = vcmp.eq.f32.partialorder %v7617, 8.507059e+37
    %v7619 = vand.u32 %v6908, 2147483648
    %v7620 = vor.u32 1.1754944e-38, %v7619
    %v7621 = vsel %vm7618, %v7620, %v7616
    %v7622 = vmul.f32 %v6612, %v7621
    %v7623 = vrcp.pop %v6909
    %v7624 = vmul.f32 %v6909, %v7623
    %v7625 = vsub.f32 1.0, %v7624
    %v7626 = vmul.f32 %v7623, %v7625
    %v7627 = vadd.f32 %v7623, %v7626
    %vm7628 = vweird.f32 %v6909
    %vm7629 = vweird.f32 %v7623
    %vm7630 = vmor %vm7628, %vm7629
    %v7631 = vsel %vm7630, %v7623, %v7627
    %v7632 = vand.u32 2147483647, %v6909
    %vm7633 = vcmp.eq.f32.partialorder %v7632, 8.507059e+37
    %v7634 = vand.u32 %v6909, 2147483648
    %v7635 = vor.u32 1.1754944e-38, %v7634
    %v7636 = vsel %vm7633, %v7635, %v7631
    %v7637 = vmul.f32 %v6614, %v7636
    %v7638 = vrcp.pop %v6910
    %v7639 = vmul.f32 %v6910, %v7638
    %v7640 = vsub.f32 1.0, %v7639
    %v7641 = vmul.f32 %v7638, %v7640
    %v7642 = vadd.f32 %v7638, %v7641
    %vm7643 = vweird.f32 %v6910
    %vm7644 = vweird.f32 %v7638
    %vm7645 = vmor %vm7643, %vm7644
    %v7646 = vsel %vm7645, %v7638, %v7642
    %v7647 = vand.u32 2147483647, %v6910
    %vm7648 = vcmp.eq.f32.partialorder %v7647, 8.507059e+37
    %v7649 = vand.u32 %v6910, 2147483648
    %v7650 = vor.u32 1.1754944e-38, %v7649
    %v7651 = vsel %vm7648, %v7650, %v7646
    %v7652 = vmul.f32 %v6616, %v7651
    %v7653 = vrcp.pop %v6911
    %v7654 = vmul.f32 %v6911, %v7653
    %v7655 = vsub.f32 1.0, %v7654
    %v7656 = vmul.f32 %v7653, %v7655
    %v7657 = vadd.f32 %v7653, %v7656
    %vm7658 = vweird.f32 %v6911
    %vm7659 = vweird.f32 %v7653
    %vm7660 = vmor %vm7658, %vm7659
    %v7661 = vsel %vm7660, %v7653, %v7657
    %v7662 = vand.u32 2147483647, %v6911
    %vm7663 = vcmp.eq.f32.partialorder %v7662, 8.507059e+37
    %v7664 = vand.u32 %v6911, 2147483648
    %v7665 = vor.u32 1.1754944e-38, %v7664
    %v7666 = vsel %vm7663, %v7665, %v7661
    %v7667 = vmul.f32 %v6618, %v7666
    %v7668 = vrcp.pop %v6912
    %v7669 = vmul.f32 %v6912, %v7668
    %v7670 = vsub.f32 1.0, %v7669
    %v7671 = vmul.f32 %v7668, %v7670
    %v7672 = vadd.f32 %v7668, %v7671
    %vm7673 = vweird.f32 %v6912
    %vm7674 = vweird.f32 %v7668
    %vm7675 = vmor %vm7673, %vm7674
    %v7676 = vsel %vm7675, %v7668, %v7672
    %v7677 = vand.u32 2147483647, %v6912
    %vm7678 = vcmp.eq.f32.partialorder %v7677, 8.507059e+37
    %v7679 = vand.u32 %v6912, 2147483648
    %v7680 = vor.u32 1.1754944e-38, %v7679
    %v7681 = vsel %vm7678, %v7680, %v7676
    %v7682 = vmul.f32 %v6620, %v7681
    %v7683 = vrcp.pop %v6913
    %v7684 = vmul.f32 %v6913, %v7683
    %v7685 = vsub.f32 1.0, %v7684
    %v7686 = vmul.f32 %v7683, %v7685
    %v7687 = vadd.f32 %v7683, %v7686
    %vm7688 = vweird.f32 %v6913
    %vm7689 = vweird.f32 %v7683
    %vm7690 = vmor %vm7688, %vm7689
    %v7691 = vsel %vm7690, %v7683, %v7687
    %v7692 = vand.u32 2147483647, %v6913
    %vm7693 = vcmp.eq.f32.partialorder %v7692, 8.507059e+37
    %v7694 = vand.u32 %v6913, 2147483648
    %v7695 = vor.u32 1.1754944e-38, %v7694
    %v7696 = vsel %vm7693, %v7695, %v7691
    %v7697 = vmul.f32 %v6622, %v7696
    %v7698 = vrcp.pop %v6914
    %v7699 = vmul.f32 %v6914, %v7698
    %v7700 = vsub.f32 1.0, %v7699
    %v7701 = vmul.f32 %v7698, %v7700
    %v7702 = vadd.f32 %v7698, %v7701
    %vm7703 = vweird.f32 %v6914
    %vm7704 = vweird.f32 %v7698
    %vm7705 = vmor %vm7703, %vm7704
    %v7706 = vsel %vm7705, %v7698, %v7702
    %v7707 = vand.u32 2147483647, %v6914
    %vm7708 = vcmp.eq.f32.partialorder %v7707, 8.507059e+37
    %v7709 = vand.u32 %v6914, 2147483648
    %v7710 = vor.u32 1.1754944e-38, %v7709
    %v7711 = vsel %vm7708, %v7710, %v7706
    %v7712 = vmul.f32 %v6624, %v7711
    %v7713 = vrcp.pop %v6861
    %v7714 = vmul.f32 %v6861, %v7713
    %v7715 = vsub.f32 1.0, %v7714
    %v7716 = vmul.f32 %v7713, %v7715
    %v7717 = vadd.f32 %v7713, %v7716
    %vm7718 = vweird.f32 %v6861
    %vm7719 = vweird.f32 %v7713
    %vm7720 = vmor %vm7718, %vm7719
    %v7721 = vsel %vm7720, %v7713, %v7717
    %v7722 = vand.u32 2147483647, %v6861
    %vm7723 = vcmp.eq.f32.partialorder %v7722, 8.507059e+37
    %v7724 = vand.u32 %v6861, 2147483648
    %v7725 = vor.u32 1.1754944e-38, %v7724
    %v7726 = vsel %vm7723, %v7725, %v7721
    %v7727 = vmul.f32 %v6626, %v7726
    %v7728 = vrcp.pop %v6915
    %v7729 = vmul.f32 %v6915, %v7728
    %v7730 = vsub.f32 1.0, %v7729
    %v7731 = vmul.f32 %v7728, %v7730
    %v7732 = vadd.f32 %v7728, %v7731
    %vm7733 = vweird.f32 %v6915
    %vm7734 = vweird.f32 %v7728
    %vm7735 = vmor %vm7733, %vm7734
    %v7736 = vsel %vm7735, %v7728, %v7732
    %v7737 = vand.u32 2147483647, %v6915
    %vm7738 = vcmp.eq.f32.partialorder %v7737, 8.507059e+37
    %v7739 = vand.u32 %v6915, 2147483648
    %v7740 = vor.u32 1.1754944e-38, %v7739
    %v7741 = vsel %vm7738, %v7740, %v7736
    %v7742 = vmul.f32 %v6628, %v7741
    %v7743 = vrcp.pop %v6916
    %v7744 = vmul.f32 %v6916, %v7743
    %v7745 = vsub.f32 1.0, %v7744
    %v7746 = vmul.f32 %v7743, %v7745
    %v7747 = vadd.f32 %v7743, %v7746
    %vm7748 = vweird.f32 %v6916
    %vm7749 = vweird.f32 %v7743
    %vm7750 = vmor %vm7748, %vm7749
    %v7751 = vsel %vm7750, %v7743, %v7747
    %v7752 = vand.u32 2147483647, %v6916
    %vm7753 = vcmp.eq.f32.partialorder %v7752, 8.507059e+37
    %v7754 = vand.u32 %v6916, 2147483648
    %v7755 = vor.u32 1.1754944e-38, %v7754
    %v7756 = vsel %vm7753, %v7755, %v7751
    %v7757 = vmul.f32 %v6630, %v7756
    %v7758 = vrcp.pop %v6917
    %v7759 = vmul.f32 %v6917, %v7758
    %v7760 = vsub.f32 1.0, %v7759
    %v7761 = vmul.f32 %v7758, %v7760
    %v7762 = vadd.f32 %v7758, %v7761
    %vm7763 = vweird.f32 %v6917
    %vm7764 = vweird.f32 %v7758
    %vm7765 = vmor %vm7763, %vm7764
    %v7766 = vsel %vm7765, %v7758, %v7762
    %v7767 = vand.u32 2147483647, %v6917
    %vm7768 = vcmp.eq.f32.partialorder %v7767, 8.507059e+37
    %v7769 = vand.u32 %v6917, 2147483648
    %v7770 = vor.u32 1.1754944e-38, %v7769
    %v7771 = vsel %vm7768, %v7770, %v7766
    %v7772 = vmul.f32 %v6632, %v7771
    %v7773 = vrcp.pop %v6918
    %v7774 = vmul.f32 %v6918, %v7773
    %v7775 = vsub.f32 1.0, %v7774
    %v7776 = vmul.f32 %v7773, %v7775
    %v7777 = vadd.f32 %v7773, %v7776
    %vm7778 = vweird.f32 %v6918
    %vm7779 = vweird.f32 %v7773
    %vm7780 = vmor %vm7778, %vm7779
    %v7781 = vsel %vm7780, %v7773, %v7777
    %v7782 = vand.u32 2147483647, %v6918
    %vm7783 = vcmp.eq.f32.partialorder %v7782, 8.507059e+37
    %v7784 = vand.u32 %v6918, 2147483648
    %v7785 = vor.u32 1.1754944e-38, %v7784
    %v7786 = vsel %vm7783, %v7785, %v7781
    %v7787 = vmul.f32 %v6634, %v7786
    %v7788 = vrcp.pop %v6919
    %v7789 = vmul.f32 %v6919, %v7788
    %v7790 = vsub.f32 1.0, %v7789
    %v7791 = vmul.f32 %v7788, %v7790
    %v7792 = vadd.f32 %v7788, %v7791
    %vm7793 = vweird.f32 %v6919
    %vm7794 = vweird.f32 %v7788
    %vm7795 = vmor %vm7793, %vm7794
    %v7796 = vsel %vm7795, %v7788, %v7792
    %v7797 = vand.u32 2147483647, %v6919
    %vm7798 = vcmp.eq.f32.partialorder %v7797, 8.507059e+37
    %v7799 = vand.u32 %v6919, 2147483648
    %v7800 = vor.u32 1.1754944e-38, %v7799
    %v7801 = vsel %vm7798, %v7800, %v7796
    %v7802 = vmul.f32 %v6636, %v7801
    %v7803 = vrcp.pop %v6920
    %v7804 = vmul.f32 %v6920, %v7803
    %v7805 = vsub.f32 1.0, %v7804
    %v7806 = vmul.f32 %v7803, %v7805
    %v7807 = vadd.f32 %v7803, %v7806
    %vm7808 = vweird.f32 %v6920
    %vm7809 = vweird.f32 %v7803
    %vm7810 = vmor %vm7808, %vm7809
    %v7811 = vsel %vm7810, %v7803, %v7807
    %v7812 = vand.u32 2147483647, %v6920
    %vm7813 = vcmp.eq.f32.partialorder %v7812, 8.507059e+37
    %v7814 = vand.u32 %v6920, 2147483648
    %v7815 = vor.u32 1.1754944e-38, %v7814
    %v7816 = vsel %vm7813, %v7815, %v7811
    %v7817 = vmul.f32 %v6638, %v7816
    %v7818 = vrcp.pop %v6921
    %v7819 = vmul.f32 %v6921, %v7818
    %v7820 = vsub.f32 1.0, %v7819
    %v7821 = vmul.f32 %v7818, %v7820
    %v7822 = vadd.f32 %v7818, %v7821
    %vm7823 = vweird.f32 %v6921
    %vm7824 = vweird.f32 %v7818
    %vm7825 = vmor %vm7823, %vm7824
    %v7826 = vsel %vm7825, %v7818, %v7822
    %v7827 = vand.u32 2147483647, %v6921
    %vm7828 = vcmp.eq.f32.partialorder %v7827, 8.507059e+37
    %v7829 = vand.u32 %v6921, 2147483648
    %v7830 = vor.u32 1.1754944e-38, %v7829
    %v7831 = vsel %vm7828, %v7830, %v7826
    %v7832 = vmul.f32 %v6640, %v7831
    %v7833 = vrcp.pop %v6864
    %v7834 = vmul.f32 %v6864, %v7833
    %v7835 = vsub.f32 1.0, %v7834
    %v7836 = vmul.f32 %v7833, %v7835
    %v7837 = vadd.f32 %v7833, %v7836
    %vm7838 = vweird.f32 %v6864
    %vm7839 = vweird.f32 %v7833
    %vm7840 = vmor %vm7838, %vm7839
    %v7841 = vsel %vm7840, %v7833, %v7837
    %v7842 = vand.u32 2147483647, %v6864
    %vm7843 = vcmp.eq.f32.partialorder %v7842, 8.507059e+37
    %v7844 = vand.u32 %v6864, 2147483648
    %v7845 = vor.u32 1.1754944e-38, %v7844
    %v7846 = vsel %vm7843, %v7845, %v7841
    %v7847 = vmul.f32 %v6642, %v7846
    %v7848 = vrcp.pop %v6922
    %v7849 = vmul.f32 %v6922, %v7848
    %v7850 = vsub.f32 1.0, %v7849
    %v7851 = vmul.f32 %v7848, %v7850
    %v7852 = vadd.f32 %v7848, %v7851
    %vm7853 = vweird.f32 %v6922
    %vm7854 = vweird.f32 %v7848
    %vm7855 = vmor %vm7853, %vm7854
    %v7856 = vsel %vm7855, %v7848, %v7852
    %v7857 = vand.u32 2147483647, %v6922
    %vm7858 = vcmp.eq.f32.partialorder %v7857, 8.507059e+37
    %v7859 = vand.u32 %v6922, 2147483648
    %v7860 = vor.u32 1.1754944e-38, %v7859
    %v7861 = vsel %vm7858, %v7860, %v7856
    %v7862 = vmul.f32 %v6644, %v7861
    %v7863 = vrcp.pop %v6923
    %v7864 = vmul.f32 %v6923, %v7863
    %v7865 = vsub.f32 1.0, %v7864
    %v7866 = vmul.f32 %v7863, %v7865
    %v7867 = vadd.f32 %v7863, %v7866
    %vm7868 = vweird.f32 %v6923
    %vm7869 = vweird.f32 %v7863
    %vm7870 = vmor %vm7868, %vm7869
    %v7871 = vsel %vm7870, %v7863, %v7867
    %v7872 = vand.u32 2147483647, %v6923
    %vm7873 = vcmp.eq.f32.partialorder %v7872, 8.507059e+37
    %v7874 = vand.u32 %v6923, 2147483648
    %v7875 = vor.u32 1.1754944e-38, %v7874
    %v7876 = vsel %vm7873, %v7875, %v7871
    %v7877 = vmul.f32 %v6646, %v7876
    %v7878 = vrcp.pop %v6924
    %v7879 = vmul.f32 %v6924, %v7878
    %v7880 = vsub.f32 1.0, %v7879
    %v7881 = vmul.f32 %v7878, %v7880
    %v7882 = vadd.f32 %v7878, %v7881
    %vm7883 = vweird.f32 %v6924
    %vm7884 = vweird.f32 %v7878
    %vm7885 = vmor %vm7883, %vm7884
    %v7886 = vsel %vm7885, %v7878, %v7882
    %v7887 = vand.u32 2147483647, %v6924
    %vm7888 = vcmp.eq.f32.partialorder %v7887, 8.507059e+37
    %v7889 = vand.u32 %v6924, 2147483648
    %v7890 = vor.u32 1.1754944e-38, %v7889
    %v7891 = vsel %vm7888, %v7890, %v7886
    %v7892 = vmul.f32 %v6648, %v7891
    %v7893 = vrcp.pop %v6925
    %v7894 = vmul.f32 %v6925, %v7893
    %v7895 = vsub.f32 1.0, %v7894
    %v7896 = vmul.f32 %v7893, %v7895
    %v7897 = vadd.f32 %v7893, %v7896
    %vm7898 = vweird.f32 %v6925
    %vm7899 = vweird.f32 %v7893
    %vm7900 = vmor %vm7898, %vm7899
    %v7901 = vsel %vm7900, %v7893, %v7897
    %v7902 = vand.u32 2147483647, %v6925
    %vm7903 = vcmp.eq.f32.partialorder %v7902, 8.507059e+37
    %v7904 = vand.u32 %v6925, 2147483648
    %v7905 = vor.u32 1.1754944e-38, %v7904
    %v7906 = vsel %vm7903, %v7905, %v7901
    %v7907 = vmul.f32 %v6650, %v7906
    %v7908 = vrcp.pop %v6926
    %v7909 = vmul.f32 %v6926, %v7908
    %v7910 = vsub.f32 1.0, %v7909
    %v7911 = vmul.f32 %v7908, %v7910
    %v7912 = vadd.f32 %v7908, %v7911
    %vm7913 = vweird.f32 %v6926
    %vm7914 = vweird.f32 %v7908
    %vm7915 = vmor %vm7913, %vm7914
    %v7916 = vsel %vm7915, %v7908, %v7912
    %v7917 = vand.u32 2147483647, %v6926
    %vm7918 = vcmp.eq.f32.partialorder %v7917, 8.507059e+37
    %v7919 = vand.u32 %v6926, 2147483648
    %v7920 = vor.u32 1.1754944e-38, %v7919
    %v7921 = vsel %vm7918, %v7920, %v7916
    %v7922 = vmul.f32 %v6652, %v7921
    %v7923 = vrcp.pop %v6927
    %v7924 = vmul.f32 %v6927, %v7923
    %v7925 = vsub.f32 1.0, %v7924
    %v7926 = vmul.f32 %v7923, %v7925
    %v7927 = vadd.f32 %v7923, %v7926
    %vm7928 = vweird.f32 %v6927
    %vm7929 = vweird.f32 %v7923
    %vm7930 = vmor %vm7928, %vm7929
    %v7931 = vsel %vm7930, %v7923, %v7927
    %v7932 = vand.u32 2147483647, %v6927
    %vm7933 = vcmp.eq.f32.partialorder %v7932, 8.507059e+37
    %v7934 = vand.u32 %v6927, 2147483648
    %v7935 = vor.u32 1.1754944e-38, %v7934
    %v7936 = vsel %vm7933, %v7935, %v7931
    %v7937 = vmul.f32 %v6654, %v7936
    %v7938 = vrcp.pop %v6928
    %v7939 = vmul.f32 %v6928, %v7938
    %v7940 = vsub.f32 1.0, %v7939
    %v7941 = vmul.f32 %v7938, %v7940
    %v7942 = vadd.f32 %v7938, %v7941
    %vm7943 = vweird.f32 %v6928
    %vm7944 = vweird.f32 %v7938
    %vm7945 = vmor %vm7943, %vm7944
    %v7946 = vsel %vm7945, %v7938, %v7942
    %v7947 = vand.u32 2147483647, %v6928
    %vm7948 = vcmp.eq.f32.partialorder %v7947, 8.507059e+37
    %v7949 = vand.u32 %v6928, 2147483648
    %v7950 = vor.u32 1.1754944e-38, %v7949
    %v7951 = vsel %vm7948, %v7950, %v7946
    %v7952 = vmul.f32 %v6656, %v7951
    %v8017 = vrot.slane %v7022, 7
    %v8018 = vsel %vm212, %v8017, %v7007
    %v8019 = vrot.slane %v7037, 6
    %v8020 = vsel %vm214, %v8019, %v8018
    %v8021 = vrot.slane %v7052, 5
    %v8022 = vsel %vm216, %v8021, %v8020
    %v8023 = vrot.slane %v7067, 4
    %v8024 = vsel %vm218, %v8023, %v8022
    %v8025 = vrot.slane %v7082, 3
    %v8026 = vsel %vm220, %v8025, %v8024
    %v8027 = vrot.slane %v7097, 2
    %v8028 = vsel %vm222, %v8027, %v8026
    %v8029 = vrot.slane %v7112, 1
    %v8030 = vsel %vm224, %v8029, %v8028
    %v8031 = vrot.slane %v7142, 7
    %v8032 = vsel %vm212, %v8031, %v7127
    %v8033 = vrot.slane %v7157, 6
    %v8034 = vsel %vm214, %v8033, %v8032
    %v8035 = vrot.slane %v7172, 5
    %v8036 = vsel %vm216, %v8035, %v8034
    %v8037 = vrot.slane %v7187, 4
    %v8038 = vsel %vm218, %v8037, %v8036
    %v8039 = vrot.slane %v7202, 3
    %v8040 = vsel %vm220, %v8039, %v8038
    %v8041 = vrot.slane %v7217, 2
    %v8042 = vsel %vm222, %v8041, %v8040
    %v8043 = vrot.slane %v7232, 1
    %v8044 = vsel %vm224, %v8043, %v8042
    %v8045 = vrot.slane %v7262, 7
    %v8046 = vsel %vm212, %v8045, %v7247
    %v8047 = vrot.slane %v7277, 6
    %v8048 = vsel %vm214, %v8047, %v8046
    %v8049 = vrot.slane %v7292, 5
    %v8050 = vsel %vm216, %v8049, %v8048
    %v8051 = vrot.slane %v7307, 4
    %v8052 = vsel %vm218, %v8051, %v8050
    %v8053 = vrot.slane %v7322, 3
    %v8054 = vsel %vm220, %v8053, %v8052
    %v8055 = vrot.slane %v7337, 2
    %v8056 = vsel %vm222, %v8055, %v8054
    %v8057 = vrot.slane %v7352, 1
    %v8058 = vsel %vm224, %v8057, %v8056
    %v8059 = vrot.slane %v7382, 7
    %v8060 = vsel %vm212, %v8059, %v7367
    %v8061 = vrot.slane %v7397, 6
    %v8062 = vsel %vm214, %v8061, %v8060
    %v8063 = vrot.slane %v7412, 5
    %v8064 = vsel %vm216, %v8063, %v8062
    %v8065 = vrot.slane %v7427, 4
    %v8066 = vsel %vm218, %v8065, %v8064
    %v8067 = vrot.slane %v7442, 3
    %v8068 = vsel %vm220, %v8067, %v8066
    %v8069 = vrot.slane %v7457, 2
    %v8070 = vsel %vm222, %v8069, %v8068
    %v8071 = vrot.slane %v7472, 1
    %v8072 = vsel %vm224, %v8071, %v8070
    %v8073 = vrot.slane %v7502, 7
    %v8074 = vsel %vm212, %v8073, %v7487
    %v8075 = vrot.slane %v7517, 6
    %v8076 = vsel %vm214, %v8075, %v8074
    %v8077 = vrot.slane %v7532, 5
    %v8078 = vsel %vm216, %v8077, %v8076
    %v8079 = vrot.slane %v7547, 4
    %v8080 = vsel %vm218, %v8079, %v8078
    %v8081 = vrot.slane %v7562, 3
    %v8082 = vsel %vm220, %v8081, %v8080
    %v8083 = vrot.slane %v7577, 2
    %v8084 = vsel %vm222, %v8083, %v8082
    %v8085 = vrot.slane %v7592, 1
    %v8086 = vsel %vm224, %v8085, %v8084
    %v8087 = vrot.slane %v7622, 7
    %v8088 = vsel %vm212, %v8087, %v7607
    %v8089 = vrot.slane %v7637, 6
    %v8090 = vsel %vm214, %v8089, %v8088
    %v8091 = vrot.slane %v7652, 5
    %v8092 = vsel %vm216, %v8091, %v8090
    %v8093 = vrot.slane %v7667, 4
    %v8094 = vsel %vm218, %v8093, %v8092
    %v8095 = vrot.slane %v7682, 3
    %v8096 = vsel %vm220, %v8095, %v8094
    %v8097 = vrot.slane %v7697, 2
    %v8098 = vsel %vm222, %v8097, %v8096
    %v8099 = vrot.slane %v7712, 1
    %v8100 = vsel %vm224, %v8099, %v8098
    %v8101 = vrot.slane %v7742, 7
    %v8102 = vsel %vm212, %v8101, %v7727
    %v8103 = vrot.slane %v7757, 6
    %v8104 = vsel %vm214, %v8103, %v8102
    %v8105 = vrot.slane %v7772, 5
    %v8106 = vsel %vm216, %v8105, %v8104
    %v8107 = vrot.slane %v7787, 4
    %v8108 = vsel %vm218, %v8107, %v8106
    %v8109 = vrot.slane %v7802, 3
    %v8110 = vsel %vm220, %v8109, %v8108
    %v8111 = vrot.slane %v7817, 2
    %v8112 = vsel %vm222, %v8111, %v8110
    %v8113 = vrot.slane %v7832, 1
    %v8114 = vsel %vm224, %v8113, %v8112
    %v8115 = vrot.slane %v7862, 7
    %v8116 = vsel %vm212, %v8115, %v7847
    %v8117 = vrot.slane %v7877, 6
    %v8118 = vsel %vm214, %v8117, %v8116
    %v8119 = vrot.slane %v7892, 5
    %v8120 = vsel %vm216, %v8119, %v8118
    %v8121 = vrot.slane %v7907, 4
    %v8122 = vsel %vm218, %v8121, %v8120
    %v8123 = vrot.slane %v7922, 3
    %v8124 = vsel %vm220, %v8123, %v8122
    %v8125 = vrot.slane %v7937, 2
    %v8126 = vsel %vm222, %v8125, %v8124
    %v8127 = vrot.slane %v7952, 1
    %v8128 = vsel %vm224, %v8127, %v8126
    %v8137 = vsel %vm145, %v8030, 0.0
    %8138 = vadd.xlane.f32.xlu0 %v8137
    %v8139 = vpop.xlane.xlu0 %8138
    %v8140 = vsel %vm145, %v8044, 0.0
    %8141 = vadd.xlane.f32.xlu0 %v8140
    %v8142 = vpop.xlane.xlu0 %8141
    %v8143 = vsel %vm145, %v8058, 0.0
    %8144 = vadd.xlane.f32.xlu0 %v8143
    %v8145 = vpop.xlane.xlu0 %8144
    %v8146 = vsel %vm145, %v8072, 0.0
    %8147 = vadd.xlane.f32.xlu0 %v8146
    %v8148 = vpop.xlane.xlu0 %8147
    %v8149 = vsel %vm145, %v8086, 0.0
    %8150 = vadd.xlane.f32.xlu0 %v8149
    %v8151 = vpop.xlane.xlu0 %8150
    %v8152 = vsel %vm145, %v8100, 0.0
    %8153 = vadd.xlane.f32.xlu0 %v8152
    %v8154 = vpop.xlane.xlu0 %8153
    %v8155 = vsel %vm145, %v8114, 0.0
    %8156 = vadd.xlane.f32.xlu0 %v8155
    %v8157 = vpop.xlane.xlu0 %8156
    %v8158 = vsel %vm145, %v8128, 0.0
    %8159 = vadd.xlane.f32.xlu0 %v8158
    %v8160 = vpop.xlane.xlu0 %8159
    %v8161 = vmul.f32 %v8139, %v5352
    %v8162 = vmul.f32 %v8142, %v5352
    %v8163 = vmul.f32 %v8145, %v5352
    %v8164 = vmul.f32 %v8148, %v5352
    %v8165 = vmul.f32 %v8151, %v5352
    %v8166 = vmul.f32 %v8154, %v5352
    %v8167 = vmul.f32 %v8157, %v5352
    %v8168 = vmul.f32 %v8160, %v5352
    %v8169 = vsel %vm145, %v8161, 0.0
    %v8170 = vrot.slane %v8169, 4
    %v8171 = vadd.f32 %v8169, %v8170
    %v8172 = vrot.slane %v8171, 2
    %v8173 = vadd.f32 %v8171, %v8172
    %v8174 = vrot.slane %v8173, 1
    %v8175 = vadd.f32 %v8173, %v8174
    %v8176 = vsel %vm145, %v8162, 0.0
    %v8177 = vrot.slane %v8176, 4
    %v8178 = vadd.f32 %v8176, %v8177
    %v8179 = vrot.slane %v8178, 2
    %v8180 = vadd.f32 %v8178, %v8179
    %v8181 = vrot.slane %v8180, 1
    %v8182 = vadd.f32 %v8180, %v8181
    %v8183 = vsel %vm145, %v8163, 0.0
    %v8184 = vrot.slane %v8183, 4
    %v8185 = vadd.f32 %v8183, %v8184
    %v8186 = vrot.slane %v8185, 2
    %v8187 = vadd.f32 %v8185, %v8186
    %v8188 = vrot.slane %v8187, 1
    %v8189 = vadd.f32 %v8187, %v8188
    %v8190 = vsel %vm145, %v8164, 0.0
    %v8191 = vrot.slane %v8190, 4
    %v8192 = vadd.f32 %v8190, %v8191
    %v8193 = vrot.slane %v8192, 2
    %v8194 = vadd.f32 %v8192, %v8193
    %v8195 = vrot.slane %v8194, 1
    %v8196 = vadd.f32 %v8194, %v8195
    %v8197 = vsel %vm145, %v8165, 0.0
    %v8198 = vrot.slane %v8197, 4
    %v8199 = vadd.f32 %v8197, %v8198
    %v8200 = vrot.slane %v8199, 2
    %v8201 = vadd.f32 %v8199, %v8200
    %v8202 = vrot.slane %v8201, 1
    %v8203 = vadd.f32 %v8201, %v8202
    %v8204 = vsel %vm145, %v8166, 0.0
    %v8205 = vrot.slane %v8204, 4
    %v8206 = vadd.f32 %v8204, %v8205
    %v8207 = vrot.slane %v8206, 2
    %v8208 = vadd.f32 %v8206, %v8207
    %v8209 = vrot.slane %v8208, 1
    %v8210 = vadd.f32 %v8208, %v8209
    %v8211 = vsel %vm145, %v8167, 0.0
    %v8212 = vrot.slane %v8211, 4
    %v8213 = vadd.f32 %v8211, %v8212
    %v8214 = vrot.slane %v8213, 2
    %v8215 = vadd.f32 %v8213, %v8214
    %v8216 = vrot.slane %v8215, 1
    %v8217 = vadd.f32 %v8215, %v8216
    %v8218 = vsel %vm145, %v8168, 0.0
    %v8219 = vrot.slane %v8218, 4
    %v8220 = vadd.f32 %v8218, %v8219
    %v8221 = vrot.slane %v8220, 2
    %v8222 = vadd.f32 %v8220, %v8221
    %v8223 = vrot.slane %v8222, 1
    %v8224 = vadd.f32 %v8222, %v8223
    %v8233 = vsel %vm212, %v8182, %v8175
    %v8234 = vsel %vm214, %v8189, %v8233
    %v8235 = vsel %vm216, %v8196, %v8234
    %v8236 = vsel %vm218, %v8203, %v8235
    %v8237 = vsel %vm220, %v8210, %v8236
    %v8238 = vsel %vm222, %v8217, %v8237
    %v8239 = vsel %vm224, %v8224, %v8238
    %v8240 = vsel %vm145, %v8239, 0
    %8242 = vmatpush.msra.mxu0 0.0
    %8243 = vmatpush.msra.mxu0 0.0
    %8244 = vmatpush.msra.mxu0 0.0
    %8245 = vmatpush.msra.mxu0 0.0
    %8246 = vmatpush.msra.mxu0 0.0
    %8247 = vmatpush.msra.mxu0 0.0
    %8248 = vmatpush.msra.mxu0 0.0
    %8249 = vmatpush.msra.mxu0 0.0
    %8250 = vmatpush.msra.mxu0 0.0
    %8251 = vmatpush.msra.mxu0 0.0
    %8252 = vmatpush.msra.mxu0 0.0
    %8253 = vmatpush.msra.mxu0 0.0
    %8254 = vmatpush.msra.mxu0 0.0
    %8255 = vmatpush.msra.mxu0 0.0
    %8256 = vmatpush.msra.mxu0 0.0
    %8257 = vmatpush.msra.mxu0 %v116
    %8258 = vmatmul.f32.gmra.mxu0 %v8240
    %v8259 = vpop.f32.mrf.mxu0
    %v8260 = vadd.f32 0.0, %v8259
    %8261 = vdwg.mxu0
    %8263 = vrot.lane.b32.xlu0 %v116, 64
    %v8264 = vpop.permute.xlu0 %8263
    %v8267 = vsel %vm145, %v250, 0
    %8269 = vmatpush.msra.mxu0 0.0
    %8270 = vmatpush.msra.mxu0 0.0
    %8271 = vmatpush.msra.mxu0 0.0
    %8272 = vmatpush.msra.mxu0 0.0
    %8273 = vmatpush.msra.mxu0 0.0
    %8274 = vmatpush.msra.mxu0 0.0
    %8275 = vmatpush.msra.mxu0 0.0
    %8276 = vmatpush.msra.mxu0 0.0
    %8277 = vmatpush.msra.mxu0 0.0
    %8278 = vmatpush.msra.mxu0 0.0
    %8279 = vmatpush.msra.mxu0 0.0
    %8280 = vmatpush.msra.mxu0 0.0
    %8281 = vmatpush.msra.mxu0 0.0
    %8282 = vmatpush.msra.mxu0 0.0
    %8283 = vmatpush.msra.mxu0 0.0
    %8284 = vmatpush.msra.mxu0 %v8264
    %8285 = vmatmul.f32.gmra.mxu0 %v8267
    %v8286 = vpop.f32.mrf.mxu0
    %v8287 = vadd.f32 0.0, %v8286
    %8288 = vdwg.mxu0
    %v8289 = vmul.f32 %v8260, %v8287
    %8290 = vst.msk [vmem:[#allocation11] sm:$0xff] %vm4692, %v8289
    // Predicated region
    $region42: #{tpu_custom_call.1} parent=1 // pred_check
      _
    $region43: #{tpu_custom_call.1} parent=1 // pred_check_branch
      %8292 = sbr.rel (0) target = $region45
    $region44: #{tpu_custom_call.1} parent=1 // pred_region
      %8294 = vsyncadd [#allocation4], 0
      %s8296 = sshll.u32 [#allocation11], 4
      %s8297 = int_to_ptr.vmem [resolvable:$true] %s8296
      %s8298 = sshll.u32 %s5, 4
      %s8299 = int_to_ptr.hbm [resolvable:$true] %s8298
      %8301 = dma.vmem_to_hbm [thread:$0]  %s8297, 128, %s8299, [#allocation4]
    $region45: #{tpu_custom_call.1} parent=1 // pred_fallthru
      _
    // Predicated region
    $region46: #{tpu_custom_call.1} parent=1 // pred_check
      _
    $region47: #{tpu_custom_call.1} parent=1 // pred_check_branch
      %8303 = sbr.rel (0) target = $region49
    $region48: #{tpu_custom_call.1} parent=1 // pred_region
      %8305 = dma.done [#allocation4], 128
    $region49: #{tpu_custom_call.1} parent=1 // pred_fallthru
      _
    %8306 = vsyncpa [#allocation3], 1
    %8307 = vsyncpa [#allocation6], 1
    %8308 = vsyncpa [#allocation9], 1
    %8309 = vsyncpa [#allocation4], 1

</llo_original>
